<compile_context>
chip_gen: v5e
topology: v5e:2x2
jax: 0.10.0
libtpu: 0.0.40
codegen_flags: <defaults>
</compile_context>

<pallas_src>
import functools

import jax
import jax.numpy as jnp
from jax.experimental import pallas as pl
from jax.experimental.pallas import tpu as pltpu


def _mixer_kernel(states_ref, aq_ref,
                  wcat_ref, bcat_ref,      # packed hypernet: (S, (G+3)*Ep) bf16, (1, (G+3)*Ep) f32
                  wv2_ref, bv2_ref,        # V[2]: (1, Ep) bf16 (zero-padded), (1, 1) f32
                  out_ref,                 # (1, block_b) f32, lane-dense
                  *, n_agents, n_groups, seg):
    Ep = seg                               # 128-lane aligned segment width
    GEp = n_groups * Ep
    A = n_agents

    # f32 HBM ingest, bf16 only for the MXU operand (cast fused in-kernel).
    s = states_ref[...].astype(jnp.bfloat16)                  # (TB, S)

    # --- single wide hypernetwork matmul, f32 accumulation ---
    y = jnp.dot(s, wcat_ref[...], preferred_element_type=jnp.float32) + bcat_ref[...]

    # All slice offsets/widths are multiples of 128 -> whole-vreg views, no lane rotates.
    w1_all = jnp.abs(y[:, :GEp])                               # |hyper_w_1(s)|      (TB, G*Ep)
    b1 = y[:, GEp:GEp + Ep]                                    # hyper_b_1(s)        (TB, Ep)
    w_fin = jnp.abs(y[:, GEp + Ep:GEp + 2 * Ep])               # |hyper_w_final(s)|  (TB, Ep)
    v_hid = jnp.maximum(y[:, GEp + 2 * Ep:GEp + 3 * Ep], 0.0)  # relu(V[0](s))       (TB, Ep)

    # --- fused agent->group sums (f32, no wrapper pass / no bf16 rounding) ---
    aq = aq_ref[...]                                           # (TB, G*A) f32
    h = b1
    for g in range(n_groups):                                  # tiny static unroll
        gq_g = jnp.sum(aq[:, g * A:(g + 1) * A], axis=1, keepdims=True)   # (TB, 1)
        h = h + gq_g * w1_all[:, g * Ep:(g + 1) * Ep]

    # ELU (alpha=1); exp(min(h,0)) keeps the discarded branch finite.
    hidden = jnp.where(h > 0, h, jnp.exp(jnp.minimum(h, 0.0)) - 1.0)

    # --- fused final reduce: rowwise dot(hidden, w_final) + rowwise dot(v_hid, wv2) ---
    wv2 = wv2_ref[...].astype(jnp.float32)                     # (1, Ep), padded lanes are 0
    row = jnp.sum(hidden * w_fin + v_hid * wv2, axis=1)        # (TB,)

    out_ref[...] = row[None, :] + bv2_ref[...]                 # lane-dense (1, TB) store


def point_like_mixer(agent_qs, states, params, *, n_agents, n_groups, embed_dim,
                     block_b=1024):
    """agent_qs: (bs, seq, n_groups*n_agents); states: (bs, seq, state_dim) -> (bs, seq, 1)."""
    bs, seq = agent_qs.shape[0], agent_qs.shape[1]
    B = bs * seq
    S = states.shape[-1]
    E, G, A = embed_dim, n_groups, n_agents
    Ep = max(128, ((E + 127) // 128) * 128)        # 128-lane aligned segment width

    (w1, bw1, wb, bb, wf, bf, wv1, bv1, wv2, bv2) = params

    def pad_cols(x, width):
        p = width - x.shape[-1]
        return x if p == 0 else jnp.pad(x, [(0, 0)] * (x.ndim - 1) + [(0, p)])

    # Pack the four state-driven hypernetwork weights into one wide matrix whose
    # segments are zero-padded to 128-lane boundaries (weights are tiny; one-time cost).
    w1_p = pad_cols(w1.reshape(S, G, E), Ep).reshape(S, G * Ep)
    bw1_p = pad_cols(bw1.reshape(1, G, E), Ep).reshape(1, G * Ep)
    w_cat = jnp.concatenate(
        [w1_p, pad_cols(wb, Ep), pad_cols(wf, Ep), pad_cols(wv1, Ep)],
        axis=1).astype(jnp.bfloat16)                                   # (S, (G+3)*Ep)
    b_cat = jnp.concatenate(
        [bw1_p, pad_cols(bb, Ep), pad_cols(bf, Ep), pad_cols(bv1, Ep)],
        axis=1).astype(jnp.float32)                                    # (1, (G+3)*Ep)
    wv2_row = pad_cols(wv2.reshape(1, E), Ep).astype(jnp.bfloat16)     # (1, Ep)
    bv2_s = bv2.reshape(1, 1).astype(jnp.float32)                      # (1, 1)

    # Activations stay f32 in HBM (no standalone convert pass); reshape is free.
    states_f = states.reshape(B, S).astype(jnp.float32)
    aq = agent_qs.reshape(B, G * A).astype(jnp.float32)

    # Ragged B handled by Pallas edge blocks — no jnp.pad copy of the inputs.
    n_blocks = pl.cdiv(B, block_b)

    kernel = functools.partial(_mixer_kernel, n_agents=A, n_groups=G, seg=Ep)

    out = pl.pallas_call(
        kernel,
        out_shape=jax.ShapeDtypeStruct((n_blocks, block_b), jnp.float32),
        grid=(n_blocks,),
        in_specs=[
            pl.BlockSpec((block_b, S), lambda i: (i, 0)),        # states tile (f32)
            pl.BlockSpec((block_b, G * A), lambda i: (i, 0)),    # agent_qs tile (f32)
            pl.BlockSpec(w_cat.shape, lambda i: (0, 0)),         # packed weights (resident)
            pl.BlockSpec(b_cat.shape, lambda i: (0, 0)),
            pl.BlockSpec(wv2_row.shape, lambda i: (0, 0)),
            pl.BlockSpec(bv2_s.shape, lambda i: (0, 0)),
        ],
        out_specs=pl.BlockSpec((1, block_b), lambda i: (i, 0)),  # lane-dense output row
        compiler_params=pltpu.CompilerParams(
            # single batch axis; on v7x this lets the runtime shard blocks across both TCs
            dimension_semantics=("parallel",),
            vmem_limit_bytes=32 * 1024 * 1024,
        ),
    )(states_f, aq, w_cat, b_cat, wv2_row, bv2_s)

    return out.reshape(n_blocks * block_b)[:B].reshape(bs, seq, 1)  # q_tot: (bs, seq, 1)


def _init_params(key, state_dim, embed_dim, n_groups):
    """Deterministic init mimicking nn.Linear default (U[-1/sqrt(fan_in), 1/sqrt(fan_in)])."""
    def linear(k, fan_in, fan_out):
        kw, kb = jax.random.split(k)
        bound = 1.0 / jnp.sqrt(fan_in)
        w = jax.random.uniform(kw, (fan_in, fan_out), jnp.float32, -bound, bound)
        b = jax.random.uniform(kb, (1, fan_out), jnp.float32, -bound, bound)
        return w, b

    ks = jax.random.split(key, 5)
    w1, bw1 = linear(ks[0], state_dim, embed_dim * n_groups)   # hyper_w_1
    wb, bb = linear(ks[1], state_dim, embed_dim)               # hyper_b_1
    wf, bf = linear(ks[2], state_dim, embed_dim)               # hyper_w_final
    wv1, bv1 = linear(ks[3], state_dim, embed_dim)             # V[0]
    wv2, bv2 = linear(ks[4], embed_dim, 1)                     # V[2]
    return (w1, bw1, wb, bb, wf, bf, wv1, bv1, wv2, bv2)


def _reference(agent_qs, states, params, *, n_agents, n_groups, embed_dim):
    """Pure-JAX mirror of the PyTorch forward, using the same bf16 matmul rounding
    as the kernel (group sums stay f32, matching the fused in-kernel reduction)."""
    (w1, bw1, wb, bb, wf, bf, wv1, bv1, wv2, bv2) = params
    bs, seq = agent_qs.shape[0], agent_qs.shape[1]
    S = states.shape[-1]
    E, G = embed_dim, n_groups

    bf16 = lambda x: x.astype(jnp.bfloat16)
    dot = lambda a, b: jnp.dot(bf16(a), bf16(b), preferred_element_type=jnp.float32)

    s = states.reshape(-1, S)
    gq = agent_qs.reshape(-1, G, n_agents).astype(jnp.float32).sum(axis=2)   # (B, G) f32

    W1 = jnp.abs(dot(s, w1) + bw1).reshape(-1, G, E)
    B1 = dot(s, wb) + bb
    mixed = (gq[:, :, None] * W1).sum(axis=1) + B1
    hidden = jnp.where(mixed > 0, mixed, jnp.exp(jnp.minimum(mixed, 0.0)) - 1.0)

    Wf = jnp.abs(dot(s, wf) + bf)
    v_hid = jnp.maximum(dot(s, wv1) + bv1, 0.0)
    wv2_row = bf16(wv2.reshape(1, E)).astype(jnp.float32)

    q = (hidden * Wf + v_hid * wv2_row).sum(axis=1, keepdims=True) + bv2
    return q.reshape(bs, seq, 1)


if __name__ == "__main__":
    # small config consistent with the module
    bs, seq = 2, 8
    n_agents = 4
    n_groups = 2          # mixing_group_dim
    state_dim = 32        # prod(state_shape)
    embed_dim = 32        # mixing_embed_dim

    key = jax.random.PRNGKey(0)
    k_p, k_q, k_s, k_q2, k_s2 = jax.random.split(key, 5)

    params = _init_params(k_p, state_dim, embed_dim, n_groups)
    agent_qs = jax.random.normal(k_q, (bs, seq, n_groups * n_agents), jnp.float32)
    states = jax.random.normal(k_s, (bs, seq, state_dim), jnp.float32)

    q_tot = point_like_mixer(agent_qs, states, params,
                             n_agents=n_agents, n_groups=n_groups,
                             embed_dim=embed_dim)
    q_tot = jax.block_until_ready(q_tot)

    q_ref = _reference(agent_qs, states, params,
                       n_agents=n_agents, n_groups=n_groups, embed_dim=embed_dim)
    assert q_tot.shape == (bs, seq, 1)
    assert jnp.allclose(q_tot, q_ref, atol=2e-3, rtol=2e-3), "mismatch vs reference (small)"

    # second check: ragged batch*seq -> partial edge tile (no input padding in wrapper)
    bs2, seq2 = 3, 100    # B = 300
    agent_qs2 = jax.random.normal(k_q2, (bs2, seq2, n_groups * n_agents), jnp.float32)
    states2 = jax.random.normal(k_s2, (bs2, seq2, state_dim), jnp.float32)
    q_tot2 = jax.block_until_ready(
        point_like_mixer(agent_qs2, states2, params,
                         n_agents=n_agents, n_groups=n_groups,
                         embed_dim=embed_dim, block_b=1024))
    q_ref2 = _reference(agent_qs2, states2, params,
                        n_agents=n_agents, n_groups=n_groups, embed_dim=embed_dim)
    assert q_tot2.shape == (bs2, seq2, 1)
    assert jnp.allclose(q_tot2, q_ref2, atol=2e-3, rtol=2e-3), "mismatch vs reference (ragged)"

    print("KERNEL_OK")
</pallas_src>

<mosaic_0001>
module attributes {stable_mosaic.version = 11 : i64} {
  func.func @_mixer_kernel(%arg0: i32, %arg1: memref<1024x32xf32, #tpu.memory_space<vmem>>, %arg2: memref<1024x8xf32, #tpu.memory_space<vmem>>, %arg3: memref<32x640xbf16, #tpu.memory_space<vmem>>, %arg4: memref<1x640xf32, #tpu.memory_space<vmem>>, %arg5: memref<1x128xbf16, #tpu.memory_space<vmem>>, %arg6: memref<1x1xf32, #tpu.memory_space<vmem>>, %arg7: memref<1x1024xf32, #tpu.memory_space<vmem>>) attributes {dimension_semantics = [#tpu.dimension_semantics<parallel>], iteration_bounds = array<i64: 1>, scalar_prefetch = 0 : i64, scratch_operands = 0 : i64, tpu.core_type = #tpu.core_type<tc>, window_params = [{transform_indices = @transform_0, window_bounds = array<i64: 1024, 32>}, {transform_indices = @transform_1, window_bounds = array<i64: 1024, 8>}, {pipeline_mode = #tpu.pipeline_mode<synchronous>, transform_indices = @transform_2, window_bounds = array<i64: 32, 640>}, {pipeline_mode = #tpu.pipeline_mode<synchronous>, transform_indices = @transform_3, window_bounds = array<i64: 1, 640>}, {pipeline_mode = #tpu.pipeline_mode<synchronous>, transform_indices = @transform_4, window_bounds = array<i64: 1, 128>}, {pipeline_mode = #tpu.pipeline_mode<synchronous>, transform_indices = @transform_5, window_bounds = array<i64: 1, 1>}, {transform_indices = @transform_6, window_bounds = array<i64: 1, 1024>}]} {
    %c0 = arith.constant 0 : index
    %c0_0 = arith.constant 0 : index
    %0 = vector.load %arg1[%c0, %c0_0] : memref<1024x32xf32, #tpu.memory_space<vmem>>, vector<1024x32xf32>
    %1 = arith.truncf %0 : vector<1024x32xf32> to vector<1024x32xbf16>
    %c0_1 = arith.constant 0 : index
    %c0_2 = arith.constant 0 : index
    %2 = vector.load %arg3[%c0_1, %c0_2] : memref<32x640xbf16, #tpu.memory_space<vmem>>, vector<32x640xbf16>
    %cst = arith.constant dense<0.000000e+00> : vector<1024x640xf32>
    %3 = tpu.matmul %1, %2, %cst {dimension_numbers = #tpu.dot_dimension_numbers<[1], [0], [0], [1], [0, 0, 1, 1], [], []>} : vector<1024x32xbf16>, vector<32x640xbf16>, vector<1024x640xf32> -> vector<1024x640xf32>
    %c0_3 = arith.constant 0 : index
    %c0_4 = arith.constant 0 : index
    %4 = vector.load %arg4[%c0_3, %c0_4] : memref<1x640xf32, #tpu.memory_space<vmem>>, vector<1x640xf32>
    %5 = vector.broadcast %4 : vector<1x640xf32> to vector<1024x640xf32>
    %6 = arith.addf %3, %5 : vector<1024x640xf32>
    %7 = vector.extract_strided_slice %6 {offsets = [0, 0], sizes = [1024, 256], strides = [1, 1]} : vector<1024x640xf32> to vector<1024x256xf32>
    %8 = math.absf %7 : vector<1024x256xf32>
    %9 = vector.extract_strided_slice %6 {offsets = [0, 256], sizes = [1024, 128], strides = [1, 1]} : vector<1024x640xf32> to vector<1024x128xf32>
    %10 = vector.extract_strided_slice %6 {offsets = [0, 384], sizes = [1024, 128], strides = [1, 1]} : vector<1024x640xf32> to vector<1024x128xf32>
    %11 = math.absf %10 : vector<1024x128xf32>
    %12 = vector.extract_strided_slice %6 {offsets = [0, 512], sizes = [1024, 128], strides = [1, 1]} : vector<1024x640xf32> to vector<1024x128xf32>
    %cst_5 = arith.constant 0.000000e+00 : f32
    %13 = vector.broadcast %cst_5 : f32 to vector<1024x128xf32>
    %14 = arith.maximumf %12, %13 : vector<1024x128xf32>
    %c0_6 = arith.constant 0 : index
    %c0_7 = arith.constant 0 : index
    %15 = vector.load %arg2[%c0_6, %c0_7] : memref<1024x8xf32, #tpu.memory_space<vmem>>, vector<1024x8xf32>
    %16 = vector.extract_strided_slice %15 {offsets = [0, 0], sizes = [1024, 4], strides = [1, 1]} : vector<1024x8xf32> to vector<1024x4xf32>
    %cst_8 = arith.constant dense<0.000000e+00> : vector<1024xf32>
    %17 = vector.multi_reduction <add>, %16, %cst_8 [1] : vector<1024x4xf32> to vector<1024xf32>
    %18 = vector.shape_cast %17 : vector<1024xf32> to vector<1024x1xf32>
    %19 = vector.extract_strided_slice %8 {offsets = [0, 0], sizes = [1024, 128], strides = [1, 1]} : vector<1024x256xf32> to vector<1024x128xf32>
    %20 = vector.broadcast %18 : vector<1024x1xf32> to vector<1024x128xf32>
    %21 = arith.mulf %20, %19 : vector<1024x128xf32>
    %22 = arith.addf %9, %21 : vector<1024x128xf32>
    %23 = vector.extract_strided_slice %15 {offsets = [0, 4], sizes = [1024, 4], strides = [1, 1]} : vector<1024x8xf32> to vector<1024x4xf32>
    %cst_9 = arith.constant dense<0.000000e+00> : vector<1024xf32>
    %24 = vector.multi_reduction <add>, %23, %cst_9 [1] : vector<1024x4xf32> to vector<1024xf32>
    %25 = vector.shape_cast %24 : vector<1024xf32> to vector<1024x1xf32>
    %26 = vector.extract_strided_slice %8 {offsets = [0, 128], sizes = [1024, 128], strides = [1, 1]} : vector<1024x256xf32> to vector<1024x128xf32>
    %27 = vector.broadcast %25 : vector<1024x1xf32> to vector<1024x128xf32>
    %28 = arith.mulf %27, %26 : vector<1024x128xf32>
    %29 = arith.addf %22, %28 : vector<1024x128xf32>
    %cst_10 = arith.constant 0.000000e+00 : f32
    %30 = vector.broadcast %cst_10 : f32 to vector<1024x128xf32>
    %31 = arith.cmpf ogt, %29, %30 : vector<1024x128xf32>
    %cst_11 = arith.constant 0.000000e+00 : f32
    %32 = vector.broadcast %cst_11 : f32 to vector<1024x128xf32>
    %33 = arith.minimumf %29, %32 : vector<1024x128xf32>
    %34 = math.exp %33 : vector<1024x128xf32>
    %cst_12 = arith.constant 1.000000e+00 : f32
    %35 = vector.broadcast %cst_12 : f32 to vector<1024x128xf32>
    %36 = arith.subf %34, %35 : vector<1024x128xf32>
    %37 = arith.select %31, %29, %36 : vector<1024x128xi1>, vector<1024x128xf32>
    %c0_13 = arith.constant 0 : index
    %c0_14 = arith.constant 0 : index
    %38 = vector.load %arg5[%c0_13, %c0_14] : memref<1x128xbf16, #tpu.memory_space<vmem>>, vector<1x128xbf16>
    %39 = arith.extf %38 : vector<1x128xbf16> to vector<1x128xf32>
    %40 = arith.mulf %37, %11 : vector<1024x128xf32>
    %41 = vector.broadcast %39 : vector<1x128xf32> to vector<1024x128xf32>
    %42 = arith.mulf %14, %41 : vector<1024x128xf32>
    %43 = arith.addf %40, %42 : vector<1024x128xf32>
    %cst_15 = arith.constant dense<0.000000e+00> : vector<1024xf32>
    %44 = vector.multi_reduction <add>, %43, %cst_15 [1] : vector<1024x128xf32> to vector<1024xf32>
    %45 = vector.shape_cast %44 : vector<1024xf32> to vector<1x1024xf32>
    %c0_16 = arith.constant 0 : index
    %c0_17 = arith.constant 0 : index
    %46 = vector.load %arg6[%c0_16, %c0_17] : memref<1x1xf32, #tpu.memory_space<vmem>>, vector<1x1xf32>
    %47 = vector.broadcast %46 : vector<1x1xf32> to vector<1x1024xf32>
    %48 = arith.addf %45, %47 : vector<1x1024xf32>
    %c0_18 = arith.constant 0 : index
    %c0_19 = arith.constant 0 : index
    %49 = vector.load %arg7[%c0_18, %c0_19] : memref<1x1024xf32, #tpu.memory_space<vmem>>, vector<1x1024xf32>
    tpu.vector_store %arg7[%c0_18, %c0_19], %48 {strides = array<i32>} : memref<1x1024xf32, #tpu.memory_space<vmem>>, vector<1x1024xf32>,
    return
  }
  func.func @transform_0(%arg0: i32) -> (i32, i32) {
    %c0_i32 = arith.constant 0 : i32
    %c0_i32_0 = arith.constant 0 : i32
    return %arg0, %c0_i32 : i32, i32
  }
  func.func @transform_1(%arg0: i32) -> (i32, i32) {
    %c0_i32 = arith.constant 0 : i32
    %c0_i32_0 = arith.constant 0 : i32
    return %arg0, %c0_i32 : i32, i32
  }
  func.func @transform_2(%arg0: i32) -> (i32, i32) {
    %c0_i32 = arith.constant 0 : i32
    %c0_i32_0 = arith.constant 0 : i32
    %c0_i32_1 = arith.constant 0 : i32
    return %c0_i32, %c0_i32_0 : i32, i32
  }
  func.func @transform_3(%arg0: i32) -> (i32, i32) {
    %c0_i32 = arith.constant 0 : i32
    %c0_i32_0 = arith.constant 0 : i32
    %c0_i32_1 = arith.constant 0 : i32
    return %c0_i32, %c0_i32_0 : i32, i32
  }
  func.func @transform_4(%arg0: i32) -> (i32, i32) {
    %c0_i32 = arith.constant 0 : i32
    %c0_i32_0 = arith.constant 0 : i32
    %c0_i32_1 = arith.constant 0 : i32
    return %c0_i32, %c0_i32_0 : i32, i32
  }
  func.func @transform_5(%arg0: i32) -> (i32, i32) {
    %c0_i32 = arith.constant 0 : i32
    %c0_i32_0 = arith.constant 0 : i32
    %c0_i32_1 = arith.constant 0 : i32
    return %c0_i32, %c0_i32_0 : i32, i32
  }
  func.func @transform_6(%arg0: i32) -> (i32, i32) {
    %c0_i32 = arith.constant 0 : i32
    %c0_i32_0 = arith.constant 0 : i32
    return %arg0, %c0_i32 : i32, i32
  }
}

</mosaic_0001>

<llo_original>
// kernel: tpu_custom_call.1
$region0: #{tpu_custom_call.1}
  #allocation0 [shape = 'u32[]', space=smem, size = 0x4, offset = 0x4, fixed_abs, tag = 'smem constant byte address 0x4 - core index']
  #allocation1 [shape = 'u32[72,128]{1,0:T(1,128)}', space=vmem, size = 0x9000, scoped, tag = 'internal scratch']
  #allocation2 [shape = 'f32[1,1]{1,0:T(1,128)S(1)}', space=vmem, size = 0x200, scoped, tag = 'scoped memory for tpu_custom_call.1']
  %s0 = inlined_call_operand.vmem [shape: f32[16,32], index: 0, kind: input, shape index: {}]
  %s1 = inlined_call_operand.vmem [shape: f32[16,8], index: 1, kind: input, shape index: {}]
  %s2 = inlined_call_operand.hbm [shape: bf16[32,640], index: 2, kind: input, shape index: {}]
  %s3 = inlined_call_operand.vmem [shape: f32[1,640], index: 3, kind: input, shape index: {}]
  %s4 = inlined_call_operand.vmem [shape: bf16[1,128], index: 4, kind: input, shape index: {}]
  %s5 = inlined_call_operand.<no memory space> [shape: f32[1,1], index: 5, kind: input, shape index: {}]
  %s6 = inlined_call_operand.hbm [shape: f32[1,1024], index: 6, kind: output, shape index: {}]
  %s7 = sld [smem:[#allocation0]]
  $region38: #{tpu_custom_call.1} parent=0
    _
  %s9 = ssub.s32 1, %s7
  %s10 = scalar_select 0, %s9, %s7
  %v11 = vstv %s5
  %12 = vst [vmem:[#allocation2] sm:$0x1] %v11
  $region1: #{tpu_custom_call.1} parent=0
    #allocation3 [shape = 'u8[40960]{0}', space=vmem, size = 0xa000, scoped, tag = 'input window, operand 2, single buffered']
    #allocation4 [shape = 's32[1]{0}', space=sflag, size = 0x4, scoped, tag = 'scoped memory for tpu_custom_call.1']
    #allocation5 [shape = 's32[1]{0}', space=sflag, size = 0x4, scoped, tag = 'scoped memory for tpu_custom_call.1']
    #allocation6 [shape = 'u8[4096]{0}', space=vmem, size = 0x1000, scoped, tag = 'output window, operand 0, single buffered']
    %13 = vsyncpa [#allocation4], 0
    %14 = vsyncpa [#allocation5], 0
    // Predicated region
    $region2: #{tpu_custom_call.1} parent=1 // pred_check
      _
    $region3: #{tpu_custom_call.1} parent=1 // pred_check_branch
      %16 = sbr.rel (0) target = $region5
    $region4: #{tpu_custom_call.1} parent=1 // pred_region
      _
    $region5: #{tpu_custom_call.1} parent=1 // pred_fallthru
      _
    // Predicated region
    $region6: #{tpu_custom_call.1} parent=1 // pred_check
      _
    $region7: #{tpu_custom_call.1} parent=1 // pred_check_branch
      %18 = sbr.rel (0) target = $region9
    $region8: #{tpu_custom_call.1} parent=1 // pred_region
      _
    $region9: #{tpu_custom_call.1} parent=1 // pred_fallthru
      _
    // Predicated region
    $region10: #{tpu_custom_call.1} parent=1 // pred_check
      _
    $region11: #{tpu_custom_call.1} parent=1 // pred_check_branch
      %20 = sbr.rel (0) target = $region13
    $region12: #{tpu_custom_call.1} parent=1 // pred_region
      %22 = vsyncadd [#allocation4], 0
      %s23 = sshll.u32 %s2, 4
      %s24 = int_to_ptr.hbm [resolvable:$true] %s23
      %s25 = sshll.u32 [#allocation3], 4
      %s26 = int_to_ptr.vmem [resolvable:$true] %s25
      %31 = dma.hbm_to_vmem [thread:$0]  %s24, 1280, %s26, [#allocation4], 320, 320, 20
    $region13: #{tpu_custom_call.1} parent=1 // pred_fallthru
      _
    // Predicated region
    $region14: #{tpu_custom_call.1} parent=1 // pred_check
      _
    $region15: #{tpu_custom_call.1} parent=1 // pred_check_branch
      %33 = sbr.rel (0) target = $region17
    $region16: #{tpu_custom_call.1} parent=1 // pred_region
      _
    $region17: #{tpu_custom_call.1} parent=1 // pred_fallthru
      _
    // Predicated region
    $region18: #{tpu_custom_call.1} parent=1 // pred_check
      _
    $region19: #{tpu_custom_call.1} parent=1 // pred_check_branch
      %35 = sbr.rel (0) target = $region21
    $region20: #{tpu_custom_call.1} parent=1 // pred_region
      _
    $region21: #{tpu_custom_call.1} parent=1 // pred_fallthru
      _
    // Predicated region
    $region22: #{tpu_custom_call.1} parent=1 // pred_check
      _
    $region23: #{tpu_custom_call.1} parent=1 // pred_check_branch
      %37 = sbr.rel (0) target = $region25
    $region24: #{tpu_custom_call.1} parent=1 // pred_region
      _
    $region25: #{tpu_custom_call.1} parent=1 // pred_fallthru
      _
    // Predicated region
    $region26: #{tpu_custom_call.1} parent=1 // pred_check
      _
    $region27: #{tpu_custom_call.1} parent=1 // pred_check_branch
      %39 = sbr.rel (0) target = $region29
    $region28: #{tpu_custom_call.1} parent=1 // pred_region
      %41 = dma.done [#allocation4], 1280
    $region29: #{tpu_custom_call.1} parent=1 // pred_fallthru
      _
    %v43 = vld [vmem:[%s0] sm:$0xff]
    %v44 = vld [vmem:[%s0 + $0x8] sm:$0xff]
    %v45 = vld [vmem:[%s0 + $0x10] sm:$0xff]
    %v46 = vld [vmem:[%s0 + $0x18] sm:$0xff]
    %v47 = vld [vmem:[%s0 + $0x20] sm:$0xff]
    %v48 = vld [vmem:[%s0 + $0x28] sm:$0xff]
    %v49 = vld [vmem:[%s0 + $0x30] sm:$0xff]
    %v50 = vld [vmem:[%s0 + $0x38] sm:$0xff]
    %v51 = vld [vmem:[%s0 + $0x40] sm:$0xff]
    %v52 = vld [vmem:[%s0 + $0x48] sm:$0xff]
    %v53 = vld [vmem:[%s0 + $0x50] sm:$0xff]
    %v54 = vld [vmem:[%s0 + $0x58] sm:$0xff]
    %v55 = vld [vmem:[%s0 + $0x60] sm:$0xff]
    %v56 = vld [vmem:[%s0 + $0x68] sm:$0xff]
    %v57 = vld [vmem:[%s0 + $0x70] sm:$0xff]
    %v58 = vld [vmem:[%s0 + $0x78] sm:$0xff]
    %v59 = vld [vmem:[%s0 + $0x80] sm:$0xff]
    %v60 = vld [vmem:[%s0 + $0x88] sm:$0xff]
    %v61 = vld [vmem:[%s0 + $0x90] sm:$0xff]
    %v62 = vld [vmem:[%s0 + $0x98] sm:$0xff]
    %v63 = vld [vmem:[%s0 + $0xa0] sm:$0xff]
    %v64 = vld [vmem:[%s0 + $0xa8] sm:$0xff]
    %v65 = vld [vmem:[%s0 + $0xb0] sm:$0xff]
    %v66 = vld [vmem:[%s0 + $0xb8] sm:$0xff]
    %v67 = vld [vmem:[%s0 + $0xc0] sm:$0xff]
    %v68 = vld [vmem:[%s0 + $0xc8] sm:$0xff]
    %v69 = vld [vmem:[%s0 + $0xd0] sm:$0xff]
    %v70 = vld [vmem:[%s0 + $0xd8] sm:$0xff]
    %v71 = vld [vmem:[%s0 + $0xe0] sm:$0xff]
    %v72 = vld [vmem:[%s0 + $0xe8] sm:$0xff]
    %v73 = vld [vmem:[%s0 + $0xf0] sm:$0xff]
    %v74 = vld [vmem:[%s0 + $0xf8] sm:$0xff]
    %v75 = vld [vmem:[%s0 + $0x100] sm:$0xff]
    %v76 = vld [vmem:[%s0 + $0x108] sm:$0xff]
    %v77 = vld [vmem:[%s0 + $0x110] sm:$0xff]
    %v78 = vld [vmem:[%s0 + $0x118] sm:$0xff]
    %v79 = vld [vmem:[%s0 + $0x120] sm:$0xff]
    %v80 = vld [vmem:[%s0 + $0x128] sm:$0xff]
    %v81 = vld [vmem:[%s0 + $0x130] sm:$0xff]
    %v82 = vld [vmem:[%s0 + $0x138] sm:$0xff]
    %v83 = vld [vmem:[%s0 + $0x140] sm:$0xff]
    %v84 = vld [vmem:[%s0 + $0x148] sm:$0xff]
    %v85 = vld [vmem:[%s0 + $0x150] sm:$0xff]
    %v86 = vld [vmem:[%s0 + $0x158] sm:$0xff]
    %v87 = vld [vmem:[%s0 + $0x160] sm:$0xff]
    %v88 = vld [vmem:[%s0 + $0x168] sm:$0xff]
    %v89 = vld [vmem:[%s0 + $0x170] sm:$0xff]
    %v90 = vld [vmem:[%s0 + $0x178] sm:$0xff]
    %v91 = vld [vmem:[%s0 + $0x180] sm:$0xff]
    %v92 = vld [vmem:[%s0 + $0x188] sm:$0xff]
    %v93 = vld [vmem:[%s0 + $0x190] sm:$0xff]
    %v94 = vld [vmem:[%s0 + $0x198] sm:$0xff]
    %v95 = vld [vmem:[%s0 + $0x1a0] sm:$0xff]
    %v96 = vld [vmem:[%s0 + $0x1a8] sm:$0xff]
    %v97 = vld [vmem:[%s0 + $0x1b0] sm:$0xff]
    %v98 = vld [vmem:[%s0 + $0x1b8] sm:$0xff]
    %v99 = vld [vmem:[%s0 + $0x1c0] sm:$0xff]
    %v100 = vld [vmem:[%s0 + $0x1c8] sm:$0xff]
    %v101 = vld [vmem:[%s0 + $0x1d0] sm:$0xff]
    %v102 = vld [vmem:[%s0 + $0x1d8] sm:$0xff]
    %v103 = vld [vmem:[%s0 + $0x1e0] sm:$0xff]
    %v104 = vld [vmem:[%s0 + $0x1e8] sm:$0xff]
    %v105 = vld [vmem:[%s0 + $0x1f0] sm:$0xff]
    %v106 = vld [vmem:[%s0 + $0x1f8] sm:$0xff]
    %v107 = vld [vmem:[%s0 + $0x200] sm:$0xff]
    %v108 = vld [vmem:[%s0 + $0x208] sm:$0xff]
    %v109 = vld [vmem:[%s0 + $0x210] sm:$0xff]
    %v110 = vld [vmem:[%s0 + $0x218] sm:$0xff]
    %v111 = vld [vmem:[%s0 + $0x220] sm:$0xff]
    %v112 = vld [vmem:[%s0 + $0x228] sm:$0xff]
    %v113 = vld [vmem:[%s0 + $0x230] sm:$0xff]
    %v114 = vld [vmem:[%s0 + $0x238] sm:$0xff]
    %v115 = vld [vmem:[%s0 + $0x240] sm:$0xff]
    %v116 = vld [vmem:[%s0 + $0x248] sm:$0xff]
    %v117 = vld [vmem:[%s0 + $0x250] sm:$0xff]
    %v118 = vld [vmem:[%s0 + $0x258] sm:$0xff]
    %v119 = vld [vmem:[%s0 + $0x260] sm:$0xff]
    %v120 = vld [vmem:[%s0 + $0x268] sm:$0xff]
    %v121 = vld [vmem:[%s0 + $0x270] sm:$0xff]
    %v122 = vld [vmem:[%s0 + $0x278] sm:$0xff]
    %v123 = vld [vmem:[%s0 + $0x280] sm:$0xff]
    %v124 = vld [vmem:[%s0 + $0x288] sm:$0xff]
    %v125 = vld [vmem:[%s0 + $0x290] sm:$0xff]
    %v126 = vld [vmem:[%s0 + $0x298] sm:$0xff]
    %v127 = vld [vmem:[%s0 + $0x2a0] sm:$0xff]
    %v128 = vld [vmem:[%s0 + $0x2a8] sm:$0xff]
    %v129 = vld [vmem:[%s0 + $0x2b0] sm:$0xff]
    %v130 = vld [vmem:[%s0 + $0x2b8] sm:$0xff]
    %v131 = vld [vmem:[%s0 + $0x2c0] sm:$0xff]
    %v132 = vld [vmem:[%s0 + $0x2c8] sm:$0xff]
    %v133 = vld [vmem:[%s0 + $0x2d0] sm:$0xff]
    %v134 = vld [vmem:[%s0 + $0x2d8] sm:$0xff]
    %v135 = vld [vmem:[%s0 + $0x2e0] sm:$0xff]
    %v136 = vld [vmem:[%s0 + $0x2e8] sm:$0xff]
    %v137 = vld [vmem:[%s0 + $0x2f0] sm:$0xff]
    %v138 = vld [vmem:[%s0 + $0x2f8] sm:$0xff]
    %v139 = vld [vmem:[%s0 + $0x300] sm:$0xff]
    %v140 = vld [vmem:[%s0 + $0x308] sm:$0xff]
    %v141 = vld [vmem:[%s0 + $0x310] sm:$0xff]
    %v142 = vld [vmem:[%s0 + $0x318] sm:$0xff]
    %v143 = vld [vmem:[%s0 + $0x320] sm:$0xff]
    %v144 = vld [vmem:[%s0 + $0x328] sm:$0xff]
    %v145 = vld [vmem:[%s0 + $0x330] sm:$0xff]
    %v146 = vld [vmem:[%s0 + $0x338] sm:$0xff]
    %v147 = vld [vmem:[%s0 + $0x340] sm:$0xff]
    %v148 = vld [vmem:[%s0 + $0x348] sm:$0xff]
    %v149 = vld [vmem:[%s0 + $0x350] sm:$0xff]
    %v150 = vld [vmem:[%s0 + $0x358] sm:$0xff]
    %v151 = vld [vmem:[%s0 + $0x360] sm:$0xff]
    %v152 = vld [vmem:[%s0 + $0x368] sm:$0xff]
    %v153 = vld [vmem:[%s0 + $0x370] sm:$0xff]
    %v154 = vld [vmem:[%s0 + $0x378] sm:$0xff]
    %v155 = vld [vmem:[%s0 + $0x380] sm:$0xff]
    %v156 = vld [vmem:[%s0 + $0x388] sm:$0xff]
    %v157 = vld [vmem:[%s0 + $0x390] sm:$0xff]
    %v158 = vld [vmem:[%s0 + $0x398] sm:$0xff]
    %v159 = vld [vmem:[%s0 + $0x3a0] sm:$0xff]
    %v160 = vld [vmem:[%s0 + $0x3a8] sm:$0xff]
    %v161 = vld [vmem:[%s0 + $0x3b0] sm:$0xff]
    %v162 = vld [vmem:[%s0 + $0x3b8] sm:$0xff]
    %v163 = vld [vmem:[%s0 + $0x3c0] sm:$0xff]
    %v164 = vld [vmem:[%s0 + $0x3c8] sm:$0xff]
    %v165 = vld [vmem:[%s0 + $0x3d0] sm:$0xff]
    %v166 = vld [vmem:[%s0 + $0x3d8] sm:$0xff]
    %v167 = vld [vmem:[%s0 + $0x3e0] sm:$0xff]
    %v168 = vld [vmem:[%s0 + $0x3e8] sm:$0xff]
    %v169 = vld [vmem:[%s0 + $0x3f0] sm:$0xff]
    %v170 = vld [vmem:[%s0 + $0x3f8] sm:$0xff]
    %v171 = vpack.c.bf16 %v44, %v43
    %v172 = vpack.c.bf16 %v46, %v45
    %v173 = vpack.c.bf16 %v48, %v47
    %v174 = vpack.c.bf16 %v50, %v49
    %v175 = vpack.c.bf16 %v52, %v51
    %v176 = vpack.c.bf16 %v54, %v53
    %v177 = vpack.c.bf16 %v56, %v55
    %v178 = vpack.c.bf16 %v58, %v57
    %v179 = vpack.c.bf16 %v60, %v59
    %v180 = vpack.c.bf16 %v62, %v61
    %v181 = vpack.c.bf16 %v64, %v63
    %v182 = vpack.c.bf16 %v66, %v65
    %v183 = vpack.c.bf16 %v68, %v67
    %v184 = vpack.c.bf16 %v70, %v69
    %v185 = vpack.c.bf16 %v72, %v71
    %v186 = vpack.c.bf16 %v74, %v73
    %v187 = vpack.c.bf16 %v76, %v75
    %v188 = vpack.c.bf16 %v78, %v77
    %v189 = vpack.c.bf16 %v80, %v79
    %v190 = vpack.c.bf16 %v82, %v81
    %v191 = vpack.c.bf16 %v84, %v83
    %v192 = vpack.c.bf16 %v86, %v85
    %v193 = vpack.c.bf16 %v88, %v87
    %v194 = vpack.c.bf16 %v90, %v89
    %v195 = vpack.c.bf16 %v92, %v91
    %v196 = vpack.c.bf16 %v94, %v93
    %v197 = vpack.c.bf16 %v96, %v95
    %v198 = vpack.c.bf16 %v98, %v97
    %v199 = vpack.c.bf16 %v100, %v99
    %v200 = vpack.c.bf16 %v102, %v101
    %v201 = vpack.c.bf16 %v104, %v103
    %v202 = vpack.c.bf16 %v106, %v105
    %v203 = vpack.c.bf16 %v108, %v107
    %v204 = vpack.c.bf16 %v110, %v109
    %v205 = vpack.c.bf16 %v112, %v111
    %v206 = vpack.c.bf16 %v114, %v113
    %v207 = vpack.c.bf16 %v116, %v115
    %v208 = vpack.c.bf16 %v118, %v117
    %v209 = vpack.c.bf16 %v120, %v119
    %v210 = vpack.c.bf16 %v122, %v121
    %v211 = vpack.c.bf16 %v124, %v123
    %v212 = vpack.c.bf16 %v126, %v125
    %v213 = vpack.c.bf16 %v128, %v127
    %v214 = vpack.c.bf16 %v130, %v129
    %v215 = vpack.c.bf16 %v132, %v131
    %v216 = vpack.c.bf16 %v134, %v133
    %v217 = vpack.c.bf16 %v136, %v135
    %v218 = vpack.c.bf16 %v138, %v137
    %v219 = vpack.c.bf16 %v140, %v139
    %v220 = vpack.c.bf16 %v142, %v141
    %v221 = vpack.c.bf16 %v144, %v143
    %v222 = vpack.c.bf16 %v146, %v145
    %v223 = vpack.c.bf16 %v148, %v147
    %v224 = vpack.c.bf16 %v150, %v149
    %v225 = vpack.c.bf16 %v152, %v151
    %v226 = vpack.c.bf16 %v154, %v153
    %v227 = vpack.c.bf16 %v156, %v155
    %v228 = vpack.c.bf16 %v158, %v157
    %v229 = vpack.c.bf16 %v160, %v159
    %v230 = vpack.c.bf16 %v162, %v161
    %v231 = vpack.c.bf16 %v164, %v163
    %v232 = vpack.c.bf16 %v166, %v165
    %v233 = vpack.c.bf16 %v168, %v167
    %v234 = vpack.c.bf16 %v170, %v169
    %v235 = vld [vmem:[#allocation3] sm:$0xff]
    %v236 = vld [vmem:[#allocation3 + $0x8] sm:$0xff]
    %v237 = vld [vmem:[#allocation3 + $0x10] sm:$0xf]
    %v238 = vld [vmem:[#allocation3 + $0x14] sm:$0xff]
    %v239 = vld [vmem:[#allocation3 + $0x1c] sm:$0xff]
    %v240 = vld [vmem:[#allocation3 + $0x24] sm:$0xf]
    %v241 = vld [vmem:[#allocation3 + $0x28] sm:$0xff]
    %v242 = vld [vmem:[#allocation3 + $0x30] sm:$0xff]
    %v243 = vld [vmem:[#allocation3 + $0x38] sm:$0xf]
    %v244 = vld [vmem:[#allocation3 + $0x3c] sm:$0xff]
    %v245 = vld [vmem:[#allocation3 + $0x44] sm:$0xff]
    %v246 = vld [vmem:[#allocation3 + $0x4c] sm:$0xf]
    %v247 = vld [vmem:[%s3] sm:$0x1f]
    %v249 = vperm.slane %v247, 0
    %v250 = vperm.slane %v247, 1
    %v251 = vperm.slane %v247, 2
    %v252 = vperm.slane %v247, 3
    %v253 = vperm.slane %v247, 4
    %v271 = vunpack.c.l.b16 %v235
    %v272 = vunpack.c.h.b16 %v235
    %v273 = vunpack.c.l.b16 %v236
    %v274 = vunpack.c.h.b16 %v236
    %v275 = vunpack.c.l.b16 %v237
    %v276 = vunpack.c.l.b16 %v238
    %v277 = vunpack.c.h.b16 %v238
    %v278 = vunpack.c.l.b16 %v239
    %v279 = vunpack.c.h.b16 %v239
    %v280 = vunpack.c.l.b16 %v240
    %v281 = vunpack.c.l.b16 %v241
    %v282 = vunpack.c.h.b16 %v241
    %v283 = vunpack.c.l.b16 %v242
    %v284 = vunpack.c.h.b16 %v242
    %v285 = vunpack.c.l.b16 %v243
    %v286 = vunpack.c.l.b16 %v244
    %v287 = vunpack.c.h.b16 %v244
    %v288 = vunpack.c.l.b16 %v245
    %v289 = vunpack.c.h.b16 %v245
    %v290 = vunpack.c.l.b16 %v246
    %v291 = vpack.c.b16 %v276, %v271
    %v292 = vpack.c.b16 %v277, %v272
    %v293 = vpack.c.b16 %v278, %v273
    %v294 = vpack.c.b16 %v279, %v274
    %v295 = vpack.c.b16 %v280, %v275
    %v296 = vpack.c.b16 %v286, %v281
    %v297 = vpack.c.b16 %v287, %v282
    %v298 = vpack.c.b16 %v288, %v283
    %v299 = vpack.c.b16 %v289, %v284
    %v300 = vpack.c.b16 %v290, %v285
    %vm311 = vcmask 261120
    %v313 = vsel %vm311, %v171, 0
    %v316 = vsel %vm311, %v172, 0
    %v319 = vsel %vm311, %v173, 0
    %v322 = vsel %vm311, %v174, 0
    %v325 = vsel %vm311, %v175, 0
    %v328 = vsel %vm311, %v176, 0
    %v331 = vsel %vm311, %v177, 0
    %v334 = vsel %vm311, %v178, 0
    %v337 = vsel %vm311, %v179, 0
    %v340 = vsel %vm311, %v180, 0
    %v343 = vsel %vm311, %v181, 0
    %v346 = vsel %vm311, %v182, 0
    %v349 = vsel %vm311, %v183, 0
    %v352 = vsel %vm311, %v184, 0
    %v355 = vsel %vm311, %v185, 0
    %v358 = vsel %vm311, %v186, 0
    %v361 = vsel %vm311, %v187, 0
    %v364 = vsel %vm311, %v188, 0
    %v367 = vsel %vm311, %v189, 0
    %v370 = vsel %vm311, %v190, 0
    %v373 = vsel %vm311, %v191, 0
    %v376 = vsel %vm311, %v192, 0
    %v379 = vsel %vm311, %v193, 0
    %v382 = vsel %vm311, %v194, 0
    %v385 = vsel %vm311, %v195, 0
    %v388 = vsel %vm311, %v196, 0
    %v391 = vsel %vm311, %v197, 0
    %v394 = vsel %vm311, %v198, 0
    %v397 = vsel %vm311, %v199, 0
    %v400 = vsel %vm311, %v200, 0
    %v403 = vsel %vm311, %v201, 0
    %v406 = vsel %vm311, %v202, 0
    %v409 = vsel %vm311, %v203, 0
    %v412 = vsel %vm311, %v204, 0
    %v415 = vsel %vm311, %v205, 0
    %v418 = vsel %vm311, %v206, 0
    %v421 = vsel %vm311, %v207, 0
    %v424 = vsel %vm311, %v208, 0
    %v427 = vsel %vm311, %v209, 0
    %v430 = vsel %vm311, %v210, 0
    %v433 = vsel %vm311, %v211, 0
    %v436 = vsel %vm311, %v212, 0
    %v439 = vsel %vm311, %v213, 0
    %v442 = vsel %vm311, %v214, 0
    %v445 = vsel %vm311, %v215, 0
    %v448 = vsel %vm311, %v216, 0
    %v451 = vsel %vm311, %v217, 0
    %v454 = vsel %vm311, %v218, 0
    %v457 = vsel %vm311, %v219, 0
    %v460 = vsel %vm311, %v220, 0
    %v463 = vsel %vm311, %v221, 0
    %v466 = vsel %vm311, %v222, 0
    %v469 = vsel %vm311, %v223, 0
    %v472 = vsel %vm311, %v224, 0
    %v475 = vsel %vm311, %v225, 0
    %v478 = vsel %vm311, %v226, 0
    %v481 = vsel %vm311, %v227, 0
    %v484 = vsel %vm311, %v228, 0
    %v487 = vsel %vm311, %v229, 0
    %v490 = vsel %vm311, %v230, 0
    %v493 = vsel %vm311, %v231, 0
    %v496 = vsel %vm311, %v232, 0
    %v499 = vsel %vm311, %v233, 0
    %v502 = vsel %vm311, %v234, 0
    %504 = vmatpush.bf16.msra.mxu0 0
    %505 = vmatpush.bf16.msra.mxu0 0
    %506 = vmatpush.bf16.msra.mxu0 0
    %507 = vmatpush.bf16.msra.mxu0 0
    %508 = vmatpush.bf16.msra.mxu0 0
    %509 = vmatpush.bf16.msra.mxu0 0
    %510 = vmatpush.bf16.msra.mxu0 %v296
    %511 = vmatpush.bf16.msra.mxu0 %v291
    %512 = vmatmul.bf16.gmra.mxu0 %v313
    %v513 = vpop.f32.mrf.mxu0
    %v514 = vadd.f32 %v249, %v513
    %v515 = vpop.f32.mrf.mxu0
    %v516 = vadd.f32 %v249, %v515
    %517 = vmatmul.bf16.gmra.mxu0 %v316
    %v518 = vpop.f32.mrf.mxu0
    %v519 = vadd.f32 %v249, %v518
    %v520 = vpop.f32.mrf.mxu0
    %v521 = vadd.f32 %v249, %v520
    %522 = vmatmul.bf16.gmra.mxu0 %v319
    %v523 = vpop.f32.mrf.mxu0
    %v524 = vadd.f32 %v249, %v523
    %v525 = vpop.f32.mrf.mxu0
    %v526 = vadd.f32 %v249, %v525
    %527 = vmatmul.bf16.gmra.mxu0 %v322
    %v528 = vpop.f32.mrf.mxu0
    %v529 = vadd.f32 %v249, %v528
    %v530 = vpop.f32.mrf.mxu0
    %v531 = vadd.f32 %v249, %v530
    %532 = vmatmul.bf16.gmra.mxu0 %v325
    %v533 = vpop.f32.mrf.mxu0
    %v534 = vadd.f32 %v249, %v533
    %v535 = vpop.f32.mrf.mxu0
    %v536 = vadd.f32 %v249, %v535
    %537 = vmatmul.bf16.gmra.mxu0 %v328
    %v538 = vpop.f32.mrf.mxu0
    %v539 = vadd.f32 %v249, %v538
    %v540 = vpop.f32.mrf.mxu0
    %v541 = vadd.f32 %v249, %v540
    %542 = vmatmul.bf16.gmra.mxu0 %v331
    %v543 = vpop.f32.mrf.mxu0
    %v544 = vadd.f32 %v249, %v543
    %v545 = vpop.f32.mrf.mxu0
    %v546 = vadd.f32 %v249, %v545
    %547 = vmatmul.bf16.gmra.mxu0 %v334
    %v548 = vpop.f32.mrf.mxu0
    %v549 = vadd.f32 %v249, %v548
    %v550 = vpop.f32.mrf.mxu0
    %v551 = vadd.f32 %v249, %v550
    %552 = vmatmul.bf16.gmra.mxu0 %v337
    %v553 = vpop.f32.mrf.mxu0
    %v554 = vadd.f32 %v249, %v553
    %v555 = vpop.f32.mrf.mxu0
    %v556 = vadd.f32 %v249, %v555
    %557 = vmatmul.bf16.gmra.mxu0 %v340
    %v558 = vpop.f32.mrf.mxu0
    %v559 = vadd.f32 %v249, %v558
    %v560 = vpop.f32.mrf.mxu0
    %v561 = vadd.f32 %v249, %v560
    %562 = vmatmul.bf16.gmra.mxu0 %v343
    %v563 = vpop.f32.mrf.mxu0
    %v564 = vadd.f32 %v249, %v563
    %v565 = vpop.f32.mrf.mxu0
    %v566 = vadd.f32 %v249, %v565
    %567 = vmatmul.bf16.gmra.mxu0 %v346
    %v568 = vpop.f32.mrf.mxu0
    %v569 = vadd.f32 %v249, %v568
    %v570 = vpop.f32.mrf.mxu0
    %v571 = vadd.f32 %v249, %v570
    %572 = vmatmul.bf16.gmra.mxu0 %v349
    %v573 = vpop.f32.mrf.mxu0
    %v574 = vadd.f32 %v249, %v573
    %v575 = vpop.f32.mrf.mxu0
    %v576 = vadd.f32 %v249, %v575
    %577 = vmatmul.bf16.gmra.mxu0 %v352
    %v578 = vpop.f32.mrf.mxu0
    %v579 = vadd.f32 %v249, %v578
    %v580 = vpop.f32.mrf.mxu0
    %v581 = vadd.f32 %v249, %v580
    %582 = vmatmul.bf16.gmra.mxu0 %v355
    %v583 = vpop.f32.mrf.mxu0
    %v584 = vadd.f32 %v249, %v583
    %v585 = vpop.f32.mrf.mxu0
    %v586 = vadd.f32 %v249, %v585
    %587 = vmatmul.bf16.gmra.mxu0 %v358
    %v588 = vpop.f32.mrf.mxu0
    %v589 = vadd.f32 %v249, %v588
    %v590 = vpop.f32.mrf.mxu0
    %v591 = vadd.f32 %v249, %v590
    %592 = vmatmul.bf16.gmra.mxu0 %v361
    %v593 = vpop.f32.mrf.mxu0
    %v594 = vadd.f32 %v249, %v593
    %v595 = vpop.f32.mrf.mxu0
    %v596 = vadd.f32 %v249, %v595
    %597 = vmatmul.bf16.gmra.mxu0 %v364
    %v598 = vpop.f32.mrf.mxu0
    %v599 = vadd.f32 %v249, %v598
    %v600 = vpop.f32.mrf.mxu0
    %v601 = vadd.f32 %v249, %v600
    %602 = vmatmul.bf16.gmra.mxu0 %v367
    %v603 = vpop.f32.mrf.mxu0
    %v604 = vadd.f32 %v249, %v603
    %v605 = vpop.f32.mrf.mxu0
    %v606 = vadd.f32 %v249, %v605
    %607 = vmatmul.bf16.gmra.mxu0 %v370
    %v608 = vpop.f32.mrf.mxu0
    %v609 = vadd.f32 %v249, %v608
    %v610 = vpop.f32.mrf.mxu0
    %v611 = vadd.f32 %v249, %v610
    %612 = vmatmul.bf16.gmra.mxu0 %v373
    %v613 = vpop.f32.mrf.mxu0
    %v614 = vadd.f32 %v249, %v613
    %v615 = vpop.f32.mrf.mxu0
    %v616 = vadd.f32 %v249, %v615
    %617 = vmatmul.bf16.gmra.mxu0 %v376
    %v618 = vpop.f32.mrf.mxu0
    %v619 = vadd.f32 %v249, %v618
    %v620 = vpop.f32.mrf.mxu0
    %v621 = vadd.f32 %v249, %v620
    %622 = vmatmul.bf16.gmra.mxu0 %v379
    %v623 = vpop.f32.mrf.mxu0
    %v624 = vadd.f32 %v249, %v623
    %v625 = vpop.f32.mrf.mxu0
    %v626 = vadd.f32 %v249, %v625
    %627 = vmatmul.bf16.gmra.mxu0 %v382
    %v628 = vpop.f32.mrf.mxu0
    %v629 = vadd.f32 %v249, %v628
    %v630 = vpop.f32.mrf.mxu0
    %v631 = vadd.f32 %v249, %v630
    %632 = vmatmul.bf16.gmra.mxu0 %v385
    %v633 = vpop.f32.mrf.mxu0
    %v634 = vadd.f32 %v249, %v633
    %v635 = vpop.f32.mrf.mxu0
    %v636 = vadd.f32 %v249, %v635
    %637 = vmatmul.bf16.gmra.mxu0 %v388
    %v638 = vpop.f32.mrf.mxu0
    %v639 = vadd.f32 %v249, %v638
    %v640 = vpop.f32.mrf.mxu0
    %v641 = vadd.f32 %v249, %v640
    %642 = vmatmul.bf16.gmra.mxu0 %v391
    %v643 = vpop.f32.mrf.mxu0
    %v644 = vadd.f32 %v249, %v643
    %v645 = vpop.f32.mrf.mxu0
    %v646 = vadd.f32 %v249, %v645
    %647 = vmatmul.bf16.gmra.mxu0 %v394
    %v648 = vpop.f32.mrf.mxu0
    %v649 = vadd.f32 %v249, %v648
    %v650 = vpop.f32.mrf.mxu0
    %v651 = vadd.f32 %v249, %v650
    %652 = vmatmul.bf16.gmra.mxu0 %v397
    %v653 = vpop.f32.mrf.mxu0
    %v654 = vadd.f32 %v249, %v653
    %v655 = vpop.f32.mrf.mxu0
    %v656 = vadd.f32 %v249, %v655
    %657 = vmatmul.bf16.gmra.mxu0 %v400
    %v658 = vpop.f32.mrf.mxu0
    %v659 = vadd.f32 %v249, %v658
    %v660 = vpop.f32.mrf.mxu0
    %v661 = vadd.f32 %v249, %v660
    %662 = vmatmul.bf16.gmra.mxu0 %v403
    %v663 = vpop.f32.mrf.mxu0
    %v664 = vadd.f32 %v249, %v663
    %v665 = vpop.f32.mrf.mxu0
    %v666 = vadd.f32 %v249, %v665
    %667 = vmatmul.bf16.gmra.mxu0 %v406
    %v668 = vpop.f32.mrf.mxu0
    %v669 = vadd.f32 %v249, %v668
    %v670 = vpop.f32.mrf.mxu0
    %v671 = vadd.f32 %v249, %v670
    %672 = vmatmul.bf16.gmra.mxu0 %v409
    %v673 = vpop.f32.mrf.mxu0
    %v674 = vadd.f32 %v249, %v673
    %v675 = vpop.f32.mrf.mxu0
    %v676 = vadd.f32 %v249, %v675
    %677 = vmatmul.bf16.gmra.mxu0 %v412
    %v678 = vpop.f32.mrf.mxu0
    %v679 = vadd.f32 %v249, %v678
    %v680 = vpop.f32.mrf.mxu0
    %v681 = vadd.f32 %v249, %v680
    %682 = vmatmul.bf16.gmra.mxu0 %v415
    %v683 = vpop.f32.mrf.mxu0
    %v684 = vadd.f32 %v249, %v683
    %v685 = vpop.f32.mrf.mxu0
    %v686 = vadd.f32 %v249, %v685
    %687 = vmatmul.bf16.gmra.mxu0 %v418
    %v688 = vpop.f32.mrf.mxu0
    %v689 = vadd.f32 %v249, %v688
    %v690 = vpop.f32.mrf.mxu0
    %v691 = vadd.f32 %v249, %v690
    %692 = vmatmul.bf16.gmra.mxu0 %v421
    %v693 = vpop.f32.mrf.mxu0
    %v694 = vadd.f32 %v249, %v693
    %v695 = vpop.f32.mrf.mxu0
    %v696 = vadd.f32 %v249, %v695
    %697 = vmatmul.bf16.gmra.mxu0 %v424
    %v698 = vpop.f32.mrf.mxu0
    %v699 = vadd.f32 %v249, %v698
    %v700 = vpop.f32.mrf.mxu0
    %v701 = vadd.f32 %v249, %v700
    %702 = vmatmul.bf16.gmra.mxu0 %v427
    %v703 = vpop.f32.mrf.mxu0
    %v704 = vadd.f32 %v249, %v703
    %v705 = vpop.f32.mrf.mxu0
    %v706 = vadd.f32 %v249, %v705
    %707 = vmatmul.bf16.gmra.mxu0 %v430
    %v708 = vpop.f32.mrf.mxu0
    %v709 = vadd.f32 %v249, %v708
    %v710 = vpop.f32.mrf.mxu0
    %v711 = vadd.f32 %v249, %v710
    %712 = vmatmul.bf16.gmra.mxu0 %v433
    %v713 = vpop.f32.mrf.mxu0
    %v714 = vadd.f32 %v249, %v713
    %v715 = vpop.f32.mrf.mxu0
    %v716 = vadd.f32 %v249, %v715
    %717 = vmatmul.bf16.gmra.mxu0 %v436
    %v718 = vpop.f32.mrf.mxu0
    %v719 = vadd.f32 %v249, %v718
    %v720 = vpop.f32.mrf.mxu0
    %v721 = vadd.f32 %v249, %v720
    %722 = vmatmul.bf16.gmra.mxu0 %v439
    %v723 = vpop.f32.mrf.mxu0
    %v724 = vadd.f32 %v249, %v723
    %v725 = vpop.f32.mrf.mxu0
    %v726 = vadd.f32 %v249, %v725
    %727 = vmatmul.bf16.gmra.mxu0 %v442
    %v728 = vpop.f32.mrf.mxu0
    %v729 = vadd.f32 %v249, %v728
    %v730 = vpop.f32.mrf.mxu0
    %v731 = vadd.f32 %v249, %v730
    %732 = vmatmul.bf16.gmra.mxu0 %v445
    %v733 = vpop.f32.mrf.mxu0
    %v734 = vadd.f32 %v249, %v733
    %v735 = vpop.f32.mrf.mxu0
    %v736 = vadd.f32 %v249, %v735
    %737 = vmatmul.bf16.gmra.mxu0 %v448
    %v738 = vpop.f32.mrf.mxu0
    %v739 = vadd.f32 %v249, %v738
    %v740 = vpop.f32.mrf.mxu0
    %v741 = vadd.f32 %v249, %v740
    %742 = vmatmul.bf16.gmra.mxu0 %v451
    %v743 = vpop.f32.mrf.mxu0
    %v744 = vadd.f32 %v249, %v743
    %v745 = vpop.f32.mrf.mxu0
    %v746 = vadd.f32 %v249, %v745
    %747 = vmatmul.bf16.gmra.mxu0 %v454
    %v748 = vpop.f32.mrf.mxu0
    %v749 = vadd.f32 %v249, %v748
    %v750 = vpop.f32.mrf.mxu0
    %v751 = vadd.f32 %v249, %v750
    %752 = vmatmul.bf16.gmra.mxu0 %v457
    %v753 = vpop.f32.mrf.mxu0
    %v754 = vadd.f32 %v249, %v753
    %v755 = vpop.f32.mrf.mxu0
    %v756 = vadd.f32 %v249, %v755
    %757 = vmatmul.bf16.gmra.mxu0 %v460
    %v758 = vpop.f32.mrf.mxu0
    %v759 = vadd.f32 %v249, %v758
    %v760 = vpop.f32.mrf.mxu0
    %v761 = vadd.f32 %v249, %v760
    %762 = vmatmul.bf16.gmra.mxu0 %v463
    %v763 = vpop.f32.mrf.mxu0
    %v764 = vadd.f32 %v249, %v763
    %v765 = vpop.f32.mrf.mxu0
    %v766 = vadd.f32 %v249, %v765
    %767 = vmatmul.bf16.gmra.mxu0 %v466
    %v768 = vpop.f32.mrf.mxu0
    %v769 = vadd.f32 %v249, %v768
    %v770 = vpop.f32.mrf.mxu0
    %v771 = vadd.f32 %v249, %v770
    %772 = vmatmul.bf16.gmra.mxu0 %v469
    %v773 = vpop.f32.mrf.mxu0
    %v774 = vadd.f32 %v249, %v773
    %v775 = vpop.f32.mrf.mxu0
    %v776 = vadd.f32 %v249, %v775
    %777 = vmatmul.bf16.gmra.mxu0 %v472
    %v778 = vpop.f32.mrf.mxu0
    %v779 = vadd.f32 %v249, %v778
    %v780 = vpop.f32.mrf.mxu0
    %v781 = vadd.f32 %v249, %v780
    %782 = vmatmul.bf16.gmra.mxu0 %v475
    %v783 = vpop.f32.mrf.mxu0
    %v784 = vadd.f32 %v249, %v783
    %v785 = vpop.f32.mrf.mxu0
    %v786 = vadd.f32 %v249, %v785
    %787 = vmatmul.bf16.gmra.mxu0 %v478
    %v788 = vpop.f32.mrf.mxu0
    %v789 = vadd.f32 %v249, %v788
    %v790 = vpop.f32.mrf.mxu0
    %v791 = vadd.f32 %v249, %v790
    %792 = vmatmul.bf16.gmra.mxu0 %v481
    %v793 = vpop.f32.mrf.mxu0
    %v794 = vadd.f32 %v249, %v793
    %v795 = vpop.f32.mrf.mxu0
    %v796 = vadd.f32 %v249, %v795
    %797 = vmatmul.bf16.gmra.mxu0 %v484
    %v798 = vpop.f32.mrf.mxu0
    %v799 = vadd.f32 %v249, %v798
    %v800 = vpop.f32.mrf.mxu0
    %v801 = vadd.f32 %v249, %v800
    %802 = vmatmul.bf16.gmra.mxu0 %v487
    %v803 = vpop.f32.mrf.mxu0
    %v804 = vadd.f32 %v249, %v803
    %v805 = vpop.f32.mrf.mxu0
    %v806 = vadd.f32 %v249, %v805
    %807 = vmatmul.bf16.gmra.mxu0 %v490
    %v808 = vpop.f32.mrf.mxu0
    %v809 = vadd.f32 %v249, %v808
    %v810 = vpop.f32.mrf.mxu0
    %v811 = vadd.f32 %v249, %v810
    %812 = vmatmul.bf16.gmra.mxu0 %v493
    %v813 = vpop.f32.mrf.mxu0
    %v814 = vadd.f32 %v249, %v813
    %v815 = vpop.f32.mrf.mxu0
    %v816 = vadd.f32 %v249, %v815
    %817 = vmatmul.bf16.gmra.mxu0 %v496
    %v818 = vpop.f32.mrf.mxu0
    %v819 = vadd.f32 %v249, %v818
    %v820 = vpop.f32.mrf.mxu0
    %v821 = vadd.f32 %v249, %v820
    %822 = vmatmul.bf16.gmra.mxu0 %v499
    %v823 = vpop.f32.mrf.mxu0
    %v824 = vadd.f32 %v249, %v823
    %v825 = vpop.f32.mrf.mxu0
    %v826 = vadd.f32 %v249, %v825
    %827 = vmatmul.bf16.gmra.mxu0 %v502
    %v828 = vpop.f32.mrf.mxu0
    %v829 = vadd.f32 %v249, %v828
    %v830 = vpop.f32.mrf.mxu0
    %v831 = vadd.f32 %v249, %v830
    %832 = vdwg.mxu0
    %833 = vmatpush.bf16.msra.mxu0 0
    %834 = vmatpush.bf16.msra.mxu0 0
    %835 = vmatpush.bf16.msra.mxu0 0
    %836 = vmatpush.bf16.msra.mxu0 0
    %837 = vmatpush.bf16.msra.mxu0 0
    %838 = vmatpush.bf16.msra.mxu0 0
    %839 = vmatpush.bf16.msra.mxu0 %v297
    %840 = vmatpush.bf16.msra.mxu0 %v292
    %841 = vmatmul.bf16.gmra.mxu0 %v313
    %v842 = vpop.f32.mrf.mxu0
    %v843 = vadd.f32 %v250, %v842
    %v844 = vpop.f32.mrf.mxu0
    %v845 = vadd.f32 %v250, %v844
    %846 = vmatmul.bf16.gmra.mxu0 %v316
    %v847 = vpop.f32.mrf.mxu0
    %v848 = vadd.f32 %v250, %v847
    %v849 = vpop.f32.mrf.mxu0
    %v850 = vadd.f32 %v250, %v849
    %851 = vmatmul.bf16.gmra.mxu0 %v319
    %v852 = vpop.f32.mrf.mxu0
    %v853 = vadd.f32 %v250, %v852
    %v854 = vpop.f32.mrf.mxu0
    %v855 = vadd.f32 %v250, %v854
    %856 = vmatmul.bf16.gmra.mxu0 %v322
    %v857 = vpop.f32.mrf.mxu0
    %v858 = vadd.f32 %v250, %v857
    %v859 = vpop.f32.mrf.mxu0
    %v860 = vadd.f32 %v250, %v859
    %861 = vmatmul.bf16.gmra.mxu0 %v325
    %v862 = vpop.f32.mrf.mxu0
    %v863 = vadd.f32 %v250, %v862
    %v864 = vpop.f32.mrf.mxu0
    %v865 = vadd.f32 %v250, %v864
    %866 = vmatmul.bf16.gmra.mxu0 %v328
    %v867 = vpop.f32.mrf.mxu0
    %v868 = vadd.f32 %v250, %v867
    %v869 = vpop.f32.mrf.mxu0
    %v870 = vadd.f32 %v250, %v869
    %871 = vmatmul.bf16.gmra.mxu0 %v331
    %v872 = vpop.f32.mrf.mxu0
    %v873 = vadd.f32 %v250, %v872
    %v874 = vpop.f32.mrf.mxu0
    %v875 = vadd.f32 %v250, %v874
    %876 = vmatmul.bf16.gmra.mxu0 %v334
    %v877 = vpop.f32.mrf.mxu0
    %v878 = vadd.f32 %v250, %v877
    %v879 = vpop.f32.mrf.mxu0
    %v880 = vadd.f32 %v250, %v879
    %881 = vmatmul.bf16.gmra.mxu0 %v337
    %v882 = vpop.f32.mrf.mxu0
    %v883 = vadd.f32 %v250, %v882
    %v884 = vpop.f32.mrf.mxu0
    %v885 = vadd.f32 %v250, %v884
    %886 = vmatmul.bf16.gmra.mxu0 %v340
    %v887 = vpop.f32.mrf.mxu0
    %v888 = vadd.f32 %v250, %v887
    %v889 = vpop.f32.mrf.mxu0
    %v890 = vadd.f32 %v250, %v889
    %891 = vmatmul.bf16.gmra.mxu0 %v343
    %v892 = vpop.f32.mrf.mxu0
    %v893 = vadd.f32 %v250, %v892
    %v894 = vpop.f32.mrf.mxu0
    %v895 = vadd.f32 %v250, %v894
    %896 = vmatmul.bf16.gmra.mxu0 %v346
    %v897 = vpop.f32.mrf.mxu0
    %v898 = vadd.f32 %v250, %v897
    %v899 = vpop.f32.mrf.mxu0
    %v900 = vadd.f32 %v250, %v899
    %901 = vmatmul.bf16.gmra.mxu0 %v349
    %v902 = vpop.f32.mrf.mxu0
    %v903 = vadd.f32 %v250, %v902
    %v904 = vpop.f32.mrf.mxu0
    %v905 = vadd.f32 %v250, %v904
    %906 = vmatmul.bf16.gmra.mxu0 %v352
    %v907 = vpop.f32.mrf.mxu0
    %v908 = vadd.f32 %v250, %v907
    %v909 = vpop.f32.mrf.mxu0
    %v910 = vadd.f32 %v250, %v909
    %911 = vmatmul.bf16.gmra.mxu0 %v355
    %v912 = vpop.f32.mrf.mxu0
    %v913 = vadd.f32 %v250, %v912
    %v914 = vpop.f32.mrf.mxu0
    %v915 = vadd.f32 %v250, %v914
    %916 = vmatmul.bf16.gmra.mxu0 %v358
    %v917 = vpop.f32.mrf.mxu0
    %v918 = vadd.f32 %v250, %v917
    %v919 = vpop.f32.mrf.mxu0
    %v920 = vadd.f32 %v250, %v919
    %921 = vmatmul.bf16.gmra.mxu0 %v361
    %v922 = vpop.f32.mrf.mxu0
    %v923 = vadd.f32 %v250, %v922
    %v924 = vpop.f32.mrf.mxu0
    %v925 = vadd.f32 %v250, %v924
    %926 = vmatmul.bf16.gmra.mxu0 %v364
    %v927 = vpop.f32.mrf.mxu0
    %v928 = vadd.f32 %v250, %v927
    %v929 = vpop.f32.mrf.mxu0
    %v930 = vadd.f32 %v250, %v929
    %931 = vmatmul.bf16.gmra.mxu0 %v367
    %v932 = vpop.f32.mrf.mxu0
    %v933 = vadd.f32 %v250, %v932
    %v934 = vpop.f32.mrf.mxu0
    %v935 = vadd.f32 %v250, %v934
    %936 = vmatmul.bf16.gmra.mxu0 %v370
    %v937 = vpop.f32.mrf.mxu0
    %v938 = vadd.f32 %v250, %v937
    %v939 = vpop.f32.mrf.mxu0
    %v940 = vadd.f32 %v250, %v939
    %941 = vmatmul.bf16.gmra.mxu0 %v373
    %v942 = vpop.f32.mrf.mxu0
    %v943 = vadd.f32 %v250, %v942
    %v944 = vpop.f32.mrf.mxu0
    %v945 = vadd.f32 %v250, %v944
    %946 = vmatmul.bf16.gmra.mxu0 %v376
    %v947 = vpop.f32.mrf.mxu0
    %v948 = vadd.f32 %v250, %v947
    %v949 = vpop.f32.mrf.mxu0
    %v950 = vadd.f32 %v250, %v949
    %951 = vmatmul.bf16.gmra.mxu0 %v379
    %v952 = vpop.f32.mrf.mxu0
    %v953 = vadd.f32 %v250, %v952
    %v954 = vpop.f32.mrf.mxu0
    %v955 = vadd.f32 %v250, %v954
    %956 = vmatmul.bf16.gmra.mxu0 %v382
    %v957 = vpop.f32.mrf.mxu0
    %v958 = vadd.f32 %v250, %v957
    %v959 = vpop.f32.mrf.mxu0
    %v960 = vadd.f32 %v250, %v959
    %961 = vmatmul.bf16.gmra.mxu0 %v385
    %v962 = vpop.f32.mrf.mxu0
    %v963 = vadd.f32 %v250, %v962
    %v964 = vpop.f32.mrf.mxu0
    %v965 = vadd.f32 %v250, %v964
    %966 = vmatmul.bf16.gmra.mxu0 %v388
    %v967 = vpop.f32.mrf.mxu0
    %v968 = vadd.f32 %v250, %v967
    %v969 = vpop.f32.mrf.mxu0
    %v970 = vadd.f32 %v250, %v969
    %971 = vmatmul.bf16.gmra.mxu0 %v391
    %v972 = vpop.f32.mrf.mxu0
    %v973 = vadd.f32 %v250, %v972
    %v974 = vpop.f32.mrf.mxu0
    %v975 = vadd.f32 %v250, %v974
    %976 = vmatmul.bf16.gmra.mxu0 %v394
    %v977 = vpop.f32.mrf.mxu0
    %v978 = vadd.f32 %v250, %v977
    %v979 = vpop.f32.mrf.mxu0
    %v980 = vadd.f32 %v250, %v979
    %981 = vmatmul.bf16.gmra.mxu0 %v397
    %v982 = vpop.f32.mrf.mxu0
    %v983 = vadd.f32 %v250, %v982
    %v984 = vpop.f32.mrf.mxu0
    %v985 = vadd.f32 %v250, %v984
    %986 = vmatmul.bf16.gmra.mxu0 %v400
    %v987 = vpop.f32.mrf.mxu0
    %v988 = vadd.f32 %v250, %v987
    %v989 = vpop.f32.mrf.mxu0
    %v990 = vadd.f32 %v250, %v989
    %991 = vmatmul.bf16.gmra.mxu0 %v403
    %v992 = vpop.f32.mrf.mxu0
    %v993 = vadd.f32 %v250, %v992
    %v994 = vpop.f32.mrf.mxu0
    %v995 = vadd.f32 %v250, %v994
    %996 = vmatmul.bf16.gmra.mxu0 %v406
    %v997 = vpop.f32.mrf.mxu0
    %v998 = vadd.f32 %v250, %v997
    %v999 = vpop.f32.mrf.mxu0
    %v1000 = vadd.f32 %v250, %v999
    %1001 = vmatmul.bf16.gmra.mxu0 %v409
    %v1002 = vpop.f32.mrf.mxu0
    %v1003 = vadd.f32 %v250, %v1002
    %v1004 = vpop.f32.mrf.mxu0
    %v1005 = vadd.f32 %v250, %v1004
    %1006 = vmatmul.bf16.gmra.mxu0 %v412
    %v1007 = vpop.f32.mrf.mxu0
    %v1008 = vadd.f32 %v250, %v1007
    %v1009 = vpop.f32.mrf.mxu0
    %v1010 = vadd.f32 %v250, %v1009
    %1011 = vmatmul.bf16.gmra.mxu0 %v415
    %v1012 = vpop.f32.mrf.mxu0
    %v1013 = vadd.f32 %v250, %v1012
    %v1014 = vpop.f32.mrf.mxu0
    %v1015 = vadd.f32 %v250, %v1014
    %1016 = vmatmul.bf16.gmra.mxu0 %v418
    %v1017 = vpop.f32.mrf.mxu0
    %v1018 = vadd.f32 %v250, %v1017
    %v1019 = vpop.f32.mrf.mxu0
    %v1020 = vadd.f32 %v250, %v1019
    %1021 = vmatmul.bf16.gmra.mxu0 %v421
    %v1022 = vpop.f32.mrf.mxu0
    %v1023 = vadd.f32 %v250, %v1022
    %v1024 = vpop.f32.mrf.mxu0
    %v1025 = vadd.f32 %v250, %v1024
    %1026 = vmatmul.bf16.gmra.mxu0 %v424
    %v1027 = vpop.f32.mrf.mxu0
    %v1028 = vadd.f32 %v250, %v1027
    %v1029 = vpop.f32.mrf.mxu0
    %v1030 = vadd.f32 %v250, %v1029
    %1031 = vmatmul.bf16.gmra.mxu0 %v427
    %v1032 = vpop.f32.mrf.mxu0
    %v1033 = vadd.f32 %v250, %v1032
    %v1034 = vpop.f32.mrf.mxu0
    %v1035 = vadd.f32 %v250, %v1034
    %1036 = vmatmul.bf16.gmra.mxu0 %v430
    %v1037 = vpop.f32.mrf.mxu0
    %v1038 = vadd.f32 %v250, %v1037
    %v1039 = vpop.f32.mrf.mxu0
    %v1040 = vadd.f32 %v250, %v1039
    %1041 = vmatmul.bf16.gmra.mxu0 %v433
    %v1042 = vpop.f32.mrf.mxu0
    %v1043 = vadd.f32 %v250, %v1042
    %v1044 = vpop.f32.mrf.mxu0
    %v1045 = vadd.f32 %v250, %v1044
    %1046 = vmatmul.bf16.gmra.mxu0 %v436
    %v1047 = vpop.f32.mrf.mxu0
    %v1048 = vadd.f32 %v250, %v1047
    %v1049 = vpop.f32.mrf.mxu0
    %v1050 = vadd.f32 %v250, %v1049
    %1051 = vmatmul.bf16.gmra.mxu0 %v439
    %v1052 = vpop.f32.mrf.mxu0
    %v1053 = vadd.f32 %v250, %v1052
    %v1054 = vpop.f32.mrf.mxu0
    %v1055 = vadd.f32 %v250, %v1054
    %1056 = vmatmul.bf16.gmra.mxu0 %v442
    %v1057 = vpop.f32.mrf.mxu0
    %v1058 = vadd.f32 %v250, %v1057
    %v1059 = vpop.f32.mrf.mxu0
    %v1060 = vadd.f32 %v250, %v1059
    %1061 = vmatmul.bf16.gmra.mxu0 %v445
    %v1062 = vpop.f32.mrf.mxu0
    %v1063 = vadd.f32 %v250, %v1062
    %v1064 = vpop.f32.mrf.mxu0
    %v1065 = vadd.f32 %v250, %v1064
    %1066 = vmatmul.bf16.gmra.mxu0 %v448
    %v1067 = vpop.f32.mrf.mxu0
    %v1068 = vadd.f32 %v250, %v1067
    %v1069 = vpop.f32.mrf.mxu0
    %v1070 = vadd.f32 %v250, %v1069
    %1071 = vmatmul.bf16.gmra.mxu0 %v451
    %v1072 = vpop.f32.mrf.mxu0
    %v1073 = vadd.f32 %v250, %v1072
    %v1074 = vpop.f32.mrf.mxu0
    %v1075 = vadd.f32 %v250, %v1074
    %1076 = vmatmul.bf16.gmra.mxu0 %v454
    %v1077 = vpop.f32.mrf.mxu0
    %v1078 = vadd.f32 %v250, %v1077
    %v1079 = vpop.f32.mrf.mxu0
    %v1080 = vadd.f32 %v250, %v1079
    %1081 = vmatmul.bf16.gmra.mxu0 %v457
    %v1082 = vpop.f32.mrf.mxu0
    %v1083 = vadd.f32 %v250, %v1082
    %v1084 = vpop.f32.mrf.mxu0
    %v1085 = vadd.f32 %v250, %v1084
    %1086 = vmatmul.bf16.gmra.mxu0 %v460
    %v1087 = vpop.f32.mrf.mxu0
    %v1088 = vadd.f32 %v250, %v1087
    %v1089 = vpop.f32.mrf.mxu0
    %v1090 = vadd.f32 %v250, %v1089
    %1091 = vmatmul.bf16.gmra.mxu0 %v463
    %v1092 = vpop.f32.mrf.mxu0
    %v1093 = vadd.f32 %v250, %v1092
    %v1094 = vpop.f32.mrf.mxu0
    %v1095 = vadd.f32 %v250, %v1094
    %1096 = vmatmul.bf16.gmra.mxu0 %v466
    %v1097 = vpop.f32.mrf.mxu0
    %v1098 = vadd.f32 %v250, %v1097
    %v1099 = vpop.f32.mrf.mxu0
    %v1100 = vadd.f32 %v250, %v1099
    %1101 = vmatmul.bf16.gmra.mxu0 %v469
    %v1102 = vpop.f32.mrf.mxu0
    %v1103 = vadd.f32 %v250, %v1102
    %v1104 = vpop.f32.mrf.mxu0
    %v1105 = vadd.f32 %v250, %v1104
    %1106 = vmatmul.bf16.gmra.mxu0 %v472
    %v1107 = vpop.f32.mrf.mxu0
    %v1108 = vadd.f32 %v250, %v1107
    %v1109 = vpop.f32.mrf.mxu0
    %v1110 = vadd.f32 %v250, %v1109
    %1111 = vmatmul.bf16.gmra.mxu0 %v475
    %v1112 = vpop.f32.mrf.mxu0
    %v1113 = vadd.f32 %v250, %v1112
    %v1114 = vpop.f32.mrf.mxu0
    %v1115 = vadd.f32 %v250, %v1114
    %1116 = vmatmul.bf16.gmra.mxu0 %v478
    %v1117 = vpop.f32.mrf.mxu0
    %v1118 = vadd.f32 %v250, %v1117
    %v1119 = vpop.f32.mrf.mxu0
    %v1120 = vadd.f32 %v250, %v1119
    %1121 = vmatmul.bf16.gmra.mxu0 %v481
    %v1122 = vpop.f32.mrf.mxu0
    %v1123 = vadd.f32 %v250, %v1122
    %v1124 = vpop.f32.mrf.mxu0
    %v1125 = vadd.f32 %v250, %v1124
    %1126 = vmatmul.bf16.gmra.mxu0 %v484
    %v1127 = vpop.f32.mrf.mxu0
    %v1128 = vadd.f32 %v250, %v1127
    %v1129 = vpop.f32.mrf.mxu0
    %v1130 = vadd.f32 %v250, %v1129
    %1131 = vmatmul.bf16.gmra.mxu0 %v487
    %v1132 = vpop.f32.mrf.mxu0
    %v1133 = vadd.f32 %v250, %v1132
    %v1134 = vpop.f32.mrf.mxu0
    %v1135 = vadd.f32 %v250, %v1134
    %1136 = vmatmul.bf16.gmra.mxu0 %v490
    %v1137 = vpop.f32.mrf.mxu0
    %v1138 = vadd.f32 %v250, %v1137
    %v1139 = vpop.f32.mrf.mxu0
    %v1140 = vadd.f32 %v250, %v1139
    %1141 = vmatmul.bf16.gmra.mxu0 %v493
    %v1142 = vpop.f32.mrf.mxu0
    %v1143 = vadd.f32 %v250, %v1142
    %v1144 = vpop.f32.mrf.mxu0
    %v1145 = vadd.f32 %v250, %v1144
    %1146 = vmatmul.bf16.gmra.mxu0 %v496
    %v1147 = vpop.f32.mrf.mxu0
    %v1148 = vadd.f32 %v250, %v1147
    %v1149 = vpop.f32.mrf.mxu0
    %v1150 = vadd.f32 %v250, %v1149
    %1151 = vmatmul.bf16.gmra.mxu0 %v499
    %v1152 = vpop.f32.mrf.mxu0
    %v1153 = vadd.f32 %v250, %v1152
    %v1154 = vpop.f32.mrf.mxu0
    %v1155 = vadd.f32 %v250, %v1154
    %1156 = vmatmul.bf16.gmra.mxu0 %v502
    %v1157 = vpop.f32.mrf.mxu0
    %v1158 = vadd.f32 %v250, %v1157
    %v1159 = vpop.f32.mrf.mxu0
    %v1160 = vadd.f32 %v250, %v1159
    %1161 = vdwg.mxu0
    %1162 = vmatpush.bf16.msra.mxu0 0
    %1163 = vmatpush.bf16.msra.mxu0 0
    %1164 = vmatpush.bf16.msra.mxu0 0
    %1165 = vmatpush.bf16.msra.mxu0 0
    %1166 = vmatpush.bf16.msra.mxu0 0
    %1167 = vmatpush.bf16.msra.mxu0 0
    %1168 = vmatpush.bf16.msra.mxu0 %v298
    %1169 = vmatpush.bf16.msra.mxu0 %v293
    %1170 = vmatmul.bf16.gmra.mxu0 %v313
    %v1171 = vpop.f32.mrf.mxu0
    %v1172 = vadd.f32 %v251, %v1171
    %v1173 = vpop.f32.mrf.mxu0
    %v1174 = vadd.f32 %v251, %v1173
    %1175 = vmatmul.bf16.gmra.mxu0 %v316
    %v1176 = vpop.f32.mrf.mxu0
    %v1177 = vadd.f32 %v251, %v1176
    %v1178 = vpop.f32.mrf.mxu0
    %v1179 = vadd.f32 %v251, %v1178
    %1180 = vmatmul.bf16.gmra.mxu0 %v319
    %v1181 = vpop.f32.mrf.mxu0
    %v1182 = vadd.f32 %v251, %v1181
    %v1183 = vpop.f32.mrf.mxu0
    %v1184 = vadd.f32 %v251, %v1183
    %1185 = vmatmul.bf16.gmra.mxu0 %v322
    %v1186 = vpop.f32.mrf.mxu0
    %v1187 = vadd.f32 %v251, %v1186
    %v1188 = vpop.f32.mrf.mxu0
    %v1189 = vadd.f32 %v251, %v1188
    %1190 = vmatmul.bf16.gmra.mxu0 %v325
    %v1191 = vpop.f32.mrf.mxu0
    %v1192 = vadd.f32 %v251, %v1191
    %v1193 = vpop.f32.mrf.mxu0
    %v1194 = vadd.f32 %v251, %v1193
    %1195 = vmatmul.bf16.gmra.mxu0 %v328
    %v1196 = vpop.f32.mrf.mxu0
    %v1197 = vadd.f32 %v251, %v1196
    %v1198 = vpop.f32.mrf.mxu0
    %v1199 = vadd.f32 %v251, %v1198
    %1200 = vmatmul.bf16.gmra.mxu0 %v331
    %v1201 = vpop.f32.mrf.mxu0
    %v1202 = vadd.f32 %v251, %v1201
    %v1203 = vpop.f32.mrf.mxu0
    %v1204 = vadd.f32 %v251, %v1203
    %1205 = vmatmul.bf16.gmra.mxu0 %v334
    %v1206 = vpop.f32.mrf.mxu0
    %v1207 = vadd.f32 %v251, %v1206
    %v1208 = vpop.f32.mrf.mxu0
    %v1209 = vadd.f32 %v251, %v1208
    %1210 = vmatmul.bf16.gmra.mxu0 %v337
    %v1211 = vpop.f32.mrf.mxu0
    %v1212 = vadd.f32 %v251, %v1211
    %v1213 = vpop.f32.mrf.mxu0
    %v1214 = vadd.f32 %v251, %v1213
    %1215 = vmatmul.bf16.gmra.mxu0 %v340
    %v1216 = vpop.f32.mrf.mxu0
    %v1217 = vadd.f32 %v251, %v1216
    %v1218 = vpop.f32.mrf.mxu0
    %v1219 = vadd.f32 %v251, %v1218
    %1220 = vmatmul.bf16.gmra.mxu0 %v343
    %v1221 = vpop.f32.mrf.mxu0
    %v1222 = vadd.f32 %v251, %v1221
    %v1223 = vpop.f32.mrf.mxu0
    %v1224 = vadd.f32 %v251, %v1223
    %1225 = vmatmul.bf16.gmra.mxu0 %v346
    %v1226 = vpop.f32.mrf.mxu0
    %v1227 = vadd.f32 %v251, %v1226
    %v1228 = vpop.f32.mrf.mxu0
    %v1229 = vadd.f32 %v251, %v1228
    %1230 = vmatmul.bf16.gmra.mxu0 %v349
    %v1231 = vpop.f32.mrf.mxu0
    %v1232 = vadd.f32 %v251, %v1231
    %v1233 = vpop.f32.mrf.mxu0
    %v1234 = vadd.f32 %v251, %v1233
    %1235 = vmatmul.bf16.gmra.mxu0 %v352
    %v1236 = vpop.f32.mrf.mxu0
    %v1237 = vadd.f32 %v251, %v1236
    %v1238 = vpop.f32.mrf.mxu0
    %v1239 = vadd.f32 %v251, %v1238
    %1240 = vmatmul.bf16.gmra.mxu0 %v355
    %v1241 = vpop.f32.mrf.mxu0
    %v1242 = vadd.f32 %v251, %v1241
    %v1243 = vpop.f32.mrf.mxu0
    %v1244 = vadd.f32 %v251, %v1243
    %1245 = vmatmul.bf16.gmra.mxu0 %v358
    %v1246 = vpop.f32.mrf.mxu0
    %v1247 = vadd.f32 %v251, %v1246
    %v1248 = vpop.f32.mrf.mxu0
    %v1249 = vadd.f32 %v251, %v1248
    %1250 = vmatmul.bf16.gmra.mxu0 %v361
    %v1251 = vpop.f32.mrf.mxu0
    %v1252 = vadd.f32 %v251, %v1251
    %v1253 = vpop.f32.mrf.mxu0
    %v1254 = vadd.f32 %v251, %v1253
    %1255 = vmatmul.bf16.gmra.mxu0 %v364
    %v1256 = vpop.f32.mrf.mxu0
    %v1257 = vadd.f32 %v251, %v1256
    %v1258 = vpop.f32.mrf.mxu0
    %v1259 = vadd.f32 %v251, %v1258
    %1260 = vmatmul.bf16.gmra.mxu0 %v367
    %v1261 = vpop.f32.mrf.mxu0
    %v1262 = vadd.f32 %v251, %v1261
    %v1263 = vpop.f32.mrf.mxu0
    %v1264 = vadd.f32 %v251, %v1263
    %1265 = vmatmul.bf16.gmra.mxu0 %v370
    %v1266 = vpop.f32.mrf.mxu0
    %v1267 = vadd.f32 %v251, %v1266
    %v1268 = vpop.f32.mrf.mxu0
    %v1269 = vadd.f32 %v251, %v1268
    %1270 = vmatmul.bf16.gmra.mxu0 %v373
    %v1271 = vpop.f32.mrf.mxu0
    %v1272 = vadd.f32 %v251, %v1271
    %v1273 = vpop.f32.mrf.mxu0
    %v1274 = vadd.f32 %v251, %v1273
    %1275 = vmatmul.bf16.gmra.mxu0 %v376
    %v1276 = vpop.f32.mrf.mxu0
    %v1277 = vadd.f32 %v251, %v1276
    %v1278 = vpop.f32.mrf.mxu0
    %v1279 = vadd.f32 %v251, %v1278
    %1280 = vmatmul.bf16.gmra.mxu0 %v379
    %v1281 = vpop.f32.mrf.mxu0
    %v1282 = vadd.f32 %v251, %v1281
    %v1283 = vpop.f32.mrf.mxu0
    %v1284 = vadd.f32 %v251, %v1283
    %1285 = vmatmul.bf16.gmra.mxu0 %v382
    %v1286 = vpop.f32.mrf.mxu0
    %v1287 = vadd.f32 %v251, %v1286
    %v1288 = vpop.f32.mrf.mxu0
    %v1289 = vadd.f32 %v251, %v1288
    %1290 = vmatmul.bf16.gmra.mxu0 %v385
    %v1291 = vpop.f32.mrf.mxu0
    %v1292 = vadd.f32 %v251, %v1291
    %v1293 = vpop.f32.mrf.mxu0
    %v1294 = vadd.f32 %v251, %v1293
    %1295 = vmatmul.bf16.gmra.mxu0 %v388
    %v1296 = vpop.f32.mrf.mxu0
    %v1297 = vadd.f32 %v251, %v1296
    %v1298 = vpop.f32.mrf.mxu0
    %v1299 = vadd.f32 %v251, %v1298
    %1300 = vmatmul.bf16.gmra.mxu0 %v391
    %v1301 = vpop.f32.mrf.mxu0
    %v1302 = vadd.f32 %v251, %v1301
    %v1303 = vpop.f32.mrf.mxu0
    %v1304 = vadd.f32 %v251, %v1303
    %1305 = vmatmul.bf16.gmra.mxu0 %v394
    %v1306 = vpop.f32.mrf.mxu0
    %v1307 = vadd.f32 %v251, %v1306
    %v1308 = vpop.f32.mrf.mxu0
    %v1309 = vadd.f32 %v251, %v1308
    %1310 = vmatmul.bf16.gmra.mxu0 %v397
    %v1311 = vpop.f32.mrf.mxu0
    %v1312 = vadd.f32 %v251, %v1311
    %v1313 = vpop.f32.mrf.mxu0
    %v1314 = vadd.f32 %v251, %v1313
    %1315 = vmatmul.bf16.gmra.mxu0 %v400
    %v1316 = vpop.f32.mrf.mxu0
    %v1317 = vadd.f32 %v251, %v1316
    %v1318 = vpop.f32.mrf.mxu0
    %v1319 = vadd.f32 %v251, %v1318
    %1320 = vmatmul.bf16.gmra.mxu0 %v403
    %v1321 = vpop.f32.mrf.mxu0
    %v1322 = vadd.f32 %v251, %v1321
    %v1323 = vpop.f32.mrf.mxu0
    %v1324 = vadd.f32 %v251, %v1323
    %1325 = vmatmul.bf16.gmra.mxu0 %v406
    %v1326 = vpop.f32.mrf.mxu0
    %v1327 = vadd.f32 %v251, %v1326
    %v1328 = vpop.f32.mrf.mxu0
    %v1329 = vadd.f32 %v251, %v1328
    %1330 = vmatmul.bf16.gmra.mxu0 %v409
    %v1331 = vpop.f32.mrf.mxu0
    %v1332 = vadd.f32 %v251, %v1331
    %v1333 = vpop.f32.mrf.mxu0
    %v1334 = vadd.f32 %v251, %v1333
    %1335 = vmatmul.bf16.gmra.mxu0 %v412
    %v1336 = vpop.f32.mrf.mxu0
    %v1337 = vadd.f32 %v251, %v1336
    %v1338 = vpop.f32.mrf.mxu0
    %v1339 = vadd.f32 %v251, %v1338
    %1340 = vmatmul.bf16.gmra.mxu0 %v415
    %v1341 = vpop.f32.mrf.mxu0
    %v1342 = vadd.f32 %v251, %v1341
    %v1343 = vpop.f32.mrf.mxu0
    %v1344 = vadd.f32 %v251, %v1343
    %1345 = vmatmul.bf16.gmra.mxu0 %v418
    %v1346 = vpop.f32.mrf.mxu0
    %v1347 = vadd.f32 %v251, %v1346
    %v1348 = vpop.f32.mrf.mxu0
    %v1349 = vadd.f32 %v251, %v1348
    %1350 = vmatmul.bf16.gmra.mxu0 %v421
    %v1351 = vpop.f32.mrf.mxu0
    %v1352 = vadd.f32 %v251, %v1351
    %v1353 = vpop.f32.mrf.mxu0
    %v1354 = vadd.f32 %v251, %v1353
    %1355 = vmatmul.bf16.gmra.mxu0 %v424
    %v1356 = vpop.f32.mrf.mxu0
    %v1357 = vadd.f32 %v251, %v1356
    %v1358 = vpop.f32.mrf.mxu0
    %v1359 = vadd.f32 %v251, %v1358
    %1360 = vmatmul.bf16.gmra.mxu0 %v427
    %v1361 = vpop.f32.mrf.mxu0
    %v1362 = vadd.f32 %v251, %v1361
    %v1363 = vpop.f32.mrf.mxu0
    %v1364 = vadd.f32 %v251, %v1363
    %1365 = vmatmul.bf16.gmra.mxu0 %v430
    %v1366 = vpop.f32.mrf.mxu0
    %v1367 = vadd.f32 %v251, %v1366
    %v1368 = vpop.f32.mrf.mxu0
    %v1369 = vadd.f32 %v251, %v1368
    %1370 = vmatmul.bf16.gmra.mxu0 %v433
    %v1371 = vpop.f32.mrf.mxu0
    %v1372 = vadd.f32 %v251, %v1371
    %v1373 = vpop.f32.mrf.mxu0
    %v1374 = vadd.f32 %v251, %v1373
    %1375 = vmatmul.bf16.gmra.mxu0 %v436
    %v1376 = vpop.f32.mrf.mxu0
    %v1377 = vadd.f32 %v251, %v1376
    %v1378 = vpop.f32.mrf.mxu0
    %v1379 = vadd.f32 %v251, %v1378
    %1380 = vmatmul.bf16.gmra.mxu0 %v439
    %v1381 = vpop.f32.mrf.mxu0
    %v1382 = vadd.f32 %v251, %v1381
    %v1383 = vpop.f32.mrf.mxu0
    %v1384 = vadd.f32 %v251, %v1383
    %1385 = vmatmul.bf16.gmra.mxu0 %v442
    %v1386 = vpop.f32.mrf.mxu0
    %v1387 = vadd.f32 %v251, %v1386
    %v1388 = vpop.f32.mrf.mxu0
    %v1389 = vadd.f32 %v251, %v1388
    %1390 = vmatmul.bf16.gmra.mxu0 %v445
    %v1391 = vpop.f32.mrf.mxu0
    %v1392 = vadd.f32 %v251, %v1391
    %v1393 = vpop.f32.mrf.mxu0
    %v1394 = vadd.f32 %v251, %v1393
    %1395 = vmatmul.bf16.gmra.mxu0 %v448
    %v1396 = vpop.f32.mrf.mxu0
    %v1397 = vadd.f32 %v251, %v1396
    %v1398 = vpop.f32.mrf.mxu0
    %v1399 = vadd.f32 %v251, %v1398
    %1400 = vmatmul.bf16.gmra.mxu0 %v451
    %v1401 = vpop.f32.mrf.mxu0
    %v1402 = vadd.f32 %v251, %v1401
    %v1403 = vpop.f32.mrf.mxu0
    %v1404 = vadd.f32 %v251, %v1403
    %1405 = vmatmul.bf16.gmra.mxu0 %v454
    %v1406 = vpop.f32.mrf.mxu0
    %v1407 = vadd.f32 %v251, %v1406
    %v1408 = vpop.f32.mrf.mxu0
    %v1409 = vadd.f32 %v251, %v1408
    %1410 = vmatmul.bf16.gmra.mxu0 %v457
    %v1411 = vpop.f32.mrf.mxu0
    %v1412 = vadd.f32 %v251, %v1411
    %v1413 = vpop.f32.mrf.mxu0
    %v1414 = vadd.f32 %v251, %v1413
    %1415 = vmatmul.bf16.gmra.mxu0 %v460
    %v1416 = vpop.f32.mrf.mxu0
    %v1417 = vadd.f32 %v251, %v1416
    %v1418 = vpop.f32.mrf.mxu0
    %v1419 = vadd.f32 %v251, %v1418
    %1420 = vmatmul.bf16.gmra.mxu0 %v463
    %v1421 = vpop.f32.mrf.mxu0
    %v1422 = vadd.f32 %v251, %v1421
    %v1423 = vpop.f32.mrf.mxu0
    %v1424 = vadd.f32 %v251, %v1423
    %1425 = vmatmul.bf16.gmra.mxu0 %v466
    %v1426 = vpop.f32.mrf.mxu0
    %v1427 = vadd.f32 %v251, %v1426
    %v1428 = vpop.f32.mrf.mxu0
    %v1429 = vadd.f32 %v251, %v1428
    %1430 = vmatmul.bf16.gmra.mxu0 %v469
    %v1431 = vpop.f32.mrf.mxu0
    %v1432 = vadd.f32 %v251, %v1431
    %v1433 = vpop.f32.mrf.mxu0
    %v1434 = vadd.f32 %v251, %v1433
    %1435 = vmatmul.bf16.gmra.mxu0 %v472
    %v1436 = vpop.f32.mrf.mxu0
    %v1437 = vadd.f32 %v251, %v1436
    %v1438 = vpop.f32.mrf.mxu0
    %v1439 = vadd.f32 %v251, %v1438
    %1440 = vmatmul.bf16.gmra.mxu0 %v475
    %v1441 = vpop.f32.mrf.mxu0
    %v1442 = vadd.f32 %v251, %v1441
    %v1443 = vpop.f32.mrf.mxu0
    %v1444 = vadd.f32 %v251, %v1443
    %1445 = vmatmul.bf16.gmra.mxu0 %v478
    %v1446 = vpop.f32.mrf.mxu0
    %v1447 = vadd.f32 %v251, %v1446
    %v1448 = vpop.f32.mrf.mxu0
    %v1449 = vadd.f32 %v251, %v1448
    %1450 = vmatmul.bf16.gmra.mxu0 %v481
    %v1451 = vpop.f32.mrf.mxu0
    %v1452 = vadd.f32 %v251, %v1451
    %v1453 = vpop.f32.mrf.mxu0
    %v1454 = vadd.f32 %v251, %v1453
    %1455 = vmatmul.bf16.gmra.mxu0 %v484
    %v1456 = vpop.f32.mrf.mxu0
    %v1457 = vadd.f32 %v251, %v1456
    %v1458 = vpop.f32.mrf.mxu0
    %v1459 = vadd.f32 %v251, %v1458
    %1460 = vmatmul.bf16.gmra.mxu0 %v487
    %v1461 = vpop.f32.mrf.mxu0
    %v1462 = vadd.f32 %v251, %v1461
    %v1463 = vpop.f32.mrf.mxu0
    %v1464 = vadd.f32 %v251, %v1463
    %1465 = vmatmul.bf16.gmra.mxu0 %v490
    %v1466 = vpop.f32.mrf.mxu0
    %v1467 = vadd.f32 %v251, %v1466
    %v1468 = vpop.f32.mrf.mxu0
    %v1469 = vadd.f32 %v251, %v1468
    %1470 = vmatmul.bf16.gmra.mxu0 %v493
    %v1471 = vpop.f32.mrf.mxu0
    %v1472 = vadd.f32 %v251, %v1471
    %v1473 = vpop.f32.mrf.mxu0
    %v1474 = vadd.f32 %v251, %v1473
    %1475 = vmatmul.bf16.gmra.mxu0 %v496
    %v1476 = vpop.f32.mrf.mxu0
    %v1477 = vadd.f32 %v251, %v1476
    %v1478 = vpop.f32.mrf.mxu0
    %v1479 = vadd.f32 %v251, %v1478
    %1480 = vmatmul.bf16.gmra.mxu0 %v499
    %v1481 = vpop.f32.mrf.mxu0
    %v1482 = vadd.f32 %v251, %v1481
    %v1483 = vpop.f32.mrf.mxu0
    %v1484 = vadd.f32 %v251, %v1483
    %1485 = vmatmul.bf16.gmra.mxu0 %v502
    %v1486 = vpop.f32.mrf.mxu0
    %v1487 = vadd.f32 %v251, %v1486
    %v1488 = vpop.f32.mrf.mxu0
    %v1489 = vadd.f32 %v251, %v1488
    %1490 = vdwg.mxu0
    %1491 = vmatpush.bf16.msra.mxu0 0
    %1492 = vmatpush.bf16.msra.mxu0 0
    %1493 = vmatpush.bf16.msra.mxu0 0
    %1494 = vmatpush.bf16.msra.mxu0 0
    %1495 = vmatpush.bf16.msra.mxu0 0
    %1496 = vmatpush.bf16.msra.mxu0 0
    %1497 = vmatpush.bf16.msra.mxu0 %v299
    %1498 = vmatpush.bf16.msra.mxu0 %v294
    %1499 = vmatmul.bf16.gmra.mxu0 %v313
    %v1500 = vpop.f32.mrf.mxu0
    %v1501 = vadd.f32 %v252, %v1500
    %v1502 = vpop.f32.mrf.mxu0
    %v1503 = vadd.f32 %v252, %v1502
    %1504 = vmatmul.bf16.gmra.mxu0 %v316
    %v1505 = vpop.f32.mrf.mxu0
    %v1506 = vadd.f32 %v252, %v1505
    %v1507 = vpop.f32.mrf.mxu0
    %v1508 = vadd.f32 %v252, %v1507
    %1509 = vmatmul.bf16.gmra.mxu0 %v319
    %v1510 = vpop.f32.mrf.mxu0
    %v1511 = vadd.f32 %v252, %v1510
    %v1512 = vpop.f32.mrf.mxu0
    %v1513 = vadd.f32 %v252, %v1512
    %1514 = vmatmul.bf16.gmra.mxu0 %v322
    %v1515 = vpop.f32.mrf.mxu0
    %v1516 = vadd.f32 %v252, %v1515
    %v1517 = vpop.f32.mrf.mxu0
    %v1518 = vadd.f32 %v252, %v1517
    %1519 = vmatmul.bf16.gmra.mxu0 %v325
    %v1520 = vpop.f32.mrf.mxu0
    %v1521 = vadd.f32 %v252, %v1520
    %v1522 = vpop.f32.mrf.mxu0
    %v1523 = vadd.f32 %v252, %v1522
    %1524 = vmatmul.bf16.gmra.mxu0 %v328
    %v1525 = vpop.f32.mrf.mxu0
    %v1526 = vadd.f32 %v252, %v1525
    %v1527 = vpop.f32.mrf.mxu0
    %v1528 = vadd.f32 %v252, %v1527
    %1529 = vmatmul.bf16.gmra.mxu0 %v331
    %v1530 = vpop.f32.mrf.mxu0
    %v1531 = vadd.f32 %v252, %v1530
    %v1532 = vpop.f32.mrf.mxu0
    %v1533 = vadd.f32 %v252, %v1532
    %1534 = vmatmul.bf16.gmra.mxu0 %v334
    %v1535 = vpop.f32.mrf.mxu0
    %v1536 = vadd.f32 %v252, %v1535
    %v1537 = vpop.f32.mrf.mxu0
    %v1538 = vadd.f32 %v252, %v1537
    %1539 = vmatmul.bf16.gmra.mxu0 %v337
    %v1540 = vpop.f32.mrf.mxu0
    %v1541 = vadd.f32 %v252, %v1540
    %v1542 = vpop.f32.mrf.mxu0
    %v1543 = vadd.f32 %v252, %v1542
    %1544 = vmatmul.bf16.gmra.mxu0 %v340
    %v1545 = vpop.f32.mrf.mxu0
    %v1546 = vadd.f32 %v252, %v1545
    %v1547 = vpop.f32.mrf.mxu0
    %v1548 = vadd.f32 %v252, %v1547
    %1549 = vmatmul.bf16.gmra.mxu0 %v343
    %v1550 = vpop.f32.mrf.mxu0
    %v1551 = vadd.f32 %v252, %v1550
    %v1552 = vpop.f32.mrf.mxu0
    %v1553 = vadd.f32 %v252, %v1552
    %1554 = vmatmul.bf16.gmra.mxu0 %v346
    %v1555 = vpop.f32.mrf.mxu0
    %v1556 = vadd.f32 %v252, %v1555
    %v1557 = vpop.f32.mrf.mxu0
    %v1558 = vadd.f32 %v252, %v1557
    %1559 = vmatmul.bf16.gmra.mxu0 %v349
    %v1560 = vpop.f32.mrf.mxu0
    %v1561 = vadd.f32 %v252, %v1560
    %v1562 = vpop.f32.mrf.mxu0
    %v1563 = vadd.f32 %v252, %v1562
    %1564 = vmatmul.bf16.gmra.mxu0 %v352
    %v1565 = vpop.f32.mrf.mxu0
    %v1566 = vadd.f32 %v252, %v1565
    %v1567 = vpop.f32.mrf.mxu0
    %v1568 = vadd.f32 %v252, %v1567
    %1569 = vmatmul.bf16.gmra.mxu0 %v355
    %v1570 = vpop.f32.mrf.mxu0
    %v1571 = vadd.f32 %v252, %v1570
    %v1572 = vpop.f32.mrf.mxu0
    %v1573 = vadd.f32 %v252, %v1572
    %1574 = vmatmul.bf16.gmra.mxu0 %v358
    %v1575 = vpop.f32.mrf.mxu0
    %v1576 = vadd.f32 %v252, %v1575
    %v1577 = vpop.f32.mrf.mxu0
    %v1578 = vadd.f32 %v252, %v1577
    %1579 = vmatmul.bf16.gmra.mxu0 %v361
    %v1580 = vpop.f32.mrf.mxu0
    %v1581 = vadd.f32 %v252, %v1580
    %v1582 = vpop.f32.mrf.mxu0
    %v1583 = vadd.f32 %v252, %v1582
    %1584 = vmatmul.bf16.gmra.mxu0 %v364
    %v1585 = vpop.f32.mrf.mxu0
    %v1586 = vadd.f32 %v252, %v1585
    %v1587 = vpop.f32.mrf.mxu0
    %v1588 = vadd.f32 %v252, %v1587
    %1589 = vmatmul.bf16.gmra.mxu0 %v367
    %v1590 = vpop.f32.mrf.mxu0
    %v1591 = vadd.f32 %v252, %v1590
    %v1592 = vpop.f32.mrf.mxu0
    %v1593 = vadd.f32 %v252, %v1592
    %1594 = vmatmul.bf16.gmra.mxu0 %v370
    %v1595 = vpop.f32.mrf.mxu0
    %v1596 = vadd.f32 %v252, %v1595
    %v1597 = vpop.f32.mrf.mxu0
    %v1598 = vadd.f32 %v252, %v1597
    %1599 = vmatmul.bf16.gmra.mxu0 %v373
    %v1600 = vpop.f32.mrf.mxu0
    %v1601 = vadd.f32 %v252, %v1600
    %v1602 = vpop.f32.mrf.mxu0
    %v1603 = vadd.f32 %v252, %v1602
    %1604 = vmatmul.bf16.gmra.mxu0 %v376
    %v1605 = vpop.f32.mrf.mxu0
    %v1606 = vadd.f32 %v252, %v1605
    %v1607 = vpop.f32.mrf.mxu0
    %v1608 = vadd.f32 %v252, %v1607
    %1609 = vmatmul.bf16.gmra.mxu0 %v379
    %v1610 = vpop.f32.mrf.mxu0
    %v1611 = vadd.f32 %v252, %v1610
    %v1612 = vpop.f32.mrf.mxu0
    %v1613 = vadd.f32 %v252, %v1612
    %1614 = vmatmul.bf16.gmra.mxu0 %v382
    %v1615 = vpop.f32.mrf.mxu0
    %v1616 = vadd.f32 %v252, %v1615
    %v1617 = vpop.f32.mrf.mxu0
    %v1618 = vadd.f32 %v252, %v1617
    %1619 = vmatmul.bf16.gmra.mxu0 %v385
    %v1620 = vpop.f32.mrf.mxu0
    %v1621 = vadd.f32 %v252, %v1620
    %v1622 = vpop.f32.mrf.mxu0
    %v1623 = vadd.f32 %v252, %v1622
    %1624 = vmatmul.bf16.gmra.mxu0 %v388
    %v1625 = vpop.f32.mrf.mxu0
    %v1626 = vadd.f32 %v252, %v1625
    %v1627 = vpop.f32.mrf.mxu0
    %v1628 = vadd.f32 %v252, %v1627
    %1629 = vmatmul.bf16.gmra.mxu0 %v391
    %v1630 = vpop.f32.mrf.mxu0
    %v1631 = vadd.f32 %v252, %v1630
    %v1632 = vpop.f32.mrf.mxu0
    %v1633 = vadd.f32 %v252, %v1632
    %1634 = vmatmul.bf16.gmra.mxu0 %v394
    %v1635 = vpop.f32.mrf.mxu0
    %v1636 = vadd.f32 %v252, %v1635
    %v1637 = vpop.f32.mrf.mxu0
    %v1638 = vadd.f32 %v252, %v1637
    %1639 = vmatmul.bf16.gmra.mxu0 %v397
    %v1640 = vpop.f32.mrf.mxu0
    %v1641 = vadd.f32 %v252, %v1640
    %v1642 = vpop.f32.mrf.mxu0
    %v1643 = vadd.f32 %v252, %v1642
    %1644 = vmatmul.bf16.gmra.mxu0 %v400
    %v1645 = vpop.f32.mrf.mxu0
    %v1646 = vadd.f32 %v252, %v1645
    %v1647 = vpop.f32.mrf.mxu0
    %v1648 = vadd.f32 %v252, %v1647
    %1649 = vmatmul.bf16.gmra.mxu0 %v403
    %v1650 = vpop.f32.mrf.mxu0
    %v1651 = vadd.f32 %v252, %v1650
    %v1652 = vpop.f32.mrf.mxu0
    %v1653 = vadd.f32 %v252, %v1652
    %1654 = vmatmul.bf16.gmra.mxu0 %v406
    %v1655 = vpop.f32.mrf.mxu0
    %v1656 = vadd.f32 %v252, %v1655
    %v1657 = vpop.f32.mrf.mxu0
    %v1658 = vadd.f32 %v252, %v1657
    %1659 = vmatmul.bf16.gmra.mxu0 %v409
    %v1660 = vpop.f32.mrf.mxu0
    %v1661 = vadd.f32 %v252, %v1660
    %v1662 = vpop.f32.mrf.mxu0
    %v1663 = vadd.f32 %v252, %v1662
    %1664 = vmatmul.bf16.gmra.mxu0 %v412
    %v1665 = vpop.f32.mrf.mxu0
    %v1666 = vadd.f32 %v252, %v1665
    %v1667 = vpop.f32.mrf.mxu0
    %v1668 = vadd.f32 %v252, %v1667
    %1669 = vmatmul.bf16.gmra.mxu0 %v415
    %v1670 = vpop.f32.mrf.mxu0
    %v1671 = vadd.f32 %v252, %v1670
    %v1672 = vpop.f32.mrf.mxu0
    %v1673 = vadd.f32 %v252, %v1672
    %1674 = vmatmul.bf16.gmra.mxu0 %v418
    %v1675 = vpop.f32.mrf.mxu0
    %v1676 = vadd.f32 %v252, %v1675
    %v1677 = vpop.f32.mrf.mxu0
    %v1678 = vadd.f32 %v252, %v1677
    %1679 = vmatmul.bf16.gmra.mxu0 %v421
    %v1680 = vpop.f32.mrf.mxu0
    %v1681 = vadd.f32 %v252, %v1680
    %v1682 = vpop.f32.mrf.mxu0
    %v1683 = vadd.f32 %v252, %v1682
    %1684 = vmatmul.bf16.gmra.mxu0 %v424
    %v1685 = vpop.f32.mrf.mxu0
    %v1686 = vadd.f32 %v252, %v1685
    %v1687 = vpop.f32.mrf.mxu0
    %v1688 = vadd.f32 %v252, %v1687
    %1689 = vmatmul.bf16.gmra.mxu0 %v427
    %v1690 = vpop.f32.mrf.mxu0
    %v1691 = vadd.f32 %v252, %v1690
    %v1692 = vpop.f32.mrf.mxu0
    %v1693 = vadd.f32 %v252, %v1692
    %1694 = vmatmul.bf16.gmra.mxu0 %v430
    %v1695 = vpop.f32.mrf.mxu0
    %v1696 = vadd.f32 %v252, %v1695
    %v1697 = vpop.f32.mrf.mxu0
    %v1698 = vadd.f32 %v252, %v1697
    %1699 = vmatmul.bf16.gmra.mxu0 %v433
    %v1700 = vpop.f32.mrf.mxu0
    %v1701 = vadd.f32 %v252, %v1700
    %v1702 = vpop.f32.mrf.mxu0
    %v1703 = vadd.f32 %v252, %v1702
    %1704 = vmatmul.bf16.gmra.mxu0 %v436
    %v1705 = vpop.f32.mrf.mxu0
    %v1706 = vadd.f32 %v252, %v1705
    %v1707 = vpop.f32.mrf.mxu0
    %v1708 = vadd.f32 %v252, %v1707
    %1709 = vmatmul.bf16.gmra.mxu0 %v439
    %v1710 = vpop.f32.mrf.mxu0
    %v1711 = vadd.f32 %v252, %v1710
    %v1712 = vpop.f32.mrf.mxu0
    %v1713 = vadd.f32 %v252, %v1712
    %1714 = vmatmul.bf16.gmra.mxu0 %v442
    %v1715 = vpop.f32.mrf.mxu0
    %v1716 = vadd.f32 %v252, %v1715
    %v1717 = vpop.f32.mrf.mxu0
    %v1718 = vadd.f32 %v252, %v1717
    %1719 = vmatmul.bf16.gmra.mxu0 %v445
    %v1720 = vpop.f32.mrf.mxu0
    %v1721 = vadd.f32 %v252, %v1720
    %v1722 = vpop.f32.mrf.mxu0
    %v1723 = vadd.f32 %v252, %v1722
    %1724 = vmatmul.bf16.gmra.mxu0 %v448
    %v1725 = vpop.f32.mrf.mxu0
    %v1726 = vadd.f32 %v252, %v1725
    %v1727 = vpop.f32.mrf.mxu0
    %v1728 = vadd.f32 %v252, %v1727
    %1729 = vmatmul.bf16.gmra.mxu0 %v451
    %v1730 = vpop.f32.mrf.mxu0
    %v1731 = vadd.f32 %v252, %v1730
    %v1732 = vpop.f32.mrf.mxu0
    %v1733 = vadd.f32 %v252, %v1732
    %1734 = vmatmul.bf16.gmra.mxu0 %v454
    %v1735 = vpop.f32.mrf.mxu0
    %v1736 = vadd.f32 %v252, %v1735
    %v1737 = vpop.f32.mrf.mxu0
    %v1738 = vadd.f32 %v252, %v1737
    %1739 = vmatmul.bf16.gmra.mxu0 %v457
    %v1740 = vpop.f32.mrf.mxu0
    %v1741 = vadd.f32 %v252, %v1740
    %v1742 = vpop.f32.mrf.mxu0
    %v1743 = vadd.f32 %v252, %v1742
    %1744 = vmatmul.bf16.gmra.mxu0 %v460
    %v1745 = vpop.f32.mrf.mxu0
    %v1746 = vadd.f32 %v252, %v1745
    %v1747 = vpop.f32.mrf.mxu0
    %v1748 = vadd.f32 %v252, %v1747
    %1749 = vmatmul.bf16.gmra.mxu0 %v463
    %v1750 = vpop.f32.mrf.mxu0
    %v1751 = vadd.f32 %v252, %v1750
    %v1752 = vpop.f32.mrf.mxu0
    %v1753 = vadd.f32 %v252, %v1752
    %1754 = vmatmul.bf16.gmra.mxu0 %v466
    %v1755 = vpop.f32.mrf.mxu0
    %v1756 = vadd.f32 %v252, %v1755
    %v1757 = vpop.f32.mrf.mxu0
    %v1758 = vadd.f32 %v252, %v1757
    %1759 = vmatmul.bf16.gmra.mxu0 %v469
    %v1760 = vpop.f32.mrf.mxu0
    %v1761 = vadd.f32 %v252, %v1760
    %v1762 = vpop.f32.mrf.mxu0
    %v1763 = vadd.f32 %v252, %v1762
    %1764 = vmatmul.bf16.gmra.mxu0 %v472
    %v1765 = vpop.f32.mrf.mxu0
    %v1766 = vadd.f32 %v252, %v1765
    %v1767 = vpop.f32.mrf.mxu0
    %v1768 = vadd.f32 %v252, %v1767
    %1769 = vmatmul.bf16.gmra.mxu0 %v475
    %v1770 = vpop.f32.mrf.mxu0
    %v1771 = vadd.f32 %v252, %v1770
    %v1772 = vpop.f32.mrf.mxu0
    %v1773 = vadd.f32 %v252, %v1772
    %1774 = vmatmul.bf16.gmra.mxu0 %v478
    %v1775 = vpop.f32.mrf.mxu0
    %v1776 = vadd.f32 %v252, %v1775
    %v1777 = vpop.f32.mrf.mxu0
    %v1778 = vadd.f32 %v252, %v1777
    %1779 = vmatmul.bf16.gmra.mxu0 %v481
    %v1780 = vpop.f32.mrf.mxu0
    %v1781 = vadd.f32 %v252, %v1780
    %v1782 = vpop.f32.mrf.mxu0
    %v1783 = vadd.f32 %v252, %v1782
    %1784 = vmatmul.bf16.gmra.mxu0 %v484
    %v1785 = vpop.f32.mrf.mxu0
    %v1786 = vadd.f32 %v252, %v1785
    %v1787 = vpop.f32.mrf.mxu0
    %v1788 = vadd.f32 %v252, %v1787
    %1789 = vmatmul.bf16.gmra.mxu0 %v487
    %v1790 = vpop.f32.mrf.mxu0
    %v1791 = vadd.f32 %v252, %v1790
    %v1792 = vpop.f32.mrf.mxu0
    %v1793 = vadd.f32 %v252, %v1792
    %1794 = vmatmul.bf16.gmra.mxu0 %v490
    %v1795 = vpop.f32.mrf.mxu0
    %v1796 = vadd.f32 %v252, %v1795
    %v1797 = vpop.f32.mrf.mxu0
    %v1798 = vadd.f32 %v252, %v1797
    %1799 = vmatmul.bf16.gmra.mxu0 %v493
    %v1800 = vpop.f32.mrf.mxu0
    %v1801 = vadd.f32 %v252, %v1800
    %v1802 = vpop.f32.mrf.mxu0
    %v1803 = vadd.f32 %v252, %v1802
    %1804 = vmatmul.bf16.gmra.mxu0 %v496
    %v1805 = vpop.f32.mrf.mxu0
    %v1806 = vadd.f32 %v252, %v1805
    %v1807 = vpop.f32.mrf.mxu0
    %v1808 = vadd.f32 %v252, %v1807
    %1809 = vmatmul.bf16.gmra.mxu0 %v499
    %v1810 = vpop.f32.mrf.mxu0
    %v1811 = vadd.f32 %v252, %v1810
    %v1812 = vpop.f32.mrf.mxu0
    %v1813 = vadd.f32 %v252, %v1812
    %1814 = vmatmul.bf16.gmra.mxu0 %v502
    %v1815 = vpop.f32.mrf.mxu0
    %v1816 = vadd.f32 %v252, %v1815
    %v1817 = vpop.f32.mrf.mxu0
    %v1818 = vadd.f32 %v252, %v1817
    %1819 = vdwg.mxu0
    %1820 = vmatpush.bf16.msra.mxu0 0
    %1821 = vmatpush.bf16.msra.mxu0 0
    %1822 = vmatpush.bf16.msra.mxu0 0
    %1823 = vmatpush.bf16.msra.mxu0 0
    %1824 = vmatpush.bf16.msra.mxu0 0
    %1825 = vmatpush.bf16.msra.mxu0 0
    %1826 = vmatpush.bf16.msra.mxu0 %v300
    %1827 = vmatpush.bf16.msra.mxu0 %v295
    %1828 = vmatmul.bf16.gmra.mxu0 %v313
    %v1829 = vpop.f32.mrf.mxu0
    %v1830 = vadd.f32 %v253, %v1829
    %v1831 = vpop.f32.mrf.mxu0
    %v1832 = vadd.f32 %v253, %v1831
    %1833 = vmatmul.bf16.gmra.mxu0 %v316
    %v1834 = vpop.f32.mrf.mxu0
    %v1835 = vadd.f32 %v253, %v1834
    %v1836 = vpop.f32.mrf.mxu0
    %v1837 = vadd.f32 %v253, %v1836
    %1838 = vmatmul.bf16.gmra.mxu0 %v319
    %v1839 = vpop.f32.mrf.mxu0
    %v1840 = vadd.f32 %v253, %v1839
    %v1841 = vpop.f32.mrf.mxu0
    %v1842 = vadd.f32 %v253, %v1841
    %1843 = vmatmul.bf16.gmra.mxu0 %v322
    %v1844 = vpop.f32.mrf.mxu0
    %v1845 = vadd.f32 %v253, %v1844
    %v1846 = vpop.f32.mrf.mxu0
    %v1847 = vadd.f32 %v253, %v1846
    %1848 = vmatmul.bf16.gmra.mxu0 %v325
    %v1849 = vpop.f32.mrf.mxu0
    %v1850 = vadd.f32 %v253, %v1849
    %v1851 = vpop.f32.mrf.mxu0
    %v1852 = vadd.f32 %v253, %v1851
    %1853 = vmatmul.bf16.gmra.mxu0 %v328
    %v1854 = vpop.f32.mrf.mxu0
    %v1855 = vadd.f32 %v253, %v1854
    %v1856 = vpop.f32.mrf.mxu0
    %v1857 = vadd.f32 %v253, %v1856
    %1858 = vmatmul.bf16.gmra.mxu0 %v331
    %v1859 = vpop.f32.mrf.mxu0
    %v1860 = vadd.f32 %v253, %v1859
    %v1861 = vpop.f32.mrf.mxu0
    %v1862 = vadd.f32 %v253, %v1861
    %1863 = vmatmul.bf16.gmra.mxu0 %v334
    %v1864 = vpop.f32.mrf.mxu0
    %v1865 = vadd.f32 %v253, %v1864
    %v1866 = vpop.f32.mrf.mxu0
    %v1867 = vadd.f32 %v253, %v1866
    %1868 = vmatmul.bf16.gmra.mxu0 %v337
    %v1869 = vpop.f32.mrf.mxu0
    %v1870 = vadd.f32 %v253, %v1869
    %v1871 = vpop.f32.mrf.mxu0
    %v1872 = vadd.f32 %v253, %v1871
    %1873 = vmatmul.bf16.gmra.mxu0 %v340
    %v1874 = vpop.f32.mrf.mxu0
    %v1875 = vadd.f32 %v253, %v1874
    %v1876 = vpop.f32.mrf.mxu0
    %v1877 = vadd.f32 %v253, %v1876
    %1878 = vmatmul.bf16.gmra.mxu0 %v343
    %v1879 = vpop.f32.mrf.mxu0
    %v1880 = vadd.f32 %v253, %v1879
    %v1881 = vpop.f32.mrf.mxu0
    %v1882 = vadd.f32 %v253, %v1881
    %1883 = vmatmul.bf16.gmra.mxu0 %v346
    %v1884 = vpop.f32.mrf.mxu0
    %v1885 = vadd.f32 %v253, %v1884
    %v1886 = vpop.f32.mrf.mxu0
    %v1887 = vadd.f32 %v253, %v1886
    %1888 = vmatmul.bf16.gmra.mxu0 %v349
    %v1889 = vpop.f32.mrf.mxu0
    %v1890 = vadd.f32 %v253, %v1889
    %v1891 = vpop.f32.mrf.mxu0
    %v1892 = vadd.f32 %v253, %v1891
    %1893 = vmatmul.bf16.gmra.mxu0 %v352
    %v1894 = vpop.f32.mrf.mxu0
    %v1895 = vadd.f32 %v253, %v1894
    %v1896 = vpop.f32.mrf.mxu0
    %v1897 = vadd.f32 %v253, %v1896
    %1898 = vmatmul.bf16.gmra.mxu0 %v355
    %v1899 = vpop.f32.mrf.mxu0
    %v1900 = vadd.f32 %v253, %v1899
    %v1901 = vpop.f32.mrf.mxu0
    %v1902 = vadd.f32 %v253, %v1901
    %1903 = vmatmul.bf16.gmra.mxu0 %v358
    %v1904 = vpop.f32.mrf.mxu0
    %v1905 = vadd.f32 %v253, %v1904
    %v1906 = vpop.f32.mrf.mxu0
    %v1907 = vadd.f32 %v253, %v1906
    %1908 = vmatmul.bf16.gmra.mxu0 %v361
    %v1909 = vpop.f32.mrf.mxu0
    %v1910 = vadd.f32 %v253, %v1909
    %v1911 = vpop.f32.mrf.mxu0
    %v1912 = vadd.f32 %v253, %v1911
    %1913 = vmatmul.bf16.gmra.mxu0 %v364
    %v1914 = vpop.f32.mrf.mxu0
    %v1915 = vadd.f32 %v253, %v1914
    %v1916 = vpop.f32.mrf.mxu0
    %v1917 = vadd.f32 %v253, %v1916
    %1918 = vmatmul.bf16.gmra.mxu0 %v367
    %v1919 = vpop.f32.mrf.mxu0
    %v1920 = vadd.f32 %v253, %v1919
    %v1921 = vpop.f32.mrf.mxu0
    %v1922 = vadd.f32 %v253, %v1921
    %1923 = vmatmul.bf16.gmra.mxu0 %v370
    %v1924 = vpop.f32.mrf.mxu0
    %v1925 = vadd.f32 %v253, %v1924
    %v1926 = vpop.f32.mrf.mxu0
    %v1927 = vadd.f32 %v253, %v1926
    %1928 = vmatmul.bf16.gmra.mxu0 %v373
    %v1929 = vpop.f32.mrf.mxu0
    %v1930 = vadd.f32 %v253, %v1929
    %v1931 = vpop.f32.mrf.mxu0
    %v1932 = vadd.f32 %v253, %v1931
    %1933 = vmatmul.bf16.gmra.mxu0 %v376
    %v1934 = vpop.f32.mrf.mxu0
    %v1935 = vadd.f32 %v253, %v1934
    %v1936 = vpop.f32.mrf.mxu0
    %v1937 = vadd.f32 %v253, %v1936
    %1938 = vmatmul.bf16.gmra.mxu0 %v379
    %v1939 = vpop.f32.mrf.mxu0
    %v1940 = vadd.f32 %v253, %v1939
    %v1941 = vpop.f32.mrf.mxu0
    %v1942 = vadd.f32 %v253, %v1941
    %1943 = vmatmul.bf16.gmra.mxu0 %v382
    %v1944 = vpop.f32.mrf.mxu0
    %v1945 = vadd.f32 %v253, %v1944
    %v1946 = vpop.f32.mrf.mxu0
    %v1947 = vadd.f32 %v253, %v1946
    %1948 = vmatmul.bf16.gmra.mxu0 %v385
    %v1949 = vpop.f32.mrf.mxu0
    %v1950 = vadd.f32 %v253, %v1949
    %v1951 = vpop.f32.mrf.mxu0
    %v1952 = vadd.f32 %v253, %v1951
    %1953 = vmatmul.bf16.gmra.mxu0 %v388
    %v1954 = vpop.f32.mrf.mxu0
    %v1955 = vadd.f32 %v253, %v1954
    %v1956 = vpop.f32.mrf.mxu0
    %v1957 = vadd.f32 %v253, %v1956
    %1958 = vmatmul.bf16.gmra.mxu0 %v391
    %v1959 = vpop.f32.mrf.mxu0
    %v1960 = vadd.f32 %v253, %v1959
    %v1961 = vpop.f32.mrf.mxu0
    %v1962 = vadd.f32 %v253, %v1961
    %1963 = vmatmul.bf16.gmra.mxu0 %v394
    %v1964 = vpop.f32.mrf.mxu0
    %v1965 = vadd.f32 %v253, %v1964
    %v1966 = vpop.f32.mrf.mxu0
    %v1967 = vadd.f32 %v253, %v1966
    %1968 = vmatmul.bf16.gmra.mxu0 %v397
    %v1969 = vpop.f32.mrf.mxu0
    %v1970 = vadd.f32 %v253, %v1969
    %v1971 = vpop.f32.mrf.mxu0
    %v1972 = vadd.f32 %v253, %v1971
    %1973 = vmatmul.bf16.gmra.mxu0 %v400
    %v1974 = vpop.f32.mrf.mxu0
    %v1975 = vadd.f32 %v253, %v1974
    %v1976 = vpop.f32.mrf.mxu0
    %v1977 = vadd.f32 %v253, %v1976
    %1978 = vmatmul.bf16.gmra.mxu0 %v403
    %v1979 = vpop.f32.mrf.mxu0
    %v1980 = vadd.f32 %v253, %v1979
    %v1981 = vpop.f32.mrf.mxu0
    %v1982 = vadd.f32 %v253, %v1981
    %1983 = vmatmul.bf16.gmra.mxu0 %v406
    %v1984 = vpop.f32.mrf.mxu0
    %v1985 = vadd.f32 %v253, %v1984
    %v1986 = vpop.f32.mrf.mxu0
    %v1987 = vadd.f32 %v253, %v1986
    %1988 = vmatmul.bf16.gmra.mxu0 %v409
    %v1989 = vpop.f32.mrf.mxu0
    %v1990 = vadd.f32 %v253, %v1989
    %v1991 = vpop.f32.mrf.mxu0
    %v1992 = vadd.f32 %v253, %v1991
    %1993 = vmatmul.bf16.gmra.mxu0 %v412
    %v1994 = vpop.f32.mrf.mxu0
    %v1995 = vadd.f32 %v253, %v1994
    %v1996 = vpop.f32.mrf.mxu0
    %v1997 = vadd.f32 %v253, %v1996
    %1998 = vmatmul.bf16.gmra.mxu0 %v415
    %v1999 = vpop.f32.mrf.mxu0
    %v2000 = vadd.f32 %v253, %v1999
    %v2001 = vpop.f32.mrf.mxu0
    %v2002 = vadd.f32 %v253, %v2001
    %2003 = vmatmul.bf16.gmra.mxu0 %v418
    %v2004 = vpop.f32.mrf.mxu0
    %v2005 = vadd.f32 %v253, %v2004
    %v2006 = vpop.f32.mrf.mxu0
    %v2007 = vadd.f32 %v253, %v2006
    %2008 = vmatmul.bf16.gmra.mxu0 %v421
    %v2009 = vpop.f32.mrf.mxu0
    %v2010 = vadd.f32 %v253, %v2009
    %v2011 = vpop.f32.mrf.mxu0
    %v2012 = vadd.f32 %v253, %v2011
    %2013 = vmatmul.bf16.gmra.mxu0 %v424
    %v2014 = vpop.f32.mrf.mxu0
    %v2015 = vadd.f32 %v253, %v2014
    %v2016 = vpop.f32.mrf.mxu0
    %v2017 = vadd.f32 %v253, %v2016
    %2018 = vmatmul.bf16.gmra.mxu0 %v427
    %v2019 = vpop.f32.mrf.mxu0
    %v2020 = vadd.f32 %v253, %v2019
    %v2021 = vpop.f32.mrf.mxu0
    %v2022 = vadd.f32 %v253, %v2021
    %2023 = vmatmul.bf16.gmra.mxu0 %v430
    %v2024 = vpop.f32.mrf.mxu0
    %v2025 = vadd.f32 %v253, %v2024
    %v2026 = vpop.f32.mrf.mxu0
    %v2027 = vadd.f32 %v253, %v2026
    %2028 = vmatmul.bf16.gmra.mxu0 %v433
    %v2029 = vpop.f32.mrf.mxu0
    %v2030 = vadd.f32 %v253, %v2029
    %v2031 = vpop.f32.mrf.mxu0
    %v2032 = vadd.f32 %v253, %v2031
    %2033 = vmatmul.bf16.gmra.mxu0 %v436
    %v2034 = vpop.f32.mrf.mxu0
    %v2035 = vadd.f32 %v253, %v2034
    %v2036 = vpop.f32.mrf.mxu0
    %v2037 = vadd.f32 %v253, %v2036
    %2038 = vmatmul.bf16.gmra.mxu0 %v439
    %v2039 = vpop.f32.mrf.mxu0
    %v2040 = vadd.f32 %v253, %v2039
    %v2041 = vpop.f32.mrf.mxu0
    %v2042 = vadd.f32 %v253, %v2041
    %2043 = vmatmul.bf16.gmra.mxu0 %v442
    %v2044 = vpop.f32.mrf.mxu0
    %v2045 = vadd.f32 %v253, %v2044
    %v2046 = vpop.f32.mrf.mxu0
    %v2047 = vadd.f32 %v253, %v2046
    %2048 = vmatmul.bf16.gmra.mxu0 %v445
    %v2049 = vpop.f32.mrf.mxu0
    %v2050 = vadd.f32 %v253, %v2049
    %v2051 = vpop.f32.mrf.mxu0
    %v2052 = vadd.f32 %v253, %v2051
    %2053 = vmatmul.bf16.gmra.mxu0 %v448
    %v2054 = vpop.f32.mrf.mxu0
    %v2055 = vadd.f32 %v253, %v2054
    %v2056 = vpop.f32.mrf.mxu0
    %v2057 = vadd.f32 %v253, %v2056
    %2058 = vmatmul.bf16.gmra.mxu0 %v451
    %v2059 = vpop.f32.mrf.mxu0
    %v2060 = vadd.f32 %v253, %v2059
    %v2061 = vpop.f32.mrf.mxu0
    %v2062 = vadd.f32 %v253, %v2061
    %2063 = vmatmul.bf16.gmra.mxu0 %v454
    %v2064 = vpop.f32.mrf.mxu0
    %v2065 = vadd.f32 %v253, %v2064
    %v2066 = vpop.f32.mrf.mxu0
    %v2067 = vadd.f32 %v253, %v2066
    %2068 = vmatmul.bf16.gmra.mxu0 %v457
    %v2069 = vpop.f32.mrf.mxu0
    %v2070 = vadd.f32 %v253, %v2069
    %v2071 = vpop.f32.mrf.mxu0
    %v2072 = vadd.f32 %v253, %v2071
    %2073 = vmatmul.bf16.gmra.mxu0 %v460
    %v2074 = vpop.f32.mrf.mxu0
    %v2075 = vadd.f32 %v253, %v2074
    %v2076 = vpop.f32.mrf.mxu0
    %v2077 = vadd.f32 %v253, %v2076
    %2078 = vmatmul.bf16.gmra.mxu0 %v463
    %v2079 = vpop.f32.mrf.mxu0
    %v2080 = vadd.f32 %v253, %v2079
    %v2081 = vpop.f32.mrf.mxu0
    %v2082 = vadd.f32 %v253, %v2081
    %2083 = vmatmul.bf16.gmra.mxu0 %v466
    %v2084 = vpop.f32.mrf.mxu0
    %v2085 = vadd.f32 %v253, %v2084
    %v2086 = vpop.f32.mrf.mxu0
    %v2087 = vadd.f32 %v253, %v2086
    %2088 = vmatmul.bf16.gmra.mxu0 %v469
    %v2089 = vpop.f32.mrf.mxu0
    %v2090 = vadd.f32 %v253, %v2089
    %v2091 = vpop.f32.mrf.mxu0
    %v2092 = vadd.f32 %v253, %v2091
    %2093 = vmatmul.bf16.gmra.mxu0 %v472
    %v2094 = vpop.f32.mrf.mxu0
    %v2095 = vadd.f32 %v253, %v2094
    %v2096 = vpop.f32.mrf.mxu0
    %v2097 = vadd.f32 %v253, %v2096
    %2098 = vmatmul.bf16.gmra.mxu0 %v475
    %v2099 = vpop.f32.mrf.mxu0
    %v2100 = vadd.f32 %v253, %v2099
    %v2101 = vpop.f32.mrf.mxu0
    %v2102 = vadd.f32 %v253, %v2101
    %2103 = vmatmul.bf16.gmra.mxu0 %v478
    %v2104 = vpop.f32.mrf.mxu0
    %v2105 = vadd.f32 %v253, %v2104
    %v2106 = vpop.f32.mrf.mxu0
    %v2107 = vadd.f32 %v253, %v2106
    %2108 = vmatmul.bf16.gmra.mxu0 %v481
    %v2109 = vpop.f32.mrf.mxu0
    %v2110 = vadd.f32 %v253, %v2109
    %v2111 = vpop.f32.mrf.mxu0
    %v2112 = vadd.f32 %v253, %v2111
    %2113 = vmatmul.bf16.gmra.mxu0 %v484
    %v2114 = vpop.f32.mrf.mxu0
    %v2115 = vadd.f32 %v253, %v2114
    %v2116 = vpop.f32.mrf.mxu0
    %v2117 = vadd.f32 %v253, %v2116
    %2118 = vmatmul.bf16.gmra.mxu0 %v487
    %v2119 = vpop.f32.mrf.mxu0
    %v2120 = vadd.f32 %v253, %v2119
    %v2121 = vpop.f32.mrf.mxu0
    %v2122 = vadd.f32 %v253, %v2121
    %2123 = vmatmul.bf16.gmra.mxu0 %v490
    %v2124 = vpop.f32.mrf.mxu0
    %v2125 = vadd.f32 %v253, %v2124
    %v2126 = vpop.f32.mrf.mxu0
    %v2127 = vadd.f32 %v253, %v2126
    %2128 = vmatmul.bf16.gmra.mxu0 %v493
    %v2129 = vpop.f32.mrf.mxu0
    %v2130 = vadd.f32 %v253, %v2129
    %v2131 = vpop.f32.mrf.mxu0
    %v2132 = vadd.f32 %v253, %v2131
    %2133 = vmatmul.bf16.gmra.mxu0 %v496
    %v2134 = vpop.f32.mrf.mxu0
    %v2135 = vadd.f32 %v253, %v2134
    %v2136 = vpop.f32.mrf.mxu0
    %v2137 = vadd.f32 %v253, %v2136
    %2138 = vmatmul.bf16.gmra.mxu0 %v499
    %v2139 = vpop.f32.mrf.mxu0
    %v2140 = vadd.f32 %v253, %v2139
    %v2141 = vpop.f32.mrf.mxu0
    %v2142 = vadd.f32 %v253, %v2141
    %2143 = vmatmul.bf16.gmra.mxu0 %v502
    %v2144 = vpop.f32.mrf.mxu0
    %v2145 = vadd.f32 %v253, %v2144
    %v2146 = vpop.f32.mrf.mxu0
    %v2147 = vadd.f32 %v253, %v2146
    %2148 = vdwg.mxu0
    %v2149 = vand.u32 2147483647, %v514
    %v2150 = vand.u32 2147483647, %v843
    %v2151 = vand.u32 2147483647, %v516
    %v2152 = vand.u32 2147483647, %v845
    %v2153 = vand.u32 2147483647, %v519
    %v2154 = vand.u32 2147483647, %v848
    %v2155 = vand.u32 2147483647, %v521
    %v2156 = vand.u32 2147483647, %v850
    %v2157 = vand.u32 2147483647, %v524
    %v2158 = vand.u32 2147483647, %v853
    %v2159 = vand.u32 2147483647, %v526
    %v2160 = vand.u32 2147483647, %v855
    %v2161 = vand.u32 2147483647, %v529
    %v2162 = vand.u32 2147483647, %v858
    %v2163 = vand.u32 2147483647, %v531
    %v2164 = vand.u32 2147483647, %v860
    %v2165 = vand.u32 2147483647, %v534
    %v2166 = vand.u32 2147483647, %v863
    %v2167 = vand.u32 2147483647, %v536
    %v2168 = vand.u32 2147483647, %v865
    %v2169 = vand.u32 2147483647, %v539
    %v2170 = vand.u32 2147483647, %v868
    %v2171 = vand.u32 2147483647, %v541
    %v2172 = vand.u32 2147483647, %v870
    %v2173 = vand.u32 2147483647, %v544
    %v2174 = vand.u32 2147483647, %v873
    %v2175 = vand.u32 2147483647, %v546
    %v2176 = vand.u32 2147483647, %v875
    %v2177 = vand.u32 2147483647, %v549
    %v2178 = vand.u32 2147483647, %v878
    %v2179 = vand.u32 2147483647, %v551
    %v2180 = vand.u32 2147483647, %v880
    %v2181 = vand.u32 2147483647, %v554
    %v2182 = vand.u32 2147483647, %v883
    %v2183 = vand.u32 2147483647, %v556
    %v2184 = vand.u32 2147483647, %v885
    %v2185 = vand.u32 2147483647, %v559
    %v2186 = vand.u32 2147483647, %v888
    %v2187 = vand.u32 2147483647, %v561
    %v2188 = vand.u32 2147483647, %v890
    %v2189 = vand.u32 2147483647, %v564
    %v2190 = vand.u32 2147483647, %v893
    %v2191 = vand.u32 2147483647, %v566
    %v2192 = vand.u32 2147483647, %v895
    %v2193 = vand.u32 2147483647, %v569
    %v2194 = vand.u32 2147483647, %v898
    %v2195 = vand.u32 2147483647, %v571
    %v2196 = vand.u32 2147483647, %v900
    %v2197 = vand.u32 2147483647, %v574
    %v2198 = vand.u32 2147483647, %v903
    %v2199 = vand.u32 2147483647, %v576
    %v2200 = vand.u32 2147483647, %v905
    %v2201 = vand.u32 2147483647, %v579
    %v2202 = vand.u32 2147483647, %v908
    %v2203 = vand.u32 2147483647, %v581
    %v2204 = vand.u32 2147483647, %v910
    %v2205 = vand.u32 2147483647, %v584
    %v2206 = vand.u32 2147483647, %v913
    %v2207 = vand.u32 2147483647, %v586
    %v2208 = vand.u32 2147483647, %v915
    %v2209 = vand.u32 2147483647, %v589
    %v2210 = vand.u32 2147483647, %v918
    %v2211 = vand.u32 2147483647, %v591
    %v2212 = vand.u32 2147483647, %v920
    %v2213 = vand.u32 2147483647, %v594
    %v2214 = vand.u32 2147483647, %v923
    %v2215 = vand.u32 2147483647, %v596
    %v2216 = vand.u32 2147483647, %v925
    %v2217 = vand.u32 2147483647, %v599
    %v2218 = vand.u32 2147483647, %v928
    %v2219 = vand.u32 2147483647, %v601
    %v2220 = vand.u32 2147483647, %v930
    %v2221 = vand.u32 2147483647, %v604
    %v2222 = vand.u32 2147483647, %v933
    %v2223 = vand.u32 2147483647, %v606
    %v2224 = vand.u32 2147483647, %v935
    %v2225 = vand.u32 2147483647, %v609
    %v2226 = vand.u32 2147483647, %v938
    %v2227 = vand.u32 2147483647, %v611
    %v2228 = vand.u32 2147483647, %v940
    %v2229 = vand.u32 2147483647, %v614
    %v2230 = vand.u32 2147483647, %v943
    %v2231 = vand.u32 2147483647, %v616
    %v2232 = vand.u32 2147483647, %v945
    %v2233 = vand.u32 2147483647, %v619
    %v2234 = vand.u32 2147483647, %v948
    %v2235 = vand.u32 2147483647, %v621
    %v2236 = vand.u32 2147483647, %v950
    %v2237 = vand.u32 2147483647, %v624
    %v2238 = vand.u32 2147483647, %v953
    %v2239 = vand.u32 2147483647, %v626
    %v2240 = vand.u32 2147483647, %v955
    %v2241 = vand.u32 2147483647, %v629
    %v2242 = vand.u32 2147483647, %v958
    %v2243 = vand.u32 2147483647, %v631
    %v2244 = vand.u32 2147483647, %v960
    %v2245 = vand.u32 2147483647, %v634
    %v2246 = vand.u32 2147483647, %v963
    %v2247 = vand.u32 2147483647, %v636
    %v2248 = vand.u32 2147483647, %v965
    %v2249 = vand.u32 2147483647, %v639
    %v2250 = vand.u32 2147483647, %v968
    %v2251 = vand.u32 2147483647, %v641
    %v2252 = vand.u32 2147483647, %v970
    %v2253 = vand.u32 2147483647, %v644
    %v2254 = vand.u32 2147483647, %v973
    %v2255 = vand.u32 2147483647, %v646
    %v2256 = vand.u32 2147483647, %v975
    %v2257 = vand.u32 2147483647, %v649
    %v2258 = vand.u32 2147483647, %v978
    %v2259 = vand.u32 2147483647, %v651
    %v2260 = vand.u32 2147483647, %v980
    %v2261 = vand.u32 2147483647, %v654
    %v2262 = vand.u32 2147483647, %v983
    %v2263 = vand.u32 2147483647, %v656
    %v2264 = vand.u32 2147483647, %v985
    %v2265 = vand.u32 2147483647, %v659
    %v2266 = vand.u32 2147483647, %v988
    %v2267 = vand.u32 2147483647, %v661
    %v2268 = vand.u32 2147483647, %v990
    %v2269 = vand.u32 2147483647, %v664
    %v2270 = vand.u32 2147483647, %v993
    %v2271 = vand.u32 2147483647, %v666
    %v2272 = vand.u32 2147483647, %v995
    %v2273 = vand.u32 2147483647, %v669
    %v2274 = vand.u32 2147483647, %v998
    %v2275 = vand.u32 2147483647, %v671
    %v2276 = vand.u32 2147483647, %v1000
    %v2277 = vand.u32 2147483647, %v674
    %v2278 = vand.u32 2147483647, %v1003
    %v2279 = vand.u32 2147483647, %v676
    %v2280 = vand.u32 2147483647, %v1005
    %v2281 = vand.u32 2147483647, %v679
    %v2282 = vand.u32 2147483647, %v1008
    %v2283 = vand.u32 2147483647, %v681
    %v2284 = vand.u32 2147483647, %v1010
    %v2285 = vand.u32 2147483647, %v684
    %v2286 = vand.u32 2147483647, %v1013
    %v2287 = vand.u32 2147483647, %v686
    %v2288 = vand.u32 2147483647, %v1015
    %v2289 = vand.u32 2147483647, %v689
    %v2290 = vand.u32 2147483647, %v1018
    %v2291 = vand.u32 2147483647, %v691
    %v2292 = vand.u32 2147483647, %v1020
    %v2293 = vand.u32 2147483647, %v694
    %v2294 = vand.u32 2147483647, %v1023
    %v2295 = vand.u32 2147483647, %v696
    %v2296 = vand.u32 2147483647, %v1025
    %v2297 = vand.u32 2147483647, %v699
    %v2298 = vand.u32 2147483647, %v1028
    %v2299 = vand.u32 2147483647, %v701
    %v2300 = vand.u32 2147483647, %v1030
    %v2301 = vand.u32 2147483647, %v704
    %v2302 = vand.u32 2147483647, %v1033
    %v2303 = vand.u32 2147483647, %v706
    %v2304 = vand.u32 2147483647, %v1035
    %v2305 = vand.u32 2147483647, %v709
    %v2306 = vand.u32 2147483647, %v1038
    %v2307 = vand.u32 2147483647, %v711
    %v2308 = vand.u32 2147483647, %v1040
    %v2309 = vand.u32 2147483647, %v714
    %v2310 = vand.u32 2147483647, %v1043
    %v2311 = vand.u32 2147483647, %v716
    %v2312 = vand.u32 2147483647, %v1045
    %v2313 = vand.u32 2147483647, %v719
    %v2314 = vand.u32 2147483647, %v1048
    %v2315 = vand.u32 2147483647, %v721
    %v2316 = vand.u32 2147483647, %v1050
    %v2317 = vand.u32 2147483647, %v724
    %v2318 = vand.u32 2147483647, %v1053
    %v2319 = vand.u32 2147483647, %v726
    %v2320 = vand.u32 2147483647, %v1055
    %v2321 = vand.u32 2147483647, %v729
    %v2322 = vand.u32 2147483647, %v1058
    %v2323 = vand.u32 2147483647, %v731
    %v2324 = vand.u32 2147483647, %v1060
    %v2325 = vand.u32 2147483647, %v734
    %v2326 = vand.u32 2147483647, %v1063
    %v2327 = vand.u32 2147483647, %v736
    %v2328 = vand.u32 2147483647, %v1065
    %v2329 = vand.u32 2147483647, %v739
    %v2330 = vand.u32 2147483647, %v1068
    %v2331 = vand.u32 2147483647, %v741
    %v2332 = vand.u32 2147483647, %v1070
    %v2333 = vand.u32 2147483647, %v744
    %v2334 = vand.u32 2147483647, %v1073
    %v2335 = vand.u32 2147483647, %v746
    %v2336 = vand.u32 2147483647, %v1075
    %v2337 = vand.u32 2147483647, %v749
    %v2338 = vand.u32 2147483647, %v1078
    %v2339 = vand.u32 2147483647, %v751
    %v2340 = vand.u32 2147483647, %v1080
    %v2341 = vand.u32 2147483647, %v754
    %v2342 = vand.u32 2147483647, %v1083
    %v2343 = vand.u32 2147483647, %v756
    %v2344 = vand.u32 2147483647, %v1085
    %v2345 = vand.u32 2147483647, %v759
    %v2346 = vand.u32 2147483647, %v1088
    %v2347 = vand.u32 2147483647, %v761
    %v2348 = vand.u32 2147483647, %v1090
    %v2349 = vand.u32 2147483647, %v764
    %v2350 = vand.u32 2147483647, %v1093
    %v2351 = vand.u32 2147483647, %v766
    %v2352 = vand.u32 2147483647, %v1095
    %v2353 = vand.u32 2147483647, %v769
    %v2354 = vand.u32 2147483647, %v1098
    %v2355 = vand.u32 2147483647, %v771
    %v2356 = vand.u32 2147483647, %v1100
    %v2357 = vand.u32 2147483647, %v774
    %v2358 = vand.u32 2147483647, %v1103
    %v2359 = vand.u32 2147483647, %v776
    %v2360 = vand.u32 2147483647, %v1105
    %v2361 = vand.u32 2147483647, %v779
    %v2362 = vand.u32 2147483647, %v1108
    %v2363 = vand.u32 2147483647, %v781
    %v2364 = vand.u32 2147483647, %v1110
    %v2365 = vand.u32 2147483647, %v784
    %v2366 = vand.u32 2147483647, %v1113
    %v2367 = vand.u32 2147483647, %v786
    %v2368 = vand.u32 2147483647, %v1115
    %v2369 = vand.u32 2147483647, %v789
    %v2370 = vand.u32 2147483647, %v1118
    %v2371 = vand.u32 2147483647, %v791
    %v2372 = vand.u32 2147483647, %v1120
    %v2373 = vand.u32 2147483647, %v794
    %v2374 = vand.u32 2147483647, %v1123
    %v2375 = vand.u32 2147483647, %v796
    %v2376 = vand.u32 2147483647, %v1125
    %v2377 = vand.u32 2147483647, %v799
    %v2378 = vand.u32 2147483647, %v1128
    %v2379 = vand.u32 2147483647, %v801
    %v2380 = vand.u32 2147483647, %v1130
    %v2381 = vand.u32 2147483647, %v804
    %v2382 = vand.u32 2147483647, %v1133
    %v2383 = vand.u32 2147483647, %v806
    %v2384 = vand.u32 2147483647, %v1135
    %v2385 = vand.u32 2147483647, %v809
    %v2386 = vand.u32 2147483647, %v1138
    %v2387 = vand.u32 2147483647, %v811
    %v2388 = vand.u32 2147483647, %v1140
    %v2389 = vand.u32 2147483647, %v814
    %v2390 = vand.u32 2147483647, %v1143
    %v2391 = vand.u32 2147483647, %v816
    %v2392 = vand.u32 2147483647, %v1145
    %v2393 = vand.u32 2147483647, %v819
    %v2394 = vand.u32 2147483647, %v1148
    %v2395 = vand.u32 2147483647, %v821
    %v2396 = vand.u32 2147483647, %v1150
    %v2397 = vand.u32 2147483647, %v824
    %v2398 = vand.u32 2147483647, %v1153
    %v2399 = vand.u32 2147483647, %v826
    %v2400 = vand.u32 2147483647, %v1155
    %v2401 = vand.u32 2147483647, %v829
    %v2402 = vand.u32 2147483647, %v1158
    %v2403 = vand.u32 2147483647, %v831
    %v2404 = vand.u32 2147483647, %v1160
    %v2405 = vand.u32 2147483647, %v1501
    %v2406 = vand.u32 2147483647, %v1503
    %v2407 = vand.u32 2147483647, %v1506
    %v2408 = vand.u32 2147483647, %v1508
    %v2409 = vand.u32 2147483647, %v1511
    %v2410 = vand.u32 2147483647, %v1513
    %v2411 = vand.u32 2147483647, %v1516
    %v2412 = vand.u32 2147483647, %v1518
    %v2413 = vand.u32 2147483647, %v1521
    %v2414 = vand.u32 2147483647, %v1523
    %v2415 = vand.u32 2147483647, %v1526
    %v2416 = vand.u32 2147483647, %v1528
    %v2417 = vand.u32 2147483647, %v1531
    %v2418 = vand.u32 2147483647, %v1533
    %v2419 = vand.u32 2147483647, %v1536
    %v2420 = vand.u32 2147483647, %v1538
    %v2421 = vand.u32 2147483647, %v1541
    %v2422 = vand.u32 2147483647, %v1543
    %v2423 = vand.u32 2147483647, %v1546
    %v2424 = vand.u32 2147483647, %v1548
    %v2425 = vand.u32 2147483647, %v1551
    %v2426 = vand.u32 2147483647, %v1553
    %v2427 = vand.u32 2147483647, %v1556
    %v2428 = vand.u32 2147483647, %v1558
    %v2429 = vand.u32 2147483647, %v1561
    %v2430 = vand.u32 2147483647, %v1563
    %v2431 = vand.u32 2147483647, %v1566
    %v2432 = vand.u32 2147483647, %v1568
    %v2433 = vand.u32 2147483647, %v1571
    %v2434 = vand.u32 2147483647, %v1573
    %v2435 = vand.u32 2147483647, %v1576
    %v2436 = vand.u32 2147483647, %v1578
    %v2437 = vand.u32 2147483647, %v1581
    %v2438 = vand.u32 2147483647, %v1583
    %v2439 = vand.u32 2147483647, %v1586
    %v2440 = vand.u32 2147483647, %v1588
    %v2441 = vand.u32 2147483647, %v1591
    %v2442 = vand.u32 2147483647, %v1593
    %v2443 = vand.u32 2147483647, %v1596
    %v2444 = vand.u32 2147483647, %v1598
    %v2445 = vand.u32 2147483647, %v1601
    %v2446 = vand.u32 2147483647, %v1603
    %v2447 = vand.u32 2147483647, %v1606
    %v2448 = vand.u32 2147483647, %v1608
    %v2449 = vand.u32 2147483647, %v1611
    %v2450 = vand.u32 2147483647, %v1613
    %v2451 = vand.u32 2147483647, %v1616
    %v2452 = vand.u32 2147483647, %v1618
    %v2453 = vand.u32 2147483647, %v1621
    %v2454 = vand.u32 2147483647, %v1623
    %v2455 = vand.u32 2147483647, %v1626
    %v2456 = vand.u32 2147483647, %v1628
    %v2457 = vand.u32 2147483647, %v1631
    %v2458 = vand.u32 2147483647, %v1633
    %v2459 = vand.u32 2147483647, %v1636
    %v2460 = vand.u32 2147483647, %v1638
    %v2461 = vand.u32 2147483647, %v1641
    %v2462 = vand.u32 2147483647, %v1643
    %v2463 = vand.u32 2147483647, %v1646
    %v2464 = vand.u32 2147483647, %v1648
    %v2465 = vand.u32 2147483647, %v1651
    %v2466 = vand.u32 2147483647, %v1653
    %v2467 = vand.u32 2147483647, %v1656
    %v2468 = vand.u32 2147483647, %v1658
    %v2469 = vand.u32 2147483647, %v1661
    %v2470 = vand.u32 2147483647, %v1663
    %v2471 = vand.u32 2147483647, %v1666
    %v2472 = vand.u32 2147483647, %v1668
    %v2473 = vand.u32 2147483647, %v1671
    %v2474 = vand.u32 2147483647, %v1673
    %v2475 = vand.u32 2147483647, %v1676
    %v2476 = vand.u32 2147483647, %v1678
    %v2477 = vand.u32 2147483647, %v1681
    %v2478 = vand.u32 2147483647, %v1683
    %v2479 = vand.u32 2147483647, %v1686
    %v2480 = vand.u32 2147483647, %v1688
    %v2481 = vand.u32 2147483647, %v1691
    %v2482 = vand.u32 2147483647, %v1693
    %v2483 = vand.u32 2147483647, %v1696
    %v2484 = vand.u32 2147483647, %v1698
    %v2485 = vand.u32 2147483647, %v1701
    %v2486 = vand.u32 2147483647, %v1703
    %v2487 = vand.u32 2147483647, %v1706
    %v2488 = vand.u32 2147483647, %v1708
    %v2489 = vand.u32 2147483647, %v1711
    %v2490 = vand.u32 2147483647, %v1713
    %v2491 = vand.u32 2147483647, %v1716
    %v2492 = vand.u32 2147483647, %v1718
    %v2493 = vand.u32 2147483647, %v1721
    %v2494 = vand.u32 2147483647, %v1723
    %v2495 = vand.u32 2147483647, %v1726
    %v2496 = vand.u32 2147483647, %v1728
    %v2497 = vand.u32 2147483647, %v1731
    %v2498 = vand.u32 2147483647, %v1733
    %v2499 = vand.u32 2147483647, %v1736
    %v2500 = vand.u32 2147483647, %v1738
    %v2501 = vand.u32 2147483647, %v1741
    %v2502 = vand.u32 2147483647, %v1743
    %v2503 = vand.u32 2147483647, %v1746
    %v2504 = vand.u32 2147483647, %v1748
    %v2505 = vand.u32 2147483647, %v1751
    %v2506 = vand.u32 2147483647, %v1753
    %v2507 = vand.u32 2147483647, %v1756
    %v2508 = vand.u32 2147483647, %v1758
    %v2509 = vand.u32 2147483647, %v1761
    %v2510 = vand.u32 2147483647, %v1763
    %v2511 = vand.u32 2147483647, %v1766
    %v2512 = vand.u32 2147483647, %v1768
    %v2513 = vand.u32 2147483647, %v1771
    %v2514 = vand.u32 2147483647, %v1773
    %v2515 = vand.u32 2147483647, %v1776
    %v2516 = vand.u32 2147483647, %v1778
    %v2517 = vand.u32 2147483647, %v1781
    %v2518 = vand.u32 2147483647, %v1783
    %v2519 = vand.u32 2147483647, %v1786
    %v2520 = vand.u32 2147483647, %v1788
    %v2521 = vand.u32 2147483647, %v1791
    %v2522 = vand.u32 2147483647, %v1793
    %v2523 = vand.u32 2147483647, %v1796
    %v2524 = vand.u32 2147483647, %v1798
    %v2525 = vand.u32 2147483647, %v1801
    %v2526 = vand.u32 2147483647, %v1803
    %v2527 = vand.u32 2147483647, %v1806
    %v2528 = vand.u32 2147483647, %v1808
    %v2529 = vand.u32 2147483647, %v1811
    %v2530 = vand.u32 2147483647, %v1813
    %v2531 = vand.u32 2147483647, %v1816
    %v2532 = vand.u32 2147483647, %v1818
    %v2533 = vmax.f32 %v1830, 0.0
    %v2534 = vmax.f32 %v1832, 0.0
    %v2535 = vmax.f32 %v1835, 0.0
    %v2536 = vmax.f32 %v1837, 0.0
    %v2537 = vmax.f32 %v1840, 0.0
    %v2538 = vmax.f32 %v1842, 0.0
    %v2539 = vmax.f32 %v1845, 0.0
    %v2540 = vmax.f32 %v1847, 0.0
    %v2541 = vmax.f32 %v1850, 0.0
    %v2542 = vmax.f32 %v1852, 0.0
    %v2543 = vmax.f32 %v1855, 0.0
    %v2544 = vmax.f32 %v1857, 0.0
    %v2545 = vmax.f32 %v1860, 0.0
    %v2546 = vmax.f32 %v1862, 0.0
    %v2547 = vmax.f32 %v1865, 0.0
    %v2548 = vmax.f32 %v1867, 0.0
    %v2549 = vmax.f32 %v1870, 0.0
    %v2550 = vmax.f32 %v1872, 0.0
    %v2551 = vmax.f32 %v1875, 0.0
    %v2552 = vmax.f32 %v1877, 0.0
    %v2553 = vmax.f32 %v1880, 0.0
    %v2554 = vmax.f32 %v1882, 0.0
    %v2555 = vmax.f32 %v1885, 0.0
    %v2556 = vmax.f32 %v1887, 0.0
    %v2557 = vmax.f32 %v1890, 0.0
    %v2558 = vmax.f32 %v1892, 0.0
    %v2559 = vmax.f32 %v1895, 0.0
    %v2560 = vmax.f32 %v1897, 0.0
    %v2561 = vmax.f32 %v1900, 0.0
    %v2562 = vmax.f32 %v1902, 0.0
    %v2563 = vmax.f32 %v1905, 0.0
    %v2564 = vmax.f32 %v1907, 0.0
    %v2565 = vmax.f32 %v1910, 0.0
    %v2566 = vmax.f32 %v1912, 0.0
    %v2567 = vmax.f32 %v1915, 0.0
    %v2568 = vmax.f32 %v1917, 0.0
    %v2569 = vmax.f32 %v1920, 0.0
    %v2570 = vmax.f32 %v1922, 0.0
    %v2571 = vmax.f32 %v1925, 0.0
    %v2572 = vmax.f32 %v1927, 0.0
    %v2573 = vmax.f32 %v1930, 0.0
    %v2574 = vmax.f32 %v1932, 0.0
    %v2575 = vmax.f32 %v1935, 0.0
    %v2576 = vmax.f32 %v1937, 0.0
    %v2577 = vmax.f32 %v1940, 0.0
    %v2578 = vmax.f32 %v1942, 0.0
    %v2579 = vmax.f32 %v1945, 0.0
    %v2580 = vmax.f32 %v1947, 0.0
    %v2581 = vmax.f32 %v1950, 0.0
    %v2582 = vmax.f32 %v1952, 0.0
    %v2583 = vmax.f32 %v1955, 0.0
    %v2584 = vmax.f32 %v1957, 0.0
    %v2585 = vmax.f32 %v1960, 0.0
    %v2586 = vmax.f32 %v1962, 0.0
    %v2587 = vmax.f32 %v1965, 0.0
    %v2588 = vmax.f32 %v1967, 0.0
    %v2589 = vmax.f32 %v1970, 0.0
    %v2590 = vmax.f32 %v1972, 0.0
    %v2591 = vmax.f32 %v1975, 0.0
    %v2592 = vmax.f32 %v1977, 0.0
    %v2593 = vmax.f32 %v1980, 0.0
    %v2594 = vmax.f32 %v1982, 0.0
    %v2595 = vmax.f32 %v1985, 0.0
    %v2596 = vmax.f32 %v1987, 0.0
    %v2597 = vmax.f32 %v1990, 0.0
    %v2598 = vmax.f32 %v1992, 0.0
    %v2599 = vmax.f32 %v1995, 0.0
    %v2600 = vmax.f32 %v1997, 0.0
    %v2601 = vmax.f32 %v2000, 0.0
    %v2602 = vmax.f32 %v2002, 0.0
    %v2603 = vmax.f32 %v2005, 0.0
    %v2604 = vmax.f32 %v2007, 0.0
    %v2605 = vmax.f32 %v2010, 0.0
    %v2606 = vmax.f32 %v2012, 0.0
    %v2607 = vmax.f32 %v2015, 0.0
    %v2608 = vmax.f32 %v2017, 0.0
    %v2609 = vmax.f32 %v2020, 0.0
    %v2610 = vmax.f32 %v2022, 0.0
    %v2611 = vmax.f32 %v2025, 0.0
    %v2612 = vmax.f32 %v2027, 0.0
    %v2613 = vmax.f32 %v2030, 0.0
    %v2614 = vmax.f32 %v2032, 0.0
    %v2615 = vmax.f32 %v2035, 0.0
    %v2616 = vmax.f32 %v2037, 0.0
    %v2617 = vmax.f32 %v2040, 0.0
    %v2618 = vmax.f32 %v2042, 0.0
    %v2619 = vmax.f32 %v2045, 0.0
    %v2620 = vmax.f32 %v2047, 0.0
    %v2621 = vmax.f32 %v2050, 0.0
    %v2622 = vmax.f32 %v2052, 0.0
    %v2623 = vmax.f32 %v2055, 0.0
    %v2624 = vmax.f32 %v2057, 0.0
    %v2625 = vmax.f32 %v2060, 0.0
    %v2626 = vmax.f32 %v2062, 0.0
    %v2627 = vmax.f32 %v2065, 0.0
    %v2628 = vmax.f32 %v2067, 0.0
    %v2629 = vmax.f32 %v2070, 0.0
    %v2630 = vmax.f32 %v2072, 0.0
    %v2631 = vmax.f32 %v2075, 0.0
    %v2632 = vmax.f32 %v2077, 0.0
    %v2633 = vmax.f32 %v2080, 0.0
    %v2634 = vmax.f32 %v2082, 0.0
    %v2635 = vmax.f32 %v2085, 0.0
    %v2636 = vmax.f32 %v2087, 0.0
    %v2637 = vmax.f32 %v2090, 0.0
    %v2638 = vmax.f32 %v2092, 0.0
    %v2639 = vmax.f32 %v2095, 0.0
    %v2640 = vmax.f32 %v2097, 0.0
    %v2641 = vmax.f32 %v2100, 0.0
    %v2642 = vmax.f32 %v2102, 0.0
    %v2643 = vmax.f32 %v2105, 0.0
    %v2644 = vmax.f32 %v2107, 0.0
    %v2645 = vmax.f32 %v2110, 0.0
    %v2646 = vmax.f32 %v2112, 0.0
    %v2647 = vmax.f32 %v2115, 0.0
    %v2648 = vmax.f32 %v2117, 0.0
    %v2649 = vmax.f32 %v2120, 0.0
    %v2650 = vmax.f32 %v2122, 0.0
    %v2651 = vmax.f32 %v2125, 0.0
    %v2652 = vmax.f32 %v2127, 0.0
    %v2653 = vmax.f32 %v2130, 0.0
    %v2654 = vmax.f32 %v2132, 0.0
    %v2655 = vmax.f32 %v2135, 0.0
    %v2656 = vmax.f32 %v2137, 0.0
    %v2657 = vmax.f32 %v2140, 0.0
    %v2658 = vmax.f32 %v2142, 0.0
    %v2659 = vmax.f32 %v2145, 0.0
    %v2660 = vmax.f32 %v2147, 0.0
    %v2661 = vld [vmem:[%s1] sm:$0xff]
    %v2662 = vld [vmem:[%s1 + $0x8] sm:$0xff]
    %v2663 = vld [vmem:[%s1 + $0x10] sm:$0xff]
    %v2664 = vld [vmem:[%s1 + $0x18] sm:$0xff]
    %v2665 = vld [vmem:[%s1 + $0x20] sm:$0xff]
    %v2666 = vld [vmem:[%s1 + $0x28] sm:$0xff]
    %v2667 = vld [vmem:[%s1 + $0x30] sm:$0xff]
    %v2668 = vld [vmem:[%s1 + $0x38] sm:$0xff]
    %v2669 = vld [vmem:[%s1 + $0x40] sm:$0xff]
    %v2670 = vld [vmem:[%s1 + $0x48] sm:$0xff]
    %v2671 = vld [vmem:[%s1 + $0x50] sm:$0xff]
    %v2672 = vld [vmem:[%s1 + $0x58] sm:$0xff]
    %v2673 = vld [vmem:[%s1 + $0x60] sm:$0xff]
    %v2674 = vld [vmem:[%s1 + $0x68] sm:$0xff]
    %v2675 = vld [vmem:[%s1 + $0x70] sm:$0xff]
    %v2676 = vld [vmem:[%s1 + $0x78] sm:$0xff]
    %v2677 = vld [vmem:[%s1 + $0x80] sm:$0xff]
    %v2678 = vld [vmem:[%s1 + $0x88] sm:$0xff]
    %v2679 = vld [vmem:[%s1 + $0x90] sm:$0xff]
    %v2680 = vld [vmem:[%s1 + $0x98] sm:$0xff]
    %v2681 = vld [vmem:[%s1 + $0xa0] sm:$0xff]
    %v2682 = vld [vmem:[%s1 + $0xa8] sm:$0xff]
    %v2683 = vld [vmem:[%s1 + $0xb0] sm:$0xff]
    %v2684 = vld [vmem:[%s1 + $0xb8] sm:$0xff]
    %v2685 = vld [vmem:[%s1 + $0xc0] sm:$0xff]
    %v2686 = vld [vmem:[%s1 + $0xc8] sm:$0xff]
    %v2687 = vld [vmem:[%s1 + $0xd0] sm:$0xff]
    %v2688 = vld [vmem:[%s1 + $0xd8] sm:$0xff]
    %v2689 = vld [vmem:[%s1 + $0xe0] sm:$0xff]
    %v2690 = vld [vmem:[%s1 + $0xe8] sm:$0xff]
    %v2691 = vld [vmem:[%s1 + $0xf0] sm:$0xff]
    %v2692 = vld [vmem:[%s1 + $0xf8] sm:$0xff]
    %v2693 = vld [vmem:[%s1 + $0x100] sm:$0xff]
    %v2694 = vld [vmem:[%s1 + $0x108] sm:$0xff]
    %v2695 = vld [vmem:[%s1 + $0x110] sm:$0xff]
    %v2696 = vld [vmem:[%s1 + $0x118] sm:$0xff]
    %v2697 = vld [vmem:[%s1 + $0x120] sm:$0xff]
    %v2698 = vld [vmem:[%s1 + $0x128] sm:$0xff]
    %v2699 = vld [vmem:[%s1 + $0x130] sm:$0xff]
    %v2700 = vld [vmem:[%s1 + $0x138] sm:$0xff]
    %v2701 = vld [vmem:[%s1 + $0x140] sm:$0xff]
    %v2702 = vld [vmem:[%s1 + $0x148] sm:$0xff]
    %v2703 = vld [vmem:[%s1 + $0x150] sm:$0xff]
    %v2704 = vld [vmem:[%s1 + $0x158] sm:$0xff]
    %v2705 = vld [vmem:[%s1 + $0x160] sm:$0xff]
    %v2706 = vld [vmem:[%s1 + $0x168] sm:$0xff]
    %v2707 = vld [vmem:[%s1 + $0x170] sm:$0xff]
    %v2708 = vld [vmem:[%s1 + $0x178] sm:$0xff]
    %v2709 = vld [vmem:[%s1 + $0x180] sm:$0xff]
    %v2710 = vld [vmem:[%s1 + $0x188] sm:$0xff]
    %v2711 = vld [vmem:[%s1 + $0x190] sm:$0xff]
    %v2712 = vld [vmem:[%s1 + $0x198] sm:$0xff]
    %v2713 = vld [vmem:[%s1 + $0x1a0] sm:$0xff]
    %v2714 = vld [vmem:[%s1 + $0x1a8] sm:$0xff]
    %v2715 = vld [vmem:[%s1 + $0x1b0] sm:$0xff]
    %v2716 = vld [vmem:[%s1 + $0x1b8] sm:$0xff]
    %v2717 = vld [vmem:[%s1 + $0x1c0] sm:$0xff]
    %v2718 = vld [vmem:[%s1 + $0x1c8] sm:$0xff]
    %v2719 = vld [vmem:[%s1 + $0x1d0] sm:$0xff]
    %v2720 = vld [vmem:[%s1 + $0x1d8] sm:$0xff]
    %v2721 = vld [vmem:[%s1 + $0x1e0] sm:$0xff]
    %v2722 = vld [vmem:[%s1 + $0x1e8] sm:$0xff]
    %v2723 = vld [vmem:[%s1 + $0x1f0] sm:$0xff]
    %v2724 = vld [vmem:[%s1 + $0x1f8] sm:$0xff]
    %v2725 = vld [vmem:[%s1 + $0x200] sm:$0xff]
    %v2726 = vld [vmem:[%s1 + $0x208] sm:$0xff]
    %v2727 = vld [vmem:[%s1 + $0x210] sm:$0xff]
    %v2728 = vld [vmem:[%s1 + $0x218] sm:$0xff]
    %v2729 = vld [vmem:[%s1 + $0x220] sm:$0xff]
    %v2730 = vld [vmem:[%s1 + $0x228] sm:$0xff]
    %v2731 = vld [vmem:[%s1 + $0x230] sm:$0xff]
    %v2732 = vld [vmem:[%s1 + $0x238] sm:$0xff]
    %v2733 = vld [vmem:[%s1 + $0x240] sm:$0xff]
    %v2734 = vld [vmem:[%s1 + $0x248] sm:$0xff]
    %v2735 = vld [vmem:[%s1 + $0x250] sm:$0xff]
    %v2736 = vld [vmem:[%s1 + $0x258] sm:$0xff]
    %v2737 = vld [vmem:[%s1 + $0x260] sm:$0xff]
    %v2738 = vld [vmem:[%s1 + $0x268] sm:$0xff]
    %v2739 = vld [vmem:[%s1 + $0x270] sm:$0xff]
    %v2740 = vld [vmem:[%s1 + $0x278] sm:$0xff]
    %v2741 = vld [vmem:[%s1 + $0x280] sm:$0xff]
    %v2742 = vld [vmem:[%s1 + $0x288] sm:$0xff]
    %v2743 = vld [vmem:[%s1 + $0x290] sm:$0xff]
    %v2744 = vld [vmem:[%s1 + $0x298] sm:$0xff]
    %v2745 = vld [vmem:[%s1 + $0x2a0] sm:$0xff]
    %v2746 = vld [vmem:[%s1 + $0x2a8] sm:$0xff]
    %v2747 = vld [vmem:[%s1 + $0x2b0] sm:$0xff]
    %v2748 = vld [vmem:[%s1 + $0x2b8] sm:$0xff]
    %v2749 = vld [vmem:[%s1 + $0x2c0] sm:$0xff]
    %v2750 = vld [vmem:[%s1 + $0x2c8] sm:$0xff]
    %v2751 = vld [vmem:[%s1 + $0x2d0] sm:$0xff]
    %v2752 = vld [vmem:[%s1 + $0x2d8] sm:$0xff]
    %v2753 = vld [vmem:[%s1 + $0x2e0] sm:$0xff]
    %v2754 = vld [vmem:[%s1 + $0x2e8] sm:$0xff]
    %v2755 = vld [vmem:[%s1 + $0x2f0] sm:$0xff]
    %v2756 = vld [vmem:[%s1 + $0x2f8] sm:$0xff]
    %v2757 = vld [vmem:[%s1 + $0x300] sm:$0xff]
    %v2758 = vld [vmem:[%s1 + $0x308] sm:$0xff]
    %v2759 = vld [vmem:[%s1 + $0x310] sm:$0xff]
    %v2760 = vld [vmem:[%s1 + $0x318] sm:$0xff]
    %v2761 = vld [vmem:[%s1 + $0x320] sm:$0xff]
    %v2762 = vld [vmem:[%s1 + $0x328] sm:$0xff]
    %v2763 = vld [vmem:[%s1 + $0x330] sm:$0xff]
    %v2764 = vld [vmem:[%s1 + $0x338] sm:$0xff]
    %v2765 = vld [vmem:[%s1 + $0x340] sm:$0xff]
    %v2766 = vld [vmem:[%s1 + $0x348] sm:$0xff]
    %v2767 = vld [vmem:[%s1 + $0x350] sm:$0xff]
    %v2768 = vld [vmem:[%s1 + $0x358] sm:$0xff]
    %v2769 = vld [vmem:[%s1 + $0x360] sm:$0xff]
    %v2770 = vld [vmem:[%s1 + $0x368] sm:$0xff]
    %v2771 = vld [vmem:[%s1 + $0x370] sm:$0xff]
    %v2772 = vld [vmem:[%s1 + $0x378] sm:$0xff]
    %v2773 = vld [vmem:[%s1 + $0x380] sm:$0xff]
    %v2774 = vld [vmem:[%s1 + $0x388] sm:$0xff]
    %v2775 = vld [vmem:[%s1 + $0x390] sm:$0xff]
    %v2776 = vld [vmem:[%s1 + $0x398] sm:$0xff]
    %v2777 = vld [vmem:[%s1 + $0x3a0] sm:$0xff]
    %v2778 = vld [vmem:[%s1 + $0x3a8] sm:$0xff]
    %v2779 = vld [vmem:[%s1 + $0x3b0] sm:$0xff]
    %v2780 = vld [vmem:[%s1 + $0x3b8] sm:$0xff]
    %v2781 = vld [vmem:[%s1 + $0x3c0] sm:$0xff]
    %v2782 = vld [vmem:[%s1 + $0x3c8] sm:$0xff]
    %v2783 = vld [vmem:[%s1 + $0x3d0] sm:$0xff]
    %v2784 = vld [vmem:[%s1 + $0x3d8] sm:$0xff]
    %v2785 = vld [vmem:[%s1 + $0x3e0] sm:$0xff]
    %v2786 = vld [vmem:[%s1 + $0x3e8] sm:$0xff]
    %v2787 = vld [vmem:[%s1 + $0x3f0] sm:$0xff]
    %v2788 = vld [vmem:[%s1 + $0x3f8] sm:$0xff]
    %vm2789 = vcmask 31744
    %v2790 = vsel %vm2789, %v2661, 0.0
    %2791 = vadd.xlane.f32.xlu0 %v2790
    %v2792 = vpop.xlane.xlu0 %2791
    %v2793 = vsel %vm2789, %v2662, 0.0
    %2794 = vadd.xlane.f32.xlu0 %v2793
    %v2795 = vpop.xlane.xlu0 %2794
    %v2796 = vsel %vm2789, %v2663, 0.0
    %2797 = vadd.xlane.f32.xlu0 %v2796
    %v2798 = vpop.xlane.xlu0 %2797
    %v2799 = vsel %vm2789, %v2664, 0.0
    %2800 = vadd.xlane.f32.xlu0 %v2799
    %v2801 = vpop.xlane.xlu0 %2800
    %v2802 = vsel %vm2789, %v2665, 0.0
    %2803 = vadd.xlane.f32.xlu0 %v2802
    %v2804 = vpop.xlane.xlu0 %2803
    %v2805 = vsel %vm2789, %v2666, 0.0
    %2806 = vadd.xlane.f32.xlu0 %v2805
    %v2807 = vpop.xlane.xlu0 %2806
    %v2808 = vsel %vm2789, %v2667, 0.0
    %2809 = vadd.xlane.f32.xlu0 %v2808
    %v2810 = vpop.xlane.xlu0 %2809
    %v2811 = vsel %vm2789, %v2668, 0.0
    %2812 = vadd.xlane.f32.xlu0 %v2811
    %v2813 = vpop.xlane.xlu0 %2812
    %v2814 = vsel %vm2789, %v2669, 0.0
    %2815 = vadd.xlane.f32.xlu0 %v2814
    %v2816 = vpop.xlane.xlu0 %2815
    %v2817 = vsel %vm2789, %v2670, 0.0
    %2818 = vadd.xlane.f32.xlu0 %v2817
    %v2819 = vpop.xlane.xlu0 %2818
    %v2820 = vsel %vm2789, %v2671, 0.0
    %2821 = vadd.xlane.f32.xlu0 %v2820
    %v2822 = vpop.xlane.xlu0 %2821
    %v2823 = vsel %vm2789, %v2672, 0.0
    %2824 = vadd.xlane.f32.xlu0 %v2823
    %v2825 = vpop.xlane.xlu0 %2824
    %v2826 = vsel %vm2789, %v2673, 0.0
    %2827 = vadd.xlane.f32.xlu0 %v2826
    %v2828 = vpop.xlane.xlu0 %2827
    %v2829 = vsel %vm2789, %v2674, 0.0
    %2830 = vadd.xlane.f32.xlu0 %v2829
    %v2831 = vpop.xlane.xlu0 %2830
    %v2832 = vsel %vm2789, %v2675, 0.0
    %2833 = vadd.xlane.f32.xlu0 %v2832
    %v2834 = vpop.xlane.xlu0 %2833
    %v2835 = vsel %vm2789, %v2676, 0.0
    %2836 = vadd.xlane.f32.xlu0 %v2835
    %v2837 = vpop.xlane.xlu0 %2836
    %v2838 = vsel %vm2789, %v2677, 0.0
    %2839 = vadd.xlane.f32.xlu0 %v2838
    %v2840 = vpop.xlane.xlu0 %2839
    %v2841 = vsel %vm2789, %v2678, 0.0
    %2842 = vadd.xlane.f32.xlu0 %v2841
    %v2843 = vpop.xlane.xlu0 %2842
    %v2844 = vsel %vm2789, %v2679, 0.0
    %2845 = vadd.xlane.f32.xlu0 %v2844
    %v2846 = vpop.xlane.xlu0 %2845
    %v2847 = vsel %vm2789, %v2680, 0.0
    %2848 = vadd.xlane.f32.xlu0 %v2847
    %v2849 = vpop.xlane.xlu0 %2848
    %v2850 = vsel %vm2789, %v2681, 0.0
    %2851 = vadd.xlane.f32.xlu0 %v2850
    %v2852 = vpop.xlane.xlu0 %2851
    %v2853 = vsel %vm2789, %v2682, 0.0
    %2854 = vadd.xlane.f32.xlu0 %v2853
    %v2855 = vpop.xlane.xlu0 %2854
    %v2856 = vsel %vm2789, %v2683, 0.0
    %2857 = vadd.xlane.f32.xlu0 %v2856
    %v2858 = vpop.xlane.xlu0 %2857
    %v2859 = vsel %vm2789, %v2684, 0.0
    %2860 = vadd.xlane.f32.xlu0 %v2859
    %v2861 = vpop.xlane.xlu0 %2860
    %v2862 = vsel %vm2789, %v2685, 0.0
    %2863 = vadd.xlane.f32.xlu0 %v2862
    %v2864 = vpop.xlane.xlu0 %2863
    %v2865 = vsel %vm2789, %v2686, 0.0
    %2866 = vadd.xlane.f32.xlu0 %v2865
    %v2867 = vpop.xlane.xlu0 %2866
    %v2868 = vsel %vm2789, %v2687, 0.0
    %2869 = vadd.xlane.f32.xlu0 %v2868
    %v2870 = vpop.xlane.xlu0 %2869
    %v2871 = vsel %vm2789, %v2688, 0.0
    %2872 = vadd.xlane.f32.xlu0 %v2871
    %v2873 = vpop.xlane.xlu0 %2872
    %v2874 = vsel %vm2789, %v2689, 0.0
    %2875 = vadd.xlane.f32.xlu0 %v2874
    %v2876 = vpop.xlane.xlu0 %2875
    %v2877 = vsel %vm2789, %v2690, 0.0
    %2878 = vadd.xlane.f32.xlu0 %v2877
    %v2879 = vpop.xlane.xlu0 %2878
    %v2880 = vsel %vm2789, %v2691, 0.0
    %2881 = vadd.xlane.f32.xlu0 %v2880
    %v2882 = vpop.xlane.xlu0 %2881
    %v2883 = vsel %vm2789, %v2692, 0.0
    %2884 = vadd.xlane.f32.xlu0 %v2883
    %v2885 = vpop.xlane.xlu0 %2884
    %v2886 = vsel %vm2789, %v2693, 0.0
    %2887 = vadd.xlane.f32.xlu0 %v2886
    %v2888 = vpop.xlane.xlu0 %2887
    %v2889 = vsel %vm2789, %v2694, 0.0
    %2890 = vadd.xlane.f32.xlu0 %v2889
    %v2891 = vpop.xlane.xlu0 %2890
    %v2892 = vsel %vm2789, %v2695, 0.0
    %2893 = vadd.xlane.f32.xlu0 %v2892
    %v2894 = vpop.xlane.xlu0 %2893
    %v2895 = vsel %vm2789, %v2696, 0.0
    %2896 = vadd.xlane.f32.xlu0 %v2895
    %v2897 = vpop.xlane.xlu0 %2896
    %v2898 = vsel %vm2789, %v2697, 0.0
    %2899 = vadd.xlane.f32.xlu0 %v2898
    %v2900 = vpop.xlane.xlu0 %2899
    %v2901 = vsel %vm2789, %v2698, 0.0
    %2902 = vadd.xlane.f32.xlu0 %v2901
    %v2903 = vpop.xlane.xlu0 %2902
    %v2904 = vsel %vm2789, %v2699, 0.0
    %2905 = vadd.xlane.f32.xlu0 %v2904
    %v2906 = vpop.xlane.xlu0 %2905
    %v2907 = vsel %vm2789, %v2700, 0.0
    %2908 = vadd.xlane.f32.xlu0 %v2907
    %v2909 = vpop.xlane.xlu0 %2908
    %v2910 = vsel %vm2789, %v2701, 0.0
    %2911 = vadd.xlane.f32.xlu0 %v2910
    %v2912 = vpop.xlane.xlu0 %2911
    %v2913 = vsel %vm2789, %v2702, 0.0
    %2914 = vadd.xlane.f32.xlu0 %v2913
    %v2915 = vpop.xlane.xlu0 %2914
    %v2916 = vsel %vm2789, %v2703, 0.0
    %2917 = vadd.xlane.f32.xlu0 %v2916
    %v2918 = vpop.xlane.xlu0 %2917
    %v2919 = vsel %vm2789, %v2704, 0.0
    %2920 = vadd.xlane.f32.xlu0 %v2919
    %v2921 = vpop.xlane.xlu0 %2920
    %v2922 = vsel %vm2789, %v2705, 0.0
    %2923 = vadd.xlane.f32.xlu0 %v2922
    %v2924 = vpop.xlane.xlu0 %2923
    %v2925 = vsel %vm2789, %v2706, 0.0
    %2926 = vadd.xlane.f32.xlu0 %v2925
    %v2927 = vpop.xlane.xlu0 %2926
    %v2928 = vsel %vm2789, %v2707, 0.0
    %2929 = vadd.xlane.f32.xlu0 %v2928
    %v2930 = vpop.xlane.xlu0 %2929
    %v2931 = vsel %vm2789, %v2708, 0.0
    %2932 = vadd.xlane.f32.xlu0 %v2931
    %v2933 = vpop.xlane.xlu0 %2932
    %v2934 = vsel %vm2789, %v2709, 0.0
    %2935 = vadd.xlane.f32.xlu0 %v2934
    %v2936 = vpop.xlane.xlu0 %2935
    %v2937 = vsel %vm2789, %v2710, 0.0
    %2938 = vadd.xlane.f32.xlu0 %v2937
    %v2939 = vpop.xlane.xlu0 %2938
    %v2940 = vsel %vm2789, %v2711, 0.0
    %2941 = vadd.xlane.f32.xlu0 %v2940
    %v2942 = vpop.xlane.xlu0 %2941
    %v2943 = vsel %vm2789, %v2712, 0.0
    %2944 = vadd.xlane.f32.xlu0 %v2943
    %v2945 = vpop.xlane.xlu0 %2944
    %v2946 = vsel %vm2789, %v2713, 0.0
    %2947 = vadd.xlane.f32.xlu0 %v2946
    %v2948 = vpop.xlane.xlu0 %2947
    %v2949 = vsel %vm2789, %v2714, 0.0
    %2950 = vadd.xlane.f32.xlu0 %v2949
    %v2951 = vpop.xlane.xlu0 %2950
    %v2952 = vsel %vm2789, %v2715, 0.0
    %2953 = vadd.xlane.f32.xlu0 %v2952
    %v2954 = vpop.xlane.xlu0 %2953
    %v2955 = vsel %vm2789, %v2716, 0.0
    %2956 = vadd.xlane.f32.xlu0 %v2955
    %v2957 = vpop.xlane.xlu0 %2956
    %v2958 = vsel %vm2789, %v2717, 0.0
    %2959 = vadd.xlane.f32.xlu0 %v2958
    %v2960 = vpop.xlane.xlu0 %2959
    %v2961 = vsel %vm2789, %v2718, 0.0
    %2962 = vadd.xlane.f32.xlu0 %v2961
    %v2963 = vpop.xlane.xlu0 %2962
    %v2964 = vsel %vm2789, %v2719, 0.0
    %2965 = vadd.xlane.f32.xlu0 %v2964
    %v2966 = vpop.xlane.xlu0 %2965
    %v2967 = vsel %vm2789, %v2720, 0.0
    %2968 = vadd.xlane.f32.xlu0 %v2967
    %v2969 = vpop.xlane.xlu0 %2968
    %v2970 = vsel %vm2789, %v2721, 0.0
    %2971 = vadd.xlane.f32.xlu0 %v2970
    %v2972 = vpop.xlane.xlu0 %2971
    %v2973 = vsel %vm2789, %v2722, 0.0
    %2974 = vadd.xlane.f32.xlu0 %v2973
    %v2975 = vpop.xlane.xlu0 %2974
    %v2976 = vsel %vm2789, %v2723, 0.0
    %2977 = vadd.xlane.f32.xlu0 %v2976
    %v2978 = vpop.xlane.xlu0 %2977
    %v2979 = vsel %vm2789, %v2724, 0.0
    %2980 = vadd.xlane.f32.xlu0 %v2979
    %v2981 = vpop.xlane.xlu0 %2980
    %v2982 = vsel %vm2789, %v2725, 0.0
    %2983 = vadd.xlane.f32.xlu0 %v2982
    %v2984 = vpop.xlane.xlu0 %2983
    %v2985 = vsel %vm2789, %v2726, 0.0
    %2986 = vadd.xlane.f32.xlu0 %v2985
    %v2987 = vpop.xlane.xlu0 %2986
    %v2988 = vsel %vm2789, %v2727, 0.0
    %2989 = vadd.xlane.f32.xlu0 %v2988
    %v2990 = vpop.xlane.xlu0 %2989
    %v2991 = vsel %vm2789, %v2728, 0.0
    %2992 = vadd.xlane.f32.xlu0 %v2991
    %v2993 = vpop.xlane.xlu0 %2992
    %v2994 = vsel %vm2789, %v2729, 0.0
    %2995 = vadd.xlane.f32.xlu0 %v2994
    %v2996 = vpop.xlane.xlu0 %2995
    %v2997 = vsel %vm2789, %v2730, 0.0
    %2998 = vadd.xlane.f32.xlu0 %v2997
    %v2999 = vpop.xlane.xlu0 %2998
    %v3000 = vsel %vm2789, %v2731, 0.0
    %3001 = vadd.xlane.f32.xlu0 %v3000
    %v3002 = vpop.xlane.xlu0 %3001
    %v3003 = vsel %vm2789, %v2732, 0.0
    %3004 = vadd.xlane.f32.xlu0 %v3003
    %v3005 = vpop.xlane.xlu0 %3004
    %v3006 = vsel %vm2789, %v2733, 0.0
    %3007 = vadd.xlane.f32.xlu0 %v3006
    %v3008 = vpop.xlane.xlu0 %3007
    %v3009 = vsel %vm2789, %v2734, 0.0
    %3010 = vadd.xlane.f32.xlu0 %v3009
    %v3011 = vpop.xlane.xlu0 %3010
    %v3012 = vsel %vm2789, %v2735, 0.0
    %3013 = vadd.xlane.f32.xlu0 %v3012
    %v3014 = vpop.xlane.xlu0 %3013
    %v3015 = vsel %vm2789, %v2736, 0.0
    %3016 = vadd.xlane.f32.xlu0 %v3015
    %v3017 = vpop.xlane.xlu0 %3016
    %v3018 = vsel %vm2789, %v2737, 0.0
    %3019 = vadd.xlane.f32.xlu0 %v3018
    %v3020 = vpop.xlane.xlu0 %3019
    %v3021 = vsel %vm2789, %v2738, 0.0
    %3022 = vadd.xlane.f32.xlu0 %v3021
    %v3023 = vpop.xlane.xlu0 %3022
    %v3024 = vsel %vm2789, %v2739, 0.0
    %3025 = vadd.xlane.f32.xlu0 %v3024
    %v3026 = vpop.xlane.xlu0 %3025
    %v3027 = vsel %vm2789, %v2740, 0.0
    %3028 = vadd.xlane.f32.xlu0 %v3027
    %v3029 = vpop.xlane.xlu0 %3028
    %v3030 = vsel %vm2789, %v2741, 0.0
    %3031 = vadd.xlane.f32.xlu0 %v3030
    %v3032 = vpop.xlane.xlu0 %3031
    %v3033 = vsel %vm2789, %v2742, 0.0
    %3034 = vadd.xlane.f32.xlu0 %v3033
    %v3035 = vpop.xlane.xlu0 %3034
    %v3036 = vsel %vm2789, %v2743, 0.0
    %3037 = vadd.xlane.f32.xlu0 %v3036
    %v3038 = vpop.xlane.xlu0 %3037
    %v3039 = vsel %vm2789, %v2744, 0.0
    %3040 = vadd.xlane.f32.xlu0 %v3039
    %v3041 = vpop.xlane.xlu0 %3040
    %v3042 = vsel %vm2789, %v2745, 0.0
    %3043 = vadd.xlane.f32.xlu0 %v3042
    %v3044 = vpop.xlane.xlu0 %3043
    %v3045 = vsel %vm2789, %v2746, 0.0
    %3046 = vadd.xlane.f32.xlu0 %v3045
    %v3047 = vpop.xlane.xlu0 %3046
    %v3048 = vsel %vm2789, %v2747, 0.0
    %3049 = vadd.xlane.f32.xlu0 %v3048
    %v3050 = vpop.xlane.xlu0 %3049
    %v3051 = vsel %vm2789, %v2748, 0.0
    %3052 = vadd.xlane.f32.xlu0 %v3051
    %v3053 = vpop.xlane.xlu0 %3052
    %v3054 = vsel %vm2789, %v2749, 0.0
    %3055 = vadd.xlane.f32.xlu0 %v3054
    %v3056 = vpop.xlane.xlu0 %3055
    %v3057 = vsel %vm2789, %v2750, 0.0
    %3058 = vadd.xlane.f32.xlu0 %v3057
    %v3059 = vpop.xlane.xlu0 %3058
    %v3060 = vsel %vm2789, %v2751, 0.0
    %3061 = vadd.xlane.f32.xlu0 %v3060
    %v3062 = vpop.xlane.xlu0 %3061
    %v3063 = vsel %vm2789, %v2752, 0.0
    %3064 = vadd.xlane.f32.xlu0 %v3063
    %v3065 = vpop.xlane.xlu0 %3064
    %v3066 = vsel %vm2789, %v2753, 0.0
    %3067 = vadd.xlane.f32.xlu0 %v3066
    %v3068 = vpop.xlane.xlu0 %3067
    %v3069 = vsel %vm2789, %v2754, 0.0
    %3070 = vadd.xlane.f32.xlu0 %v3069
    %v3071 = vpop.xlane.xlu0 %3070
    %v3072 = vsel %vm2789, %v2755, 0.0
    %3073 = vadd.xlane.f32.xlu0 %v3072
    %v3074 = vpop.xlane.xlu0 %3073
    %v3075 = vsel %vm2789, %v2756, 0.0
    %3076 = vadd.xlane.f32.xlu0 %v3075
    %v3077 = vpop.xlane.xlu0 %3076
    %v3078 = vsel %vm2789, %v2757, 0.0
    %3079 = vadd.xlane.f32.xlu0 %v3078
    %v3080 = vpop.xlane.xlu0 %3079
    %v3081 = vsel %vm2789, %v2758, 0.0
    %3082 = vadd.xlane.f32.xlu0 %v3081
    %v3083 = vpop.xlane.xlu0 %3082
    %v3084 = vsel %vm2789, %v2759, 0.0
    %3085 = vadd.xlane.f32.xlu0 %v3084
    %v3086 = vpop.xlane.xlu0 %3085
    %v3087 = vsel %vm2789, %v2760, 0.0
    %3088 = vadd.xlane.f32.xlu0 %v3087
    %v3089 = vpop.xlane.xlu0 %3088
    %v3090 = vsel %vm2789, %v2761, 0.0
    %3091 = vadd.xlane.f32.xlu0 %v3090
    %v3092 = vpop.xlane.xlu0 %3091
    %v3093 = vsel %vm2789, %v2762, 0.0
    %3094 = vadd.xlane.f32.xlu0 %v3093
    %v3095 = vpop.xlane.xlu0 %3094
    %v3096 = vsel %vm2789, %v2763, 0.0
    %3097 = vadd.xlane.f32.xlu0 %v3096
    %v3098 = vpop.xlane.xlu0 %3097
    %v3099 = vsel %vm2789, %v2764, 0.0
    %3100 = vadd.xlane.f32.xlu0 %v3099
    %v3101 = vpop.xlane.xlu0 %3100
    %v3102 = vsel %vm2789, %v2765, 0.0
    %3103 = vadd.xlane.f32.xlu0 %v3102
    %v3104 = vpop.xlane.xlu0 %3103
    %v3105 = vsel %vm2789, %v2766, 0.0
    %3106 = vadd.xlane.f32.xlu0 %v3105
    %v3107 = vpop.xlane.xlu0 %3106
    %v3108 = vsel %vm2789, %v2767, 0.0
    %3109 = vadd.xlane.f32.xlu0 %v3108
    %v3110 = vpop.xlane.xlu0 %3109
    %v3111 = vsel %vm2789, %v2768, 0.0
    %3112 = vadd.xlane.f32.xlu0 %v3111
    %v3113 = vpop.xlane.xlu0 %3112
    %v3114 = vsel %vm2789, %v2769, 0.0
    %3115 = vadd.xlane.f32.xlu0 %v3114
    %v3116 = vpop.xlane.xlu0 %3115
    %v3117 = vsel %vm2789, %v2770, 0.0
    %3118 = vadd.xlane.f32.xlu0 %v3117
    %v3119 = vpop.xlane.xlu0 %3118
    %v3120 = vsel %vm2789, %v2771, 0.0
    %3121 = vadd.xlane.f32.xlu0 %v3120
    %v3122 = vpop.xlane.xlu0 %3121
    %v3123 = vsel %vm2789, %v2772, 0.0
    %3124 = vadd.xlane.f32.xlu0 %v3123
    %v3125 = vpop.xlane.xlu0 %3124
    %v3126 = vsel %vm2789, %v2773, 0.0
    %3127 = vadd.xlane.f32.xlu0 %v3126
    %v3128 = vpop.xlane.xlu0 %3127
    %v3129 = vsel %vm2789, %v2774, 0.0
    %3130 = vadd.xlane.f32.xlu0 %v3129
    %v3131 = vpop.xlane.xlu0 %3130
    %v3132 = vsel %vm2789, %v2775, 0.0
    %3133 = vadd.xlane.f32.xlu0 %v3132
    %v3134 = vpop.xlane.xlu0 %3133
    %v3135 = vsel %vm2789, %v2776, 0.0
    %3136 = vadd.xlane.f32.xlu0 %v3135
    %v3137 = vpop.xlane.xlu0 %3136
    %v3138 = vsel %vm2789, %v2777, 0.0
    %3139 = vadd.xlane.f32.xlu0 %v3138
    %v3140 = vpop.xlane.xlu0 %3139
    %v3141 = vsel %vm2789, %v2778, 0.0
    %3142 = vadd.xlane.f32.xlu0 %v3141
    %v3143 = vpop.xlane.xlu0 %3142
    %v3144 = vsel %vm2789, %v2779, 0.0
    %3145 = vadd.xlane.f32.xlu0 %v3144
    %v3146 = vpop.xlane.xlu0 %3145
    %v3147 = vsel %vm2789, %v2780, 0.0
    %3148 = vadd.xlane.f32.xlu0 %v3147
    %v3149 = vpop.xlane.xlu0 %3148
    %v3150 = vsel %vm2789, %v2781, 0.0
    %3151 = vadd.xlane.f32.xlu0 %v3150
    %v3152 = vpop.xlane.xlu0 %3151
    %v3153 = vsel %vm2789, %v2782, 0.0
    %3154 = vadd.xlane.f32.xlu0 %v3153
    %v3155 = vpop.xlane.xlu0 %3154
    %v3156 = vsel %vm2789, %v2783, 0.0
    %3157 = vadd.xlane.f32.xlu0 %v3156
    %v3158 = vpop.xlane.xlu0 %3157
    %v3159 = vsel %vm2789, %v2784, 0.0
    %3160 = vadd.xlane.f32.xlu0 %v3159
    %v3161 = vpop.xlane.xlu0 %3160
    %v3162 = vsel %vm2789, %v2785, 0.0
    %3163 = vadd.xlane.f32.xlu0 %v3162
    %v3164 = vpop.xlane.xlu0 %3163
    %v3165 = vsel %vm2789, %v2786, 0.0
    %3166 = vadd.xlane.f32.xlu0 %v3165
    %v3167 = vpop.xlane.xlu0 %3166
    %v3168 = vsel %vm2789, %v2787, 0.0
    %3169 = vadd.xlane.f32.xlu0 %v3168
    %v3170 = vpop.xlane.xlu0 %3169
    %v3171 = vsel %vm2789, %v2788, 0.0
    %3172 = vadd.xlane.f32.xlu0 %v3171
    %v3173 = vpop.xlane.xlu0 %3172
    %v3174 = vmul.f32 %v2792, %v2149
    %v3175 = vmul.f32 %v2795, %v2151
    %v3176 = vmul.f32 %v2798, %v2153
    %v3177 = vmul.f32 %v2801, %v2155
    %v3178 = vmul.f32 %v2804, %v2157
    %v3179 = vmul.f32 %v2807, %v2159
    %v3180 = vmul.f32 %v2810, %v2161
    %v3181 = vmul.f32 %v2813, %v2163
    %v3182 = vmul.f32 %v2816, %v2165
    %v3183 = vmul.f32 %v2819, %v2167
    %v3184 = vmul.f32 %v2822, %v2169
    %v3185 = vmul.f32 %v2825, %v2171
    %v3186 = vmul.f32 %v2828, %v2173
    %v3187 = vmul.f32 %v2831, %v2175
    %v3188 = vmul.f32 %v2834, %v2177
    %v3189 = vmul.f32 %v2837, %v2179
    %v3190 = vmul.f32 %v2840, %v2181
    %v3191 = vmul.f32 %v2843, %v2183
    %v3192 = vmul.f32 %v2846, %v2185
    %v3193 = vmul.f32 %v2849, %v2187
    %v3194 = vmul.f32 %v2852, %v2189
    %v3195 = vmul.f32 %v2855, %v2191
    %v3196 = vmul.f32 %v2858, %v2193
    %v3197 = vmul.f32 %v2861, %v2195
    %v3198 = vmul.f32 %v2864, %v2197
    %v3199 = vmul.f32 %v2867, %v2199
    %v3200 = vmul.f32 %v2870, %v2201
    %v3201 = vmul.f32 %v2873, %v2203
    %v3202 = vmul.f32 %v2876, %v2205
    %v3203 = vmul.f32 %v2879, %v2207
    %v3204 = vmul.f32 %v2882, %v2209
    %v3205 = vmul.f32 %v2885, %v2211
    %v3206 = vmul.f32 %v2888, %v2213
    %v3207 = vmul.f32 %v2891, %v2215
    %v3208 = vmul.f32 %v2894, %v2217
    %v3209 = vmul.f32 %v2897, %v2219
    %v3210 = vmul.f32 %v2900, %v2221
    %v3211 = vmul.f32 %v2903, %v2223
    %v3212 = vmul.f32 %v2906, %v2225
    %v3213 = vmul.f32 %v2909, %v2227
    %v3214 = vmul.f32 %v2912, %v2229
    %v3215 = vmul.f32 %v2915, %v2231
    %v3216 = vmul.f32 %v2918, %v2233
    %v3217 = vmul.f32 %v2921, %v2235
    %v3218 = vmul.f32 %v2924, %v2237
    %v3219 = vmul.f32 %v2927, %v2239
    %v3220 = vmul.f32 %v2930, %v2241
    %v3221 = vmul.f32 %v2933, %v2243
    %v3222 = vmul.f32 %v2936, %v2245
    %v3223 = vmul.f32 %v2939, %v2247
    %v3224 = vmul.f32 %v2942, %v2249
    %v3225 = vmul.f32 %v2945, %v2251
    %v3226 = vmul.f32 %v2948, %v2253
    %v3227 = vmul.f32 %v2951, %v2255
    %v3228 = vmul.f32 %v2954, %v2257
    %v3229 = vmul.f32 %v2957, %v2259
    %v3230 = vmul.f32 %v2960, %v2261
    %v3231 = vmul.f32 %v2963, %v2263
    %v3232 = vmul.f32 %v2966, %v2265
    %v3233 = vmul.f32 %v2969, %v2267
    %v3234 = vmul.f32 %v2972, %v2269
    %v3235 = vmul.f32 %v2975, %v2271
    %v3236 = vmul.f32 %v2978, %v2273
    %v3237 = vmul.f32 %v2981, %v2275
    %v3238 = vmul.f32 %v2984, %v2277
    %v3239 = vmul.f32 %v2987, %v2279
    %v3240 = vmul.f32 %v2990, %v2281
    %v3241 = vmul.f32 %v2993, %v2283
    %v3242 = vmul.f32 %v2996, %v2285
    %v3243 = vmul.f32 %v2999, %v2287
    %v3244 = vmul.f32 %v3002, %v2289
    %v3245 = vmul.f32 %v3005, %v2291
    %v3246 = vmul.f32 %v3008, %v2293
    %v3247 = vmul.f32 %v3011, %v2295
    %v3248 = vmul.f32 %v3014, %v2297
    %v3249 = vmul.f32 %v3017, %v2299
    %v3250 = vmul.f32 %v3020, %v2301
    %v3251 = vmul.f32 %v3023, %v2303
    %v3252 = vmul.f32 %v3026, %v2305
    %v3253 = vmul.f32 %v3029, %v2307
    %v3254 = vmul.f32 %v3032, %v2309
    %v3255 = vmul.f32 %v3035, %v2311
    %v3256 = vmul.f32 %v3038, %v2313
    %v3257 = vmul.f32 %v3041, %v2315
    %v3258 = vmul.f32 %v3044, %v2317
    %v3259 = vmul.f32 %v3047, %v2319
    %v3260 = vmul.f32 %v3050, %v2321
    %v3261 = vmul.f32 %v3053, %v2323
    %v3262 = vmul.f32 %v3056, %v2325
    %v3263 = vmul.f32 %v3059, %v2327
    %v3264 = vmul.f32 %v3062, %v2329
    %v3265 = vmul.f32 %v3065, %v2331
    %v3266 = vmul.f32 %v3068, %v2333
    %v3267 = vmul.f32 %v3071, %v2335
    %v3268 = vmul.f32 %v3074, %v2337
    %v3269 = vmul.f32 %v3077, %v2339
    %v3270 = vmul.f32 %v3080, %v2341
    %v3271 = vmul.f32 %v3083, %v2343
    %v3272 = vmul.f32 %v3086, %v2345
    %v3273 = vmul.f32 %v3089, %v2347
    %v3274 = vmul.f32 %v3092, %v2349
    %v3275 = vmul.f32 %v3095, %v2351
    %v3276 = vmul.f32 %v3098, %v2353
    %v3277 = vmul.f32 %v3101, %v2355
    %v3278 = vmul.f32 %v3104, %v2357
    %v3279 = vmul.f32 %v3107, %v2359
    %v3280 = vmul.f32 %v3110, %v2361
    %v3281 = vmul.f32 %v3113, %v2363
    %v3282 = vmul.f32 %v3116, %v2365
    %v3283 = vmul.f32 %v3119, %v2367
    %v3284 = vmul.f32 %v3122, %v2369
    %v3285 = vmul.f32 %v3125, %v2371
    %v3286 = vmul.f32 %v3128, %v2373
    %v3287 = vmul.f32 %v3131, %v2375
    %v3288 = vmul.f32 %v3134, %v2377
    %v3289 = vmul.f32 %v3137, %v2379
    %v3290 = vmul.f32 %v3140, %v2381
    %v3291 = vmul.f32 %v3143, %v2383
    %v3292 = vmul.f32 %v3146, %v2385
    %v3293 = vmul.f32 %v3149, %v2387
    %v3294 = vmul.f32 %v3152, %v2389
    %v3295 = vmul.f32 %v3155, %v2391
    %v3296 = vmul.f32 %v3158, %v2393
    %v3297 = vmul.f32 %v3161, %v2395
    %v3298 = vmul.f32 %v3164, %v2397
    %v3299 = vmul.f32 %v3167, %v2399
    %v3300 = vmul.f32 %v3170, %v2401
    %v3301 = vmul.f32 %v3173, %v2403
    %v3302 = vadd.f32 %v1172, %v3174
    %v3303 = vadd.f32 %v1174, %v3175
    %v3304 = vadd.f32 %v1177, %v3176
    %v3305 = vadd.f32 %v1179, %v3177
    %v3306 = vadd.f32 %v1182, %v3178
    %v3307 = vadd.f32 %v1184, %v3179
    %v3308 = vadd.f32 %v1187, %v3180
    %v3309 = vadd.f32 %v1189, %v3181
    %v3310 = vadd.f32 %v1192, %v3182
    %v3311 = vadd.f32 %v1194, %v3183
    %v3312 = vadd.f32 %v1197, %v3184
    %v3313 = vadd.f32 %v1199, %v3185
    %v3314 = vadd.f32 %v1202, %v3186
    %v3315 = vadd.f32 %v1204, %v3187
    %v3316 = vadd.f32 %v1207, %v3188
    %v3317 = vadd.f32 %v1209, %v3189
    %v3318 = vadd.f32 %v1212, %v3190
    %v3319 = vadd.f32 %v1214, %v3191
    %v3320 = vadd.f32 %v1217, %v3192
    %v3321 = vadd.f32 %v1219, %v3193
    %v3322 = vadd.f32 %v1222, %v3194
    %v3323 = vadd.f32 %v1224, %v3195
    %v3324 = vadd.f32 %v1227, %v3196
    %v3325 = vadd.f32 %v1229, %v3197
    %v3326 = vadd.f32 %v1232, %v3198
    %v3327 = vadd.f32 %v1234, %v3199
    %v3328 = vadd.f32 %v1237, %v3200
    %v3329 = vadd.f32 %v1239, %v3201
    %v3330 = vadd.f32 %v1242, %v3202
    %v3331 = vadd.f32 %v1244, %v3203
    %v3332 = vadd.f32 %v1247, %v3204
    %v3333 = vadd.f32 %v1249, %v3205
    %v3334 = vadd.f32 %v1252, %v3206
    %v3335 = vadd.f32 %v1254, %v3207
    %v3336 = vadd.f32 %v1257, %v3208
    %v3337 = vadd.f32 %v1259, %v3209
    %v3338 = vadd.f32 %v1262, %v3210
    %v3339 = vadd.f32 %v1264, %v3211
    %v3340 = vadd.f32 %v1267, %v3212
    %v3341 = vadd.f32 %v1269, %v3213
    %v3342 = vadd.f32 %v1272, %v3214
    %v3343 = vadd.f32 %v1274, %v3215
    %v3344 = vadd.f32 %v1277, %v3216
    %v3345 = vadd.f32 %v1279, %v3217
    %v3346 = vadd.f32 %v1282, %v3218
    %v3347 = vadd.f32 %v1284, %v3219
    %v3348 = vadd.f32 %v1287, %v3220
    %v3349 = vadd.f32 %v1289, %v3221
    %v3350 = vadd.f32 %v1292, %v3222
    %v3351 = vadd.f32 %v1294, %v3223
    %v3352 = vadd.f32 %v1297, %v3224
    %v3353 = vadd.f32 %v1299, %v3225
    %v3354 = vadd.f32 %v1302, %v3226
    %v3355 = vadd.f32 %v1304, %v3227
    %v3356 = vadd.f32 %v1307, %v3228
    %v3357 = vadd.f32 %v1309, %v3229
    %v3358 = vadd.f32 %v1312, %v3230
    %v3359 = vadd.f32 %v1314, %v3231
    %v3360 = vadd.f32 %v1317, %v3232
    %v3361 = vadd.f32 %v1319, %v3233
    %v3362 = vadd.f32 %v1322, %v3234
    %v3363 = vadd.f32 %v1324, %v3235
    %v3364 = vadd.f32 %v1327, %v3236
    %v3365 = vadd.f32 %v1329, %v3237
    %v3366 = vadd.f32 %v1332, %v3238
    %v3367 = vadd.f32 %v1334, %v3239
    %v3368 = vadd.f32 %v1337, %v3240
    %v3369 = vadd.f32 %v1339, %v3241
    %v3370 = vadd.f32 %v1342, %v3242
    %v3371 = vadd.f32 %v1344, %v3243
    %v3372 = vadd.f32 %v1347, %v3244
    %v3373 = vadd.f32 %v1349, %v3245
    %v3374 = vadd.f32 %v1352, %v3246
    %v3375 = vadd.f32 %v1354, %v3247
    %v3376 = vadd.f32 %v1357, %v3248
    %v3377 = vadd.f32 %v1359, %v3249
    %v3378 = vadd.f32 %v1362, %v3250
    %v3379 = vadd.f32 %v1364, %v3251
    %v3380 = vadd.f32 %v1367, %v3252
    %v3381 = vadd.f32 %v1369, %v3253
    %v3382 = vadd.f32 %v1372, %v3254
    %v3383 = vadd.f32 %v1374, %v3255
    %v3384 = vadd.f32 %v1377, %v3256
    %v3385 = vadd.f32 %v1379, %v3257
    %v3386 = vadd.f32 %v1382, %v3258
    %v3387 = vadd.f32 %v1384, %v3259
    %v3388 = vadd.f32 %v1387, %v3260
    %v3389 = vadd.f32 %v1389, %v3261
    %v3390 = vadd.f32 %v1392, %v3262
    %v3391 = vadd.f32 %v1394, %v3263
    %v3392 = vadd.f32 %v1397, %v3264
    %v3393 = vadd.f32 %v1399, %v3265
    %v3394 = vadd.f32 %v1402, %v3266
    %v3395 = vadd.f32 %v1404, %v3267
    %v3396 = vadd.f32 %v1407, %v3268
    %v3397 = vadd.f32 %v1409, %v3269
    %v3398 = vadd.f32 %v1412, %v3270
    %v3399 = vadd.f32 %v1414, %v3271
    %v3400 = vadd.f32 %v1417, %v3272
    %v3401 = vadd.f32 %v1419, %v3273
    %v3402 = vadd.f32 %v1422, %v3274
    %v3403 = vadd.f32 %v1424, %v3275
    %v3404 = vadd.f32 %v1427, %v3276
    %v3405 = vadd.f32 %v1429, %v3277
    %v3406 = vadd.f32 %v1432, %v3278
    %v3407 = vadd.f32 %v1434, %v3279
    %v3408 = vadd.f32 %v1437, %v3280
    %v3409 = vadd.f32 %v1439, %v3281
    %v3410 = vadd.f32 %v1442, %v3282
    %v3411 = vadd.f32 %v1444, %v3283
    %v3412 = vadd.f32 %v1447, %v3284
    %v3413 = vadd.f32 %v1449, %v3285
    %v3414 = vadd.f32 %v1452, %v3286
    %v3415 = vadd.f32 %v1454, %v3287
    %v3416 = vadd.f32 %v1457, %v3288
    %v3417 = vadd.f32 %v1459, %v3289
    %v3418 = vadd.f32 %v1462, %v3290
    %v3419 = vadd.f32 %v1464, %v3291
    %v3420 = vadd.f32 %v1467, %v3292
    %v3421 = vadd.f32 %v1469, %v3293
    %v3422 = vadd.f32 %v1472, %v3294
    %v3423 = vadd.f32 %v1474, %v3295
    %v3424 = vadd.f32 %v1477, %v3296
    %v3425 = vadd.f32 %v1479, %v3297
    %v3426 = vadd.f32 %v1482, %v3298
    %v3427 = vadd.f32 %v1484, %v3299
    %v3428 = vadd.f32 %v1487, %v3300
    %v3429 = vadd.f32 %v1489, %v3301
    %3558 = vrot.lane.b32.xlu0 %v2661, 124
    %v3559 = vpop.permute.xlu0 %3558
    %3560 = vrot.lane.b32.xlu0 %v2662, 124
    %v3561 = vpop.permute.xlu0 %3560
    %3562 = vrot.lane.b32.xlu0 %v2663, 124
    %v3563 = vpop.permute.xlu0 %3562
    %3564 = vrot.lane.b32.xlu0 %v2664, 124
    %v3565 = vpop.permute.xlu0 %3564
    %3566 = vrot.lane.b32.xlu0 %v2665, 124
    %v3567 = vpop.permute.xlu0 %3566
    %3568 = vrot.lane.b32.xlu0 %v2666, 124
    %v3569 = vpop.permute.xlu0 %3568
    %3570 = vrot.lane.b32.xlu0 %v2667, 124
    %v3571 = vpop.permute.xlu0 %3570
    %3572 = vrot.lane.b32.xlu0 %v2668, 124
    %v3573 = vpop.permute.xlu0 %3572
    %3574 = vrot.lane.b32.xlu0 %v2669, 124
    %v3575 = vpop.permute.xlu0 %3574
    %3576 = vrot.lane.b32.xlu0 %v2670, 124
    %v3577 = vpop.permute.xlu0 %3576
    %3578 = vrot.lane.b32.xlu0 %v2671, 124
    %v3579 = vpop.permute.xlu0 %3578
    %3580 = vrot.lane.b32.xlu0 %v2672, 124
    %v3581 = vpop.permute.xlu0 %3580
    %3582 = vrot.lane.b32.xlu0 %v2673, 124
    %v3583 = vpop.permute.xlu0 %3582
    %3584 = vrot.lane.b32.xlu0 %v2674, 124
    %v3585 = vpop.permute.xlu0 %3584
    %3586 = vrot.lane.b32.xlu0 %v2675, 124
    %v3587 = vpop.permute.xlu0 %3586
    %3588 = vrot.lane.b32.xlu0 %v2676, 124
    %v3589 = vpop.permute.xlu0 %3588
    %3590 = vrot.lane.b32.xlu0 %v2677, 124
    %v3591 = vpop.permute.xlu0 %3590
    %3592 = vrot.lane.b32.xlu0 %v2678, 124
    %v3593 = vpop.permute.xlu0 %3592
    %3594 = vrot.lane.b32.xlu0 %v2679, 124
    %v3595 = vpop.permute.xlu0 %3594
    %3596 = vrot.lane.b32.xlu0 %v2680, 124
    %v3597 = vpop.permute.xlu0 %3596
    %3598 = vrot.lane.b32.xlu0 %v2681, 124
    %v3599 = vpop.permute.xlu0 %3598
    %3600 = vrot.lane.b32.xlu0 %v2682, 124
    %v3601 = vpop.permute.xlu0 %3600
    %3602 = vrot.lane.b32.xlu0 %v2683, 124
    %v3603 = vpop.permute.xlu0 %3602
    %3604 = vrot.lane.b32.xlu0 %v2684, 124
    %v3605 = vpop.permute.xlu0 %3604
    %3606 = vrot.lane.b32.xlu0 %v2685, 124
    %v3607 = vpop.permute.xlu0 %3606
    %3608 = vrot.lane.b32.xlu0 %v2686, 124
    %v3609 = vpop.permute.xlu0 %3608
    %3610 = vrot.lane.b32.xlu0 %v2687, 124
    %v3611 = vpop.permute.xlu0 %3610
    %3612 = vrot.lane.b32.xlu0 %v2688, 124
    %v3613 = vpop.permute.xlu0 %3612
    %3614 = vrot.lane.b32.xlu0 %v2689, 124
    %v3615 = vpop.permute.xlu0 %3614
    %3616 = vrot.lane.b32.xlu0 %v2690, 124
    %v3617 = vpop.permute.xlu0 %3616
    %3618 = vrot.lane.b32.xlu0 %v2691, 124
    %v3619 = vpop.permute.xlu0 %3618
    %3620 = vrot.lane.b32.xlu0 %v2692, 124
    %v3621 = vpop.permute.xlu0 %3620
    %3622 = vrot.lane.b32.xlu0 %v2693, 124
    %v3623 = vpop.permute.xlu0 %3622
    %3624 = vrot.lane.b32.xlu0 %v2694, 124
    %v3625 = vpop.permute.xlu0 %3624
    %3626 = vrot.lane.b32.xlu0 %v2695, 124
    %v3627 = vpop.permute.xlu0 %3626
    %3628 = vrot.lane.b32.xlu0 %v2696, 124
    %v3629 = vpop.permute.xlu0 %3628
    %3630 = vrot.lane.b32.xlu0 %v2697, 124
    %v3631 = vpop.permute.xlu0 %3630
    %3632 = vrot.lane.b32.xlu0 %v2698, 124
    %v3633 = vpop.permute.xlu0 %3632
    %3634 = vrot.lane.b32.xlu0 %v2699, 124
    %v3635 = vpop.permute.xlu0 %3634
    %3636 = vrot.lane.b32.xlu0 %v2700, 124
    %v3637 = vpop.permute.xlu0 %3636
    %3638 = vrot.lane.b32.xlu0 %v2701, 124
    %v3639 = vpop.permute.xlu0 %3638
    %3640 = vrot.lane.b32.xlu0 %v2702, 124
    %v3641 = vpop.permute.xlu0 %3640
    %3642 = vrot.lane.b32.xlu0 %v2703, 124
    %v3643 = vpop.permute.xlu0 %3642
    %3644 = vrot.lane.b32.xlu0 %v2704, 124
    %v3645 = vpop.permute.xlu0 %3644
    %3646 = vrot.lane.b32.xlu0 %v2705, 124
    %v3647 = vpop.permute.xlu0 %3646
    %3648 = vrot.lane.b32.xlu0 %v2706, 124
    %v3649 = vpop.permute.xlu0 %3648
    %3650 = vrot.lane.b32.xlu0 %v2707, 124
    %v3651 = vpop.permute.xlu0 %3650
    %3652 = vrot.lane.b32.xlu0 %v2708, 124
    %v3653 = vpop.permute.xlu0 %3652
    %3654 = vrot.lane.b32.xlu0 %v2709, 124
    %v3655 = vpop.permute.xlu0 %3654
    %3656 = vrot.lane.b32.xlu0 %v2710, 124
    %v3657 = vpop.permute.xlu0 %3656
    %3658 = vrot.lane.b32.xlu0 %v2711, 124
    %v3659 = vpop.permute.xlu0 %3658
    %3660 = vrot.lane.b32.xlu0 %v2712, 124
    %v3661 = vpop.permute.xlu0 %3660
    %3662 = vrot.lane.b32.xlu0 %v2713, 124
    %v3663 = vpop.permute.xlu0 %3662
    %3664 = vrot.lane.b32.xlu0 %v2714, 124
    %v3665 = vpop.permute.xlu0 %3664
    %3666 = vrot.lane.b32.xlu0 %v2715, 124
    %v3667 = vpop.permute.xlu0 %3666
    %3668 = vrot.lane.b32.xlu0 %v2716, 124
    %v3669 = vpop.permute.xlu0 %3668
    %3670 = vrot.lane.b32.xlu0 %v2717, 124
    %v3671 = vpop.permute.xlu0 %3670
    %3672 = vrot.lane.b32.xlu0 %v2718, 124
    %v3673 = vpop.permute.xlu0 %3672
    %3674 = vrot.lane.b32.xlu0 %v2719, 124
    %v3675 = vpop.permute.xlu0 %3674
    %3676 = vrot.lane.b32.xlu0 %v2720, 124
    %v3677 = vpop.permute.xlu0 %3676
    %3678 = vrot.lane.b32.xlu0 %v2721, 124
    %v3679 = vpop.permute.xlu0 %3678
    %3680 = vrot.lane.b32.xlu0 %v2722, 124
    %v3681 = vpop.permute.xlu0 %3680
    %3682 = vrot.lane.b32.xlu0 %v2723, 124
    %v3683 = vpop.permute.xlu0 %3682
    %3684 = vrot.lane.b32.xlu0 %v2724, 124
    %v3685 = vpop.permute.xlu0 %3684
    %3686 = vrot.lane.b32.xlu0 %v2725, 124
    %v3687 = vpop.permute.xlu0 %3686
    %3688 = vrot.lane.b32.xlu0 %v2726, 124
    %v3689 = vpop.permute.xlu0 %3688
    %3690 = vrot.lane.b32.xlu0 %v2727, 124
    %v3691 = vpop.permute.xlu0 %3690
    %3692 = vrot.lane.b32.xlu0 %v2728, 124
    %v3693 = vpop.permute.xlu0 %3692
    %3694 = vrot.lane.b32.xlu0 %v2729, 124
    %v3695 = vpop.permute.xlu0 %3694
    %3696 = vrot.lane.b32.xlu0 %v2730, 124
    %v3697 = vpop.permute.xlu0 %3696
    %3698 = vrot.lane.b32.xlu0 %v2731, 124
    %v3699 = vpop.permute.xlu0 %3698
    %3700 = vrot.lane.b32.xlu0 %v2732, 124
    %v3701 = vpop.permute.xlu0 %3700
    %3702 = vrot.lane.b32.xlu0 %v2733, 124
    %v3703 = vpop.permute.xlu0 %3702
    %3704 = vrot.lane.b32.xlu0 %v2734, 124
    %v3705 = vpop.permute.xlu0 %3704
    %3706 = vrot.lane.b32.xlu0 %v2735, 124
    %v3707 = vpop.permute.xlu0 %3706
    %3708 = vrot.lane.b32.xlu0 %v2736, 124
    %v3709 = vpop.permute.xlu0 %3708
    %3710 = vrot.lane.b32.xlu0 %v2737, 124
    %v3711 = vpop.permute.xlu0 %3710
    %3712 = vrot.lane.b32.xlu0 %v2738, 124
    %v3713 = vpop.permute.xlu0 %3712
    %3714 = vrot.lane.b32.xlu0 %v2739, 124
    %v3715 = vpop.permute.xlu0 %3714
    %3716 = vrot.lane.b32.xlu0 %v2740, 124
    %v3717 = vpop.permute.xlu0 %3716
    %3718 = vrot.lane.b32.xlu0 %v2741, 124
    %v3719 = vpop.permute.xlu0 %3718
    %3720 = vrot.lane.b32.xlu0 %v2742, 124
    %v3721 = vpop.permute.xlu0 %3720
    %3722 = vrot.lane.b32.xlu0 %v2743, 124
    %v3723 = vpop.permute.xlu0 %3722
    %3724 = vrot.lane.b32.xlu0 %v2744, 124
    %v3725 = vpop.permute.xlu0 %3724
    %3726 = vrot.lane.b32.xlu0 %v2745, 124
    %v3727 = vpop.permute.xlu0 %3726
    %3728 = vrot.lane.b32.xlu0 %v2746, 124
    %v3729 = vpop.permute.xlu0 %3728
    %3730 = vrot.lane.b32.xlu0 %v2747, 124
    %v3731 = vpop.permute.xlu0 %3730
    %3732 = vrot.lane.b32.xlu0 %v2748, 124
    %v3733 = vpop.permute.xlu0 %3732
    %3734 = vrot.lane.b32.xlu0 %v2749, 124
    %v3735 = vpop.permute.xlu0 %3734
    %3736 = vrot.lane.b32.xlu0 %v2750, 124
    %v3737 = vpop.permute.xlu0 %3736
    %3738 = vrot.lane.b32.xlu0 %v2751, 124
    %v3739 = vpop.permute.xlu0 %3738
    %3740 = vrot.lane.b32.xlu0 %v2752, 124
    %v3741 = vpop.permute.xlu0 %3740
    %3742 = vrot.lane.b32.xlu0 %v2753, 124
    %v3743 = vpop.permute.xlu0 %3742
    %3744 = vrot.lane.b32.xlu0 %v2754, 124
    %v3745 = vpop.permute.xlu0 %3744
    %3746 = vrot.lane.b32.xlu0 %v2755, 124
    %v3747 = vpop.permute.xlu0 %3746
    %3748 = vrot.lane.b32.xlu0 %v2756, 124
    %v3749 = vpop.permute.xlu0 %3748
    %3750 = vrot.lane.b32.xlu0 %v2757, 124
    %v3751 = vpop.permute.xlu0 %3750
    %3752 = vrot.lane.b32.xlu0 %v2758, 124
    %v3753 = vpop.permute.xlu0 %3752
    %3754 = vrot.lane.b32.xlu0 %v2759, 124
    %v3755 = vpop.permute.xlu0 %3754
    %3756 = vrot.lane.b32.xlu0 %v2760, 124
    %v3757 = vpop.permute.xlu0 %3756
    %3758 = vrot.lane.b32.xlu0 %v2761, 124
    %v3759 = vpop.permute.xlu0 %3758
    %3760 = vrot.lane.b32.xlu0 %v2762, 124
    %v3761 = vpop.permute.xlu0 %3760
    %3762 = vrot.lane.b32.xlu0 %v2763, 124
    %v3763 = vpop.permute.xlu0 %3762
    %3764 = vrot.lane.b32.xlu0 %v2764, 124
    %v3765 = vpop.permute.xlu0 %3764
    %3766 = vrot.lane.b32.xlu0 %v2765, 124
    %v3767 = vpop.permute.xlu0 %3766
    %3768 = vrot.lane.b32.xlu0 %v2766, 124
    %v3769 = vpop.permute.xlu0 %3768
    %3770 = vrot.lane.b32.xlu0 %v2767, 124
    %v3771 = vpop.permute.xlu0 %3770
    %3772 = vrot.lane.b32.xlu0 %v2768, 124
    %v3773 = vpop.permute.xlu0 %3772
    %3774 = vrot.lane.b32.xlu0 %v2769, 124
    %v3775 = vpop.permute.xlu0 %3774
    %3776 = vrot.lane.b32.xlu0 %v2770, 124
    %v3777 = vpop.permute.xlu0 %3776
    %3778 = vrot.lane.b32.xlu0 %v2771, 124
    %v3779 = vpop.permute.xlu0 %3778
    %3780 = vrot.lane.b32.xlu0 %v2772, 124
    %v3781 = vpop.permute.xlu0 %3780
    %3782 = vrot.lane.b32.xlu0 %v2773, 124
    %v3783 = vpop.permute.xlu0 %3782
    %3784 = vrot.lane.b32.xlu0 %v2774, 124
    %v3785 = vpop.permute.xlu0 %3784
    %3786 = vrot.lane.b32.xlu0 %v2775, 124
    %v3787 = vpop.permute.xlu0 %3786
    %3788 = vrot.lane.b32.xlu0 %v2776, 124
    %v3789 = vpop.permute.xlu0 %3788
    %3790 = vrot.lane.b32.xlu0 %v2777, 124
    %v3791 = vpop.permute.xlu0 %3790
    %3792 = vrot.lane.b32.xlu0 %v2778, 124
    %v3793 = vpop.permute.xlu0 %3792
    %3794 = vrot.lane.b32.xlu0 %v2779, 124
    %v3795 = vpop.permute.xlu0 %3794
    %3796 = vrot.lane.b32.xlu0 %v2780, 124
    %v3797 = vpop.permute.xlu0 %3796
    %3798 = vrot.lane.b32.xlu0 %v2781, 124
    %v3799 = vpop.permute.xlu0 %3798
    %3800 = vrot.lane.b32.xlu0 %v2782, 124
    %v3801 = vpop.permute.xlu0 %3800
    %3802 = vrot.lane.b32.xlu0 %v2783, 124
    %v3803 = vpop.permute.xlu0 %3802
    %3804 = vrot.lane.b32.xlu0 %v2784, 124
    %v3805 = vpop.permute.xlu0 %3804
    %3806 = vrot.lane.b32.xlu0 %v2785, 124
    %v3807 = vpop.permute.xlu0 %3806
    %3808 = vrot.lane.b32.xlu0 %v2786, 124
    %v3809 = vpop.permute.xlu0 %3808
    %3810 = vrot.lane.b32.xlu0 %v2787, 124
    %v3811 = vpop.permute.xlu0 %3810
    %3812 = vrot.lane.b32.xlu0 %v2788, 124
    %v3813 = vpop.permute.xlu0 %3812
    %v3942 = vsel %vm2789, %v3559, 0.0
    %3943 = vadd.xlane.f32.xlu0 %v3942
    %v3944 = vpop.xlane.xlu0 %3943
    %v3945 = vsel %vm2789, %v3561, 0.0
    %3946 = vadd.xlane.f32.xlu0 %v3945
    %v3947 = vpop.xlane.xlu0 %3946
    %v3948 = vsel %vm2789, %v3563, 0.0
    %3949 = vadd.xlane.f32.xlu0 %v3948
    %v3950 = vpop.xlane.xlu0 %3949
    %v3951 = vsel %vm2789, %v3565, 0.0
    %3952 = vadd.xlane.f32.xlu0 %v3951
    %v3953 = vpop.xlane.xlu0 %3952
    %v3954 = vsel %vm2789, %v3567, 0.0
    %3955 = vadd.xlane.f32.xlu0 %v3954
    %v3956 = vpop.xlane.xlu0 %3955
    %v3957 = vsel %vm2789, %v3569, 0.0
    %3958 = vadd.xlane.f32.xlu0 %v3957
    %v3959 = vpop.xlane.xlu0 %3958
    %v3960 = vsel %vm2789, %v3571, 0.0
    %3961 = vadd.xlane.f32.xlu0 %v3960
    %v3962 = vpop.xlane.xlu0 %3961
    %v3963 = vsel %vm2789, %v3573, 0.0
    %3964 = vadd.xlane.f32.xlu0 %v3963
    %v3965 = vpop.xlane.xlu0 %3964
    %v3966 = vsel %vm2789, %v3575, 0.0
    %3967 = vadd.xlane.f32.xlu0 %v3966
    %v3968 = vpop.xlane.xlu0 %3967
    %v3969 = vsel %vm2789, %v3577, 0.0
    %3970 = vadd.xlane.f32.xlu0 %v3969
    %v3971 = vpop.xlane.xlu0 %3970
    %v3972 = vsel %vm2789, %v3579, 0.0
    %3973 = vadd.xlane.f32.xlu0 %v3972
    %v3974 = vpop.xlane.xlu0 %3973
    %v3975 = vsel %vm2789, %v3581, 0.0
    %3976 = vadd.xlane.f32.xlu0 %v3975
    %v3977 = vpop.xlane.xlu0 %3976
    %v3978 = vsel %vm2789, %v3583, 0.0
    %3979 = vadd.xlane.f32.xlu0 %v3978
    %v3980 = vpop.xlane.xlu0 %3979
    %v3981 = vsel %vm2789, %v3585, 0.0
    %3982 = vadd.xlane.f32.xlu0 %v3981
    %v3983 = vpop.xlane.xlu0 %3982
    %v3984 = vsel %vm2789, %v3587, 0.0
    %3985 = vadd.xlane.f32.xlu0 %v3984
    %v3986 = vpop.xlane.xlu0 %3985
    %v3987 = vsel %vm2789, %v3589, 0.0
    %3988 = vadd.xlane.f32.xlu0 %v3987
    %v3989 = vpop.xlane.xlu0 %3988
    %v3990 = vsel %vm2789, %v3591, 0.0
    %3991 = vadd.xlane.f32.xlu0 %v3990
    %v3992 = vpop.xlane.xlu0 %3991
    %v3993 = vsel %vm2789, %v3593, 0.0
    %3994 = vadd.xlane.f32.xlu0 %v3993
    %v3995 = vpop.xlane.xlu0 %3994
    %v3996 = vsel %vm2789, %v3595, 0.0
    %3997 = vadd.xlane.f32.xlu0 %v3996
    %v3998 = vpop.xlane.xlu0 %3997
    %v3999 = vsel %vm2789, %v3597, 0.0
    %4000 = vadd.xlane.f32.xlu0 %v3999
    %v4001 = vpop.xlane.xlu0 %4000
    %v4002 = vsel %vm2789, %v3599, 0.0
    %4003 = vadd.xlane.f32.xlu0 %v4002
    %v4004 = vpop.xlane.xlu0 %4003
    %v4005 = vsel %vm2789, %v3601, 0.0
    %4006 = vadd.xlane.f32.xlu0 %v4005
    %v4007 = vpop.xlane.xlu0 %4006
    %v4008 = vsel %vm2789, %v3603, 0.0
    %4009 = vadd.xlane.f32.xlu0 %v4008
    %v4010 = vpop.xlane.xlu0 %4009
    %v4011 = vsel %vm2789, %v3605, 0.0
    %4012 = vadd.xlane.f32.xlu0 %v4011
    %v4013 = vpop.xlane.xlu0 %4012
    %v4014 = vsel %vm2789, %v3607, 0.0
    %4015 = vadd.xlane.f32.xlu0 %v4014
    %v4016 = vpop.xlane.xlu0 %4015
    %v4017 = vsel %vm2789, %v3609, 0.0
    %4018 = vadd.xlane.f32.xlu0 %v4017
    %v4019 = vpop.xlane.xlu0 %4018
    %v4020 = vsel %vm2789, %v3611, 0.0
    %4021 = vadd.xlane.f32.xlu0 %v4020
    %v4022 = vpop.xlane.xlu0 %4021
    %v4023 = vsel %vm2789, %v3613, 0.0
    %4024 = vadd.xlane.f32.xlu0 %v4023
    %v4025 = vpop.xlane.xlu0 %4024
    %v4026 = vsel %vm2789, %v3615, 0.0
    %4027 = vadd.xlane.f32.xlu0 %v4026
    %v4028 = vpop.xlane.xlu0 %4027
    %v4029 = vsel %vm2789, %v3617, 0.0
    %4030 = vadd.xlane.f32.xlu0 %v4029
    %v4031 = vpop.xlane.xlu0 %4030
    %v4032 = vsel %vm2789, %v3619, 0.0
    %4033 = vadd.xlane.f32.xlu0 %v4032
    %v4034 = vpop.xlane.xlu0 %4033
    %v4035 = vsel %vm2789, %v3621, 0.0
    %4036 = vadd.xlane.f32.xlu0 %v4035
    %v4037 = vpop.xlane.xlu0 %4036
    %v4038 = vsel %vm2789, %v3623, 0.0
    %4039 = vadd.xlane.f32.xlu0 %v4038
    %v4040 = vpop.xlane.xlu0 %4039
    %v4041 = vsel %vm2789, %v3625, 0.0
    %4042 = vadd.xlane.f32.xlu0 %v4041
    %v4043 = vpop.xlane.xlu0 %4042
    %v4044 = vsel %vm2789, %v3627, 0.0
    %4045 = vadd.xlane.f32.xlu0 %v4044
    %v4046 = vpop.xlane.xlu0 %4045
    %v4047 = vsel %vm2789, %v3629, 0.0
    %4048 = vadd.xlane.f32.xlu0 %v4047
    %v4049 = vpop.xlane.xlu0 %4048
    %v4050 = vsel %vm2789, %v3631, 0.0
    %4051 = vadd.xlane.f32.xlu0 %v4050
    %v4052 = vpop.xlane.xlu0 %4051
    %v4053 = vsel %vm2789, %v3633, 0.0
    %4054 = vadd.xlane.f32.xlu0 %v4053
    %v4055 = vpop.xlane.xlu0 %4054
    %v4056 = vsel %vm2789, %v3635, 0.0
    %4057 = vadd.xlane.f32.xlu0 %v4056
    %v4058 = vpop.xlane.xlu0 %4057
    %v4059 = vsel %vm2789, %v3637, 0.0
    %4060 = vadd.xlane.f32.xlu0 %v4059
    %v4061 = vpop.xlane.xlu0 %4060
    %v4062 = vsel %vm2789, %v3639, 0.0
    %4063 = vadd.xlane.f32.xlu0 %v4062
    %v4064 = vpop.xlane.xlu0 %4063
    %v4065 = vsel %vm2789, %v3641, 0.0
    %4066 = vadd.xlane.f32.xlu0 %v4065
    %v4067 = vpop.xlane.xlu0 %4066
    %v4068 = vsel %vm2789, %v3643, 0.0
    %4069 = vadd.xlane.f32.xlu0 %v4068
    %v4070 = vpop.xlane.xlu0 %4069
    %v4071 = vsel %vm2789, %v3645, 0.0
    %4072 = vadd.xlane.f32.xlu0 %v4071
    %v4073 = vpop.xlane.xlu0 %4072
    %v4074 = vsel %vm2789, %v3647, 0.0
    %4075 = vadd.xlane.f32.xlu0 %v4074
    %v4076 = vpop.xlane.xlu0 %4075
    %v4077 = vsel %vm2789, %v3649, 0.0
    %4078 = vadd.xlane.f32.xlu0 %v4077
    %v4079 = vpop.xlane.xlu0 %4078
    %v4080 = vsel %vm2789, %v3651, 0.0
    %4081 = vadd.xlane.f32.xlu0 %v4080
    %v4082 = vpop.xlane.xlu0 %4081
    %v4083 = vsel %vm2789, %v3653, 0.0
    %4084 = vadd.xlane.f32.xlu0 %v4083
    %v4085 = vpop.xlane.xlu0 %4084
    %v4086 = vsel %vm2789, %v3655, 0.0
    %4087 = vadd.xlane.f32.xlu0 %v4086
    %v4088 = vpop.xlane.xlu0 %4087
    %v4089 = vsel %vm2789, %v3657, 0.0
    %4090 = vadd.xlane.f32.xlu0 %v4089
    %v4091 = vpop.xlane.xlu0 %4090
    %v4092 = vsel %vm2789, %v3659, 0.0
    %4093 = vadd.xlane.f32.xlu0 %v4092
    %v4094 = vpop.xlane.xlu0 %4093
    %v4095 = vsel %vm2789, %v3661, 0.0
    %4096 = vadd.xlane.f32.xlu0 %v4095
    %v4097 = vpop.xlane.xlu0 %4096
    %v4098 = vsel %vm2789, %v3663, 0.0
    %4099 = vadd.xlane.f32.xlu0 %v4098
    %v4100 = vpop.xlane.xlu0 %4099
    %v4101 = vsel %vm2789, %v3665, 0.0
    %4102 = vadd.xlane.f32.xlu0 %v4101
    %v4103 = vpop.xlane.xlu0 %4102
    %v4104 = vsel %vm2789, %v3667, 0.0
    %4105 = vadd.xlane.f32.xlu0 %v4104
    %v4106 = vpop.xlane.xlu0 %4105
    %v4107 = vsel %vm2789, %v3669, 0.0
    %4108 = vadd.xlane.f32.xlu0 %v4107
    %v4109 = vpop.xlane.xlu0 %4108
    %v4110 = vsel %vm2789, %v3671, 0.0
    %4111 = vadd.xlane.f32.xlu0 %v4110
    %v4112 = vpop.xlane.xlu0 %4111
    %v4113 = vsel %vm2789, %v3673, 0.0
    %4114 = vadd.xlane.f32.xlu0 %v4113
    %v4115 = vpop.xlane.xlu0 %4114
    %v4116 = vsel %vm2789, %v3675, 0.0
    %4117 = vadd.xlane.f32.xlu0 %v4116
    %v4118 = vpop.xlane.xlu0 %4117
    %v4119 = vsel %vm2789, %v3677, 0.0
    %4120 = vadd.xlane.f32.xlu0 %v4119
    %v4121 = vpop.xlane.xlu0 %4120
    %v4122 = vsel %vm2789, %v3679, 0.0
    %4123 = vadd.xlane.f32.xlu0 %v4122
    %v4124 = vpop.xlane.xlu0 %4123
    %v4125 = vsel %vm2789, %v3681, 0.0
    %4126 = vadd.xlane.f32.xlu0 %v4125
    %v4127 = vpop.xlane.xlu0 %4126
    %v4128 = vsel %vm2789, %v3683, 0.0
    %4129 = vadd.xlane.f32.xlu0 %v4128
    %v4130 = vpop.xlane.xlu0 %4129
    %v4131 = vsel %vm2789, %v3685, 0.0
    %4132 = vadd.xlane.f32.xlu0 %v4131
    %v4133 = vpop.xlane.xlu0 %4132
    %v4134 = vsel %vm2789, %v3687, 0.0
    %4135 = vadd.xlane.f32.xlu0 %v4134
    %v4136 = vpop.xlane.xlu0 %4135
    %v4137 = vsel %vm2789, %v3689, 0.0
    %4138 = vadd.xlane.f32.xlu0 %v4137
    %v4139 = vpop.xlane.xlu0 %4138
    %v4140 = vsel %vm2789, %v3691, 0.0
    %4141 = vadd.xlane.f32.xlu0 %v4140
    %v4142 = vpop.xlane.xlu0 %4141
    %v4143 = vsel %vm2789, %v3693, 0.0
    %4144 = vadd.xlane.f32.xlu0 %v4143
    %v4145 = vpop.xlane.xlu0 %4144
    %v4146 = vsel %vm2789, %v3695, 0.0
    %4147 = vadd.xlane.f32.xlu0 %v4146
    %v4148 = vpop.xlane.xlu0 %4147
    %v4149 = vsel %vm2789, %v3697, 0.0
    %4150 = vadd.xlane.f32.xlu0 %v4149
    %v4151 = vpop.xlane.xlu0 %4150
    %v4152 = vsel %vm2789, %v3699, 0.0
    %4153 = vadd.xlane.f32.xlu0 %v4152
    %v4154 = vpop.xlane.xlu0 %4153
    %v4155 = vsel %vm2789, %v3701, 0.0
    %4156 = vadd.xlane.f32.xlu0 %v4155
    %v4157 = vpop.xlane.xlu0 %4156
    %v4158 = vsel %vm2789, %v3703, 0.0
    %4159 = vadd.xlane.f32.xlu0 %v4158
    %v4160 = vpop.xlane.xlu0 %4159
    %v4161 = vsel %vm2789, %v3705, 0.0
    %4162 = vadd.xlane.f32.xlu0 %v4161
    %v4163 = vpop.xlane.xlu0 %4162
    %v4164 = vsel %vm2789, %v3707, 0.0
    %4165 = vadd.xlane.f32.xlu0 %v4164
    %v4166 = vpop.xlane.xlu0 %4165
    %v4167 = vsel %vm2789, %v3709, 0.0
    %4168 = vadd.xlane.f32.xlu0 %v4167
    %v4169 = vpop.xlane.xlu0 %4168
    %v4170 = vsel %vm2789, %v3711, 0.0
    %4171 = vadd.xlane.f32.xlu0 %v4170
    %v4172 = vpop.xlane.xlu0 %4171
    %v4173 = vsel %vm2789, %v3713, 0.0
    %4174 = vadd.xlane.f32.xlu0 %v4173
    %v4175 = vpop.xlane.xlu0 %4174
    %v4176 = vsel %vm2789, %v3715, 0.0
    %4177 = vadd.xlane.f32.xlu0 %v4176
    %v4178 = vpop.xlane.xlu0 %4177
    %v4179 = vsel %vm2789, %v3717, 0.0
    %4180 = vadd.xlane.f32.xlu0 %v4179
    %v4181 = vpop.xlane.xlu0 %4180
    %v4182 = vsel %vm2789, %v3719, 0.0
    %4183 = vadd.xlane.f32.xlu0 %v4182
    %v4184 = vpop.xlane.xlu0 %4183
    %v4185 = vsel %vm2789, %v3721, 0.0
    %4186 = vadd.xlane.f32.xlu0 %v4185
    %v4187 = vpop.xlane.xlu0 %4186
    %v4188 = vsel %vm2789, %v3723, 0.0
    %4189 = vadd.xlane.f32.xlu0 %v4188
    %v4190 = vpop.xlane.xlu0 %4189
    %v4191 = vsel %vm2789, %v3725, 0.0
    %4192 = vadd.xlane.f32.xlu0 %v4191
    %v4193 = vpop.xlane.xlu0 %4192
    %v4194 = vsel %vm2789, %v3727, 0.0
    %4195 = vadd.xlane.f32.xlu0 %v4194
    %v4196 = vpop.xlane.xlu0 %4195
    %v4197 = vsel %vm2789, %v3729, 0.0
    %4198 = vadd.xlane.f32.xlu0 %v4197
    %v4199 = vpop.xlane.xlu0 %4198
    %v4200 = vsel %vm2789, %v3731, 0.0
    %4201 = vadd.xlane.f32.xlu0 %v4200
    %v4202 = vpop.xlane.xlu0 %4201
    %v4203 = vsel %vm2789, %v3733, 0.0
    %4204 = vadd.xlane.f32.xlu0 %v4203
    %v4205 = vpop.xlane.xlu0 %4204
    %v4206 = vsel %vm2789, %v3735, 0.0
    %4207 = vadd.xlane.f32.xlu0 %v4206
    %v4208 = vpop.xlane.xlu0 %4207
    %v4209 = vsel %vm2789, %v3737, 0.0
    %4210 = vadd.xlane.f32.xlu0 %v4209
    %v4211 = vpop.xlane.xlu0 %4210
    %v4212 = vsel %vm2789, %v3739, 0.0
    %4213 = vadd.xlane.f32.xlu0 %v4212
    %v4214 = vpop.xlane.xlu0 %4213
    %v4215 = vsel %vm2789, %v3741, 0.0
    %4216 = vadd.xlane.f32.xlu0 %v4215
    %v4217 = vpop.xlane.xlu0 %4216
    %v4218 = vsel %vm2789, %v3743, 0.0
    %4219 = vadd.xlane.f32.xlu0 %v4218
    %v4220 = vpop.xlane.xlu0 %4219
    %v4221 = vsel %vm2789, %v3745, 0.0
    %4222 = vadd.xlane.f32.xlu0 %v4221
    %v4223 = vpop.xlane.xlu0 %4222
    %v4224 = vsel %vm2789, %v3747, 0.0
    %4225 = vadd.xlane.f32.xlu0 %v4224
    %v4226 = vpop.xlane.xlu0 %4225
    %v4227 = vsel %vm2789, %v3749, 0.0
    %4228 = vadd.xlane.f32.xlu0 %v4227
    %v4229 = vpop.xlane.xlu0 %4228
    %v4230 = vsel %vm2789, %v3751, 0.0
    %4231 = vadd.xlane.f32.xlu0 %v4230
    %v4232 = vpop.xlane.xlu0 %4231
    %v4233 = vsel %vm2789, %v3753, 0.0
    %4234 = vadd.xlane.f32.xlu0 %v4233
    %v4235 = vpop.xlane.xlu0 %4234
    %v4236 = vsel %vm2789, %v3755, 0.0
    %4237 = vadd.xlane.f32.xlu0 %v4236
    %v4238 = vpop.xlane.xlu0 %4237
    %v4239 = vsel %vm2789, %v3757, 0.0
    %4240 = vadd.xlane.f32.xlu0 %v4239
    %v4241 = vpop.xlane.xlu0 %4240
    %v4242 = vsel %vm2789, %v3759, 0.0
    %4243 = vadd.xlane.f32.xlu0 %v4242
    %v4244 = vpop.xlane.xlu0 %4243
    %v4245 = vsel %vm2789, %v3761, 0.0
    %4246 = vadd.xlane.f32.xlu0 %v4245
    %v4247 = vpop.xlane.xlu0 %4246
    %v4248 = vsel %vm2789, %v3763, 0.0
    %4249 = vadd.xlane.f32.xlu0 %v4248
    %v4250 = vpop.xlane.xlu0 %4249
    %v4251 = vsel %vm2789, %v3765, 0.0
    %4252 = vadd.xlane.f32.xlu0 %v4251
    %v4253 = vpop.xlane.xlu0 %4252
    %v4254 = vsel %vm2789, %v3767, 0.0
    %4255 = vadd.xlane.f32.xlu0 %v4254
    %v4256 = vpop.xlane.xlu0 %4255
    %v4257 = vsel %vm2789, %v3769, 0.0
    %4258 = vadd.xlane.f32.xlu0 %v4257
    %v4259 = vpop.xlane.xlu0 %4258
    %v4260 = vsel %vm2789, %v3771, 0.0
    %4261 = vadd.xlane.f32.xlu0 %v4260
    %v4262 = vpop.xlane.xlu0 %4261
    %v4263 = vsel %vm2789, %v3773, 0.0
    %4264 = vadd.xlane.f32.xlu0 %v4263
    %v4265 = vpop.xlane.xlu0 %4264
    %v4266 = vsel %vm2789, %v3775, 0.0
    %4267 = vadd.xlane.f32.xlu0 %v4266
    %v4268 = vpop.xlane.xlu0 %4267
    %v4269 = vsel %vm2789, %v3777, 0.0
    %4270 = vadd.xlane.f32.xlu0 %v4269
    %v4271 = vpop.xlane.xlu0 %4270
    %v4272 = vsel %vm2789, %v3779, 0.0
    %4273 = vadd.xlane.f32.xlu0 %v4272
    %v4274 = vpop.xlane.xlu0 %4273
    %v4275 = vsel %vm2789, %v3781, 0.0
    %4276 = vadd.xlane.f32.xlu0 %v4275
    %v4277 = vpop.xlane.xlu0 %4276
    %v4278 = vsel %vm2789, %v3783, 0.0
    %4279 = vadd.xlane.f32.xlu0 %v4278
    %v4280 = vpop.xlane.xlu0 %4279
    %v4281 = vsel %vm2789, %v3785, 0.0
    %4282 = vadd.xlane.f32.xlu0 %v4281
    %v4283 = vpop.xlane.xlu0 %4282
    %v4284 = vsel %vm2789, %v3787, 0.0
    %4285 = vadd.xlane.f32.xlu0 %v4284
    %v4286 = vpop.xlane.xlu0 %4285
    %v4287 = vsel %vm2789, %v3789, 0.0
    %4288 = vadd.xlane.f32.xlu0 %v4287
    %v4289 = vpop.xlane.xlu0 %4288
    %v4290 = vsel %vm2789, %v3791, 0.0
    %4291 = vadd.xlane.f32.xlu0 %v4290
    %v4292 = vpop.xlane.xlu0 %4291
    %v4293 = vsel %vm2789, %v3793, 0.0
    %4294 = vadd.xlane.f32.xlu0 %v4293
    %v4295 = vpop.xlane.xlu0 %4294
    %v4296 = vsel %vm2789, %v3795, 0.0
    %4297 = vadd.xlane.f32.xlu0 %v4296
    %v4298 = vpop.xlane.xlu0 %4297
    %v4299 = vsel %vm2789, %v3797, 0.0
    %4300 = vadd.xlane.f32.xlu0 %v4299
    %v4301 = vpop.xlane.xlu0 %4300
    %v4302 = vsel %vm2789, %v3799, 0.0
    %4303 = vadd.xlane.f32.xlu0 %v4302
    %v4304 = vpop.xlane.xlu0 %4303
    %v4305 = vsel %vm2789, %v3801, 0.0
    %4306 = vadd.xlane.f32.xlu0 %v4305
    %v4307 = vpop.xlane.xlu0 %4306
    %v4308 = vsel %vm2789, %v3803, 0.0
    %4309 = vadd.xlane.f32.xlu0 %v4308
    %v4310 = vpop.xlane.xlu0 %4309
    %v4311 = vsel %vm2789, %v3805, 0.0
    %4312 = vadd.xlane.f32.xlu0 %v4311
    %v4313 = vpop.xlane.xlu0 %4312
    %v4314 = vsel %vm2789, %v3807, 0.0
    %4315 = vadd.xlane.f32.xlu0 %v4314
    %v4316 = vpop.xlane.xlu0 %4315
    %v4317 = vsel %vm2789, %v3809, 0.0
    %4318 = vadd.xlane.f32.xlu0 %v4317
    %v4319 = vpop.xlane.xlu0 %4318
    %v4320 = vsel %vm2789, %v3811, 0.0
    %4321 = vadd.xlane.f32.xlu0 %v4320
    %v4322 = vpop.xlane.xlu0 %4321
    %v4323 = vsel %vm2789, %v3813, 0.0
    %4324 = vadd.xlane.f32.xlu0 %v4323
    %v4325 = vpop.xlane.xlu0 %4324
    %v4326 = vmul.f32 %v3944, %v2150
    %v4327 = vmul.f32 %v3947, %v2152
    %v4328 = vmul.f32 %v3950, %v2154
    %v4329 = vmul.f32 %v3953, %v2156
    %v4330 = vmul.f32 %v3956, %v2158
    %v4331 = vmul.f32 %v3959, %v2160
    %v4332 = vmul.f32 %v3962, %v2162
    %v4333 = vmul.f32 %v3965, %v2164
    %v4334 = vmul.f32 %v3968, %v2166
    %v4335 = vmul.f32 %v3971, %v2168
    %v4336 = vmul.f32 %v3974, %v2170
    %v4337 = vmul.f32 %v3977, %v2172
    %v4338 = vmul.f32 %v3980, %v2174
    %v4339 = vmul.f32 %v3983, %v2176
    %v4340 = vmul.f32 %v3986, %v2178
    %v4341 = vmul.f32 %v3989, %v2180
    %v4342 = vmul.f32 %v3992, %v2182
    %v4343 = vmul.f32 %v3995, %v2184
    %v4344 = vmul.f32 %v3998, %v2186
    %v4345 = vmul.f32 %v4001, %v2188
    %v4346 = vmul.f32 %v4004, %v2190
    %v4347 = vmul.f32 %v4007, %v2192
    %v4348 = vmul.f32 %v4010, %v2194
    %v4349 = vmul.f32 %v4013, %v2196
    %v4350 = vmul.f32 %v4016, %v2198
    %v4351 = vmul.f32 %v4019, %v2200
    %v4352 = vmul.f32 %v4022, %v2202
    %v4353 = vmul.f32 %v4025, %v2204
    %v4354 = vmul.f32 %v4028, %v2206
    %v4355 = vmul.f32 %v4031, %v2208
    %v4356 = vmul.f32 %v4034, %v2210
    %v4357 = vmul.f32 %v4037, %v2212
    %v4358 = vmul.f32 %v4040, %v2214
    %v4359 = vmul.f32 %v4043, %v2216
    %v4360 = vmul.f32 %v4046, %v2218
    %v4361 = vmul.f32 %v4049, %v2220
    %v4362 = vmul.f32 %v4052, %v2222
    %v4363 = vmul.f32 %v4055, %v2224
    %v4364 = vmul.f32 %v4058, %v2226
    %v4365 = vmul.f32 %v4061, %v2228
    %v4366 = vmul.f32 %v4064, %v2230
    %v4367 = vmul.f32 %v4067, %v2232
    %v4368 = vmul.f32 %v4070, %v2234
    %v4369 = vmul.f32 %v4073, %v2236
    %v4370 = vmul.f32 %v4076, %v2238
    %v4371 = vmul.f32 %v4079, %v2240
    %v4372 = vmul.f32 %v4082, %v2242
    %v4373 = vmul.f32 %v4085, %v2244
    %v4374 = vmul.f32 %v4088, %v2246
    %v4375 = vmul.f32 %v4091, %v2248
    %v4376 = vmul.f32 %v4094, %v2250
    %v4377 = vmul.f32 %v4097, %v2252
    %v4378 = vmul.f32 %v4100, %v2254
    %v4379 = vmul.f32 %v4103, %v2256
    %v4380 = vmul.f32 %v4106, %v2258
    %v4381 = vmul.f32 %v4109, %v2260
    %v4382 = vmul.f32 %v4112, %v2262
    %v4383 = vmul.f32 %v4115, %v2264
    %v4384 = vmul.f32 %v4118, %v2266
    %v4385 = vmul.f32 %v4121, %v2268
    %v4386 = vmul.f32 %v4124, %v2270
    %v4387 = vmul.f32 %v4127, %v2272
    %v4388 = vmul.f32 %v4130, %v2274
    %v4389 = vmul.f32 %v4133, %v2276
    %v4390 = vmul.f32 %v4136, %v2278
    %v4391 = vmul.f32 %v4139, %v2280
    %v4392 = vmul.f32 %v4142, %v2282
    %v4393 = vmul.f32 %v4145, %v2284
    %v4394 = vmul.f32 %v4148, %v2286
    %v4395 = vmul.f32 %v4151, %v2288
    %v4396 = vmul.f32 %v4154, %v2290
    %v4397 = vmul.f32 %v4157, %v2292
    %v4398 = vmul.f32 %v4160, %v2294
    %v4399 = vmul.f32 %v4163, %v2296
    %v4400 = vmul.f32 %v4166, %v2298
    %v4401 = vmul.f32 %v4169, %v2300
    %v4402 = vmul.f32 %v4172, %v2302
    %v4403 = vmul.f32 %v4175, %v2304
    %v4404 = vmul.f32 %v4178, %v2306
    %v4405 = vmul.f32 %v4181, %v2308
    %v4406 = vmul.f32 %v4184, %v2310
    %v4407 = vmul.f32 %v4187, %v2312
    %v4408 = vmul.f32 %v4190, %v2314
    %v4409 = vmul.f32 %v4193, %v2316
    %v4410 = vmul.f32 %v4196, %v2318
    %v4411 = vmul.f32 %v4199, %v2320
    %v4412 = vmul.f32 %v4202, %v2322
    %v4413 = vmul.f32 %v4205, %v2324
    %v4414 = vmul.f32 %v4208, %v2326
    %v4415 = vmul.f32 %v4211, %v2328
    %v4416 = vmul.f32 %v4214, %v2330
    %v4417 = vmul.f32 %v4217, %v2332
    %v4418 = vmul.f32 %v4220, %v2334
    %v4419 = vmul.f32 %v4223, %v2336
    %v4420 = vmul.f32 %v4226, %v2338
    %v4421 = vmul.f32 %v4229, %v2340
    %v4422 = vmul.f32 %v4232, %v2342
    %v4423 = vmul.f32 %v4235, %v2344
    %v4424 = vmul.f32 %v4238, %v2346
    %v4425 = vmul.f32 %v4241, %v2348
    %v4426 = vmul.f32 %v4244, %v2350
    %v4427 = vmul.f32 %v4247, %v2352
    %v4428 = vmul.f32 %v4250, %v2354
    %v4429 = vmul.f32 %v4253, %v2356
    %v4430 = vmul.f32 %v4256, %v2358
    %v4431 = vmul.f32 %v4259, %v2360
    %v4432 = vmul.f32 %v4262, %v2362
    %v4433 = vmul.f32 %v4265, %v2364
    %v4434 = vmul.f32 %v4268, %v2366
    %v4435 = vmul.f32 %v4271, %v2368
    %v4436 = vmul.f32 %v4274, %v2370
    %v4437 = vmul.f32 %v4277, %v2372
    %v4438 = vmul.f32 %v4280, %v2374
    %v4439 = vmul.f32 %v4283, %v2376
    %v4440 = vmul.f32 %v4286, %v2378
    %v4441 = vmul.f32 %v4289, %v2380
    %v4442 = vmul.f32 %v4292, %v2382
    %v4443 = vmul.f32 %v4295, %v2384
    %v4444 = vmul.f32 %v4298, %v2386
    %v4445 = vmul.f32 %v4301, %v2388
    %v4446 = vmul.f32 %v4304, %v2390
    %v4447 = vmul.f32 %v4307, %v2392
    %v4448 = vmul.f32 %v4310, %v2394
    %v4449 = vmul.f32 %v4313, %v2396
    %v4450 = vmul.f32 %v4316, %v2398
    %v4451 = vmul.f32 %v4319, %v2400
    %v4452 = vmul.f32 %v4322, %v2402
    %v4453 = vmul.f32 %v4325, %v2404
    %v4454 = vadd.f32 %v3302, %v4326
    %v4455 = vadd.f32 %v3303, %v4327
    %v4456 = vadd.f32 %v3304, %v4328
    %v4457 = vadd.f32 %v3305, %v4329
    %v4458 = vadd.f32 %v3306, %v4330
    %v4459 = vadd.f32 %v3307, %v4331
    %v4460 = vadd.f32 %v3308, %v4332
    %v4461 = vadd.f32 %v3309, %v4333
    %v4462 = vadd.f32 %v3310, %v4334
    %v4463 = vadd.f32 %v3311, %v4335
    %v4464 = vadd.f32 %v3312, %v4336
    %v4465 = vadd.f32 %v3313, %v4337
    %v4466 = vadd.f32 %v3314, %v4338
    %v4467 = vadd.f32 %v3315, %v4339
    %v4468 = vadd.f32 %v3316, %v4340
    %v4469 = vadd.f32 %v3317, %v4341
    %v4470 = vadd.f32 %v3318, %v4342
    %v4471 = vadd.f32 %v3319, %v4343
    %v4472 = vadd.f32 %v3320, %v4344
    %v4473 = vadd.f32 %v3321, %v4345
    %v4474 = vadd.f32 %v3322, %v4346
    %v4475 = vadd.f32 %v3323, %v4347
    %v4476 = vadd.f32 %v3324, %v4348
    %v4477 = vadd.f32 %v3325, %v4349
    %v4478 = vadd.f32 %v3326, %v4350
    %v4479 = vadd.f32 %v3327, %v4351
    %v4480 = vadd.f32 %v3328, %v4352
    %v4481 = vadd.f32 %v3329, %v4353
    %v4482 = vadd.f32 %v3330, %v4354
    %v4483 = vadd.f32 %v3331, %v4355
    %v4484 = vadd.f32 %v3332, %v4356
    %v4485 = vadd.f32 %v3333, %v4357
    %v4486 = vadd.f32 %v3334, %v4358
    %v4487 = vadd.f32 %v3335, %v4359
    %v4488 = vadd.f32 %v3336, %v4360
    %v4489 = vadd.f32 %v3337, %v4361
    %v4490 = vadd.f32 %v3338, %v4362
    %v4491 = vadd.f32 %v3339, %v4363
    %v4492 = vadd.f32 %v3340, %v4364
    %v4493 = vadd.f32 %v3341, %v4365
    %v4494 = vadd.f32 %v3342, %v4366
    %v4495 = vadd.f32 %v3343, %v4367
    %v4496 = vadd.f32 %v3344, %v4368
    %v4497 = vadd.f32 %v3345, %v4369
    %v4498 = vadd.f32 %v3346, %v4370
    %v4499 = vadd.f32 %v3347, %v4371
    %v4500 = vadd.f32 %v3348, %v4372
    %v4501 = vadd.f32 %v3349, %v4373
    %v4502 = vadd.f32 %v3350, %v4374
    %v4503 = vadd.f32 %v3351, %v4375
    %v4504 = vadd.f32 %v3352, %v4376
    %v4505 = vadd.f32 %v3353, %v4377
    %v4506 = vadd.f32 %v3354, %v4378
    %v4507 = vadd.f32 %v3355, %v4379
    %v4508 = vadd.f32 %v3356, %v4380
    %v4509 = vadd.f32 %v3357, %v4381
    %v4510 = vadd.f32 %v3358, %v4382
    %v4511 = vadd.f32 %v3359, %v4383
    %v4512 = vadd.f32 %v3360, %v4384
    %v4513 = vadd.f32 %v3361, %v4385
    %v4514 = vadd.f32 %v3362, %v4386
    %v4515 = vadd.f32 %v3363, %v4387
    %v4516 = vadd.f32 %v3364, %v4388
    %v4517 = vadd.f32 %v3365, %v4389
    %v4518 = vadd.f32 %v3366, %v4390
    %v4519 = vadd.f32 %v3367, %v4391
    %v4520 = vadd.f32 %v3368, %v4392
    %v4521 = vadd.f32 %v3369, %v4393
    %v4522 = vadd.f32 %v3370, %v4394
    %v4523 = vadd.f32 %v3371, %v4395
    %v4524 = vadd.f32 %v3372, %v4396
    %v4525 = vadd.f32 %v3373, %v4397
    %v4526 = vadd.f32 %v3374, %v4398
    %v4527 = vadd.f32 %v3375, %v4399
    %v4528 = vadd.f32 %v3376, %v4400
    %v4529 = vadd.f32 %v3377, %v4401
    %v4530 = vadd.f32 %v3378, %v4402
    %v4531 = vadd.f32 %v3379, %v4403
    %v4532 = vadd.f32 %v3380, %v4404
    %v4533 = vadd.f32 %v3381, %v4405
    %v4534 = vadd.f32 %v3382, %v4406
    %v4535 = vadd.f32 %v3383, %v4407
    %v4536 = vadd.f32 %v3384, %v4408
    %v4537 = vadd.f32 %v3385, %v4409
    %v4538 = vadd.f32 %v3386, %v4410
    %v4539 = vadd.f32 %v3387, %v4411
    %v4540 = vadd.f32 %v3388, %v4412
    %v4541 = vadd.f32 %v3389, %v4413
    %v4542 = vadd.f32 %v3390, %v4414
    %v4543 = vadd.f32 %v3391, %v4415
    %v4544 = vadd.f32 %v3392, %v4416
    %v4545 = vadd.f32 %v3393, %v4417
    %v4546 = vadd.f32 %v3394, %v4418
    %v4547 = vadd.f32 %v3395, %v4419
    %v4548 = vadd.f32 %v3396, %v4420
    %v4549 = vadd.f32 %v3397, %v4421
    %v4550 = vadd.f32 %v3398, %v4422
    %v4551 = vadd.f32 %v3399, %v4423
    %v4552 = vadd.f32 %v3400, %v4424
    %v4553 = vadd.f32 %v3401, %v4425
    %v4554 = vadd.f32 %v3402, %v4426
    %v4555 = vadd.f32 %v3403, %v4427
    %v4556 = vadd.f32 %v3404, %v4428
    %v4557 = vadd.f32 %v3405, %v4429
    %v4558 = vadd.f32 %v3406, %v4430
    %v4559 = vadd.f32 %v3407, %v4431
    %v4560 = vadd.f32 %v3408, %v4432
    %v4561 = vadd.f32 %v3409, %v4433
    %v4562 = vadd.f32 %v3410, %v4434
    %v4563 = vadd.f32 %v3411, %v4435
    %v4564 = vadd.f32 %v3412, %v4436
    %v4565 = vadd.f32 %v3413, %v4437
    %v4566 = vadd.f32 %v3414, %v4438
    %v4567 = vadd.f32 %v3415, %v4439
    %v4568 = vadd.f32 %v3416, %v4440
    %v4569 = vadd.f32 %v3417, %v4441
    %v4570 = vadd.f32 %v3418, %v4442
    %v4571 = vadd.f32 %v3419, %v4443
    %v4572 = vadd.f32 %v3420, %v4444
    %v4573 = vadd.f32 %v3421, %v4445
    %v4574 = vadd.f32 %v3422, %v4446
    %v4575 = vadd.f32 %v3423, %v4447
    %v4576 = vadd.f32 %v3424, %v4448
    %v4577 = vadd.f32 %v3425, %v4449
    %v4578 = vadd.f32 %v3426, %v4450
    %v4579 = vadd.f32 %v3427, %v4451
    %v4580 = vadd.f32 %v3428, %v4452
    %v4581 = vadd.f32 %v3429, %v4453
    %vm4582 = vcmp.gt.f32.partialorder %v4454, 0.0
    %vm4583 = vcmp.gt.f32.partialorder %v4455, 0.0
    %vm4584 = vcmp.gt.f32.partialorder %v4456, 0.0
    %vm4585 = vcmp.gt.f32.partialorder %v4457, 0.0
    %vm4586 = vcmp.gt.f32.partialorder %v4458, 0.0
    %vm4587 = vcmp.gt.f32.partialorder %v4459, 0.0
    %vm4588 = vcmp.gt.f32.partialorder %v4460, 0.0
    %vm4589 = vcmp.gt.f32.partialorder %v4461, 0.0
    %vm4590 = vcmp.gt.f32.partialorder %v4462, 0.0
    %vm4591 = vcmp.gt.f32.partialorder %v4463, 0.0
    %vm4592 = vcmp.gt.f32.partialorder %v4464, 0.0
    %vm4593 = vcmp.gt.f32.partialorder %v4465, 0.0
    %vm4594 = vcmp.gt.f32.partialorder %v4466, 0.0
    %vm4595 = vcmp.gt.f32.partialorder %v4467, 0.0
    %vm4596 = vcmp.gt.f32.partialorder %v4468, 0.0
    %vm4597 = vcmp.gt.f32.partialorder %v4469, 0.0
    %vm4598 = vcmp.gt.f32.partialorder %v4470, 0.0
    %vm4599 = vcmp.gt.f32.partialorder %v4471, 0.0
    %vm4600 = vcmp.gt.f32.partialorder %v4472, 0.0
    %vm4601 = vcmp.gt.f32.partialorder %v4473, 0.0
    %vm4602 = vcmp.gt.f32.partialorder %v4474, 0.0
    %vm4603 = vcmp.gt.f32.partialorder %v4475, 0.0
    %vm4604 = vcmp.gt.f32.partialorder %v4476, 0.0
    %vm4605 = vcmp.gt.f32.partialorder %v4477, 0.0
    %vm4606 = vcmp.gt.f32.partialorder %v4478, 0.0
    %vm4607 = vcmp.gt.f32.partialorder %v4479, 0.0
    %vm4608 = vcmp.gt.f32.partialorder %v4480, 0.0
    %vm4609 = vcmp.gt.f32.partialorder %v4481, 0.0
    %vm4610 = vcmp.gt.f32.partialorder %v4482, 0.0
    %vm4611 = vcmp.gt.f32.partialorder %v4483, 0.0
    %vm4612 = vcmp.gt.f32.partialorder %v4484, 0.0
    %vm4613 = vcmp.gt.f32.partialorder %v4485, 0.0
    %vm4614 = vcmp.gt.f32.partialorder %v4486, 0.0
    %vm4615 = vcmp.gt.f32.partialorder %v4487, 0.0
    %vm4616 = vcmp.gt.f32.partialorder %v4488, 0.0
    %vm4617 = vcmp.gt.f32.partialorder %v4489, 0.0
    %vm4618 = vcmp.gt.f32.partialorder %v4490, 0.0
    %vm4619 = vcmp.gt.f32.partialorder %v4491, 0.0
    %vm4620 = vcmp.gt.f32.partialorder %v4492, 0.0
    %vm4621 = vcmp.gt.f32.partialorder %v4493, 0.0
    %vm4622 = vcmp.gt.f32.partialorder %v4494, 0.0
    %vm4623 = vcmp.gt.f32.partialorder %v4495, 0.0
    %vm4624 = vcmp.gt.f32.partialorder %v4496, 0.0
    %vm4625 = vcmp.gt.f32.partialorder %v4497, 0.0
    %vm4626 = vcmp.gt.f32.partialorder %v4498, 0.0
    %vm4627 = vcmp.gt.f32.partialorder %v4499, 0.0
    %vm4628 = vcmp.gt.f32.partialorder %v4500, 0.0
    %vm4629 = vcmp.gt.f32.partialorder %v4501, 0.0
    %vm4630 = vcmp.gt.f32.partialorder %v4502, 0.0
    %vm4631 = vcmp.gt.f32.partialorder %v4503, 0.0
    %vm4632 = vcmp.gt.f32.partialorder %v4504, 0.0
    %vm4633 = vcmp.gt.f32.partialorder %v4505, 0.0
    %vm4634 = vcmp.gt.f32.partialorder %v4506, 0.0
    %vm4635 = vcmp.gt.f32.partialorder %v4507, 0.0
    %vm4636 = vcmp.gt.f32.partialorder %v4508, 0.0
    %vm4637 = vcmp.gt.f32.partialorder %v4509, 0.0
    %vm4638 = vcmp.gt.f32.partialorder %v4510, 0.0
    %vm4639 = vcmp.gt.f32.partialorder %v4511, 0.0
    %vm4640 = vcmp.gt.f32.partialorder %v4512, 0.0
    %vm4641 = vcmp.gt.f32.partialorder %v4513, 0.0
    %vm4642 = vcmp.gt.f32.partialorder %v4514, 0.0
    %vm4643 = vcmp.gt.f32.partialorder %v4515, 0.0
    %vm4644 = vcmp.gt.f32.partialorder %v4516, 0.0
    %vm4645 = vcmp.gt.f32.partialorder %v4517, 0.0
    %vm4646 = vcmp.gt.f32.partialorder %v4518, 0.0
    %vm4647 = vcmp.gt.f32.partialorder %v4519, 0.0
    %vm4648 = vcmp.gt.f32.partialorder %v4520, 0.0
    %vm4649 = vcmp.gt.f32.partialorder %v4521, 0.0
    %vm4650 = vcmp.gt.f32.partialorder %v4522, 0.0
    %vm4651 = vcmp.gt.f32.partialorder %v4523, 0.0
    %vm4652 = vcmp.gt.f32.partialorder %v4524, 0.0
    %vm4653 = vcmp.gt.f32.partialorder %v4525, 0.0
    %vm4654 = vcmp.gt.f32.partialorder %v4526, 0.0
    %vm4655 = vcmp.gt.f32.partialorder %v4527, 0.0
    %vm4656 = vcmp.gt.f32.partialorder %v4528, 0.0
    %vm4657 = vcmp.gt.f32.partialorder %v4529, 0.0
    %vm4658 = vcmp.gt.f32.partialorder %v4530, 0.0
    %vm4659 = vcmp.gt.f32.partialorder %v4531, 0.0
    %vm4660 = vcmp.gt.f32.partialorder %v4532, 0.0
    %vm4661 = vcmp.gt.f32.partialorder %v4533, 0.0
    %vm4662 = vcmp.gt.f32.partialorder %v4534, 0.0
    %vm4663 = vcmp.gt.f32.partialorder %v4535, 0.0
    %vm4664 = vcmp.gt.f32.partialorder %v4536, 0.0
    %vm4665 = vcmp.gt.f32.partialorder %v4537, 0.0
    %vm4666 = vcmp.gt.f32.partialorder %v4538, 0.0
    %vm4667 = vcmp.gt.f32.partialorder %v4539, 0.0
    %vm4668 = vcmp.gt.f32.partialorder %v4540, 0.0
    %vm4669 = vcmp.gt.f32.partialorder %v4541, 0.0
    %vm4670 = vcmp.gt.f32.partialorder %v4542, 0.0
    %vm4671 = vcmp.gt.f32.partialorder %v4543, 0.0
    %vm4672 = vcmp.gt.f32.partialorder %v4544, 0.0
    %vm4673 = vcmp.gt.f32.partialorder %v4545, 0.0
    %vm4674 = vcmp.gt.f32.partialorder %v4546, 0.0
    %vm4675 = vcmp.gt.f32.partialorder %v4547, 0.0
    %vm4676 = vcmp.gt.f32.partialorder %v4548, 0.0
    %vm4677 = vcmp.gt.f32.partialorder %v4549, 0.0
    %vm4678 = vcmp.gt.f32.partialorder %v4550, 0.0
    %vm4679 = vcmp.gt.f32.partialorder %v4551, 0.0
    %vm4680 = vcmp.gt.f32.partialorder %v4552, 0.0
    %vm4681 = vcmp.gt.f32.partialorder %v4553, 0.0
    %vm4682 = vcmp.gt.f32.partialorder %v4554, 0.0
    %vm4683 = vcmp.gt.f32.partialorder %v4555, 0.0
    %vm4684 = vcmp.gt.f32.partialorder %v4556, 0.0
    %vm4685 = vcmp.gt.f32.partialorder %v4557, 0.0
    %vm4686 = vcmp.gt.f32.partialorder %v4558, 0.0
    %vm4687 = vcmp.gt.f32.partialorder %v4559, 0.0
    %vm4688 = vcmp.gt.f32.partialorder %v4560, 0.0
    %vm4689 = vcmp.gt.f32.partialorder %v4561, 0.0
    %vm4690 = vcmp.gt.f32.partialorder %v4562, 0.0
    %vm4691 = vcmp.gt.f32.partialorder %v4563, 0.0
    %vm4692 = vcmp.gt.f32.partialorder %v4564, 0.0
    %vm4693 = vcmp.gt.f32.partialorder %v4565, 0.0
    %vm4694 = vcmp.gt.f32.partialorder %v4566, 0.0
    %vm4695 = vcmp.gt.f32.partialorder %v4567, 0.0
    %vm4696 = vcmp.gt.f32.partialorder %v4568, 0.0
    %vm4697 = vcmp.gt.f32.partialorder %v4569, 0.0
    %vm4698 = vcmp.gt.f32.partialorder %v4570, 0.0
    %vm4699 = vcmp.gt.f32.partialorder %v4571, 0.0
    %vm4700 = vcmp.gt.f32.partialorder %v4572, 0.0
    %vm4701 = vcmp.gt.f32.partialorder %v4573, 0.0
    %vm4702 = vcmp.gt.f32.partialorder %v4574, 0.0
    %vm4703 = vcmp.gt.f32.partialorder %v4575, 0.0
    %vm4704 = vcmp.gt.f32.partialorder %v4576, 0.0
    %vm4705 = vcmp.gt.f32.partialorder %v4577, 0.0
    %vm4706 = vcmp.gt.f32.partialorder %v4578, 0.0
    %vm4707 = vcmp.gt.f32.partialorder %v4579, 0.0
    %vm4708 = vcmp.gt.f32.partialorder %v4580, 0.0
    %vm4709 = vcmp.gt.f32.partialorder %v4581, 0.0
    %v4710 = vmin.f32 %v4454, 0.0
    %v4711 = vmin.f32 %v4455, 0.0
    %v4712 = vmin.f32 %v4456, 0.0
    %v4713 = vmin.f32 %v4457, 0.0
    %v4714 = vmin.f32 %v4458, 0.0
    %v4715 = vmin.f32 %v4459, 0.0
    %v4716 = vmin.f32 %v4460, 0.0
    %v4717 = vmin.f32 %v4461, 0.0
    %v4718 = vmin.f32 %v4462, 0.0
    %v4719 = vmin.f32 %v4463, 0.0
    %v4720 = vmin.f32 %v4464, 0.0
    %v4721 = vmin.f32 %v4465, 0.0
    %v4722 = vmin.f32 %v4466, 0.0
    %v4723 = vmin.f32 %v4467, 0.0
    %v4724 = vmin.f32 %v4468, 0.0
    %v4725 = vmin.f32 %v4469, 0.0
    %v4726 = vmin.f32 %v4470, 0.0
    %v4727 = vmin.f32 %v4471, 0.0
    %v4728 = vmin.f32 %v4472, 0.0
    %v4729 = vmin.f32 %v4473, 0.0
    %v4730 = vmin.f32 %v4474, 0.0
    %v4731 = vmin.f32 %v4475, 0.0
    %v4732 = vmin.f32 %v4476, 0.0
    %v4733 = vmin.f32 %v4477, 0.0
    %v4734 = vmin.f32 %v4478, 0.0
    %v4735 = vmin.f32 %v4479, 0.0
    %v4736 = vmin.f32 %v4480, 0.0
    %v4737 = vmin.f32 %v4481, 0.0
    %v4738 = vmin.f32 %v4482, 0.0
    %v4739 = vmin.f32 %v4483, 0.0
    %v4740 = vmin.f32 %v4484, 0.0
    %v4741 = vmin.f32 %v4485, 0.0
    %v4742 = vmin.f32 %v4486, 0.0
    %v4743 = vmin.f32 %v4487, 0.0
    %v4744 = vmin.f32 %v4488, 0.0
    %v4745 = vmin.f32 %v4489, 0.0
    %v4746 = vmin.f32 %v4490, 0.0
    %v4747 = vmin.f32 %v4491, 0.0
    %v4748 = vmin.f32 %v4492, 0.0
    %v4749 = vmin.f32 %v4493, 0.0
    %v4750 = vmin.f32 %v4494, 0.0
    %v4751 = vmin.f32 %v4495, 0.0
    %v4752 = vmin.f32 %v4496, 0.0
    %v4753 = vmin.f32 %v4497, 0.0
    %v4754 = vmin.f32 %v4498, 0.0
    %v4755 = vmin.f32 %v4499, 0.0
    %v4756 = vmin.f32 %v4500, 0.0
    %v4757 = vmin.f32 %v4501, 0.0
    %v4758 = vmin.f32 %v4502, 0.0
    %v4759 = vmin.f32 %v4503, 0.0
    %v4760 = vmin.f32 %v4504, 0.0
    %v4761 = vmin.f32 %v4505, 0.0
    %v4762 = vmin.f32 %v4506, 0.0
    %v4763 = vmin.f32 %v4507, 0.0
    %v4764 = vmin.f32 %v4508, 0.0
    %v4765 = vmin.f32 %v4509, 0.0
    %v4766 = vmin.f32 %v4510, 0.0
    %v4767 = vmin.f32 %v4511, 0.0
    %v4768 = vmin.f32 %v4512, 0.0
    %v4769 = vmin.f32 %v4513, 0.0
    %v4770 = vmin.f32 %v4514, 0.0
    %v4771 = vmin.f32 %v4515, 0.0
    %v4772 = vmin.f32 %v4516, 0.0
    %v4773 = vmin.f32 %v4517, 0.0
    %v4774 = vmin.f32 %v4518, 0.0
    %v4775 = vmin.f32 %v4519, 0.0
    %v4776 = vmin.f32 %v4520, 0.0
    %v4777 = vmin.f32 %v4521, 0.0
    %v4778 = vmin.f32 %v4522, 0.0
    %v4779 = vmin.f32 %v4523, 0.0
    %v4780 = vmin.f32 %v4524, 0.0
    %v4781 = vmin.f32 %v4525, 0.0
    %v4782 = vmin.f32 %v4526, 0.0
    %v4783 = vmin.f32 %v4527, 0.0
    %v4784 = vmin.f32 %v4528, 0.0
    %v4785 = vmin.f32 %v4529, 0.0
    %v4786 = vmin.f32 %v4530, 0.0
    %v4787 = vmin.f32 %v4531, 0.0
    %v4788 = vmin.f32 %v4532, 0.0
    %v4789 = vmin.f32 %v4533, 0.0
    %v4790 = vmin.f32 %v4534, 0.0
    %v4791 = vmin.f32 %v4535, 0.0
    %v4792 = vmin.f32 %v4536, 0.0
    %v4793 = vmin.f32 %v4537, 0.0
    %v4794 = vmin.f32 %v4538, 0.0
    %v4795 = vmin.f32 %v4539, 0.0
    %v4796 = vmin.f32 %v4540, 0.0
    %v4797 = vmin.f32 %v4541, 0.0
    %v4798 = vmin.f32 %v4542, 0.0
    %v4799 = vmin.f32 %v4543, 0.0
    %v4800 = vmin.f32 %v4544, 0.0
    %v4801 = vmin.f32 %v4545, 0.0
    %v4802 = vmin.f32 %v4546, 0.0
    %v4803 = vmin.f32 %v4547, 0.0
    %v4804 = vmin.f32 %v4548, 0.0
    %v4805 = vmin.f32 %v4549, 0.0
    %v4806 = vmin.f32 %v4550, 0.0
    %v4807 = vmin.f32 %v4551, 0.0
    %v4808 = vmin.f32 %v4552, 0.0
    %v4809 = vmin.f32 %v4553, 0.0
    %v4810 = vmin.f32 %v4554, 0.0
    %v4811 = vmin.f32 %v4555, 0.0
    %v4812 = vmin.f32 %v4556, 0.0
    %v4813 = vmin.f32 %v4557, 0.0
    %v4814 = vmin.f32 %v4558, 0.0
    %v4815 = vmin.f32 %v4559, 0.0
    %v4816 = vmin.f32 %v4560, 0.0
    %v4817 = vmin.f32 %v4561, 0.0
    %v4818 = vmin.f32 %v4562, 0.0
    %v4819 = vmin.f32 %v4563, 0.0
    %v4820 = vmin.f32 %v4564, 0.0
    %v4821 = vmin.f32 %v4565, 0.0
    %v4822 = vmin.f32 %v4566, 0.0
    %v4823 = vmin.f32 %v4567, 0.0
    %v4824 = vmin.f32 %v4568, 0.0
    %v4825 = vmin.f32 %v4569, 0.0
    %v4826 = vmin.f32 %v4570, 0.0
    %v4827 = vmin.f32 %v4571, 0.0
    %v4828 = vmin.f32 %v4572, 0.0
    %v4829 = vmin.f32 %v4573, 0.0
    %v4830 = vmin.f32 %v4574, 0.0
    %v4831 = vmin.f32 %v4575, 0.0
    %v4832 = vmin.f32 %v4576, 0.0
    %v4833 = vmin.f32 %v4577, 0.0
    %v4834 = vmin.f32 %v4578, 0.0
    %v4835 = vmin.f32 %v4579, 0.0
    %v4836 = vmin.f32 %v4580, 0.0
    %v4837 = vmin.f32 %v4581, 0.0
    %v4838 = vmul.f32 %v4710, 1.442695
    %v4839 = vpow.pop %v4838
    %v4840 = vmul.f32 %v4711, 1.442695
    %v4841 = vpow.pop %v4840
    %v4842 = vmul.f32 %v4712, 1.442695
    %v4843 = vpow.pop %v4842
    %v4844 = vmul.f32 %v4713, 1.442695
    %v4845 = vpow.pop %v4844
    %v4846 = vmul.f32 %v4714, 1.442695
    %v4847 = vpow.pop %v4846
    %v4848 = vmul.f32 %v4715, 1.442695
    %v4849 = vpow.pop %v4848
    %v4850 = vmul.f32 %v4716, 1.442695
    %v4851 = vpow.pop %v4850
    %v4852 = vmul.f32 %v4717, 1.442695
    %v4853 = vpow.pop %v4852
    %v4854 = vmul.f32 %v4718, 1.442695
    %v4855 = vpow.pop %v4854
    %v4856 = vmul.f32 %v4719, 1.442695
    %v4857 = vpow.pop %v4856
    %v4858 = vmul.f32 %v4720, 1.442695
    %v4859 = vpow.pop %v4858
    %v4860 = vmul.f32 %v4721, 1.442695
    %v4861 = vpow.pop %v4860
    %v4862 = vmul.f32 %v4722, 1.442695
    %v4863 = vpow.pop %v4862
    %v4864 = vmul.f32 %v4723, 1.442695
    %v4865 = vpow.pop %v4864
    %v4866 = vmul.f32 %v4724, 1.442695
    %v4867 = vpow.pop %v4866
    %v4868 = vmul.f32 %v4725, 1.442695
    %v4869 = vpow.pop %v4868
    %v4870 = vmul.f32 %v4726, 1.442695
    %v4871 = vpow.pop %v4870
    %v4872 = vmul.f32 %v4727, 1.442695
    %v4873 = vpow.pop %v4872
    %v4874 = vmul.f32 %v4728, 1.442695
    %v4875 = vpow.pop %v4874
    %v4876 = vmul.f32 %v4729, 1.442695
    %v4877 = vpow.pop %v4876
    %v4878 = vmul.f32 %v4730, 1.442695
    %v4879 = vpow.pop %v4878
    %v4880 = vmul.f32 %v4731, 1.442695
    %v4881 = vpow.pop %v4880
    %v4882 = vmul.f32 %v4732, 1.442695
    %v4883 = vpow.pop %v4882
    %v4884 = vmul.f32 %v4733, 1.442695
    %v4885 = vpow.pop %v4884
    %v4886 = vmul.f32 %v4734, 1.442695
    %v4887 = vpow.pop %v4886
    %v4888 = vmul.f32 %v4735, 1.442695
    %v4889 = vpow.pop %v4888
    %v4890 = vmul.f32 %v4736, 1.442695
    %v4891 = vpow.pop %v4890
    %v4892 = vmul.f32 %v4737, 1.442695
    %v4893 = vpow.pop %v4892
    %v4894 = vmul.f32 %v4738, 1.442695
    %v4895 = vpow.pop %v4894
    %v4896 = vmul.f32 %v4739, 1.442695
    %v4897 = vpow.pop %v4896
    %v4898 = vmul.f32 %v4740, 1.442695
    %v4899 = vpow.pop %v4898
    %v4900 = vmul.f32 %v4741, 1.442695
    %v4901 = vpow.pop %v4900
    %v4902 = vmul.f32 %v4742, 1.442695
    %v4903 = vpow.pop %v4902
    %v4904 = vmul.f32 %v4743, 1.442695
    %v4905 = vpow.pop %v4904
    %v4906 = vmul.f32 %v4744, 1.442695
    %v4907 = vpow.pop %v4906
    %v4908 = vmul.f32 %v4745, 1.442695
    %v4909 = vpow.pop %v4908
    %v4910 = vmul.f32 %v4746, 1.442695
    %v4911 = vpow.pop %v4910
    %v4912 = vmul.f32 %v4747, 1.442695
    %v4913 = vpow.pop %v4912
    %v4914 = vmul.f32 %v4748, 1.442695
    %v4915 = vpow.pop %v4914
    %v4916 = vmul.f32 %v4749, 1.442695
    %v4917 = vpow.pop %v4916
    %v4918 = vmul.f32 %v4750, 1.442695
    %v4919 = vpow.pop %v4918
    %v4920 = vmul.f32 %v4751, 1.442695
    %v4921 = vpow.pop %v4920
    %v4922 = vmul.f32 %v4752, 1.442695
    %v4923 = vpow.pop %v4922
    %v4924 = vmul.f32 %v4753, 1.442695
    %v4925 = vpow.pop %v4924
    %v4926 = vmul.f32 %v4754, 1.442695
    %v4927 = vpow.pop %v4926
    %v4928 = vmul.f32 %v4755, 1.442695
    %v4929 = vpow.pop %v4928
    %v4930 = vmul.f32 %v4756, 1.442695
    %v4931 = vpow.pop %v4930
    %v4932 = vmul.f32 %v4757, 1.442695
    %v4933 = vpow.pop %v4932
    %v4934 = vmul.f32 %v4758, 1.442695
    %v4935 = vpow.pop %v4934
    %v4936 = vmul.f32 %v4759, 1.442695
    %v4937 = vpow.pop %v4936
    %v4938 = vmul.f32 %v4760, 1.442695
    %v4939 = vpow.pop %v4938
    %v4940 = vmul.f32 %v4761, 1.442695
    %v4941 = vpow.pop %v4940
    %v4942 = vmul.f32 %v4762, 1.442695
    %v4943 = vpow.pop %v4942
    %v4944 = vmul.f32 %v4763, 1.442695
    %v4945 = vpow.pop %v4944
    %v4946 = vmul.f32 %v4764, 1.442695
    %v4947 = vpow.pop %v4946
    %v4948 = vmul.f32 %v4765, 1.442695
    %v4949 = vpow.pop %v4948
    %v4950 = vmul.f32 %v4766, 1.442695
    %v4951 = vpow.pop %v4950
    %v4952 = vmul.f32 %v4767, 1.442695
    %v4953 = vpow.pop %v4952
    %v4954 = vmul.f32 %v4768, 1.442695
    %v4955 = vpow.pop %v4954
    %v4956 = vmul.f32 %v4769, 1.442695
    %v4957 = vpow.pop %v4956
    %v4958 = vmul.f32 %v4770, 1.442695
    %v4959 = vpow.pop %v4958
    %v4960 = vmul.f32 %v4771, 1.442695
    %v4961 = vpow.pop %v4960
    %v4962 = vmul.f32 %v4772, 1.442695
    %v4963 = vpow.pop %v4962
    %v4964 = vmul.f32 %v4773, 1.442695
    %v4965 = vpow.pop %v4964
    %v4966 = vmul.f32 %v4774, 1.442695
    %v4967 = vpow.pop %v4966
    %v4968 = vmul.f32 %v4775, 1.442695
    %v4969 = vpow.pop %v4968
    %v4970 = vmul.f32 %v4776, 1.442695
    %v4971 = vpow.pop %v4970
    %v4972 = vmul.f32 %v4777, 1.442695
    %v4973 = vpow.pop %v4972
    %v4974 = vmul.f32 %v4778, 1.442695
    %v4975 = vpow.pop %v4974
    %v4976 = vmul.f32 %v4779, 1.442695
    %v4977 = vpow.pop %v4976
    %v4978 = vmul.f32 %v4780, 1.442695
    %v4979 = vpow.pop %v4978
    %v4980 = vmul.f32 %v4781, 1.442695
    %v4981 = vpow.pop %v4980
    %v4982 = vmul.f32 %v4782, 1.442695
    %v4983 = vpow.pop %v4982
    %v4984 = vmul.f32 %v4783, 1.442695
    %v4985 = vpow.pop %v4984
    %v4986 = vmul.f32 %v4784, 1.442695
    %v4987 = vpow.pop %v4986
    %v4988 = vmul.f32 %v4785, 1.442695
    %v4989 = vpow.pop %v4988
    %v4990 = vmul.f32 %v4786, 1.442695
    %v4991 = vpow.pop %v4990
    %v4992 = vmul.f32 %v4787, 1.442695
    %v4993 = vpow.pop %v4992
    %v4994 = vmul.f32 %v4788, 1.442695
    %v4995 = vpow.pop %v4994
    %v4996 = vmul.f32 %v4789, 1.442695
    %v4997 = vpow.pop %v4996
    %v4998 = vmul.f32 %v4790, 1.442695
    %v4999 = vpow.pop %v4998
    %v5000 = vmul.f32 %v4791, 1.442695
    %v5001 = vpow.pop %v5000
    %v5002 = vmul.f32 %v4792, 1.442695
    %v5003 = vpow.pop %v5002
    %v5004 = vmul.f32 %v4793, 1.442695
    %v5005 = vpow.pop %v5004
    %v5006 = vmul.f32 %v4794, 1.442695
    %v5007 = vpow.pop %v5006
    %v5008 = vmul.f32 %v4795, 1.442695
    %v5009 = vpow.pop %v5008
    %v5010 = vmul.f32 %v4796, 1.442695
    %v5011 = vpow.pop %v5010
    %v5012 = vmul.f32 %v4797, 1.442695
    %v5013 = vpow.pop %v5012
    %v5014 = vmul.f32 %v4798, 1.442695
    %v5015 = vpow.pop %v5014
    %v5016 = vmul.f32 %v4799, 1.442695
    %v5017 = vpow.pop %v5016
    %v5018 = vmul.f32 %v4800, 1.442695
    %v5019 = vpow.pop %v5018
    %v5020 = vmul.f32 %v4801, 1.442695
    %v5021 = vpow.pop %v5020
    %v5022 = vmul.f32 %v4802, 1.442695
    %v5023 = vpow.pop %v5022
    %v5024 = vmul.f32 %v4803, 1.442695
    %v5025 = vpow.pop %v5024
    %v5026 = vmul.f32 %v4804, 1.442695
    %v5027 = vpow.pop %v5026
    %v5028 = vmul.f32 %v4805, 1.442695
    %v5029 = vpow.pop %v5028
    %v5030 = vmul.f32 %v4806, 1.442695
    %v5031 = vpow.pop %v5030
    %v5032 = vmul.f32 %v4807, 1.442695
    %v5033 = vpow.pop %v5032
    %v5034 = vmul.f32 %v4808, 1.442695
    %v5035 = vpow.pop %v5034
    %v5036 = vmul.f32 %v4809, 1.442695
    %v5037 = vpow.pop %v5036
    %v5038 = vmul.f32 %v4810, 1.442695
    %v5039 = vpow.pop %v5038
    %v5040 = vmul.f32 %v4811, 1.442695
    %v5041 = vpow.pop %v5040
    %v5042 = vmul.f32 %v4812, 1.442695
    %v5043 = vpow.pop %v5042
    %v5044 = vmul.f32 %v4813, 1.442695
    %v5045 = vpow.pop %v5044
    %v5046 = vmul.f32 %v4814, 1.442695
    %v5047 = vpow.pop %v5046
    %v5048 = vmul.f32 %v4815, 1.442695
    %v5049 = vpow.pop %v5048
    %v5050 = vmul.f32 %v4816, 1.442695
    %v5051 = vpow.pop %v5050
    %v5052 = vmul.f32 %v4817, 1.442695
    %v5053 = vpow.pop %v5052
    %v5054 = vmul.f32 %v4818, 1.442695
    %v5055 = vpow.pop %v5054
    %v5056 = vmul.f32 %v4819, 1.442695
    %v5057 = vpow.pop %v5056
    %v5058 = vmul.f32 %v4820, 1.442695
    %v5059 = vpow.pop %v5058
    %v5060 = vmul.f32 %v4821, 1.442695
    %v5061 = vpow.pop %v5060
    %v5062 = vmul.f32 %v4822, 1.442695
    %v5063 = vpow.pop %v5062
    %v5064 = vmul.f32 %v4823, 1.442695
    %v5065 = vpow.pop %v5064
    %v5066 = vmul.f32 %v4824, 1.442695
    %v5067 = vpow.pop %v5066
    %v5068 = vmul.f32 %v4825, 1.442695
    %v5069 = vpow.pop %v5068
    %v5070 = vmul.f32 %v4826, 1.442695
    %v5071 = vpow.pop %v5070
    %v5072 = vmul.f32 %v4827, 1.442695
    %v5073 = vpow.pop %v5072
    %v5074 = vmul.f32 %v4828, 1.442695
    %v5075 = vpow.pop %v5074
    %v5076 = vmul.f32 %v4829, 1.442695
    %v5077 = vpow.pop %v5076
    %v5078 = vmul.f32 %v4830, 1.442695
    %v5079 = vpow.pop %v5078
    %v5080 = vmul.f32 %v4831, 1.442695
    %v5081 = vpow.pop %v5080
    %v5082 = vmul.f32 %v4832, 1.442695
    %v5083 = vpow.pop %v5082
    %v5084 = vmul.f32 %v4833, 1.442695
    %v5085 = vpow.pop %v5084
    %v5086 = vmul.f32 %v4834, 1.442695
    %v5087 = vpow.pop %v5086
    %v5088 = vmul.f32 %v4835, 1.442695
    %v5089 = vpow.pop %v5088
    %v5090 = vmul.f32 %v4836, 1.442695
    %v5091 = vpow.pop %v5090
    %v5092 = vmul.f32 %v4837, 1.442695
    %v5093 = vpow.pop %v5092
    %v5094 = vsub.f32 %v4839, 1.0
    %v5095 = vsub.f32 %v4841, 1.0
    %v5096 = vsub.f32 %v4843, 1.0
    %v5097 = vsub.f32 %v4845, 1.0
    %v5098 = vsub.f32 %v4847, 1.0
    %v5099 = vsub.f32 %v4849, 1.0
    %v5100 = vsub.f32 %v4851, 1.0
    %v5101 = vsub.f32 %v4853, 1.0
    %v5102 = vsub.f32 %v4855, 1.0
    %v5103 = vsub.f32 %v4857, 1.0
    %v5104 = vsub.f32 %v4859, 1.0
    %v5105 = vsub.f32 %v4861, 1.0
    %v5106 = vsub.f32 %v4863, 1.0
    %v5107 = vsub.f32 %v4865, 1.0
    %v5108 = vsub.f32 %v4867, 1.0
    %v5109 = vsub.f32 %v4869, 1.0
    %v5110 = vsub.f32 %v4871, 1.0
    %v5111 = vsub.f32 %v4873, 1.0
    %v5112 = vsub.f32 %v4875, 1.0
    %v5113 = vsub.f32 %v4877, 1.0
    %v5114 = vsub.f32 %v4879, 1.0
    %v5115 = vsub.f32 %v4881, 1.0
    %v5116 = vsub.f32 %v4883, 1.0
    %v5117 = vsub.f32 %v4885, 1.0
    %v5118 = vsub.f32 %v4887, 1.0
    %v5119 = vsub.f32 %v4889, 1.0
    %v5120 = vsub.f32 %v4891, 1.0
    %v5121 = vsub.f32 %v4893, 1.0
    %v5122 = vsub.f32 %v4895, 1.0
    %v5123 = vsub.f32 %v4897, 1.0
    %v5124 = vsub.f32 %v4899, 1.0
    %v5125 = vsub.f32 %v4901, 1.0
    %v5126 = vsub.f32 %v4903, 1.0
    %v5127 = vsub.f32 %v4905, 1.0
    %v5128 = vsub.f32 %v4907, 1.0
    %v5129 = vsub.f32 %v4909, 1.0
    %v5130 = vsub.f32 %v4911, 1.0
    %v5131 = vsub.f32 %v4913, 1.0
    %v5132 = vsub.f32 %v4915, 1.0
    %v5133 = vsub.f32 %v4917, 1.0
    %v5134 = vsub.f32 %v4919, 1.0
    %v5135 = vsub.f32 %v4921, 1.0
    %v5136 = vsub.f32 %v4923, 1.0
    %v5137 = vsub.f32 %v4925, 1.0
    %v5138 = vsub.f32 %v4927, 1.0
    %v5139 = vsub.f32 %v4929, 1.0
    %v5140 = vsub.f32 %v4931, 1.0
    %v5141 = vsub.f32 %v4933, 1.0
    %v5142 = vsub.f32 %v4935, 1.0
    %v5143 = vsub.f32 %v4937, 1.0
    %v5144 = vsub.f32 %v4939, 1.0
    %v5145 = vsub.f32 %v4941, 1.0
    %v5146 = vsub.f32 %v4943, 1.0
    %v5147 = vsub.f32 %v4945, 1.0
    %v5148 = vsub.f32 %v4947, 1.0
    %v5149 = vsub.f32 %v4949, 1.0
    %v5150 = vsub.f32 %v4951, 1.0
    %v5151 = vsub.f32 %v4953, 1.0
    %v5152 = vsub.f32 %v4955, 1.0
    %v5153 = vsub.f32 %v4957, 1.0
    %v5154 = vsub.f32 %v4959, 1.0
    %v5155 = vsub.f32 %v4961, 1.0
    %v5156 = vsub.f32 %v4963, 1.0
    %v5157 = vsub.f32 %v4965, 1.0
    %v5158 = vsub.f32 %v4967, 1.0
    %v5159 = vsub.f32 %v4969, 1.0
    %v5160 = vsub.f32 %v4971, 1.0
    %v5161 = vsub.f32 %v4973, 1.0
    %v5162 = vsub.f32 %v4975, 1.0
    %v5163 = vsub.f32 %v4977, 1.0
    %v5164 = vsub.f32 %v4979, 1.0
    %v5165 = vsub.f32 %v4981, 1.0
    %v5166 = vsub.f32 %v4983, 1.0
    %v5167 = vsub.f32 %v4985, 1.0
    %v5168 = vsub.f32 %v4987, 1.0
    %v5169 = vsub.f32 %v4989, 1.0
    %v5170 = vsub.f32 %v4991, 1.0
    %v5171 = vsub.f32 %v4993, 1.0
    %v5172 = vsub.f32 %v4995, 1.0
    %v5173 = vsub.f32 %v4997, 1.0
    %v5174 = vsub.f32 %v4999, 1.0
    %v5175 = vsub.f32 %v5001, 1.0
    %v5176 = vsub.f32 %v5003, 1.0
    %v5177 = vsub.f32 %v5005, 1.0
    %v5178 = vsub.f32 %v5007, 1.0
    %v5179 = vsub.f32 %v5009, 1.0
    %v5180 = vsub.f32 %v5011, 1.0
    %v5181 = vsub.f32 %v5013, 1.0
    %v5182 = vsub.f32 %v5015, 1.0
    %v5183 = vsub.f32 %v5017, 1.0
    %v5184 = vsub.f32 %v5019, 1.0
    %v5185 = vsub.f32 %v5021, 1.0
    %v5186 = vsub.f32 %v5023, 1.0
    %v5187 = vsub.f32 %v5025, 1.0
    %v5188 = vsub.f32 %v5027, 1.0
    %v5189 = vsub.f32 %v5029, 1.0
    %v5190 = vsub.f32 %v5031, 1.0
    %v5191 = vsub.f32 %v5033, 1.0
    %v5192 = vsub.f32 %v5035, 1.0
    %v5193 = vsub.f32 %v5037, 1.0
    %v5194 = vsub.f32 %v5039, 1.0
    %v5195 = vsub.f32 %v5041, 1.0
    %v5196 = vsub.f32 %v5043, 1.0
    %v5197 = vsub.f32 %v5045, 1.0
    %v5198 = vsub.f32 %v5047, 1.0
    %v5199 = vsub.f32 %v5049, 1.0
    %v5200 = vsub.f32 %v5051, 1.0
    %v5201 = vsub.f32 %v5053, 1.0
    %v5202 = vsub.f32 %v5055, 1.0
    %v5203 = vsub.f32 %v5057, 1.0
    %v5204 = vsub.f32 %v5059, 1.0
    %v5205 = vsub.f32 %v5061, 1.0
    %v5206 = vsub.f32 %v5063, 1.0
    %v5207 = vsub.f32 %v5065, 1.0
    %v5208 = vsub.f32 %v5067, 1.0
    %v5209 = vsub.f32 %v5069, 1.0
    %v5210 = vsub.f32 %v5071, 1.0
    %v5211 = vsub.f32 %v5073, 1.0
    %v5212 = vsub.f32 %v5075, 1.0
    %v5213 = vsub.f32 %v5077, 1.0
    %v5214 = vsub.f32 %v5079, 1.0
    %v5215 = vsub.f32 %v5081, 1.0
    %v5216 = vsub.f32 %v5083, 1.0
    %v5217 = vsub.f32 %v5085, 1.0
    %v5218 = vsub.f32 %v5087, 1.0
    %v5219 = vsub.f32 %v5089, 1.0
    %v5220 = vsub.f32 %v5091, 1.0
    %v5221 = vsub.f32 %v5093, 1.0
    %v5222 = vsel %vm4582, %v4454, %v5094
    %v5223 = vsel %vm4583, %v4455, %v5095
    %v5224 = vsel %vm4584, %v4456, %v5096
    %v5225 = vsel %vm4585, %v4457, %v5097
    %v5226 = vsel %vm4586, %v4458, %v5098
    %v5227 = vsel %vm4587, %v4459, %v5099
    %v5228 = vsel %vm4588, %v4460, %v5100
    %v5229 = vsel %vm4589, %v4461, %v5101
    %v5230 = vsel %vm4590, %v4462, %v5102
    %v5231 = vsel %vm4591, %v4463, %v5103
    %v5232 = vsel %vm4592, %v4464, %v5104
    %v5233 = vsel %vm4593, %v4465, %v5105
    %v5234 = vsel %vm4594, %v4466, %v5106
    %v5235 = vsel %vm4595, %v4467, %v5107
    %v5236 = vsel %vm4596, %v4468, %v5108
    %v5237 = vsel %vm4597, %v4469, %v5109
    %v5238 = vsel %vm4598, %v4470, %v5110
    %v5239 = vsel %vm4599, %v4471, %v5111
    %v5240 = vsel %vm4600, %v4472, %v5112
    %v5241 = vsel %vm4601, %v4473, %v5113
    %v5242 = vsel %vm4602, %v4474, %v5114
    %v5243 = vsel %vm4603, %v4475, %v5115
    %v5244 = vsel %vm4604, %v4476, %v5116
    %v5245 = vsel %vm4605, %v4477, %v5117
    %v5246 = vsel %vm4606, %v4478, %v5118
    %v5247 = vsel %vm4607, %v4479, %v5119
    %v5248 = vsel %vm4608, %v4480, %v5120
    %v5249 = vsel %vm4609, %v4481, %v5121
    %v5250 = vsel %vm4610, %v4482, %v5122
    %v5251 = vsel %vm4611, %v4483, %v5123
    %v5252 = vsel %vm4612, %v4484, %v5124
    %v5253 = vsel %vm4613, %v4485, %v5125
    %v5254 = vsel %vm4614, %v4486, %v5126
    %v5255 = vsel %vm4615, %v4487, %v5127
    %v5256 = vsel %vm4616, %v4488, %v5128
    %v5257 = vsel %vm4617, %v4489, %v5129
    %v5258 = vsel %vm4618, %v4490, %v5130
    %v5259 = vsel %vm4619, %v4491, %v5131
    %v5260 = vsel %vm4620, %v4492, %v5132
    %v5261 = vsel %vm4621, %v4493, %v5133
    %v5262 = vsel %vm4622, %v4494, %v5134
    %v5263 = vsel %vm4623, %v4495, %v5135
    %v5264 = vsel %vm4624, %v4496, %v5136
    %v5265 = vsel %vm4625, %v4497, %v5137
    %v5266 = vsel %vm4626, %v4498, %v5138
    %v5267 = vsel %vm4627, %v4499, %v5139
    %v5268 = vsel %vm4628, %v4500, %v5140
    %v5269 = vsel %vm4629, %v4501, %v5141
    %v5270 = vsel %vm4630, %v4502, %v5142
    %v5271 = vsel %vm4631, %v4503, %v5143
    %v5272 = vsel %vm4632, %v4504, %v5144
    %v5273 = vsel %vm4633, %v4505, %v5145
    %v5274 = vsel %vm4634, %v4506, %v5146
    %v5275 = vsel %vm4635, %v4507, %v5147
    %v5276 = vsel %vm4636, %v4508, %v5148
    %v5277 = vsel %vm4637, %v4509, %v5149
    %v5278 = vsel %vm4638, %v4510, %v5150
    %v5279 = vsel %vm4639, %v4511, %v5151
    %v5280 = vsel %vm4640, %v4512, %v5152
    %v5281 = vsel %vm4641, %v4513, %v5153
    %v5282 = vsel %vm4642, %v4514, %v5154
    %v5283 = vsel %vm4643, %v4515, %v5155
    %v5284 = vsel %vm4644, %v4516, %v5156
    %v5285 = vsel %vm4645, %v4517, %v5157
    %v5286 = vsel %vm4646, %v4518, %v5158
    %v5287 = vsel %vm4647, %v4519, %v5159
    %v5288 = vsel %vm4648, %v4520, %v5160
    %v5289 = vsel %vm4649, %v4521, %v5161
    %v5290 = vsel %vm4650, %v4522, %v5162
    %v5291 = vsel %vm4651, %v4523, %v5163
    %v5292 = vsel %vm4652, %v4524, %v5164
    %v5293 = vsel %vm4653, %v4525, %v5165
    %v5294 = vsel %vm4654, %v4526, %v5166
    %v5295 = vsel %vm4655, %v4527, %v5167
    %v5296 = vsel %vm4656, %v4528, %v5168
    %v5297 = vsel %vm4657, %v4529, %v5169
    %v5298 = vsel %vm4658, %v4530, %v5170
    %v5299 = vsel %vm4659, %v4531, %v5171
    %v5300 = vsel %vm4660, %v4532, %v5172
    %v5301 = vsel %vm4661, %v4533, %v5173
    %v5302 = vsel %vm4662, %v4534, %v5174
    %v5303 = vsel %vm4663, %v4535, %v5175
    %v5304 = vsel %vm4664, %v4536, %v5176
    %v5305 = vsel %vm4665, %v4537, %v5177
    %v5306 = vsel %vm4666, %v4538, %v5178
    %v5307 = vsel %vm4667, %v4539, %v5179
    %v5308 = vsel %vm4668, %v4540, %v5180
    %v5309 = vsel %vm4669, %v4541, %v5181
    %v5310 = vsel %vm4670, %v4542, %v5182
    %v5311 = vsel %vm4671, %v4543, %v5183
    %v5312 = vsel %vm4672, %v4544, %v5184
    %v5313 = vsel %vm4673, %v4545, %v5185
    %v5314 = vsel %vm4674, %v4546, %v5186
    %v5315 = vsel %vm4675, %v4547, %v5187
    %v5316 = vsel %vm4676, %v4548, %v5188
    %v5317 = vsel %vm4677, %v4549, %v5189
    %v5318 = vsel %vm4678, %v4550, %v5190
    %v5319 = vsel %vm4679, %v4551, %v5191
    %v5320 = vsel %vm4680, %v4552, %v5192
    %v5321 = vsel %vm4681, %v4553, %v5193
    %v5322 = vsel %vm4682, %v4554, %v5194
    %v5323 = vsel %vm4683, %v4555, %v5195
    %v5324 = vsel %vm4684, %v4556, %v5196
    %v5325 = vsel %vm4685, %v4557, %v5197
    %v5326 = vsel %vm4686, %v4558, %v5198
    %v5327 = vsel %vm4687, %v4559, %v5199
    %v5328 = vsel %vm4688, %v4560, %v5200
    %v5329 = vsel %vm4689, %v4561, %v5201
    %v5330 = vsel %vm4690, %v4562, %v5202
    %v5331 = vsel %vm4691, %v4563, %v5203
    %v5332 = vsel %vm4692, %v4564, %v5204
    %v5333 = vsel %vm4693, %v4565, %v5205
    %v5334 = vsel %vm4694, %v4566, %v5206
    %v5335 = vsel %vm4695, %v4567, %v5207
    %v5336 = vsel %vm4696, %v4568, %v5208
    %v5337 = vsel %vm4697, %v4569, %v5209
    %v5338 = vsel %vm4698, %v4570, %v5210
    %v5339 = vsel %vm4699, %v4571, %v5211
    %v5340 = vsel %vm4700, %v4572, %v5212
    %v5341 = vsel %vm4701, %v4573, %v5213
    %v5342 = vsel %vm4702, %v4574, %v5214
    %v5343 = vsel %vm4703, %v4575, %v5215
    %v5344 = vsel %vm4704, %v4576, %v5216
    %v5345 = vsel %vm4705, %v4577, %v5217
    %v5346 = vsel %vm4706, %v4578, %v5218
    %v5347 = vsel %vm4707, %v4579, %v5219
    %v5348 = vsel %vm4708, %v4580, %v5220
    %v5349 = vsel %vm4709, %v4581, %v5221
    %v5350 = vld [vmem:[%s4] sm:$0x1]
    %v5351 = vunpack.c.l.bf16 %v5350
    %v5352 = vmul.f32 %v5222, %v2405
    %v5353 = vmul.f32 %v5223, %v2406
    %v5354 = vmul.f32 %v5224, %v2407
    %v5355 = vmul.f32 %v5225, %v2408
    %v5356 = vmul.f32 %v5226, %v2409
    %v5357 = vmul.f32 %v5227, %v2410
    %v5358 = vmul.f32 %v5228, %v2411
    %v5359 = vmul.f32 %v5229, %v2412
    %v5360 = vmul.f32 %v5230, %v2413
    %v5361 = vmul.f32 %v5231, %v2414
    %v5362 = vmul.f32 %v5232, %v2415
    %v5363 = vmul.f32 %v5233, %v2416
    %v5364 = vmul.f32 %v5234, %v2417
    %v5365 = vmul.f32 %v5235, %v2418
    %v5366 = vmul.f32 %v5236, %v2419
    %v5367 = vmul.f32 %v5237, %v2420
    %v5368 = vmul.f32 %v5238, %v2421
    %v5369 = vmul.f32 %v5239, %v2422
    %v5370 = vmul.f32 %v5240, %v2423
    %v5371 = vmul.f32 %v5241, %v2424
    %v5372 = vmul.f32 %v5242, %v2425
    %v5373 = vmul.f32 %v5243, %v2426
    %v5374 = vmul.f32 %v5244, %v2427
    %v5375 = vmul.f32 %v5245, %v2428
    %v5376 = vmul.f32 %v5246, %v2429
    %v5377 = vmul.f32 %v5247, %v2430
    %v5378 = vmul.f32 %v5248, %v2431
    %v5379 = vmul.f32 %v5249, %v2432
    %v5380 = vmul.f32 %v5250, %v2433
    %v5381 = vmul.f32 %v5251, %v2434
    %v5382 = vmul.f32 %v5252, %v2435
    %v5383 = vmul.f32 %v5253, %v2436
    %v5384 = vmul.f32 %v5254, %v2437
    %v5385 = vmul.f32 %v5255, %v2438
    %v5386 = vmul.f32 %v5256, %v2439
    %v5387 = vmul.f32 %v5257, %v2440
    %v5388 = vmul.f32 %v5258, %v2441
    %v5389 = vmul.f32 %v5259, %v2442
    %v5390 = vmul.f32 %v5260, %v2443
    %v5391 = vmul.f32 %v5261, %v2444
    %v5392 = vmul.f32 %v5262, %v2445
    %v5393 = vmul.f32 %v5263, %v2446
    %v5394 = vmul.f32 %v5264, %v2447
    %v5395 = vmul.f32 %v5265, %v2448
    %v5396 = vmul.f32 %v5266, %v2449
    %v5397 = vmul.f32 %v5267, %v2450
    %v5398 = vmul.f32 %v5268, %v2451
    %v5399 = vmul.f32 %v5269, %v2452
    %v5400 = vmul.f32 %v5270, %v2453
    %v5401 = vmul.f32 %v5271, %v2454
    %v5402 = vmul.f32 %v5272, %v2455
    %v5403 = vmul.f32 %v5273, %v2456
    %v5404 = vmul.f32 %v5274, %v2457
    %v5405 = vmul.f32 %v5275, %v2458
    %v5406 = vmul.f32 %v5276, %v2459
    %v5407 = vmul.f32 %v5277, %v2460
    %v5408 = vmul.f32 %v5278, %v2461
    %v5409 = vmul.f32 %v5279, %v2462
    %v5410 = vmul.f32 %v5280, %v2463
    %v5411 = vmul.f32 %v5281, %v2464
    %v5412 = vmul.f32 %v5282, %v2465
    %v5413 = vmul.f32 %v5283, %v2466
    %v5414 = vmul.f32 %v5284, %v2467
    %v5415 = vmul.f32 %v5285, %v2468
    %v5416 = vmul.f32 %v5286, %v2469
    %v5417 = vmul.f32 %v5287, %v2470
    %v5418 = vmul.f32 %v5288, %v2471
    %v5419 = vmul.f32 %v5289, %v2472
    %v5420 = vmul.f32 %v5290, %v2473
    %v5421 = vmul.f32 %v5291, %v2474
    %v5422 = vmul.f32 %v5292, %v2475
    %v5423 = vmul.f32 %v5293, %v2476
    %v5424 = vmul.f32 %v5294, %v2477
    %v5425 = vmul.f32 %v5295, %v2478
    %v5426 = vmul.f32 %v5296, %v2479
    %v5427 = vmul.f32 %v5297, %v2480
    %v5428 = vmul.f32 %v5298, %v2481
    %v5429 = vmul.f32 %v5299, %v2482
    %v5430 = vmul.f32 %v5300, %v2483
    %v5431 = vmul.f32 %v5301, %v2484
    %v5432 = vmul.f32 %v5302, %v2485
    %v5433 = vmul.f32 %v5303, %v2486
    %v5434 = vmul.f32 %v5304, %v2487
    %v5435 = vmul.f32 %v5305, %v2488
    %v5436 = vmul.f32 %v5306, %v2489
    %v5437 = vmul.f32 %v5307, %v2490
    %v5438 = vmul.f32 %v5308, %v2491
    %v5439 = vmul.f32 %v5309, %v2492
    %v5440 = vmul.f32 %v5310, %v2493
    %v5441 = vmul.f32 %v5311, %v2494
    %v5442 = vmul.f32 %v5312, %v2495
    %v5443 = vmul.f32 %v5313, %v2496
    %v5444 = vmul.f32 %v5314, %v2497
    %v5445 = vmul.f32 %v5315, %v2498
    %v5446 = vmul.f32 %v5316, %v2499
    %v5447 = vmul.f32 %v5317, %v2500
    %v5448 = vmul.f32 %v5318, %v2501
    %v5449 = vmul.f32 %v5319, %v2502
    %v5450 = vmul.f32 %v5320, %v2503
    %v5451 = vmul.f32 %v5321, %v2504
    %v5452 = vmul.f32 %v5322, %v2505
    %v5453 = vmul.f32 %v5323, %v2506
    %v5454 = vmul.f32 %v5324, %v2507
    %v5455 = vmul.f32 %v5325, %v2508
    %v5456 = vmul.f32 %v5326, %v2509
    %v5457 = vmul.f32 %v5327, %v2510
    %v5458 = vmul.f32 %v5328, %v2511
    %v5459 = vmul.f32 %v5329, %v2512
    %v5460 = vmul.f32 %v5330, %v2513
    %v5461 = vmul.f32 %v5331, %v2514
    %v5462 = vmul.f32 %v5332, %v2515
    %v5463 = vmul.f32 %v5333, %v2516
    %v5464 = vmul.f32 %v5334, %v2517
    %v5465 = vmul.f32 %v5335, %v2518
    %v5466 = vmul.f32 %v5336, %v2519
    %v5467 = vmul.f32 %v5337, %v2520
    %v5468 = vmul.f32 %v5338, %v2521
    %v5469 = vmul.f32 %v5339, %v2522
    %v5470 = vmul.f32 %v5340, %v2523
    %v5471 = vmul.f32 %v5341, %v2524
    %v5472 = vmul.f32 %v5342, %v2525
    %v5473 = vmul.f32 %v5343, %v2526
    %v5474 = vmul.f32 %v5344, %v2527
    %v5475 = vmul.f32 %v5345, %v2528
    %v5476 = vmul.f32 %v5346, %v2529
    %v5477 = vmul.f32 %v5347, %v2530
    %v5478 = vmul.f32 %v5348, %v2531
    %v5479 = vmul.f32 %v5349, %v2532
    %v5480 = vperm.slane %v5351, 0
    %v5481 = vmul.f32 %v2533, %v5480
    %v5482 = vmul.f32 %v2534, %v5480
    %v5483 = vmul.f32 %v2535, %v5480
    %v5484 = vmul.f32 %v2536, %v5480
    %v5485 = vmul.f32 %v2537, %v5480
    %v5486 = vmul.f32 %v2538, %v5480
    %v5487 = vmul.f32 %v2539, %v5480
    %v5488 = vmul.f32 %v2540, %v5480
    %v5489 = vmul.f32 %v2541, %v5480
    %v5490 = vmul.f32 %v2542, %v5480
    %v5491 = vmul.f32 %v2543, %v5480
    %v5492 = vmul.f32 %v2544, %v5480
    %v5493 = vmul.f32 %v2545, %v5480
    %v5494 = vmul.f32 %v2546, %v5480
    %v5495 = vmul.f32 %v2547, %v5480
    %v5496 = vmul.f32 %v2548, %v5480
    %v5497 = vmul.f32 %v2549, %v5480
    %v5498 = vmul.f32 %v2550, %v5480
    %v5499 = vmul.f32 %v2551, %v5480
    %v5500 = vmul.f32 %v2552, %v5480
    %v5501 = vmul.f32 %v2553, %v5480
    %v5502 = vmul.f32 %v2554, %v5480
    %v5503 = vmul.f32 %v2555, %v5480
    %v5504 = vmul.f32 %v2556, %v5480
    %v5505 = vmul.f32 %v2557, %v5480
    %v5506 = vmul.f32 %v2558, %v5480
    %v5507 = vmul.f32 %v2559, %v5480
    %v5508 = vmul.f32 %v2560, %v5480
    %v5509 = vmul.f32 %v2561, %v5480
    %v5510 = vmul.f32 %v2562, %v5480
    %v5511 = vmul.f32 %v2563, %v5480
    %v5512 = vmul.f32 %v2564, %v5480
    %v5513 = vmul.f32 %v2565, %v5480
    %v5514 = vmul.f32 %v2566, %v5480
    %v5515 = vmul.f32 %v2567, %v5480
    %v5516 = vmul.f32 %v2568, %v5480
    %v5517 = vmul.f32 %v2569, %v5480
    %v5518 = vmul.f32 %v2570, %v5480
    %v5519 = vmul.f32 %v2571, %v5480
    %v5520 = vmul.f32 %v2572, %v5480
    %v5521 = vmul.f32 %v2573, %v5480
    %v5522 = vmul.f32 %v2574, %v5480
    %v5523 = vmul.f32 %v2575, %v5480
    %v5524 = vmul.f32 %v2576, %v5480
    %v5525 = vmul.f32 %v2577, %v5480
    %v5526 = vmul.f32 %v2578, %v5480
    %v5527 = vmul.f32 %v2579, %v5480
    %v5528 = vmul.f32 %v2580, %v5480
    %v5529 = vmul.f32 %v2581, %v5480
    %v5530 = vmul.f32 %v2582, %v5480
    %v5531 = vmul.f32 %v2583, %v5480
    %v5532 = vmul.f32 %v2584, %v5480
    %v5533 = vmul.f32 %v2585, %v5480
    %v5534 = vmul.f32 %v2586, %v5480
    %v5535 = vmul.f32 %v2587, %v5480
    %v5536 = vmul.f32 %v2588, %v5480
    %v5537 = vmul.f32 %v2589, %v5480
    %v5538 = vmul.f32 %v2590, %v5480
    %v5539 = vmul.f32 %v2591, %v5480
    %v5540 = vmul.f32 %v2592, %v5480
    %v5541 = vmul.f32 %v2593, %v5480
    %v5542 = vmul.f32 %v2594, %v5480
    %v5543 = vmul.f32 %v2595, %v5480
    %v5544 = vmul.f32 %v2596, %v5480
    %v5545 = vmul.f32 %v2597, %v5480
    %v5546 = vmul.f32 %v2598, %v5480
    %v5547 = vmul.f32 %v2599, %v5480
    %v5548 = vmul.f32 %v2600, %v5480
    %v5549 = vmul.f32 %v2601, %v5480
    %v5550 = vmul.f32 %v2602, %v5480
    %v5551 = vmul.f32 %v2603, %v5480
    %v5552 = vmul.f32 %v2604, %v5480
    %v5553 = vmul.f32 %v2605, %v5480
    %v5554 = vmul.f32 %v2606, %v5480
    %v5555 = vmul.f32 %v2607, %v5480
    %v5556 = vmul.f32 %v2608, %v5480
    %v5557 = vmul.f32 %v2609, %v5480
    %v5558 = vmul.f32 %v2610, %v5480
    %v5559 = vmul.f32 %v2611, %v5480
    %v5560 = vmul.f32 %v2612, %v5480
    %v5561 = vmul.f32 %v2613, %v5480
    %v5562 = vmul.f32 %v2614, %v5480
    %v5563 = vmul.f32 %v2615, %v5480
    %v5564 = vmul.f32 %v2616, %v5480
    %v5565 = vmul.f32 %v2617, %v5480
    %v5566 = vmul.f32 %v2618, %v5480
    %v5567 = vmul.f32 %v2619, %v5480
    %v5568 = vmul.f32 %v2620, %v5480
    %v5569 = vmul.f32 %v2621, %v5480
    %v5570 = vmul.f32 %v2622, %v5480
    %v5571 = vmul.f32 %v2623, %v5480
    %v5572 = vmul.f32 %v2624, %v5480
    %v5573 = vmul.f32 %v2625, %v5480
    %v5574 = vmul.f32 %v2626, %v5480
    %v5575 = vmul.f32 %v2627, %v5480
    %v5576 = vmul.f32 %v2628, %v5480
    %v5577 = vmul.f32 %v2629, %v5480
    %v5578 = vmul.f32 %v2630, %v5480
    %v5579 = vmul.f32 %v2631, %v5480
    %v5580 = vmul.f32 %v2632, %v5480
    %v5581 = vmul.f32 %v2633, %v5480
    %v5582 = vmul.f32 %v2634, %v5480
    %v5583 = vmul.f32 %v2635, %v5480
    %v5584 = vmul.f32 %v2636, %v5480
    %v5585 = vmul.f32 %v2637, %v5480
    %v5586 = vmul.f32 %v2638, %v5480
    %v5587 = vmul.f32 %v2639, %v5480
    %v5588 = vmul.f32 %v2640, %v5480
    %v5589 = vmul.f32 %v2641, %v5480
    %v5590 = vmul.f32 %v2642, %v5480
    %v5591 = vmul.f32 %v2643, %v5480
    %v5592 = vmul.f32 %v2644, %v5480
    %v5593 = vmul.f32 %v2645, %v5480
    %v5594 = vmul.f32 %v2646, %v5480
    %v5595 = vmul.f32 %v2647, %v5480
    %v5596 = vmul.f32 %v2648, %v5480
    %v5597 = vmul.f32 %v2649, %v5480
    %v5598 = vmul.f32 %v2650, %v5480
    %v5599 = vmul.f32 %v2651, %v5480
    %v5600 = vmul.f32 %v2652, %v5480
    %v5601 = vmul.f32 %v2653, %v5480
    %v5602 = vmul.f32 %v2654, %v5480
    %v5603 = vmul.f32 %v2655, %v5480
    %v5604 = vmul.f32 %v2656, %v5480
    %v5605 = vmul.f32 %v2657, %v5480
    %v5606 = vmul.f32 %v2658, %v5480
    %v5607 = vmul.f32 %v2659, %v5480
    %v5608 = vmul.f32 %v2660, %v5480
    %v5609 = vadd.f32 %v5352, %v5481
    %v5610 = vadd.f32 %v5353, %v5482
    %v5611 = vadd.f32 %v5354, %v5483
    %v5612 = vadd.f32 %v5355, %v5484
    %v5613 = vadd.f32 %v5356, %v5485
    %v5614 = vadd.f32 %v5357, %v5486
    %v5615 = vadd.f32 %v5358, %v5487
    %v5616 = vadd.f32 %v5359, %v5488
    %v5617 = vadd.f32 %v5360, %v5489
    %v5618 = vadd.f32 %v5361, %v5490
    %v5619 = vadd.f32 %v5362, %v5491
    %v5620 = vadd.f32 %v5363, %v5492
    %v5621 = vadd.f32 %v5364, %v5493
    %v5622 = vadd.f32 %v5365, %v5494
    %v5623 = vadd.f32 %v5366, %v5495
    %v5624 = vadd.f32 %v5367, %v5496
    %v5625 = vadd.f32 %v5368, %v5497
    %v5626 = vadd.f32 %v5369, %v5498
    %v5627 = vadd.f32 %v5370, %v5499
    %v5628 = vadd.f32 %v5371, %v5500
    %v5629 = vadd.f32 %v5372, %v5501
    %v5630 = vadd.f32 %v5373, %v5502
    %v5631 = vadd.f32 %v5374, %v5503
    %v5632 = vadd.f32 %v5375, %v5504
    %v5633 = vadd.f32 %v5376, %v5505
    %v5634 = vadd.f32 %v5377, %v5506
    %v5635 = vadd.f32 %v5378, %v5507
    %v5636 = vadd.f32 %v5379, %v5508
    %v5637 = vadd.f32 %v5380, %v5509
    %v5638 = vadd.f32 %v5381, %v5510
    %v5639 = vadd.f32 %v5382, %v5511
    %v5640 = vadd.f32 %v5383, %v5512
    %v5641 = vadd.f32 %v5384, %v5513
    %v5642 = vadd.f32 %v5385, %v5514
    %v5643 = vadd.f32 %v5386, %v5515
    %v5644 = vadd.f32 %v5387, %v5516
    %v5645 = vadd.f32 %v5388, %v5517
    %v5646 = vadd.f32 %v5389, %v5518
    %v5647 = vadd.f32 %v5390, %v5519
    %v5648 = vadd.f32 %v5391, %v5520
    %v5649 = vadd.f32 %v5392, %v5521
    %v5650 = vadd.f32 %v5393, %v5522
    %v5651 = vadd.f32 %v5394, %v5523
    %v5652 = vadd.f32 %v5395, %v5524
    %v5653 = vadd.f32 %v5396, %v5525
    %v5654 = vadd.f32 %v5397, %v5526
    %v5655 = vadd.f32 %v5398, %v5527
    %v5656 = vadd.f32 %v5399, %v5528
    %v5657 = vadd.f32 %v5400, %v5529
    %v5658 = vadd.f32 %v5401, %v5530
    %v5659 = vadd.f32 %v5402, %v5531
    %v5660 = vadd.f32 %v5403, %v5532
    %v5661 = vadd.f32 %v5404, %v5533
    %v5662 = vadd.f32 %v5405, %v5534
    %v5663 = vadd.f32 %v5406, %v5535
    %v5664 = vadd.f32 %v5407, %v5536
    %v5665 = vadd.f32 %v5408, %v5537
    %v5666 = vadd.f32 %v5409, %v5538
    %v5667 = vadd.f32 %v5410, %v5539
    %v5668 = vadd.f32 %v5411, %v5540
    %v5669 = vadd.f32 %v5412, %v5541
    %v5670 = vadd.f32 %v5413, %v5542
    %v5671 = vadd.f32 %v5414, %v5543
    %v5672 = vadd.f32 %v5415, %v5544
    %v5673 = vadd.f32 %v5416, %v5545
    %v5674 = vadd.f32 %v5417, %v5546
    %v5675 = vadd.f32 %v5418, %v5547
    %v5676 = vadd.f32 %v5419, %v5548
    %v5677 = vadd.f32 %v5420, %v5549
    %v5678 = vadd.f32 %v5421, %v5550
    %v5679 = vadd.f32 %v5422, %v5551
    %v5680 = vadd.f32 %v5423, %v5552
    %v5681 = vadd.f32 %v5424, %v5553
    %v5682 = vadd.f32 %v5425, %v5554
    %v5683 = vadd.f32 %v5426, %v5555
    %v5684 = vadd.f32 %v5427, %v5556
    %v5685 = vadd.f32 %v5428, %v5557
    %v5686 = vadd.f32 %v5429, %v5558
    %v5687 = vadd.f32 %v5430, %v5559
    %v5688 = vadd.f32 %v5431, %v5560
    %v5689 = vadd.f32 %v5432, %v5561
    %v5690 = vadd.f32 %v5433, %v5562
    %v5691 = vadd.f32 %v5434, %v5563
    %v5692 = vadd.f32 %v5435, %v5564
    %v5693 = vadd.f32 %v5436, %v5565
    %v5694 = vadd.f32 %v5437, %v5566
    %v5695 = vadd.f32 %v5438, %v5567
    %v5696 = vadd.f32 %v5439, %v5568
    %v5697 = vadd.f32 %v5440, %v5569
    %v5698 = vadd.f32 %v5441, %v5570
    %v5699 = vadd.f32 %v5442, %v5571
    %v5700 = vadd.f32 %v5443, %v5572
    %v5701 = vadd.f32 %v5444, %v5573
    %v5702 = vadd.f32 %v5445, %v5574
    %v5703 = vadd.f32 %v5446, %v5575
    %v5704 = vadd.f32 %v5447, %v5576
    %v5705 = vadd.f32 %v5448, %v5577
    %v5706 = vadd.f32 %v5449, %v5578
    %v5707 = vadd.f32 %v5450, %v5579
    %v5708 = vadd.f32 %v5451, %v5580
    %v5709 = vadd.f32 %v5452, %v5581
    %v5710 = vadd.f32 %v5453, %v5582
    %v5711 = vadd.f32 %v5454, %v5583
    %v5712 = vadd.f32 %v5455, %v5584
    %v5713 = vadd.f32 %v5456, %v5585
    %v5714 = vadd.f32 %v5457, %v5586
    %v5715 = vadd.f32 %v5458, %v5587
    %v5716 = vadd.f32 %v5459, %v5588
    %v5717 = vadd.f32 %v5460, %v5589
    %v5718 = vadd.f32 %v5461, %v5590
    %v5719 = vadd.f32 %v5462, %v5591
    %v5720 = vadd.f32 %v5463, %v5592
    %v5721 = vadd.f32 %v5464, %v5593
    %v5722 = vadd.f32 %v5465, %v5594
    %v5723 = vadd.f32 %v5466, %v5595
    %v5724 = vadd.f32 %v5467, %v5596
    %v5725 = vadd.f32 %v5468, %v5597
    %v5726 = vadd.f32 %v5469, %v5598
    %v5727 = vadd.f32 %v5470, %v5599
    %v5728 = vadd.f32 %v5471, %v5600
    %v5729 = vadd.f32 %v5472, %v5601
    %v5730 = vadd.f32 %v5473, %v5602
    %v5731 = vadd.f32 %v5474, %v5603
    %v5732 = vadd.f32 %v5475, %v5604
    %v5733 = vadd.f32 %v5476, %v5605
    %v5734 = vadd.f32 %v5477, %v5606
    %v5735 = vadd.f32 %v5478, %v5607
    %v5736 = vadd.f32 %v5479, %v5608
    %5737 = vadd.xlane.f32.xlu0 %v5609
    %v5738 = vpop.xlane.xlu0 %5737
    %5739 = vadd.xlane.f32.xlu0 %v5610
    %v5740 = vpop.xlane.xlu0 %5739
    %5741 = vadd.xlane.f32.xlu0 %v5611
    %v5742 = vpop.xlane.xlu0 %5741
    %5743 = vadd.xlane.f32.xlu0 %v5612
    %v5744 = vpop.xlane.xlu0 %5743
    %5745 = vadd.xlane.f32.xlu0 %v5613
    %v5746 = vpop.xlane.xlu0 %5745
    %5747 = vadd.xlane.f32.xlu0 %v5614
    %v5748 = vpop.xlane.xlu0 %5747
    %5749 = vadd.xlane.f32.xlu0 %v5615
    %v5750 = vpop.xlane.xlu0 %5749
    %5751 = vadd.xlane.f32.xlu0 %v5616
    %v5752 = vpop.xlane.xlu0 %5751
    %5753 = vadd.xlane.f32.xlu0 %v5617
    %v5754 = vpop.xlane.xlu0 %5753
    %5755 = vadd.xlane.f32.xlu0 %v5618
    %v5756 = vpop.xlane.xlu0 %5755
    %5757 = vadd.xlane.f32.xlu0 %v5619
    %v5758 = vpop.xlane.xlu0 %5757
    %5759 = vadd.xlane.f32.xlu0 %v5620
    %v5760 = vpop.xlane.xlu0 %5759
    %5761 = vadd.xlane.f32.xlu0 %v5621
    %v5762 = vpop.xlane.xlu0 %5761
    %5763 = vadd.xlane.f32.xlu0 %v5622
    %v5764 = vpop.xlane.xlu0 %5763
    %5765 = vadd.xlane.f32.xlu0 %v5623
    %v5766 = vpop.xlane.xlu0 %5765
    %5767 = vadd.xlane.f32.xlu0 %v5624
    %v5768 = vpop.xlane.xlu0 %5767
    %5769 = vadd.xlane.f32.xlu0 %v5625
    %v5770 = vpop.xlane.xlu0 %5769
    %5771 = vadd.xlane.f32.xlu0 %v5626
    %v5772 = vpop.xlane.xlu0 %5771
    %5773 = vadd.xlane.f32.xlu0 %v5627
    %v5774 = vpop.xlane.xlu0 %5773
    %5775 = vadd.xlane.f32.xlu0 %v5628
    %v5776 = vpop.xlane.xlu0 %5775
    %5777 = vadd.xlane.f32.xlu0 %v5629
    %v5778 = vpop.xlane.xlu0 %5777
    %5779 = vadd.xlane.f32.xlu0 %v5630
    %v5780 = vpop.xlane.xlu0 %5779
    %5781 = vadd.xlane.f32.xlu0 %v5631
    %v5782 = vpop.xlane.xlu0 %5781
    %5783 = vadd.xlane.f32.xlu0 %v5632
    %v5784 = vpop.xlane.xlu0 %5783
    %5785 = vadd.xlane.f32.xlu0 %v5633
    %v5786 = vpop.xlane.xlu0 %5785
    %5787 = vadd.xlane.f32.xlu0 %v5634
    %v5788 = vpop.xlane.xlu0 %5787
    %5789 = vadd.xlane.f32.xlu0 %v5635
    %v5790 = vpop.xlane.xlu0 %5789
    %5791 = vadd.xlane.f32.xlu0 %v5636
    %v5792 = vpop.xlane.xlu0 %5791
    %5793 = vadd.xlane.f32.xlu0 %v5637
    %v5794 = vpop.xlane.xlu0 %5793
    %5795 = vadd.xlane.f32.xlu0 %v5638
    %v5796 = vpop.xlane.xlu0 %5795
    %5797 = vadd.xlane.f32.xlu0 %v5639
    %v5798 = vpop.xlane.xlu0 %5797
    %5799 = vadd.xlane.f32.xlu0 %v5640
    %v5800 = vpop.xlane.xlu0 %5799
    %5801 = vadd.xlane.f32.xlu0 %v5641
    %v5802 = vpop.xlane.xlu0 %5801
    %5803 = vadd.xlane.f32.xlu0 %v5642
    %v5804 = vpop.xlane.xlu0 %5803
    %5805 = vadd.xlane.f32.xlu0 %v5643
    %v5806 = vpop.xlane.xlu0 %5805
    %5807 = vadd.xlane.f32.xlu0 %v5644
    %v5808 = vpop.xlane.xlu0 %5807
    %5809 = vadd.xlane.f32.xlu0 %v5645
    %v5810 = vpop.xlane.xlu0 %5809
    %5811 = vadd.xlane.f32.xlu0 %v5646
    %v5812 = vpop.xlane.xlu0 %5811
    %5813 = vadd.xlane.f32.xlu0 %v5647
    %v5814 = vpop.xlane.xlu0 %5813
    %5815 = vadd.xlane.f32.xlu0 %v5648
    %v5816 = vpop.xlane.xlu0 %5815
    %5817 = vadd.xlane.f32.xlu0 %v5649
    %v5818 = vpop.xlane.xlu0 %5817
    %5819 = vadd.xlane.f32.xlu0 %v5650
    %v5820 = vpop.xlane.xlu0 %5819
    %5821 = vadd.xlane.f32.xlu0 %v5651
    %v5822 = vpop.xlane.xlu0 %5821
    %5823 = vadd.xlane.f32.xlu0 %v5652
    %v5824 = vpop.xlane.xlu0 %5823
    %5825 = vadd.xlane.f32.xlu0 %v5653
    %v5826 = vpop.xlane.xlu0 %5825
    %5827 = vadd.xlane.f32.xlu0 %v5654
    %v5828 = vpop.xlane.xlu0 %5827
    %5829 = vadd.xlane.f32.xlu0 %v5655
    %v5830 = vpop.xlane.xlu0 %5829
    %5831 = vadd.xlane.f32.xlu0 %v5656
    %v5832 = vpop.xlane.xlu0 %5831
    %5833 = vadd.xlane.f32.xlu0 %v5657
    %v5834 = vpop.xlane.xlu0 %5833
    %5835 = vadd.xlane.f32.xlu0 %v5658
    %v5836 = vpop.xlane.xlu0 %5835
    %5837 = vadd.xlane.f32.xlu0 %v5659
    %v5838 = vpop.xlane.xlu0 %5837
    %5839 = vadd.xlane.f32.xlu0 %v5660
    %v5840 = vpop.xlane.xlu0 %5839
    %5841 = vadd.xlane.f32.xlu0 %v5661
    %v5842 = vpop.xlane.xlu0 %5841
    %5843 = vadd.xlane.f32.xlu0 %v5662
    %v5844 = vpop.xlane.xlu0 %5843
    %5845 = vadd.xlane.f32.xlu0 %v5663
    %v5846 = vpop.xlane.xlu0 %5845
    %5847 = vadd.xlane.f32.xlu0 %v5664
    %v5848 = vpop.xlane.xlu0 %5847
    %5849 = vadd.xlane.f32.xlu0 %v5665
    %v5850 = vpop.xlane.xlu0 %5849
    %5851 = vadd.xlane.f32.xlu0 %v5666
    %v5852 = vpop.xlane.xlu0 %5851
    %5853 = vadd.xlane.f32.xlu0 %v5667
    %v5854 = vpop.xlane.xlu0 %5853
    %5855 = vadd.xlane.f32.xlu0 %v5668
    %v5856 = vpop.xlane.xlu0 %5855
    %5857 = vadd.xlane.f32.xlu0 %v5669
    %v5858 = vpop.xlane.xlu0 %5857
    %5859 = vadd.xlane.f32.xlu0 %v5670
    %v5860 = vpop.xlane.xlu0 %5859
    %5861 = vadd.xlane.f32.xlu0 %v5671
    %v5862 = vpop.xlane.xlu0 %5861
    %5863 = vadd.xlane.f32.xlu0 %v5672
    %v5864 = vpop.xlane.xlu0 %5863
    %5865 = vadd.xlane.f32.xlu0 %v5673
    %v5866 = vpop.xlane.xlu0 %5865
    %5867 = vadd.xlane.f32.xlu0 %v5674
    %v5868 = vpop.xlane.xlu0 %5867
    %5869 = vadd.xlane.f32.xlu0 %v5675
    %v5870 = vpop.xlane.xlu0 %5869
    %5871 = vadd.xlane.f32.xlu0 %v5676
    %v5872 = vpop.xlane.xlu0 %5871
    %5873 = vadd.xlane.f32.xlu0 %v5677
    %v5874 = vpop.xlane.xlu0 %5873
    %5875 = vadd.xlane.f32.xlu0 %v5678
    %v5876 = vpop.xlane.xlu0 %5875
    %5877 = vadd.xlane.f32.xlu0 %v5679
    %v5878 = vpop.xlane.xlu0 %5877
    %5879 = vadd.xlane.f32.xlu0 %v5680
    %v5880 = vpop.xlane.xlu0 %5879
    %5881 = vadd.xlane.f32.xlu0 %v5681
    %v5882 = vpop.xlane.xlu0 %5881
    %5883 = vadd.xlane.f32.xlu0 %v5682
    %v5884 = vpop.xlane.xlu0 %5883
    %5885 = vadd.xlane.f32.xlu0 %v5683
    %v5886 = vpop.xlane.xlu0 %5885
    %5887 = vadd.xlane.f32.xlu0 %v5684
    %v5888 = vpop.xlane.xlu0 %5887
    %5889 = vadd.xlane.f32.xlu0 %v5685
    %v5890 = vpop.xlane.xlu0 %5889
    %5891 = vadd.xlane.f32.xlu0 %v5686
    %v5892 = vpop.xlane.xlu0 %5891
    %5893 = vadd.xlane.f32.xlu0 %v5687
    %v5894 = vpop.xlane.xlu0 %5893
    %5895 = vadd.xlane.f32.xlu0 %v5688
    %v5896 = vpop.xlane.xlu0 %5895
    %5897 = vadd.xlane.f32.xlu0 %v5689
    %v5898 = vpop.xlane.xlu0 %5897
    %5899 = vadd.xlane.f32.xlu0 %v5690
    %v5900 = vpop.xlane.xlu0 %5899
    %5901 = vadd.xlane.f32.xlu0 %v5691
    %v5902 = vpop.xlane.xlu0 %5901
    %5903 = vadd.xlane.f32.xlu0 %v5692
    %v5904 = vpop.xlane.xlu0 %5903
    %5905 = vadd.xlane.f32.xlu0 %v5693
    %v5906 = vpop.xlane.xlu0 %5905
    %5907 = vadd.xlane.f32.xlu0 %v5694
    %v5908 = vpop.xlane.xlu0 %5907
    %5909 = vadd.xlane.f32.xlu0 %v5695
    %v5910 = vpop.xlane.xlu0 %5909
    %5911 = vadd.xlane.f32.xlu0 %v5696
    %v5912 = vpop.xlane.xlu0 %5911
    %5913 = vadd.xlane.f32.xlu0 %v5697
    %v5914 = vpop.xlane.xlu0 %5913
    %5915 = vadd.xlane.f32.xlu0 %v5698
    %v5916 = vpop.xlane.xlu0 %5915
    %5917 = vadd.xlane.f32.xlu0 %v5699
    %v5918 = vpop.xlane.xlu0 %5917
    %5919 = vadd.xlane.f32.xlu0 %v5700
    %v5920 = vpop.xlane.xlu0 %5919
    %5921 = vadd.xlane.f32.xlu0 %v5701
    %v5922 = vpop.xlane.xlu0 %5921
    %5923 = vadd.xlane.f32.xlu0 %v5702
    %v5924 = vpop.xlane.xlu0 %5923
    %5925 = vadd.xlane.f32.xlu0 %v5703
    %v5926 = vpop.xlane.xlu0 %5925
    %5927 = vadd.xlane.f32.xlu0 %v5704
    %v5928 = vpop.xlane.xlu0 %5927
    %5929 = vadd.xlane.f32.xlu0 %v5705
    %v5930 = vpop.xlane.xlu0 %5929
    %5931 = vadd.xlane.f32.xlu0 %v5706
    %v5932 = vpop.xlane.xlu0 %5931
    %5933 = vadd.xlane.f32.xlu0 %v5707
    %v5934 = vpop.xlane.xlu0 %5933
    %5935 = vadd.xlane.f32.xlu0 %v5708
    %v5936 = vpop.xlane.xlu0 %5935
    %5937 = vadd.xlane.f32.xlu0 %v5709
    %v5938 = vpop.xlane.xlu0 %5937
    %5939 = vadd.xlane.f32.xlu0 %v5710
    %v5940 = vpop.xlane.xlu0 %5939
    %5941 = vadd.xlane.f32.xlu0 %v5711
    %v5942 = vpop.xlane.xlu0 %5941
    %5943 = vadd.xlane.f32.xlu0 %v5712
    %v5944 = vpop.xlane.xlu0 %5943
    %5945 = vadd.xlane.f32.xlu0 %v5713
    %v5946 = vpop.xlane.xlu0 %5945
    %5947 = vadd.xlane.f32.xlu0 %v5714
    %v5948 = vpop.xlane.xlu0 %5947
    %5949 = vadd.xlane.f32.xlu0 %v5715
    %v5950 = vpop.xlane.xlu0 %5949
    %5951 = vadd.xlane.f32.xlu0 %v5716
    %v5952 = vpop.xlane.xlu0 %5951
    %5953 = vadd.xlane.f32.xlu0 %v5717
    %v5954 = vpop.xlane.xlu0 %5953
    %5955 = vadd.xlane.f32.xlu0 %v5718
    %v5956 = vpop.xlane.xlu0 %5955
    %5957 = vadd.xlane.f32.xlu0 %v5719
    %v5958 = vpop.xlane.xlu0 %5957
    %5959 = vadd.xlane.f32.xlu0 %v5720
    %v5960 = vpop.xlane.xlu0 %5959
    %5961 = vadd.xlane.f32.xlu0 %v5721
    %v5962 = vpop.xlane.xlu0 %5961
    %5963 = vadd.xlane.f32.xlu0 %v5722
    %v5964 = vpop.xlane.xlu0 %5963
    %5965 = vadd.xlane.f32.xlu0 %v5723
    %v5966 = vpop.xlane.xlu0 %5965
    %5967 = vadd.xlane.f32.xlu0 %v5724
    %v5968 = vpop.xlane.xlu0 %5967
    %5969 = vadd.xlane.f32.xlu0 %v5725
    %v5970 = vpop.xlane.xlu0 %5969
    %5971 = vadd.xlane.f32.xlu0 %v5726
    %v5972 = vpop.xlane.xlu0 %5971
    %5973 = vadd.xlane.f32.xlu0 %v5727
    %v5974 = vpop.xlane.xlu0 %5973
    %5975 = vadd.xlane.f32.xlu0 %v5728
    %v5976 = vpop.xlane.xlu0 %5975
    %5977 = vadd.xlane.f32.xlu0 %v5729
    %v5978 = vpop.xlane.xlu0 %5977
    %5979 = vadd.xlane.f32.xlu0 %v5730
    %v5980 = vpop.xlane.xlu0 %5979
    %5981 = vadd.xlane.f32.xlu0 %v5731
    %v5982 = vpop.xlane.xlu0 %5981
    %5983 = vadd.xlane.f32.xlu0 %v5732
    %v5984 = vpop.xlane.xlu0 %5983
    %5985 = vadd.xlane.f32.xlu0 %v5733
    %v5986 = vpop.xlane.xlu0 %5985
    %5987 = vadd.xlane.f32.xlu0 %v5734
    %v5988 = vpop.xlane.xlu0 %5987
    %5989 = vadd.xlane.f32.xlu0 %v5735
    %v5990 = vpop.xlane.xlu0 %5989
    %5991 = vadd.xlane.f32.xlu0 %v5736
    %v5992 = vpop.xlane.xlu0 %5991
    %v5993 = vld [vmem:[#allocation2] sm:$0x1]
    %5995 = vset.pattern.permute.xlu0 0
    %5996 = vperm.xlu0 %5995, %v5993
    %v5997 = vpop.permute.xlu0 %5996
    %v5999 = vperm.slane %v5997, 0
    %v6000 = vadd.f32 %v5738, %v5999
    %v6001 = vadd.f32 %v5740, %v5999
    %v6002 = vadd.f32 %v5742, %v5999
    %v6003 = vadd.f32 %v5744, %v5999
    %v6004 = vadd.f32 %v5746, %v5999
    %v6005 = vadd.f32 %v5748, %v5999
    %v6006 = vadd.f32 %v5750, %v5999
    %v6007 = vadd.f32 %v5752, %v5999
    %v6008 = vadd.f32 %v5754, %v5999
    %v6009 = vadd.f32 %v5756, %v5999
    %v6010 = vadd.f32 %v5758, %v5999
    %v6011 = vadd.f32 %v5760, %v5999
    %v6012 = vadd.f32 %v5762, %v5999
    %v6013 = vadd.f32 %v5764, %v5999
    %v6014 = vadd.f32 %v5766, %v5999
    %v6015 = vadd.f32 %v5768, %v5999
    %v6016 = vadd.f32 %v5770, %v5999
    %v6017 = vadd.f32 %v5772, %v5999
    %v6018 = vadd.f32 %v5774, %v5999
    %v6019 = vadd.f32 %v5776, %v5999
    %v6020 = vadd.f32 %v5778, %v5999
    %v6021 = vadd.f32 %v5780, %v5999
    %v6022 = vadd.f32 %v5782, %v5999
    %v6023 = vadd.f32 %v5784, %v5999
    %v6024 = vadd.f32 %v5786, %v5999
    %v6025 = vadd.f32 %v5788, %v5999
    %v6026 = vadd.f32 %v5790, %v5999
    %v6027 = vadd.f32 %v5792, %v5999
    %v6028 = vadd.f32 %v5794, %v5999
    %v6029 = vadd.f32 %v5796, %v5999
    %v6030 = vadd.f32 %v5798, %v5999
    %v6031 = vadd.f32 %v5800, %v5999
    %v6032 = vadd.f32 %v5802, %v5999
    %v6033 = vadd.f32 %v5804, %v5999
    %v6034 = vadd.f32 %v5806, %v5999
    %v6035 = vadd.f32 %v5808, %v5999
    %v6036 = vadd.f32 %v5810, %v5999
    %v6037 = vadd.f32 %v5812, %v5999
    %v6038 = vadd.f32 %v5814, %v5999
    %v6039 = vadd.f32 %v5816, %v5999
    %v6040 = vadd.f32 %v5818, %v5999
    %v6041 = vadd.f32 %v5820, %v5999
    %v6042 = vadd.f32 %v5822, %v5999
    %v6043 = vadd.f32 %v5824, %v5999
    %v6044 = vadd.f32 %v5826, %v5999
    %v6045 = vadd.f32 %v5828, %v5999
    %v6046 = vadd.f32 %v5830, %v5999
    %v6047 = vadd.f32 %v5832, %v5999
    %v6048 = vadd.f32 %v5834, %v5999
    %v6049 = vadd.f32 %v5836, %v5999
    %v6050 = vadd.f32 %v5838, %v5999
    %v6051 = vadd.f32 %v5840, %v5999
    %v6052 = vadd.f32 %v5842, %v5999
    %v6053 = vadd.f32 %v5844, %v5999
    %v6054 = vadd.f32 %v5846, %v5999
    %v6055 = vadd.f32 %v5848, %v5999
    %v6056 = vadd.f32 %v5850, %v5999
    %v6057 = vadd.f32 %v5852, %v5999
    %v6058 = vadd.f32 %v5854, %v5999
    %v6059 = vadd.f32 %v5856, %v5999
    %v6060 = vadd.f32 %v5858, %v5999
    %v6061 = vadd.f32 %v5860, %v5999
    %v6062 = vadd.f32 %v5862, %v5999
    %v6063 = vadd.f32 %v5864, %v5999
    %v6064 = vadd.f32 %v5866, %v5999
    %v6065 = vadd.f32 %v5868, %v5999
    %v6066 = vadd.f32 %v5870, %v5999
    %v6067 = vadd.f32 %v5872, %v5999
    %v6068 = vadd.f32 %v5874, %v5999
    %v6069 = vadd.f32 %v5876, %v5999
    %v6070 = vadd.f32 %v5878, %v5999
    %v6071 = vadd.f32 %v5880, %v5999
    %v6072 = vadd.f32 %v5882, %v5999
    %v6073 = vadd.f32 %v5884, %v5999
    %v6074 = vadd.f32 %v5886, %v5999
    %v6075 = vadd.f32 %v5888, %v5999
    %v6076 = vadd.f32 %v5890, %v5999
    %v6077 = vadd.f32 %v5892, %v5999
    %v6078 = vadd.f32 %v5894, %v5999
    %v6079 = vadd.f32 %v5896, %v5999
    %v6080 = vadd.f32 %v5898, %v5999
    %v6081 = vadd.f32 %v5900, %v5999
    %v6082 = vadd.f32 %v5902, %v5999
    %v6083 = vadd.f32 %v5904, %v5999
    %v6084 = vadd.f32 %v5906, %v5999
    %v6085 = vadd.f32 %v5908, %v5999
    %v6086 = vadd.f32 %v5910, %v5999
    %v6087 = vadd.f32 %v5912, %v5999
    %v6088 = vadd.f32 %v5914, %v5999
    %v6089 = vadd.f32 %v5916, %v5999
    %v6090 = vadd.f32 %v5918, %v5999
    %v6091 = vadd.f32 %v5920, %v5999
    %v6092 = vadd.f32 %v5922, %v5999
    %v6093 = vadd.f32 %v5924, %v5999
    %v6094 = vadd.f32 %v5926, %v5999
    %v6095 = vadd.f32 %v5928, %v5999
    %v6096 = vadd.f32 %v5930, %v5999
    %v6097 = vadd.f32 %v5932, %v5999
    %v6098 = vadd.f32 %v5934, %v5999
    %v6099 = vadd.f32 %v5936, %v5999
    %v6100 = vadd.f32 %v5938, %v5999
    %v6101 = vadd.f32 %v5940, %v5999
    %v6102 = vadd.f32 %v5942, %v5999
    %v6103 = vadd.f32 %v5944, %v5999
    %v6104 = vadd.f32 %v5946, %v5999
    %v6105 = vadd.f32 %v5948, %v5999
    %v6106 = vadd.f32 %v5950, %v5999
    %v6107 = vadd.f32 %v5952, %v5999
    %v6108 = vadd.f32 %v5954, %v5999
    %v6109 = vadd.f32 %v5956, %v5999
    %v6110 = vadd.f32 %v5958, %v5999
    %v6111 = vadd.f32 %v5960, %v5999
    %v6112 = vadd.f32 %v5962, %v5999
    %v6113 = vadd.f32 %v5964, %v5999
    %v6114 = vadd.f32 %v5966, %v5999
    %v6115 = vadd.f32 %v5968, %v5999
    %v6116 = vadd.f32 %v5970, %v5999
    %v6117 = vadd.f32 %v5972, %v5999
    %v6118 = vadd.f32 %v5974, %v5999
    %v6119 = vadd.f32 %v5976, %v5999
    %v6120 = vadd.f32 %v5978, %v5999
    %v6121 = vadd.f32 %v5980, %v5999
    %v6122 = vadd.f32 %v5982, %v5999
    %v6123 = vadd.f32 %v5984, %v5999
    %v6124 = vadd.f32 %v5986, %v5999
    %v6125 = vadd.f32 %v5988, %v5999
    %v6126 = vadd.f32 %v5990, %v5999
    %v6127 = vadd.f32 %v5992, %v5999
    %v6256 = vperm.slane %v6000, 0
    %v6257 = vperm.slane %v6000, 1
    %v6258 = vperm.slane %v6000, 2
    %v6259 = vperm.slane %v6000, 3
    %v6260 = vperm.slane %v6000, 4
    %v6261 = vperm.slane %v6000, 5
    %v6262 = vperm.slane %v6000, 6
    %v6263 = vperm.slane %v6000, 7
    %v6264 = vperm.slane %v6001, 0
    %v6265 = vperm.slane %v6001, 1
    %v6266 = vperm.slane %v6001, 2
    %v6267 = vperm.slane %v6001, 3
    %v6268 = vperm.slane %v6001, 4
    %v6269 = vperm.slane %v6001, 5
    %v6270 = vperm.slane %v6001, 6
    %v6271 = vperm.slane %v6001, 7
    %v6272 = vperm.slane %v6002, 0
    %v6273 = vperm.slane %v6002, 1
    %v6274 = vperm.slane %v6002, 2
    %v6275 = vperm.slane %v6002, 3
    %v6276 = vperm.slane %v6002, 4
    %v6277 = vperm.slane %v6002, 5
    %v6278 = vperm.slane %v6002, 6
    %v6279 = vperm.slane %v6002, 7
    %v6280 = vperm.slane %v6003, 0
    %v6281 = vperm.slane %v6003, 1
    %v6282 = vperm.slane %v6003, 2
    %v6283 = vperm.slane %v6003, 3
    %v6284 = vperm.slane %v6003, 4
    %v6285 = vperm.slane %v6003, 5
    %v6286 = vperm.slane %v6003, 6
    %v6287 = vperm.slane %v6003, 7
    %v6288 = vperm.slane %v6004, 0
    %v6289 = vperm.slane %v6004, 1
    %v6290 = vperm.slane %v6004, 2
    %v6291 = vperm.slane %v6004, 3
    %v6292 = vperm.slane %v6004, 4
    %v6293 = vperm.slane %v6004, 5
    %v6294 = vperm.slane %v6004, 6
    %v6295 = vperm.slane %v6004, 7
    %v6296 = vperm.slane %v6005, 0
    %v6297 = vperm.slane %v6005, 1
    %v6298 = vperm.slane %v6005, 2
    %v6299 = vperm.slane %v6005, 3
    %v6300 = vperm.slane %v6005, 4
    %v6301 = vperm.slane %v6005, 5
    %v6302 = vperm.slane %v6005, 6
    %v6303 = vperm.slane %v6005, 7
    %v6304 = vperm.slane %v6006, 0
    %v6305 = vperm.slane %v6006, 1
    %v6306 = vperm.slane %v6006, 2
    %v6307 = vperm.slane %v6006, 3
    %v6308 = vperm.slane %v6006, 4
    %v6309 = vperm.slane %v6006, 5
    %v6310 = vperm.slane %v6006, 6
    %v6311 = vperm.slane %v6006, 7
    %v6312 = vperm.slane %v6007, 0
    %v6313 = vperm.slane %v6007, 1
    %v6314 = vperm.slane %v6007, 2
    %v6315 = vperm.slane %v6007, 3
    %v6316 = vperm.slane %v6007, 4
    %v6317 = vperm.slane %v6007, 5
    %v6318 = vperm.slane %v6007, 6
    %v6319 = vperm.slane %v6007, 7
    %v6320 = vperm.slane %v6008, 0
    %v6321 = vperm.slane %v6008, 1
    %v6322 = vperm.slane %v6008, 2
    %v6323 = vperm.slane %v6008, 3
    %v6324 = vperm.slane %v6008, 4
    %v6325 = vperm.slane %v6008, 5
    %v6326 = vperm.slane %v6008, 6
    %v6327 = vperm.slane %v6008, 7
    %v6328 = vperm.slane %v6009, 0
    %v6329 = vperm.slane %v6009, 1
    %v6330 = vperm.slane %v6009, 2
    %v6331 = vperm.slane %v6009, 3
    %v6332 = vperm.slane %v6009, 4
    %v6333 = vperm.slane %v6009, 5
    %v6334 = vperm.slane %v6009, 6
    %v6335 = vperm.slane %v6009, 7
    %v6336 = vperm.slane %v6010, 0
    %v6337 = vperm.slane %v6010, 1
    %v6338 = vperm.slane %v6010, 2
    %v6339 = vperm.slane %v6010, 3
    %v6340 = vperm.slane %v6010, 4
    %v6341 = vperm.slane %v6010, 5
    %v6342 = vperm.slane %v6010, 6
    %v6343 = vperm.slane %v6010, 7
    %v6344 = vperm.slane %v6011, 0
    %v6345 = vperm.slane %v6011, 1
    %v6346 = vperm.slane %v6011, 2
    %v6347 = vperm.slane %v6011, 3
    %v6348 = vperm.slane %v6011, 4
    %v6349 = vperm.slane %v6011, 5
    %v6350 = vperm.slane %v6011, 6
    %v6351 = vperm.slane %v6011, 7
    %v6352 = vperm.slane %v6012, 0
    %v6353 = vperm.slane %v6012, 1
    %v6354 = vperm.slane %v6012, 2
    %v6355 = vperm.slane %v6012, 3
    %v6356 = vperm.slane %v6012, 4
    %v6357 = vperm.slane %v6012, 5
    %v6358 = vperm.slane %v6012, 6
    %v6359 = vperm.slane %v6012, 7
    %v6360 = vperm.slane %v6013, 0
    %v6361 = vperm.slane %v6013, 1
    %v6362 = vperm.slane %v6013, 2
    %v6363 = vperm.slane %v6013, 3
    %v6364 = vperm.slane %v6013, 4
    %v6365 = vperm.slane %v6013, 5
    %v6366 = vperm.slane %v6013, 6
    %v6367 = vperm.slane %v6013, 7
    %v6368 = vperm.slane %v6014, 0
    %v6369 = vperm.slane %v6014, 1
    %v6370 = vperm.slane %v6014, 2
    %v6371 = vperm.slane %v6014, 3
    %v6372 = vperm.slane %v6014, 4
    %v6373 = vperm.slane %v6014, 5
    %v6374 = vperm.slane %v6014, 6
    %v6375 = vperm.slane %v6014, 7
    %v6376 = vperm.slane %v6015, 0
    %v6377 = vperm.slane %v6015, 1
    %v6378 = vperm.slane %v6015, 2
    %v6379 = vperm.slane %v6015, 3
    %v6380 = vperm.slane %v6015, 4
    %v6381 = vperm.slane %v6015, 5
    %v6382 = vperm.slane %v6015, 6
    %v6383 = vperm.slane %v6015, 7
    %v6384 = vperm.slane %v6016, 0
    %v6385 = vperm.slane %v6016, 1
    %v6386 = vperm.slane %v6016, 2
    %v6387 = vperm.slane %v6016, 3
    %v6388 = vperm.slane %v6016, 4
    %v6389 = vperm.slane %v6016, 5
    %v6390 = vperm.slane %v6016, 6
    %v6391 = vperm.slane %v6016, 7
    %v6392 = vperm.slane %v6017, 0
    %v6393 = vperm.slane %v6017, 1
    %v6394 = vperm.slane %v6017, 2
    %v6395 = vperm.slane %v6017, 3
    %v6396 = vperm.slane %v6017, 4
    %v6397 = vperm.slane %v6017, 5
    %v6398 = vperm.slane %v6017, 6
    %v6399 = vperm.slane %v6017, 7
    %v6400 = vperm.slane %v6018, 0
    %v6401 = vperm.slane %v6018, 1
    %v6402 = vperm.slane %v6018, 2
    %v6403 = vperm.slane %v6018, 3
    %v6404 = vperm.slane %v6018, 4
    %v6405 = vperm.slane %v6018, 5
    %v6406 = vperm.slane %v6018, 6
    %v6407 = vperm.slane %v6018, 7
    %v6408 = vperm.slane %v6019, 0
    %v6409 = vperm.slane %v6019, 1
    %v6410 = vperm.slane %v6019, 2
    %v6411 = vperm.slane %v6019, 3
    %v6412 = vperm.slane %v6019, 4
    %v6413 = vperm.slane %v6019, 5
    %v6414 = vperm.slane %v6019, 6
    %v6415 = vperm.slane %v6019, 7
    %v6416 = vperm.slane %v6020, 0
    %v6417 = vperm.slane %v6020, 1
    %v6418 = vperm.slane %v6020, 2
    %v6419 = vperm.slane %v6020, 3
    %v6420 = vperm.slane %v6020, 4
    %v6421 = vperm.slane %v6020, 5
    %v6422 = vperm.slane %v6020, 6
    %v6423 = vperm.slane %v6020, 7
    %v6424 = vperm.slane %v6021, 0
    %v6425 = vperm.slane %v6021, 1
    %v6426 = vperm.slane %v6021, 2
    %v6427 = vperm.slane %v6021, 3
    %v6428 = vperm.slane %v6021, 4
    %v6429 = vperm.slane %v6021, 5
    %v6430 = vperm.slane %v6021, 6
    %v6431 = vperm.slane %v6021, 7
    %v6432 = vperm.slane %v6022, 0
    %v6433 = vperm.slane %v6022, 1
    %v6434 = vperm.slane %v6022, 2
    %v6435 = vperm.slane %v6022, 3
    %v6436 = vperm.slane %v6022, 4
    %v6437 = vperm.slane %v6022, 5
    %v6438 = vperm.slane %v6022, 6
    %v6439 = vperm.slane %v6022, 7
    %v6440 = vperm.slane %v6023, 0
    %v6441 = vperm.slane %v6023, 1
    %v6442 = vperm.slane %v6023, 2
    %v6443 = vperm.slane %v6023, 3
    %v6444 = vperm.slane %v6023, 4
    %v6445 = vperm.slane %v6023, 5
    %v6446 = vperm.slane %v6023, 6
    %v6447 = vperm.slane %v6023, 7
    %v6448 = vperm.slane %v6024, 0
    %v6449 = vperm.slane %v6024, 1
    %v6450 = vperm.slane %v6024, 2
    %v6451 = vperm.slane %v6024, 3
    %v6452 = vperm.slane %v6024, 4
    %v6453 = vperm.slane %v6024, 5
    %v6454 = vperm.slane %v6024, 6
    %v6455 = vperm.slane %v6024, 7
    %v6456 = vperm.slane %v6025, 0
    %v6457 = vperm.slane %v6025, 1
    %v6458 = vperm.slane %v6025, 2
    %v6459 = vperm.slane %v6025, 3
    %v6460 = vperm.slane %v6025, 4
    %v6461 = vperm.slane %v6025, 5
    %v6462 = vperm.slane %v6025, 6
    %v6463 = vperm.slane %v6025, 7
    %v6464 = vperm.slane %v6026, 0
    %v6465 = vperm.slane %v6026, 1
    %v6466 = vperm.slane %v6026, 2
    %v6467 = vperm.slane %v6026, 3
    %v6468 = vperm.slane %v6026, 4
    %v6469 = vperm.slane %v6026, 5
    %v6470 = vperm.slane %v6026, 6
    %v6471 = vperm.slane %v6026, 7
    %v6472 = vperm.slane %v6027, 0
    %v6473 = vperm.slane %v6027, 1
    %v6474 = vperm.slane %v6027, 2
    %v6475 = vperm.slane %v6027, 3
    %v6476 = vperm.slane %v6027, 4
    %v6477 = vperm.slane %v6027, 5
    %v6478 = vperm.slane %v6027, 6
    %v6479 = vperm.slane %v6027, 7
    %v6480 = vperm.slane %v6028, 0
    %v6481 = vperm.slane %v6028, 1
    %v6482 = vperm.slane %v6028, 2
    %v6483 = vperm.slane %v6028, 3
    %v6484 = vperm.slane %v6028, 4
    %v6485 = vperm.slane %v6028, 5
    %v6486 = vperm.slane %v6028, 6
    %v6487 = vperm.slane %v6028, 7
    %v6488 = vperm.slane %v6029, 0
    %v6489 = vperm.slane %v6029, 1
    %v6490 = vperm.slane %v6029, 2
    %v6491 = vperm.slane %v6029, 3
    %v6492 = vperm.slane %v6029, 4
    %v6493 = vperm.slane %v6029, 5
    %v6494 = vperm.slane %v6029, 6
    %v6495 = vperm.slane %v6029, 7
    %v6496 = vperm.slane %v6030, 0
    %v6497 = vperm.slane %v6030, 1
    %v6498 = vperm.slane %v6030, 2
    %v6499 = vperm.slane %v6030, 3
    %v6500 = vperm.slane %v6030, 4
    %v6501 = vperm.slane %v6030, 5
    %v6502 = vperm.slane %v6030, 6
    %v6503 = vperm.slane %v6030, 7
    %v6504 = vperm.slane %v6031, 0
    %v6505 = vperm.slane %v6031, 1
    %v6506 = vperm.slane %v6031, 2
    %v6507 = vperm.slane %v6031, 3
    %v6508 = vperm.slane %v6031, 4
    %v6509 = vperm.slane %v6031, 5
    %v6510 = vperm.slane %v6031, 6
    %v6511 = vperm.slane %v6031, 7
    %v6512 = vperm.slane %v6032, 0
    %v6513 = vperm.slane %v6032, 1
    %v6514 = vperm.slane %v6032, 2
    %v6515 = vperm.slane %v6032, 3
    %v6516 = vperm.slane %v6032, 4
    %v6517 = vperm.slane %v6032, 5
    %v6518 = vperm.slane %v6032, 6
    %v6519 = vperm.slane %v6032, 7
    %v6520 = vperm.slane %v6033, 0
    %v6521 = vperm.slane %v6033, 1
    %v6522 = vperm.slane %v6033, 2
    %v6523 = vperm.slane %v6033, 3
    %v6524 = vperm.slane %v6033, 4
    %v6525 = vperm.slane %v6033, 5
    %v6526 = vperm.slane %v6033, 6
    %v6527 = vperm.slane %v6033, 7
    %v6528 = vperm.slane %v6034, 0
    %v6529 = vperm.slane %v6034, 1
    %v6530 = vperm.slane %v6034, 2
    %v6531 = vperm.slane %v6034, 3
    %v6532 = vperm.slane %v6034, 4
    %v6533 = vperm.slane %v6034, 5
    %v6534 = vperm.slane %v6034, 6
    %v6535 = vperm.slane %v6034, 7
    %v6536 = vperm.slane %v6035, 0
    %v6537 = vperm.slane %v6035, 1
    %v6538 = vperm.slane %v6035, 2
    %v6539 = vperm.slane %v6035, 3
    %v6540 = vperm.slane %v6035, 4
    %v6541 = vperm.slane %v6035, 5
    %v6542 = vperm.slane %v6035, 6
    %v6543 = vperm.slane %v6035, 7
    %v6544 = vperm.slane %v6036, 0
    %v6545 = vperm.slane %v6036, 1
    %v6546 = vperm.slane %v6036, 2
    %v6547 = vperm.slane %v6036, 3
    %v6548 = vperm.slane %v6036, 4
    %v6549 = vperm.slane %v6036, 5
    %v6550 = vperm.slane %v6036, 6
    %v6551 = vperm.slane %v6036, 7
    %v6552 = vperm.slane %v6037, 0
    %v6553 = vperm.slane %v6037, 1
    %v6554 = vperm.slane %v6037, 2
    %v6555 = vperm.slane %v6037, 3
    %v6556 = vperm.slane %v6037, 4
    %v6557 = vperm.slane %v6037, 5
    %v6558 = vperm.slane %v6037, 6
    %v6559 = vperm.slane %v6037, 7
    %v6560 = vperm.slane %v6038, 0
    %v6561 = vperm.slane %v6038, 1
    %v6562 = vperm.slane %v6038, 2
    %v6563 = vperm.slane %v6038, 3
    %v6564 = vperm.slane %v6038, 4
    %v6565 = vperm.slane %v6038, 5
    %v6566 = vperm.slane %v6038, 6
    %v6567 = vperm.slane %v6038, 7
    %v6568 = vperm.slane %v6039, 0
    %v6569 = vperm.slane %v6039, 1
    %v6570 = vperm.slane %v6039, 2
    %v6571 = vperm.slane %v6039, 3
    %v6572 = vperm.slane %v6039, 4
    %v6573 = vperm.slane %v6039, 5
    %v6574 = vperm.slane %v6039, 6
    %v6575 = vperm.slane %v6039, 7
    %v6576 = vperm.slane %v6040, 0
    %v6577 = vperm.slane %v6040, 1
    %v6578 = vperm.slane %v6040, 2
    %v6579 = vperm.slane %v6040, 3
    %v6580 = vperm.slane %v6040, 4
    %v6581 = vperm.slane %v6040, 5
    %v6582 = vperm.slane %v6040, 6
    %v6583 = vperm.slane %v6040, 7
    %v6584 = vperm.slane %v6041, 0
    %v6585 = vperm.slane %v6041, 1
    %v6586 = vperm.slane %v6041, 2
    %v6587 = vperm.slane %v6041, 3
    %v6588 = vperm.slane %v6041, 4
    %v6589 = vperm.slane %v6041, 5
    %v6590 = vperm.slane %v6041, 6
    %v6591 = vperm.slane %v6041, 7
    %v6592 = vperm.slane %v6042, 0
    %v6593 = vperm.slane %v6042, 1
    %v6594 = vperm.slane %v6042, 2
    %v6595 = vperm.slane %v6042, 3
    %v6596 = vperm.slane %v6042, 4
    %v6597 = vperm.slane %v6042, 5
    %v6598 = vperm.slane %v6042, 6
    %v6599 = vperm.slane %v6042, 7
    %v6600 = vperm.slane %v6043, 0
    %v6601 = vperm.slane %v6043, 1
    %v6602 = vperm.slane %v6043, 2
    %v6603 = vperm.slane %v6043, 3
    %v6604 = vperm.slane %v6043, 4
    %v6605 = vperm.slane %v6043, 5
    %v6606 = vperm.slane %v6043, 6
    %v6607 = vperm.slane %v6043, 7
    %v6608 = vperm.slane %v6044, 0
    %v6609 = vperm.slane %v6044, 1
    %v6610 = vperm.slane %v6044, 2
    %v6611 = vperm.slane %v6044, 3
    %v6612 = vperm.slane %v6044, 4
    %v6613 = vperm.slane %v6044, 5
    %v6614 = vperm.slane %v6044, 6
    %v6615 = vperm.slane %v6044, 7
    %v6616 = vperm.slane %v6045, 0
    %v6617 = vperm.slane %v6045, 1
    %v6618 = vperm.slane %v6045, 2
    %v6619 = vperm.slane %v6045, 3
    %v6620 = vperm.slane %v6045, 4
    %v6621 = vperm.slane %v6045, 5
    %v6622 = vperm.slane %v6045, 6
    %v6623 = vperm.slane %v6045, 7
    %v6624 = vperm.slane %v6046, 0
    %v6625 = vperm.slane %v6046, 1
    %v6626 = vperm.slane %v6046, 2
    %v6627 = vperm.slane %v6046, 3
    %v6628 = vperm.slane %v6046, 4
    %v6629 = vperm.slane %v6046, 5
    %v6630 = vperm.slane %v6046, 6
    %v6631 = vperm.slane %v6046, 7
    %v6632 = vperm.slane %v6047, 0
    %v6633 = vperm.slane %v6047, 1
    %v6634 = vperm.slane %v6047, 2
    %v6635 = vperm.slane %v6047, 3
    %v6636 = vperm.slane %v6047, 4
    %v6637 = vperm.slane %v6047, 5
    %v6638 = vperm.slane %v6047, 6
    %v6639 = vperm.slane %v6047, 7
    %v6640 = vperm.slane %v6048, 0
    %v6641 = vperm.slane %v6048, 1
    %v6642 = vperm.slane %v6048, 2
    %v6643 = vperm.slane %v6048, 3
    %v6644 = vperm.slane %v6048, 4
    %v6645 = vperm.slane %v6048, 5
    %v6646 = vperm.slane %v6048, 6
    %v6647 = vperm.slane %v6048, 7
    %v6648 = vperm.slane %v6049, 0
    %v6649 = vperm.slane %v6049, 1
    %v6650 = vperm.slane %v6049, 2
    %v6651 = vperm.slane %v6049, 3
    %v6652 = vperm.slane %v6049, 4
    %v6653 = vperm.slane %v6049, 5
    %v6654 = vperm.slane %v6049, 6
    %v6655 = vperm.slane %v6049, 7
    %v6656 = vperm.slane %v6050, 0
    %v6657 = vperm.slane %v6050, 1
    %v6658 = vperm.slane %v6050, 2
    %v6659 = vperm.slane %v6050, 3
    %v6660 = vperm.slane %v6050, 4
    %v6661 = vperm.slane %v6050, 5
    %v6662 = vperm.slane %v6050, 6
    %v6663 = vperm.slane %v6050, 7
    %v6664 = vperm.slane %v6051, 0
    %v6665 = vperm.slane %v6051, 1
    %v6666 = vperm.slane %v6051, 2
    %v6667 = vperm.slane %v6051, 3
    %v6668 = vperm.slane %v6051, 4
    %v6669 = vperm.slane %v6051, 5
    %v6670 = vperm.slane %v6051, 6
    %v6671 = vperm.slane %v6051, 7
    %v6672 = vperm.slane %v6052, 0
    %v6673 = vperm.slane %v6052, 1
    %v6674 = vperm.slane %v6052, 2
    %v6675 = vperm.slane %v6052, 3
    %v6676 = vperm.slane %v6052, 4
    %v6677 = vperm.slane %v6052, 5
    %v6678 = vperm.slane %v6052, 6
    %v6679 = vperm.slane %v6052, 7
    %v6680 = vperm.slane %v6053, 0
    %v6681 = vperm.slane %v6053, 1
    %v6682 = vperm.slane %v6053, 2
    %v6683 = vperm.slane %v6053, 3
    %v6684 = vperm.slane %v6053, 4
    %v6685 = vperm.slane %v6053, 5
    %v6686 = vperm.slane %v6053, 6
    %v6687 = vperm.slane %v6053, 7
    %v6688 = vperm.slane %v6054, 0
    %v6689 = vperm.slane %v6054, 1
    %v6690 = vperm.slane %v6054, 2
    %v6691 = vperm.slane %v6054, 3
    %v6692 = vperm.slane %v6054, 4
    %v6693 = vperm.slane %v6054, 5
    %v6694 = vperm.slane %v6054, 6
    %v6695 = vperm.slane %v6054, 7
    %v6696 = vperm.slane %v6055, 0
    %v6697 = vperm.slane %v6055, 1
    %v6698 = vperm.slane %v6055, 2
    %v6699 = vperm.slane %v6055, 3
    %v6700 = vperm.slane %v6055, 4
    %v6701 = vperm.slane %v6055, 5
    %v6702 = vperm.slane %v6055, 6
    %v6703 = vperm.slane %v6055, 7
    %v6704 = vperm.slane %v6056, 0
    %v6705 = vperm.slane %v6056, 1
    %v6706 = vperm.slane %v6056, 2
    %v6707 = vperm.slane %v6056, 3
    %v6708 = vperm.slane %v6056, 4
    %v6709 = vperm.slane %v6056, 5
    %v6710 = vperm.slane %v6056, 6
    %v6711 = vperm.slane %v6056, 7
    %v6712 = vperm.slane %v6057, 0
    %v6713 = vperm.slane %v6057, 1
    %v6714 = vperm.slane %v6057, 2
    %v6715 = vperm.slane %v6057, 3
    %v6716 = vperm.slane %v6057, 4
    %v6717 = vperm.slane %v6057, 5
    %v6718 = vperm.slane %v6057, 6
    %v6719 = vperm.slane %v6057, 7
    %v6720 = vperm.slane %v6058, 0
    %v6721 = vperm.slane %v6058, 1
    %v6722 = vperm.slane %v6058, 2
    %v6723 = vperm.slane %v6058, 3
    %v6724 = vperm.slane %v6058, 4
    %v6725 = vperm.slane %v6058, 5
    %v6726 = vperm.slane %v6058, 6
    %v6727 = vperm.slane %v6058, 7
    %v6728 = vperm.slane %v6059, 0
    %v6729 = vperm.slane %v6059, 1
    %v6730 = vperm.slane %v6059, 2
    %v6731 = vperm.slane %v6059, 3
    %v6732 = vperm.slane %v6059, 4
    %v6733 = vperm.slane %v6059, 5
    %v6734 = vperm.slane %v6059, 6
    %v6735 = vperm.slane %v6059, 7
    %v6736 = vperm.slane %v6060, 0
    %v6737 = vperm.slane %v6060, 1
    %v6738 = vperm.slane %v6060, 2
    %v6739 = vperm.slane %v6060, 3
    %v6740 = vperm.slane %v6060, 4
    %v6741 = vperm.slane %v6060, 5
    %v6742 = vperm.slane %v6060, 6
    %v6743 = vperm.slane %v6060, 7
    %v6744 = vperm.slane %v6061, 0
    %v6745 = vperm.slane %v6061, 1
    %v6746 = vperm.slane %v6061, 2
    %v6747 = vperm.slane %v6061, 3
    %v6748 = vperm.slane %v6061, 4
    %v6749 = vperm.slane %v6061, 5
    %v6750 = vperm.slane %v6061, 6
    %v6751 = vperm.slane %v6061, 7
    %v6752 = vperm.slane %v6062, 0
    %v6753 = vperm.slane %v6062, 1
    %v6754 = vperm.slane %v6062, 2
    %v6755 = vperm.slane %v6062, 3
    %v6756 = vperm.slane %v6062, 4
    %v6757 = vperm.slane %v6062, 5
    %v6758 = vperm.slane %v6062, 6
    %v6759 = vperm.slane %v6062, 7
    %v6760 = vperm.slane %v6063, 0
    %v6761 = vperm.slane %v6063, 1
    %v6762 = vperm.slane %v6063, 2
    %v6763 = vperm.slane %v6063, 3
    %v6764 = vperm.slane %v6063, 4
    %v6765 = vperm.slane %v6063, 5
    %v6766 = vperm.slane %v6063, 6
    %v6767 = vperm.slane %v6063, 7
    %v6768 = vperm.slane %v6064, 0
    %v6769 = vperm.slane %v6064, 1
    %v6770 = vperm.slane %v6064, 2
    %v6771 = vperm.slane %v6064, 3
    %v6772 = vperm.slane %v6064, 4
    %v6773 = vperm.slane %v6064, 5
    %v6774 = vperm.slane %v6064, 6
    %v6775 = vperm.slane %v6064, 7
    %v6776 = vperm.slane %v6065, 0
    %v6777 = vperm.slane %v6065, 1
    %v6778 = vperm.slane %v6065, 2
    %v6779 = vperm.slane %v6065, 3
    %v6780 = vperm.slane %v6065, 4
    %v6781 = vperm.slane %v6065, 5
    %v6782 = vperm.slane %v6065, 6
    %v6783 = vperm.slane %v6065, 7
    %v6784 = vperm.slane %v6066, 0
    %v6785 = vperm.slane %v6066, 1
    %v6786 = vperm.slane %v6066, 2
    %v6787 = vperm.slane %v6066, 3
    %v6788 = vperm.slane %v6066, 4
    %v6789 = vperm.slane %v6066, 5
    %v6790 = vperm.slane %v6066, 6
    %v6791 = vperm.slane %v6066, 7
    %v6792 = vperm.slane %v6067, 0
    %v6793 = vperm.slane %v6067, 1
    %v6794 = vperm.slane %v6067, 2
    %v6795 = vperm.slane %v6067, 3
    %v6796 = vperm.slane %v6067, 4
    %v6797 = vperm.slane %v6067, 5
    %v6798 = vperm.slane %v6067, 6
    %v6799 = vperm.slane %v6067, 7
    %v6800 = vperm.slane %v6068, 0
    %v6801 = vperm.slane %v6068, 1
    %v6802 = vperm.slane %v6068, 2
    %v6803 = vperm.slane %v6068, 3
    %v6804 = vperm.slane %v6068, 4
    %v6805 = vperm.slane %v6068, 5
    %v6806 = vperm.slane %v6068, 6
    %v6807 = vperm.slane %v6068, 7
    %v6808 = vperm.slane %v6069, 0
    %v6809 = vperm.slane %v6069, 1
    %v6810 = vperm.slane %v6069, 2
    %v6811 = vperm.slane %v6069, 3
    %v6812 = vperm.slane %v6069, 4
    %v6813 = vperm.slane %v6069, 5
    %v6814 = vperm.slane %v6069, 6
    %v6815 = vperm.slane %v6069, 7
    %v6816 = vperm.slane %v6070, 0
    %v6817 = vperm.slane %v6070, 1
    %v6818 = vperm.slane %v6070, 2
    %v6819 = vperm.slane %v6070, 3
    %v6820 = vperm.slane %v6070, 4
    %v6821 = vperm.slane %v6070, 5
    %v6822 = vperm.slane %v6070, 6
    %v6823 = vperm.slane %v6070, 7
    %v6824 = vperm.slane %v6071, 0
    %v6825 = vperm.slane %v6071, 1
    %v6826 = vperm.slane %v6071, 2
    %v6827 = vperm.slane %v6071, 3
    %v6828 = vperm.slane %v6071, 4
    %v6829 = vperm.slane %v6071, 5
    %v6830 = vperm.slane %v6071, 6
    %v6831 = vperm.slane %v6071, 7
    %v6832 = vperm.slane %v6072, 0
    %v6833 = vperm.slane %v6072, 1
    %v6834 = vperm.slane %v6072, 2
    %v6835 = vperm.slane %v6072, 3
    %v6836 = vperm.slane %v6072, 4
    %v6837 = vperm.slane %v6072, 5
    %v6838 = vperm.slane %v6072, 6
    %v6839 = vperm.slane %v6072, 7
    %v6840 = vperm.slane %v6073, 0
    %v6841 = vperm.slane %v6073, 1
    %v6842 = vperm.slane %v6073, 2
    %v6843 = vperm.slane %v6073, 3
    %v6844 = vperm.slane %v6073, 4
    %v6845 = vperm.slane %v6073, 5
    %v6846 = vperm.slane %v6073, 6
    %v6847 = vperm.slane %v6073, 7
    %v6848 = vperm.slane %v6074, 0
    %v6849 = vperm.slane %v6074, 1
    %v6850 = vperm.slane %v6074, 2
    %v6851 = vperm.slane %v6074, 3
    %v6852 = vperm.slane %v6074, 4
    %v6853 = vperm.slane %v6074, 5
    %v6854 = vperm.slane %v6074, 6
    %v6855 = vperm.slane %v6074, 7
    %v6856 = vperm.slane %v6075, 0
    %v6857 = vperm.slane %v6075, 1
    %v6858 = vperm.slane %v6075, 2
    %v6859 = vperm.slane %v6075, 3
    %v6860 = vperm.slane %v6075, 4
    %v6861 = vperm.slane %v6075, 5
    %v6862 = vperm.slane %v6075, 6
    %v6863 = vperm.slane %v6075, 7
    %v6864 = vperm.slane %v6076, 0
    %v6865 = vperm.slane %v6076, 1
    %v6866 = vperm.slane %v6076, 2
    %v6867 = vperm.slane %v6076, 3
    %v6868 = vperm.slane %v6076, 4
    %v6869 = vperm.slane %v6076, 5
    %v6870 = vperm.slane %v6076, 6
    %v6871 = vperm.slane %v6076, 7
    %v6872 = vperm.slane %v6077, 0
    %v6873 = vperm.slane %v6077, 1
    %v6874 = vperm.slane %v6077, 2
    %v6875 = vperm.slane %v6077, 3
    %v6876 = vperm.slane %v6077, 4
    %v6877 = vperm.slane %v6077, 5
    %v6878 = vperm.slane %v6077, 6
    %v6879 = vperm.slane %v6077, 7
    %v6880 = vperm.slane %v6078, 0
    %v6881 = vperm.slane %v6078, 1
    %v6882 = vperm.slane %v6078, 2
    %v6883 = vperm.slane %v6078, 3
    %v6884 = vperm.slane %v6078, 4
    %v6885 = vperm.slane %v6078, 5
    %v6886 = vperm.slane %v6078, 6
    %v6887 = vperm.slane %v6078, 7
    %v6888 = vperm.slane %v6079, 0
    %v6889 = vperm.slane %v6079, 1
    %v6890 = vperm.slane %v6079, 2
    %v6891 = vperm.slane %v6079, 3
    %v6892 = vperm.slane %v6079, 4
    %v6893 = vperm.slane %v6079, 5
    %v6894 = vperm.slane %v6079, 6
    %v6895 = vperm.slane %v6079, 7
    %v6896 = vperm.slane %v6080, 0
    %v6897 = vperm.slane %v6080, 1
    %v6898 = vperm.slane %v6080, 2
    %v6899 = vperm.slane %v6080, 3
    %v6900 = vperm.slane %v6080, 4
    %v6901 = vperm.slane %v6080, 5
    %v6902 = vperm.slane %v6080, 6
    %v6903 = vperm.slane %v6080, 7
    %v6904 = vperm.slane %v6081, 0
    %v6905 = vperm.slane %v6081, 1
    %v6906 = vperm.slane %v6081, 2
    %v6907 = vperm.slane %v6081, 3
    %v6908 = vperm.slane %v6081, 4
    %v6909 = vperm.slane %v6081, 5
    %v6910 = vperm.slane %v6081, 6
    %v6911 = vperm.slane %v6081, 7
    %v6912 = vperm.slane %v6082, 0
    %v6913 = vperm.slane %v6082, 1
    %v6914 = vperm.slane %v6082, 2
    %v6915 = vperm.slane %v6082, 3
    %v6916 = vperm.slane %v6082, 4
    %v6917 = vperm.slane %v6082, 5
    %v6918 = vperm.slane %v6082, 6
    %v6919 = vperm.slane %v6082, 7
    %v6920 = vperm.slane %v6083, 0
    %v6921 = vperm.slane %v6083, 1
    %v6922 = vperm.slane %v6083, 2
    %v6923 = vperm.slane %v6083, 3
    %v6924 = vperm.slane %v6083, 4
    %v6925 = vperm.slane %v6083, 5
    %v6926 = vperm.slane %v6083, 6
    %v6927 = vperm.slane %v6083, 7
    %v6928 = vperm.slane %v6084, 0
    %v6929 = vperm.slane %v6084, 1
    %v6930 = vperm.slane %v6084, 2
    %v6931 = vperm.slane %v6084, 3
    %v6932 = vperm.slane %v6084, 4
    %v6933 = vperm.slane %v6084, 5
    %v6934 = vperm.slane %v6084, 6
    %v6935 = vperm.slane %v6084, 7
    %v6936 = vperm.slane %v6085, 0
    %v6937 = vperm.slane %v6085, 1
    %v6938 = vperm.slane %v6085, 2
    %v6939 = vperm.slane %v6085, 3
    %v6940 = vperm.slane %v6085, 4
    %v6941 = vperm.slane %v6085, 5
    %v6942 = vperm.slane %v6085, 6
    %v6943 = vperm.slane %v6085, 7
    %v6944 = vperm.slane %v6086, 0
    %v6945 = vperm.slane %v6086, 1
    %v6946 = vperm.slane %v6086, 2
    %v6947 = vperm.slane %v6086, 3
    %v6948 = vperm.slane %v6086, 4
    %v6949 = vperm.slane %v6086, 5
    %v6950 = vperm.slane %v6086, 6
    %v6951 = vperm.slane %v6086, 7
    %v6952 = vperm.slane %v6087, 0
    %v6953 = vperm.slane %v6087, 1
    %v6954 = vperm.slane %v6087, 2
    %v6955 = vperm.slane %v6087, 3
    %v6956 = vperm.slane %v6087, 4
    %v6957 = vperm.slane %v6087, 5
    %v6958 = vperm.slane %v6087, 6
    %v6959 = vperm.slane %v6087, 7
    %v6960 = vperm.slane %v6088, 0
    %v6961 = vperm.slane %v6088, 1
    %v6962 = vperm.slane %v6088, 2
    %v6963 = vperm.slane %v6088, 3
    %v6964 = vperm.slane %v6088, 4
    %v6965 = vperm.slane %v6088, 5
    %v6966 = vperm.slane %v6088, 6
    %v6967 = vperm.slane %v6088, 7
    %v6968 = vperm.slane %v6089, 0
    %v6969 = vperm.slane %v6089, 1
    %v6970 = vperm.slane %v6089, 2
    %v6971 = vperm.slane %v6089, 3
    %v6972 = vperm.slane %v6089, 4
    %v6973 = vperm.slane %v6089, 5
    %v6974 = vperm.slane %v6089, 6
    %v6975 = vperm.slane %v6089, 7
    %v6976 = vperm.slane %v6090, 0
    %v6977 = vperm.slane %v6090, 1
    %v6978 = vperm.slane %v6090, 2
    %v6979 = vperm.slane %v6090, 3
    %v6980 = vperm.slane %v6090, 4
    %v6981 = vperm.slane %v6090, 5
    %v6982 = vperm.slane %v6090, 6
    %v6983 = vperm.slane %v6090, 7
    %v6984 = vperm.slane %v6091, 0
    %v6985 = vperm.slane %v6091, 1
    %v6986 = vperm.slane %v6091, 2
    %v6987 = vperm.slane %v6091, 3
    %v6988 = vperm.slane %v6091, 4
    %v6989 = vperm.slane %v6091, 5
    %v6990 = vperm.slane %v6091, 6
    %v6991 = vperm.slane %v6091, 7
    %v6992 = vperm.slane %v6092, 0
    %v6993 = vperm.slane %v6092, 1
    %v6994 = vperm.slane %v6092, 2
    %v6995 = vperm.slane %v6092, 3
    %v6996 = vperm.slane %v6092, 4
    %v6997 = vperm.slane %v6092, 5
    %v6998 = vperm.slane %v6092, 6
    %v6999 = vperm.slane %v6092, 7
    %v7000 = vperm.slane %v6093, 0
    %v7001 = vperm.slane %v6093, 1
    %v7002 = vperm.slane %v6093, 2
    %v7003 = vperm.slane %v6093, 3
    %v7004 = vperm.slane %v6093, 4
    %v7005 = vperm.slane %v6093, 5
    %v7006 = vperm.slane %v6093, 6
    %v7007 = vperm.slane %v6093, 7
    %v7008 = vperm.slane %v6094, 0
    %v7009 = vperm.slane %v6094, 1
    %v7010 = vperm.slane %v6094, 2
    %v7011 = vperm.slane %v6094, 3
    %v7012 = vperm.slane %v6094, 4
    %v7013 = vperm.slane %v6094, 5
    %v7014 = vperm.slane %v6094, 6
    %v7015 = vperm.slane %v6094, 7
    %v7016 = vperm.slane %v6095, 0
    %v7017 = vperm.slane %v6095, 1
    %v7018 = vperm.slane %v6095, 2
    %v7019 = vperm.slane %v6095, 3
    %v7020 = vperm.slane %v6095, 4
    %v7021 = vperm.slane %v6095, 5
    %v7022 = vperm.slane %v6095, 6
    %v7023 = vperm.slane %v6095, 7
    %v7024 = vperm.slane %v6096, 0
    %v7025 = vperm.slane %v6096, 1
    %v7026 = vperm.slane %v6096, 2
    %v7027 = vperm.slane %v6096, 3
    %v7028 = vperm.slane %v6096, 4
    %v7029 = vperm.slane %v6096, 5
    %v7030 = vperm.slane %v6096, 6
    %v7031 = vperm.slane %v6096, 7
    %v7032 = vperm.slane %v6097, 0
    %v7033 = vperm.slane %v6097, 1
    %v7034 = vperm.slane %v6097, 2
    %v7035 = vperm.slane %v6097, 3
    %v7036 = vperm.slane %v6097, 4
    %v7037 = vperm.slane %v6097, 5
    %v7038 = vperm.slane %v6097, 6
    %v7039 = vperm.slane %v6097, 7
    %v7040 = vperm.slane %v6098, 0
    %v7041 = vperm.slane %v6098, 1
    %v7042 = vperm.slane %v6098, 2
    %v7043 = vperm.slane %v6098, 3
    %v7044 = vperm.slane %v6098, 4
    %v7045 = vperm.slane %v6098, 5
    %v7046 = vperm.slane %v6098, 6
    %v7047 = vperm.slane %v6098, 7
    %v7048 = vperm.slane %v6099, 0
    %v7049 = vperm.slane %v6099, 1
    %v7050 = vperm.slane %v6099, 2
    %v7051 = vperm.slane %v6099, 3
    %v7052 = vperm.slane %v6099, 4
    %v7053 = vperm.slane %v6099, 5
    %v7054 = vperm.slane %v6099, 6
    %v7055 = vperm.slane %v6099, 7
    %v7056 = vperm.slane %v6100, 0
    %v7057 = vperm.slane %v6100, 1
    %v7058 = vperm.slane %v6100, 2
    %v7059 = vperm.slane %v6100, 3
    %v7060 = vperm.slane %v6100, 4
    %v7061 = vperm.slane %v6100, 5
    %v7062 = vperm.slane %v6100, 6
    %v7063 = vperm.slane %v6100, 7
    %v7064 = vperm.slane %v6101, 0
    %v7065 = vperm.slane %v6101, 1
    %v7066 = vperm.slane %v6101, 2
    %v7067 = vperm.slane %v6101, 3
    %v7068 = vperm.slane %v6101, 4
    %v7069 = vperm.slane %v6101, 5
    %v7070 = vperm.slane %v6101, 6
    %v7071 = vperm.slane %v6101, 7
    %v7072 = vperm.slane %v6102, 0
    %v7073 = vperm.slane %v6102, 1
    %v7074 = vperm.slane %v6102, 2
    %v7075 = vperm.slane %v6102, 3
    %v7076 = vperm.slane %v6102, 4
    %v7077 = vperm.slane %v6102, 5
    %v7078 = vperm.slane %v6102, 6
    %v7079 = vperm.slane %v6102, 7
    %v7080 = vperm.slane %v6103, 0
    %v7081 = vperm.slane %v6103, 1
    %v7082 = vperm.slane %v6103, 2
    %v7083 = vperm.slane %v6103, 3
    %v7084 = vperm.slane %v6103, 4
    %v7085 = vperm.slane %v6103, 5
    %v7086 = vperm.slane %v6103, 6
    %v7087 = vperm.slane %v6103, 7
    %v7088 = vperm.slane %v6104, 0
    %v7089 = vperm.slane %v6104, 1
    %v7090 = vperm.slane %v6104, 2
    %v7091 = vperm.slane %v6104, 3
    %v7092 = vperm.slane %v6104, 4
    %v7093 = vperm.slane %v6104, 5
    %v7094 = vperm.slane %v6104, 6
    %v7095 = vperm.slane %v6104, 7
    %v7096 = vperm.slane %v6105, 0
    %v7097 = vperm.slane %v6105, 1
    %v7098 = vperm.slane %v6105, 2
    %v7099 = vperm.slane %v6105, 3
    %v7100 = vperm.slane %v6105, 4
    %v7101 = vperm.slane %v6105, 5
    %v7102 = vperm.slane %v6105, 6
    %v7103 = vperm.slane %v6105, 7
    %v7104 = vperm.slane %v6106, 0
    %v7105 = vperm.slane %v6106, 1
    %v7106 = vperm.slane %v6106, 2
    %v7107 = vperm.slane %v6106, 3
    %v7108 = vperm.slane %v6106, 4
    %v7109 = vperm.slane %v6106, 5
    %v7110 = vperm.slane %v6106, 6
    %v7111 = vperm.slane %v6106, 7
    %v7112 = vperm.slane %v6107, 0
    %v7113 = vperm.slane %v6107, 1
    %v7114 = vperm.slane %v6107, 2
    %v7115 = vperm.slane %v6107, 3
    %v7116 = vperm.slane %v6107, 4
    %v7117 = vperm.slane %v6107, 5
    %v7118 = vperm.slane %v6107, 6
    %v7119 = vperm.slane %v6107, 7
    %v7120 = vperm.slane %v6108, 0
    %v7121 = vperm.slane %v6108, 1
    %v7122 = vperm.slane %v6108, 2
    %v7123 = vperm.slane %v6108, 3
    %v7124 = vperm.slane %v6108, 4
    %v7125 = vperm.slane %v6108, 5
    %v7126 = vperm.slane %v6108, 6
    %v7127 = vperm.slane %v6108, 7
    %v7128 = vperm.slane %v6109, 0
    %v7129 = vperm.slane %v6109, 1
    %v7130 = vperm.slane %v6109, 2
    %v7131 = vperm.slane %v6109, 3
    %v7132 = vperm.slane %v6109, 4
    %v7133 = vperm.slane %v6109, 5
    %v7134 = vperm.slane %v6109, 6
    %v7135 = vperm.slane %v6109, 7
    %v7136 = vperm.slane %v6110, 0
    %v7137 = vperm.slane %v6110, 1
    %v7138 = vperm.slane %v6110, 2
    %v7139 = vperm.slane %v6110, 3
    %v7140 = vperm.slane %v6110, 4
    %v7141 = vperm.slane %v6110, 5
    %v7142 = vperm.slane %v6110, 6
    %v7143 = vperm.slane %v6110, 7
    %v7144 = vperm.slane %v6111, 0
    %v7145 = vperm.slane %v6111, 1
    %v7146 = vperm.slane %v6111, 2
    %v7147 = vperm.slane %v6111, 3
    %v7148 = vperm.slane %v6111, 4
    %v7149 = vperm.slane %v6111, 5
    %v7150 = vperm.slane %v6111, 6
    %v7151 = vperm.slane %v6111, 7
    %v7152 = vperm.slane %v6112, 0
    %v7153 = vperm.slane %v6112, 1
    %v7154 = vperm.slane %v6112, 2
    %v7155 = vperm.slane %v6112, 3
    %v7156 = vperm.slane %v6112, 4
    %v7157 = vperm.slane %v6112, 5
    %v7158 = vperm.slane %v6112, 6
    %v7159 = vperm.slane %v6112, 7
    %v7160 = vperm.slane %v6113, 0
    %v7161 = vperm.slane %v6113, 1
    %v7162 = vperm.slane %v6113, 2
    %v7163 = vperm.slane %v6113, 3
    %v7164 = vperm.slane %v6113, 4
    %v7165 = vperm.slane %v6113, 5
    %v7166 = vperm.slane %v6113, 6
    %v7167 = vperm.slane %v6113, 7
    %v7168 = vperm.slane %v6114, 0
    %v7169 = vperm.slane %v6114, 1
    %v7170 = vperm.slane %v6114, 2
    %v7171 = vperm.slane %v6114, 3
    %v7172 = vperm.slane %v6114, 4
    %v7173 = vperm.slane %v6114, 5
    %v7174 = vperm.slane %v6114, 6
    %v7175 = vperm.slane %v6114, 7
    %v7176 = vperm.slane %v6115, 0
    %v7177 = vperm.slane %v6115, 1
    %v7178 = vperm.slane %v6115, 2
    %v7179 = vperm.slane %v6115, 3
    %v7180 = vperm.slane %v6115, 4
    %v7181 = vperm.slane %v6115, 5
    %v7182 = vperm.slane %v6115, 6
    %v7183 = vperm.slane %v6115, 7
    %v7184 = vperm.slane %v6116, 0
    %v7185 = vperm.slane %v6116, 1
    %v7186 = vperm.slane %v6116, 2
    %v7187 = vperm.slane %v6116, 3
    %v7188 = vperm.slane %v6116, 4
    %v7189 = vperm.slane %v6116, 5
    %v7190 = vperm.slane %v6116, 6
    %v7191 = vperm.slane %v6116, 7
    %v7192 = vperm.slane %v6117, 0
    %v7193 = vperm.slane %v6117, 1
    %v7194 = vperm.slane %v6117, 2
    %v7195 = vperm.slane %v6117, 3
    %v7196 = vperm.slane %v6117, 4
    %v7197 = vperm.slane %v6117, 5
    %v7198 = vperm.slane %v6117, 6
    %v7199 = vperm.slane %v6117, 7
    %v7200 = vperm.slane %v6118, 0
    %v7201 = vperm.slane %v6118, 1
    %v7202 = vperm.slane %v6118, 2
    %v7203 = vperm.slane %v6118, 3
    %v7204 = vperm.slane %v6118, 4
    %v7205 = vperm.slane %v6118, 5
    %v7206 = vperm.slane %v6118, 6
    %v7207 = vperm.slane %v6118, 7
    %v7208 = vperm.slane %v6119, 0
    %v7209 = vperm.slane %v6119, 1
    %v7210 = vperm.slane %v6119, 2
    %v7211 = vperm.slane %v6119, 3
    %v7212 = vperm.slane %v6119, 4
    %v7213 = vperm.slane %v6119, 5
    %v7214 = vperm.slane %v6119, 6
    %v7215 = vperm.slane %v6119, 7
    %v7216 = vperm.slane %v6120, 0
    %v7217 = vperm.slane %v6120, 1
    %v7218 = vperm.slane %v6120, 2
    %v7219 = vperm.slane %v6120, 3
    %v7220 = vperm.slane %v6120, 4
    %v7221 = vperm.slane %v6120, 5
    %v7222 = vperm.slane %v6120, 6
    %v7223 = vperm.slane %v6120, 7
    %v7224 = vperm.slane %v6121, 0
    %v7225 = vperm.slane %v6121, 1
    %v7226 = vperm.slane %v6121, 2
    %v7227 = vperm.slane %v6121, 3
    %v7228 = vperm.slane %v6121, 4
    %v7229 = vperm.slane %v6121, 5
    %v7230 = vperm.slane %v6121, 6
    %v7231 = vperm.slane %v6121, 7
    %v7232 = vperm.slane %v6122, 0
    %v7233 = vperm.slane %v6122, 1
    %v7234 = vperm.slane %v6122, 2
    %v7235 = vperm.slane %v6122, 3
    %v7236 = vperm.slane %v6122, 4
    %v7237 = vperm.slane %v6122, 5
    %v7238 = vperm.slane %v6122, 6
    %v7239 = vperm.slane %v6122, 7
    %v7240 = vperm.slane %v6123, 0
    %v7241 = vperm.slane %v6123, 1
    %v7242 = vperm.slane %v6123, 2
    %v7243 = vperm.slane %v6123, 3
    %v7244 = vperm.slane %v6123, 4
    %v7245 = vperm.slane %v6123, 5
    %v7246 = vperm.slane %v6123, 6
    %v7247 = vperm.slane %v6123, 7
    %v7248 = vperm.slane %v6124, 0
    %v7249 = vperm.slane %v6124, 1
    %v7250 = vperm.slane %v6124, 2
    %v7251 = vperm.slane %v6124, 3
    %v7252 = vperm.slane %v6124, 4
    %v7253 = vperm.slane %v6124, 5
    %v7254 = vperm.slane %v6124, 6
    %v7255 = vperm.slane %v6124, 7
    %v7256 = vperm.slane %v6125, 0
    %v7257 = vperm.slane %v6125, 1
    %v7258 = vperm.slane %v6125, 2
    %v7259 = vperm.slane %v6125, 3
    %v7260 = vperm.slane %v6125, 4
    %v7261 = vperm.slane %v6125, 5
    %v7262 = vperm.slane %v6125, 6
    %v7263 = vperm.slane %v6125, 7
    %v7264 = vperm.slane %v6126, 0
    %v7265 = vperm.slane %v6126, 1
    %v7266 = vperm.slane %v6126, 2
    %v7267 = vperm.slane %v6126, 3
    %v7268 = vperm.slane %v6126, 4
    %v7269 = vperm.slane %v6126, 5
    %v7270 = vperm.slane %v6126, 6
    %v7271 = vperm.slane %v6126, 7
    %v7272 = vperm.slane %v6127, 0
    %v7273 = vperm.slane %v6127, 1
    %v7274 = vperm.slane %v6127, 2
    %v7275 = vperm.slane %v6127, 3
    %v7276 = vperm.slane %v6127, 4
    %v7277 = vperm.slane %v6127, 5
    %v7278 = vperm.slane %v6127, 6
    %v7279 = vperm.slane %v6127, 7
    %7280 = vst [vmem:[#allocation1] ss:$9 sm:$0xff] %v6256
    %s7281 = scalar_lea.vmem [#allocation1], 1
    %7282 = vst [vmem:[%s7281] ss:$9 sm:$0xff] %v6257
    %s7283 = scalar_lea.vmem [#allocation1], 2
    %7284 = vst [vmem:[%s7283] ss:$9 sm:$0xff] %v6258
    %s7285 = scalar_lea.vmem [#allocation1], 3
    %7286 = vst [vmem:[%s7285] ss:$9 sm:$0xff] %v6259
    %s7287 = scalar_lea.vmem [#allocation1], 4
    %7288 = vst [vmem:[%s7287] ss:$9 sm:$0xff] %v6260
    %s7289 = scalar_lea.vmem [#allocation1], 5
    %7290 = vst [vmem:[%s7289] ss:$9 sm:$0xff] %v6261
    %s7291 = scalar_lea.vmem [#allocation1], 6
    %7292 = vst [vmem:[%s7291] ss:$9 sm:$0xff] %v6262
    %s7293 = scalar_lea.vmem [#allocation1], 7
    %7294 = vst [vmem:[%s7293] ss:$9 sm:$0xff] %v6263
    %v7295 = vld [vmem:[#allocation1] sm:$0xff]
    %7296 = vst [vmem:[#allocation1] ss:$9 sm:$0xff] %v6264
    %7297 = vst [vmem:[%s7281] ss:$9 sm:$0xff] %v6265
    %7298 = vst [vmem:[%s7283] ss:$9 sm:$0xff] %v6266
    %7299 = vst [vmem:[%s7285] ss:$9 sm:$0xff] %v6267
    %7300 = vst [vmem:[%s7287] ss:$9 sm:$0xff] %v6268
    %7301 = vst [vmem:[%s7289] ss:$9 sm:$0xff] %v6269
    %7302 = vst [vmem:[%s7291] ss:$9 sm:$0xff] %v6270
    %7303 = vst [vmem:[%s7293] ss:$9 sm:$0xff] %v6271
    %v7304 = vld [vmem:[#allocation1] sm:$0xff]
    %7305 = vst [vmem:[#allocation1] ss:$9 sm:$0xff] %v6272
    %7306 = vst [vmem:[%s7281] ss:$9 sm:$0xff] %v6273
    %7307 = vst [vmem:[%s7283] ss:$9 sm:$0xff] %v6274
    %7308 = vst [vmem:[%s7285] ss:$9 sm:$0xff] %v6275
    %7309 = vst [vmem:[%s7287] ss:$9 sm:$0xff] %v6276
    %7310 = vst [vmem:[%s7289] ss:$9 sm:$0xff] %v6277
    %7311 = vst [vmem:[%s7291] ss:$9 sm:$0xff] %v6278
    %7312 = vst [vmem:[%s7293] ss:$9 sm:$0xff] %v6279
    %v7313 = vld [vmem:[#allocation1] sm:$0xff]
    %7314 = vst [vmem:[#allocation1] ss:$9 sm:$0xff] %v6280
    %7315 = vst [vmem:[%s7281] ss:$9 sm:$0xff] %v6281
    %7316 = vst [vmem:[%s7283] ss:$9 sm:$0xff] %v6282
    %7317 = vst [vmem:[%s7285] ss:$9 sm:$0xff] %v6283
    %7318 = vst [vmem:[%s7287] ss:$9 sm:$0xff] %v6284
    %7319 = vst [vmem:[%s7289] ss:$9 sm:$0xff] %v6285
    %7320 = vst [vmem:[%s7291] ss:$9 sm:$0xff] %v6286
    %7321 = vst [vmem:[%s7293] ss:$9 sm:$0xff] %v6287
    %v7322 = vld [vmem:[#allocation1] sm:$0xff]
    %7323 = vst [vmem:[#allocation1] ss:$9 sm:$0xff] %v6288
    %7324 = vst [vmem:[%s7281] ss:$9 sm:$0xff] %v6289
    %7325 = vst [vmem:[%s7283] ss:$9 sm:$0xff] %v6290
    %7326 = vst [vmem:[%s7285] ss:$9 sm:$0xff] %v6291
    %7327 = vst [vmem:[%s7287] ss:$9 sm:$0xff] %v6292
    %7328 = vst [vmem:[%s7289] ss:$9 sm:$0xff] %v6293
    %7329 = vst [vmem:[%s7291] ss:$9 sm:$0xff] %v6294
    %7330 = vst [vmem:[%s7293] ss:$9 sm:$0xff] %v6295
    %v7331 = vld [vmem:[#allocation1] sm:$0xff]
    %7332 = vst [vmem:[#allocation1] ss:$9 sm:$0xff] %v6296
    %7333 = vst [vmem:[%s7281] ss:$9 sm:$0xff] %v6297
    %7334 = vst [vmem:[%s7283] ss:$9 sm:$0xff] %v6298
    %7335 = vst [vmem:[%s7285] ss:$9 sm:$0xff] %v6299
    %7336 = vst [vmem:[%s7287] ss:$9 sm:$0xff] %v6300
    %7337 = vst [vmem:[%s7289] ss:$9 sm:$0xff] %v6301
    %7338 = vst [vmem:[%s7291] ss:$9 sm:$0xff] %v6302
    %7339 = vst [vmem:[%s7293] ss:$9 sm:$0xff] %v6303
    %v7340 = vld [vmem:[#allocation1] sm:$0xff]
    %7341 = vst [vmem:[#allocation1] ss:$9 sm:$0xff] %v6304
    %7342 = vst [vmem:[%s7281] ss:$9 sm:$0xff] %v6305
    %7343 = vst [vmem:[%s7283] ss:$9 sm:$0xff] %v6306
    %7344 = vst [vmem:[%s7285] ss:$9 sm:$0xff] %v6307
    %7345 = vst [vmem:[%s7287] ss:$9 sm:$0xff] %v6308
    %7346 = vst [vmem:[%s7289] ss:$9 sm:$0xff] %v6309
    %7347 = vst [vmem:[%s7291] ss:$9 sm:$0xff] %v6310
    %7348 = vst [vmem:[%s7293] ss:$9 sm:$0xff] %v6311
    %v7349 = vld [vmem:[#allocation1] sm:$0xff]
    %7350 = vst [vmem:[#allocation1] ss:$9 sm:$0xff] %v6312
    %7351 = vst [vmem:[%s7281] ss:$9 sm:$0xff] %v6313
    %7352 = vst [vmem:[%s7283] ss:$9 sm:$0xff] %v6314
    %7353 = vst [vmem:[%s7285] ss:$9 sm:$0xff] %v6315
    %7354 = vst [vmem:[%s7287] ss:$9 sm:$0xff] %v6316
    %7355 = vst [vmem:[%s7289] ss:$9 sm:$0xff] %v6317
    %7356 = vst [vmem:[%s7291] ss:$9 sm:$0xff] %v6318
    %7357 = vst [vmem:[%s7293] ss:$9 sm:$0xff] %v6319
    %v7358 = vld [vmem:[#allocation1] sm:$0xff]
    %7359 = vst [vmem:[#allocation1] ss:$9 sm:$0xff] %v6320
    %7360 = vst [vmem:[%s7281] ss:$9 sm:$0xff] %v6321
    %7361 = vst [vmem:[%s7283] ss:$9 sm:$0xff] %v6322
    %7362 = vst [vmem:[%s7285] ss:$9 sm:$0xff] %v6323
    %7363 = vst [vmem:[%s7287] ss:$9 sm:$0xff] %v6324
    %7364 = vst [vmem:[%s7289] ss:$9 sm:$0xff] %v6325
    %7365 = vst [vmem:[%s7291] ss:$9 sm:$0xff] %v6326
    %7366 = vst [vmem:[%s7293] ss:$9 sm:$0xff] %v6327
    %v7367 = vld [vmem:[#allocation1] sm:$0xff]
    %7368 = vst [vmem:[#allocation1] ss:$9 sm:$0xff] %v6328
    %7369 = vst [vmem:[%s7281] ss:$9 sm:$0xff] %v6329
    %7370 = vst [vmem:[%s7283] ss:$9 sm:$0xff] %v6330
    %7371 = vst [vmem:[%s7285] ss:$9 sm:$0xff] %v6331
    %7372 = vst [vmem:[%s7287] ss:$9 sm:$0xff] %v6332
    %7373 = vst [vmem:[%s7289] ss:$9 sm:$0xff] %v6333
    %7374 = vst [vmem:[%s7291] ss:$9 sm:$0xff] %v6334
    %7375 = vst [vmem:[%s7293] ss:$9 sm:$0xff] %v6335
    %v7376 = vld [vmem:[#allocation1] sm:$0xff]
    %7377 = vst [vmem:[#allocation1] ss:$9 sm:$0xff] %v6336
    %7378 = vst [vmem:[%s7281] ss:$9 sm:$0xff] %v6337
    %7379 = vst [vmem:[%s7283] ss:$9 sm:$0xff] %v6338
    %7380 = vst [vmem:[%s7285] ss:$9 sm:$0xff] %v6339
    %7381 = vst [vmem:[%s7287] ss:$9 sm:$0xff] %v6340
    %7382 = vst [vmem:[%s7289] ss:$9 sm:$0xff] %v6341
    %7383 = vst [vmem:[%s7291] ss:$9 sm:$0xff] %v6342
    %7384 = vst [vmem:[%s7293] ss:$9 sm:$0xff] %v6343
    %v7385 = vld [vmem:[#allocation1] sm:$0xff]
    %7386 = vst [vmem:[#allocation1] ss:$9 sm:$0xff] %v6344
    %7387 = vst [vmem:[%s7281] ss:$9 sm:$0xff] %v6345
    %7388 = vst [vmem:[%s7283] ss:$9 sm:$0xff] %v6346
    %7389 = vst [vmem:[%s7285] ss:$9 sm:$0xff] %v6347
    %7390 = vst [vmem:[%s7287] ss:$9 sm:$0xff] %v6348
    %7391 = vst [vmem:[%s7289] ss:$9 sm:$0xff] %v6349
    %7392 = vst [vmem:[%s7291] ss:$9 sm:$0xff] %v6350
    %7393 = vst [vmem:[%s7293] ss:$9 sm:$0xff] %v6351
    %v7394 = vld [vmem:[#allocation1] sm:$0xff]
    %7395 = vst [vmem:[#allocation1] ss:$9 sm:$0xff] %v6352
    %7396 = vst [vmem:[%s7281] ss:$9 sm:$0xff] %v6353
    %7397 = vst [vmem:[%s7283] ss:$9 sm:$0xff] %v6354
    %7398 = vst [vmem:[%s7285] ss:$9 sm:$0xff] %v6355
    %7399 = vst [vmem:[%s7287] ss:$9 sm:$0xff] %v6356
    %7400 = vst [vmem:[%s7289] ss:$9 sm:$0xff] %v6357
    %7401 = vst [vmem:[%s7291] ss:$9 sm:$0xff] %v6358
    %7402 = vst [vmem:[%s7293] ss:$9 sm:$0xff] %v6359
    %v7403 = vld [vmem:[#allocation1] sm:$0xff]
    %7404 = vst [vmem:[#allocation1] ss:$9 sm:$0xff] %v6360
    %7405 = vst [vmem:[%s7281] ss:$9 sm:$0xff] %v6361
    %7406 = vst [vmem:[%s7283] ss:$9 sm:$0xff] %v6362
    %7407 = vst [vmem:[%s7285] ss:$9 sm:$0xff] %v6363
    %7408 = vst [vmem:[%s7287] ss:$9 sm:$0xff] %v6364
    %7409 = vst [vmem:[%s7289] ss:$9 sm:$0xff] %v6365
    %7410 = vst [vmem:[%s7291] ss:$9 sm:$0xff] %v6366
    %7411 = vst [vmem:[%s7293] ss:$9 sm:$0xff] %v6367
    %v7412 = vld [vmem:[#allocation1] sm:$0xff]
    %7413 = vst [vmem:[#allocation1] ss:$9 sm:$0xff] %v6368
    %7414 = vst [vmem:[%s7281] ss:$9 sm:$0xff] %v6369
    %7415 = vst [vmem:[%s7283] ss:$9 sm:$0xff] %v6370
    %7416 = vst [vmem:[%s7285] ss:$9 sm:$0xff] %v6371
    %7417 = vst [vmem:[%s7287] ss:$9 sm:$0xff] %v6372
    %7418 = vst [vmem:[%s7289] ss:$9 sm:$0xff] %v6373
    %7419 = vst [vmem:[%s7291] ss:$9 sm:$0xff] %v6374
    %7420 = vst [vmem:[%s7293] ss:$9 sm:$0xff] %v6375
    %v7421 = vld [vmem:[#allocation1] sm:$0xff]
    %7422 = vst [vmem:[#allocation1] ss:$9 sm:$0xff] %v6376
    %7423 = vst [vmem:[%s7281] ss:$9 sm:$0xff] %v6377
    %7424 = vst [vmem:[%s7283] ss:$9 sm:$0xff] %v6378
    %7425 = vst [vmem:[%s7285] ss:$9 sm:$0xff] %v6379
    %7426 = vst [vmem:[%s7287] ss:$9 sm:$0xff] %v6380
    %7427 = vst [vmem:[%s7289] ss:$9 sm:$0xff] %v6381
    %7428 = vst [vmem:[%s7291] ss:$9 sm:$0xff] %v6382
    %7429 = vst [vmem:[%s7293] ss:$9 sm:$0xff] %v6383
    %v7430 = vld [vmem:[#allocation1] sm:$0xff]
    %7431 = vst [vmem:[#allocation1] ss:$9 sm:$0xff] %v6384
    %7432 = vst [vmem:[%s7281] ss:$9 sm:$0xff] %v6385
    %7433 = vst [vmem:[%s7283] ss:$9 sm:$0xff] %v6386
    %7434 = vst [vmem:[%s7285] ss:$9 sm:$0xff] %v6387
    %7435 = vst [vmem:[%s7287] ss:$9 sm:$0xff] %v6388
    %7436 = vst [vmem:[%s7289] ss:$9 sm:$0xff] %v6389
    %7437 = vst [vmem:[%s7291] ss:$9 sm:$0xff] %v6390
    %7438 = vst [vmem:[%s7293] ss:$9 sm:$0xff] %v6391
    %v7439 = vld [vmem:[#allocation1] sm:$0xff]
    %7440 = vst [vmem:[#allocation1] ss:$9 sm:$0xff] %v6392
    %7441 = vst [vmem:[%s7281] ss:$9 sm:$0xff] %v6393
    %7442 = vst [vmem:[%s7283] ss:$9 sm:$0xff] %v6394
    %7443 = vst [vmem:[%s7285] ss:$9 sm:$0xff] %v6395
    %7444 = vst [vmem:[%s7287] ss:$9 sm:$0xff] %v6396
    %7445 = vst [vmem:[%s7289] ss:$9 sm:$0xff] %v6397
    %7446 = vst [vmem:[%s7291] ss:$9 sm:$0xff] %v6398
    %7447 = vst [vmem:[%s7293] ss:$9 sm:$0xff] %v6399
    %v7448 = vld [vmem:[#allocation1] sm:$0xff]
    %7449 = vst [vmem:[#allocation1] ss:$9 sm:$0xff] %v6400
    %7450 = vst [vmem:[%s7281] ss:$9 sm:$0xff] %v6401
    %7451 = vst [vmem:[%s7283] ss:$9 sm:$0xff] %v6402
    %7452 = vst [vmem:[%s7285] ss:$9 sm:$0xff] %v6403
    %7453 = vst [vmem:[%s7287] ss:$9 sm:$0xff] %v6404
    %7454 = vst [vmem:[%s7289] ss:$9 sm:$0xff] %v6405
    %7455 = vst [vmem:[%s7291] ss:$9 sm:$0xff] %v6406
    %7456 = vst [vmem:[%s7293] ss:$9 sm:$0xff] %v6407
    %v7457 = vld [vmem:[#allocation1] sm:$0xff]
    %7458 = vst [vmem:[#allocation1] ss:$9 sm:$0xff] %v6408
    %7459 = vst [vmem:[%s7281] ss:$9 sm:$0xff] %v6409
    %7460 = vst [vmem:[%s7283] ss:$9 sm:$0xff] %v6410
    %7461 = vst [vmem:[%s7285] ss:$9 sm:$0xff] %v6411
    %7462 = vst [vmem:[%s7287] ss:$9 sm:$0xff] %v6412
    %7463 = vst [vmem:[%s7289] ss:$9 sm:$0xff] %v6413
    %7464 = vst [vmem:[%s7291] ss:$9 sm:$0xff] %v6414
    %7465 = vst [vmem:[%s7293] ss:$9 sm:$0xff] %v6415
    %v7466 = vld [vmem:[#allocation1] sm:$0xff]
    %7467 = vst [vmem:[#allocation1] ss:$9 sm:$0xff] %v6416
    %7468 = vst [vmem:[%s7281] ss:$9 sm:$0xff] %v6417
    %7469 = vst [vmem:[%s7283] ss:$9 sm:$0xff] %v6418
    %7470 = vst [vmem:[%s7285] ss:$9 sm:$0xff] %v6419
    %7471 = vst [vmem:[%s7287] ss:$9 sm:$0xff] %v6420
    %7472 = vst [vmem:[%s7289] ss:$9 sm:$0xff] %v6421
    %7473 = vst [vmem:[%s7291] ss:$9 sm:$0xff] %v6422
    %7474 = vst [vmem:[%s7293] ss:$9 sm:$0xff] %v6423
    %v7475 = vld [vmem:[#allocation1] sm:$0xff]
    %7476 = vst [vmem:[#allocation1] ss:$9 sm:$0xff] %v6424
    %7477 = vst [vmem:[%s7281] ss:$9 sm:$0xff] %v6425
    %7478 = vst [vmem:[%s7283] ss:$9 sm:$0xff] %v6426
    %7479 = vst [vmem:[%s7285] ss:$9 sm:$0xff] %v6427
    %7480 = vst [vmem:[%s7287] ss:$9 sm:$0xff] %v6428
    %7481 = vst [vmem:[%s7289] ss:$9 sm:$0xff] %v6429
    %7482 = vst [vmem:[%s7291] ss:$9 sm:$0xff] %v6430
    %7483 = vst [vmem:[%s7293] ss:$9 sm:$0xff] %v6431
    %v7484 = vld [vmem:[#allocation1] sm:$0xff]
    %7485 = vst [vmem:[#allocation1] ss:$9 sm:$0xff] %v6432
    %7486 = vst [vmem:[%s7281] ss:$9 sm:$0xff] %v6433
    %7487 = vst [vmem:[%s7283] ss:$9 sm:$0xff] %v6434
    %7488 = vst [vmem:[%s7285] ss:$9 sm:$0xff] %v6435
    %7489 = vst [vmem:[%s7287] ss:$9 sm:$0xff] %v6436
    %7490 = vst [vmem:[%s7289] ss:$9 sm:$0xff] %v6437
    %7491 = vst [vmem:[%s7291] ss:$9 sm:$0xff] %v6438
    %7492 = vst [vmem:[%s7293] ss:$9 sm:$0xff] %v6439
    %v7493 = vld [vmem:[#allocation1] sm:$0xff]
    %7494 = vst [vmem:[#allocation1] ss:$9 sm:$0xff] %v6440
    %7495 = vst [vmem:[%s7281] ss:$9 sm:$0xff] %v6441
    %7496 = vst [vmem:[%s7283] ss:$9 sm:$0xff] %v6442
    %7497 = vst [vmem:[%s7285] ss:$9 sm:$0xff] %v6443
    %7498 = vst [vmem:[%s7287] ss:$9 sm:$0xff] %v6444
    %7499 = vst [vmem:[%s7289] ss:$9 sm:$0xff] %v6445
    %7500 = vst [vmem:[%s7291] ss:$9 sm:$0xff] %v6446
    %7501 = vst [vmem:[%s7293] ss:$9 sm:$0xff] %v6447
    %v7502 = vld [vmem:[#allocation1] sm:$0xff]
    %7503 = vst [vmem:[#allocation1] ss:$9 sm:$0xff] %v6448
    %7504 = vst [vmem:[%s7281] ss:$9 sm:$0xff] %v6449
    %7505 = vst [vmem:[%s7283] ss:$9 sm:$0xff] %v6450
    %7506 = vst [vmem:[%s7285] ss:$9 sm:$0xff] %v6451
    %7507 = vst [vmem:[%s7287] ss:$9 sm:$0xff] %v6452
    %7508 = vst [vmem:[%s7289] ss:$9 sm:$0xff] %v6453
    %7509 = vst [vmem:[%s7291] ss:$9 sm:$0xff] %v6454
    %7510 = vst [vmem:[%s7293] ss:$9 sm:$0xff] %v6455
    %v7511 = vld [vmem:[#allocation1] sm:$0xff]
    %7512 = vst [vmem:[#allocation1] ss:$9 sm:$0xff] %v6456
    %7513 = vst [vmem:[%s7281] ss:$9 sm:$0xff] %v6457
    %7514 = vst [vmem:[%s7283] ss:$9 sm:$0xff] %v6458
    %7515 = vst [vmem:[%s7285] ss:$9 sm:$0xff] %v6459
    %7516 = vst [vmem:[%s7287] ss:$9 sm:$0xff] %v6460
    %7517 = vst [vmem:[%s7289] ss:$9 sm:$0xff] %v6461
    %7518 = vst [vmem:[%s7291] ss:$9 sm:$0xff] %v6462
    %7519 = vst [vmem:[%s7293] ss:$9 sm:$0xff] %v6463
    %v7520 = vld [vmem:[#allocation1] sm:$0xff]
    %7521 = vst [vmem:[#allocation1] ss:$9 sm:$0xff] %v6464
    %7522 = vst [vmem:[%s7281] ss:$9 sm:$0xff] %v6465
    %7523 = vst [vmem:[%s7283] ss:$9 sm:$0xff] %v6466
    %7524 = vst [vmem:[%s7285] ss:$9 sm:$0xff] %v6467
    %7525 = vst [vmem:[%s7287] ss:$9 sm:$0xff] %v6468
    %7526 = vst [vmem:[%s7289] ss:$9 sm:$0xff] %v6469
    %7527 = vst [vmem:[%s7291] ss:$9 sm:$0xff] %v6470
    %7528 = vst [vmem:[%s7293] ss:$9 sm:$0xff] %v6471
    %v7529 = vld [vmem:[#allocation1] sm:$0xff]
    %7530 = vst [vmem:[#allocation1] ss:$9 sm:$0xff] %v6472
    %7531 = vst [vmem:[%s7281] ss:$9 sm:$0xff] %v6473
    %7532 = vst [vmem:[%s7283] ss:$9 sm:$0xff] %v6474
    %7533 = vst [vmem:[%s7285] ss:$9 sm:$0xff] %v6475
    %7534 = vst [vmem:[%s7287] ss:$9 sm:$0xff] %v6476
    %7535 = vst [vmem:[%s7289] ss:$9 sm:$0xff] %v6477
    %7536 = vst [vmem:[%s7291] ss:$9 sm:$0xff] %v6478
    %7537 = vst [vmem:[%s7293] ss:$9 sm:$0xff] %v6479
    %v7538 = vld [vmem:[#allocation1] sm:$0xff]
    %7539 = vst [vmem:[#allocation1] ss:$9 sm:$0xff] %v6480
    %7540 = vst [vmem:[%s7281] ss:$9 sm:$0xff] %v6481
    %7541 = vst [vmem:[%s7283] ss:$9 sm:$0xff] %v6482
    %7542 = vst [vmem:[%s7285] ss:$9 sm:$0xff] %v6483
    %7543 = vst [vmem:[%s7287] ss:$9 sm:$0xff] %v6484
    %7544 = vst [vmem:[%s7289] ss:$9 sm:$0xff] %v6485
    %7545 = vst [vmem:[%s7291] ss:$9 sm:$0xff] %v6486
    %7546 = vst [vmem:[%s7293] ss:$9 sm:$0xff] %v6487
    %v7547 = vld [vmem:[#allocation1] sm:$0xff]
    %7548 = vst [vmem:[#allocation1] ss:$9 sm:$0xff] %v6488
    %7549 = vst [vmem:[%s7281] ss:$9 sm:$0xff] %v6489
    %7550 = vst [vmem:[%s7283] ss:$9 sm:$0xff] %v6490
    %7551 = vst [vmem:[%s7285] ss:$9 sm:$0xff] %v6491
    %7552 = vst [vmem:[%s7287] ss:$9 sm:$0xff] %v6492
    %7553 = vst [vmem:[%s7289] ss:$9 sm:$0xff] %v6493
    %7554 = vst [vmem:[%s7291] ss:$9 sm:$0xff] %v6494
    %7555 = vst [vmem:[%s7293] ss:$9 sm:$0xff] %v6495
    %v7556 = vld [vmem:[#allocation1] sm:$0xff]
    %7557 = vst [vmem:[#allocation1] ss:$9 sm:$0xff] %v6496
    %7558 = vst [vmem:[%s7281] ss:$9 sm:$0xff] %v6497
    %7559 = vst [vmem:[%s7283] ss:$9 sm:$0xff] %v6498
    %7560 = vst [vmem:[%s7285] ss:$9 sm:$0xff] %v6499
    %7561 = vst [vmem:[%s7287] ss:$9 sm:$0xff] %v6500
    %7562 = vst [vmem:[%s7289] ss:$9 sm:$0xff] %v6501
    %7563 = vst [vmem:[%s7291] ss:$9 sm:$0xff] %v6502
    %7564 = vst [vmem:[%s7293] ss:$9 sm:$0xff] %v6503
    %v7565 = vld [vmem:[#allocation1] sm:$0xff]
    %7566 = vst [vmem:[#allocation1] ss:$9 sm:$0xff] %v6504
    %7567 = vst [vmem:[%s7281] ss:$9 sm:$0xff] %v6505
    %7568 = vst [vmem:[%s7283] ss:$9 sm:$0xff] %v6506
    %7569 = vst [vmem:[%s7285] ss:$9 sm:$0xff] %v6507
    %7570 = vst [vmem:[%s7287] ss:$9 sm:$0xff] %v6508
    %7571 = vst [vmem:[%s7289] ss:$9 sm:$0xff] %v6509
    %7572 = vst [vmem:[%s7291] ss:$9 sm:$0xff] %v6510
    %7573 = vst [vmem:[%s7293] ss:$9 sm:$0xff] %v6511
    %v7574 = vld [vmem:[#allocation1] sm:$0xff]
    %7575 = vst [vmem:[#allocation1] ss:$9 sm:$0xff] %v6512
    %7576 = vst [vmem:[%s7281] ss:$9 sm:$0xff] %v6513
    %7577 = vst [vmem:[%s7283] ss:$9 sm:$0xff] %v6514
    %7578 = vst [vmem:[%s7285] ss:$9 sm:$0xff] %v6515
    %7579 = vst [vmem:[%s7287] ss:$9 sm:$0xff] %v6516
    %7580 = vst [vmem:[%s7289] ss:$9 sm:$0xff] %v6517
    %7581 = vst [vmem:[%s7291] ss:$9 sm:$0xff] %v6518
    %7582 = vst [vmem:[%s7293] ss:$9 sm:$0xff] %v6519
    %v7583 = vld [vmem:[#allocation1] sm:$0xff]
    %7584 = vst [vmem:[#allocation1] ss:$9 sm:$0xff] %v6520
    %7585 = vst [vmem:[%s7281] ss:$9 sm:$0xff] %v6521
    %7586 = vst [vmem:[%s7283] ss:$9 sm:$0xff] %v6522
    %7587 = vst [vmem:[%s7285] ss:$9 sm:$0xff] %v6523
    %7588 = vst [vmem:[%s7287] ss:$9 sm:$0xff] %v6524
    %7589 = vst [vmem:[%s7289] ss:$9 sm:$0xff] %v6525
    %7590 = vst [vmem:[%s7291] ss:$9 sm:$0xff] %v6526
    %7591 = vst [vmem:[%s7293] ss:$9 sm:$0xff] %v6527
    %v7592 = vld [vmem:[#allocation1] sm:$0xff]
    %7593 = vst [vmem:[#allocation1] ss:$9 sm:$0xff] %v6528
    %7594 = vst [vmem:[%s7281] ss:$9 sm:$0xff] %v6529
    %7595 = vst [vmem:[%s7283] ss:$9 sm:$0xff] %v6530
    %7596 = vst [vmem:[%s7285] ss:$9 sm:$0xff] %v6531
    %7597 = vst [vmem:[%s7287] ss:$9 sm:$0xff] %v6532
    %7598 = vst [vmem:[%s7289] ss:$9 sm:$0xff] %v6533
    %7599 = vst [vmem:[%s7291] ss:$9 sm:$0xff] %v6534
    %7600 = vst [vmem:[%s7293] ss:$9 sm:$0xff] %v6535
    %v7601 = vld [vmem:[#allocation1] sm:$0xff]
    %7602 = vst [vmem:[#allocation1] ss:$9 sm:$0xff] %v6536
    %7603 = vst [vmem:[%s7281] ss:$9 sm:$0xff] %v6537
    %7604 = vst [vmem:[%s7283] ss:$9 sm:$0xff] %v6538
    %7605 = vst [vmem:[%s7285] ss:$9 sm:$0xff] %v6539
    %7606 = vst [vmem:[%s7287] ss:$9 sm:$0xff] %v6540
    %7607 = vst [vmem:[%s7289] ss:$9 sm:$0xff] %v6541
    %7608 = vst [vmem:[%s7291] ss:$9 sm:$0xff] %v6542
    %7609 = vst [vmem:[%s7293] ss:$9 sm:$0xff] %v6543
    %v7610 = vld [vmem:[#allocation1] sm:$0xff]
    %7611 = vst [vmem:[#allocation1] ss:$9 sm:$0xff] %v6544
    %7612 = vst [vmem:[%s7281] ss:$9 sm:$0xff] %v6545
    %7613 = vst [vmem:[%s7283] ss:$9 sm:$0xff] %v6546
    %7614 = vst [vmem:[%s7285] ss:$9 sm:$0xff] %v6547
    %7615 = vst [vmem:[%s7287] ss:$9 sm:$0xff] %v6548
    %7616 = vst [vmem:[%s7289] ss:$9 sm:$0xff] %v6549
    %7617 = vst [vmem:[%s7291] ss:$9 sm:$0xff] %v6550
    %7618 = vst [vmem:[%s7293] ss:$9 sm:$0xff] %v6551
    %v7619 = vld [vmem:[#allocation1] sm:$0xff]
    %7620 = vst [vmem:[#allocation1] ss:$9 sm:$0xff] %v6552
    %7621 = vst [vmem:[%s7281] ss:$9 sm:$0xff] %v6553
    %7622 = vst [vmem:[%s7283] ss:$9 sm:$0xff] %v6554
    %7623 = vst [vmem:[%s7285] ss:$9 sm:$0xff] %v6555
    %7624 = vst [vmem:[%s7287] ss:$9 sm:$0xff] %v6556
    %7625 = vst [vmem:[%s7289] ss:$9 sm:$0xff] %v6557
    %7626 = vst [vmem:[%s7291] ss:$9 sm:$0xff] %v6558
    %7627 = vst [vmem:[%s7293] ss:$9 sm:$0xff] %v6559
    %v7628 = vld [vmem:[#allocation1] sm:$0xff]
    %7629 = vst [vmem:[#allocation1] ss:$9 sm:$0xff] %v6560
    %7630 = vst [vmem:[%s7281] ss:$9 sm:$0xff] %v6561
    %7631 = vst [vmem:[%s7283] ss:$9 sm:$0xff] %v6562
    %7632 = vst [vmem:[%s7285] ss:$9 sm:$0xff] %v6563
    %7633 = vst [vmem:[%s7287] ss:$9 sm:$0xff] %v6564
    %7634 = vst [vmem:[%s7289] ss:$9 sm:$0xff] %v6565
    %7635 = vst [vmem:[%s7291] ss:$9 sm:$0xff] %v6566
    %7636 = vst [vmem:[%s7293] ss:$9 sm:$0xff] %v6567
    %v7637 = vld [vmem:[#allocation1] sm:$0xff]
    %7638 = vst [vmem:[#allocation1] ss:$9 sm:$0xff] %v6568
    %7639 = vst [vmem:[%s7281] ss:$9 sm:$0xff] %v6569
    %7640 = vst [vmem:[%s7283] ss:$9 sm:$0xff] %v6570
    %7641 = vst [vmem:[%s7285] ss:$9 sm:$0xff] %v6571
    %7642 = vst [vmem:[%s7287] ss:$9 sm:$0xff] %v6572
    %7643 = vst [vmem:[%s7289] ss:$9 sm:$0xff] %v6573
    %7644 = vst [vmem:[%s7291] ss:$9 sm:$0xff] %v6574
    %7645 = vst [vmem:[%s7293] ss:$9 sm:$0xff] %v6575
    %v7646 = vld [vmem:[#allocation1] sm:$0xff]
    %7647 = vst [vmem:[#allocation1] ss:$9 sm:$0xff] %v6576
    %7648 = vst [vmem:[%s7281] ss:$9 sm:$0xff] %v6577
    %7649 = vst [vmem:[%s7283] ss:$9 sm:$0xff] %v6578
    %7650 = vst [vmem:[%s7285] ss:$9 sm:$0xff] %v6579
    %7651 = vst [vmem:[%s7287] ss:$9 sm:$0xff] %v6580
    %7652 = vst [vmem:[%s7289] ss:$9 sm:$0xff] %v6581
    %7653 = vst [vmem:[%s7291] ss:$9 sm:$0xff] %v6582
    %7654 = vst [vmem:[%s7293] ss:$9 sm:$0xff] %v6583
    %v7655 = vld [vmem:[#allocation1] sm:$0xff]
    %7656 = vst [vmem:[#allocation1] ss:$9 sm:$0xff] %v6584
    %7657 = vst [vmem:[%s7281] ss:$9 sm:$0xff] %v6585
    %7658 = vst [vmem:[%s7283] ss:$9 sm:$0xff] %v6586
    %7659 = vst [vmem:[%s7285] ss:$9 sm:$0xff] %v6587
    %7660 = vst [vmem:[%s7287] ss:$9 sm:$0xff] %v6588
    %7661 = vst [vmem:[%s7289] ss:$9 sm:$0xff] %v6589
    %7662 = vst [vmem:[%s7291] ss:$9 sm:$0xff] %v6590
    %7663 = vst [vmem:[%s7293] ss:$9 sm:$0xff] %v6591
    %v7664 = vld [vmem:[#allocation1] sm:$0xff]
    %7665 = vst [vmem:[#allocation1] ss:$9 sm:$0xff] %v6592
    %7666 = vst [vmem:[%s7281] ss:$9 sm:$0xff] %v6593
    %7667 = vst [vmem:[%s7283] ss:$9 sm:$0xff] %v6594
    %7668 = vst [vmem:[%s7285] ss:$9 sm:$0xff] %v6595
    %7669 = vst [vmem:[%s7287] ss:$9 sm:$0xff] %v6596
    %7670 = vst [vmem:[%s7289] ss:$9 sm:$0xff] %v6597
    %7671 = vst [vmem:[%s7291] ss:$9 sm:$0xff] %v6598
    %7672 = vst [vmem:[%s7293] ss:$9 sm:$0xff] %v6599
    %v7673 = vld [vmem:[#allocation1] sm:$0xff]
    %7674 = vst [vmem:[#allocation1] ss:$9 sm:$0xff] %v6600
    %7675 = vst [vmem:[%s7281] ss:$9 sm:$0xff] %v6601
    %7676 = vst [vmem:[%s7283] ss:$9 sm:$0xff] %v6602
    %7677 = vst [vmem:[%s7285] ss:$9 sm:$0xff] %v6603
    %7678 = vst [vmem:[%s7287] ss:$9 sm:$0xff] %v6604
    %7679 = vst [vmem:[%s7289] ss:$9 sm:$0xff] %v6605
    %7680 = vst [vmem:[%s7291] ss:$9 sm:$0xff] %v6606
    %7681 = vst [vmem:[%s7293] ss:$9 sm:$0xff] %v6607
    %v7682 = vld [vmem:[#allocation1] sm:$0xff]
    %7683 = vst [vmem:[#allocation1] ss:$9 sm:$0xff] %v6608
    %7684 = vst [vmem:[%s7281] ss:$9 sm:$0xff] %v6609
    %7685 = vst [vmem:[%s7283] ss:$9 sm:$0xff] %v6610
    %7686 = vst [vmem:[%s7285] ss:$9 sm:$0xff] %v6611
    %7687 = vst [vmem:[%s7287] ss:$9 sm:$0xff] %v6612
    %7688 = vst [vmem:[%s7289] ss:$9 sm:$0xff] %v6613
    %7689 = vst [vmem:[%s7291] ss:$9 sm:$0xff] %v6614
    %7690 = vst [vmem:[%s7293] ss:$9 sm:$0xff] %v6615
    %v7691 = vld [vmem:[#allocation1] sm:$0xff]
    %7692 = vst [vmem:[#allocation1] ss:$9 sm:$0xff] %v6616
    %7693 = vst [vmem:[%s7281] ss:$9 sm:$0xff] %v6617
    %7694 = vst [vmem:[%s7283] ss:$9 sm:$0xff] %v6618
    %7695 = vst [vmem:[%s7285] ss:$9 sm:$0xff] %v6619
    %7696 = vst [vmem:[%s7287] ss:$9 sm:$0xff] %v6620
    %7697 = vst [vmem:[%s7289] ss:$9 sm:$0xff] %v6621
    %7698 = vst [vmem:[%s7291] ss:$9 sm:$0xff] %v6622
    %7699 = vst [vmem:[%s7293] ss:$9 sm:$0xff] %v6623
    %v7700 = vld [vmem:[#allocation1] sm:$0xff]
    %7701 = vst [vmem:[#allocation1] ss:$9 sm:$0xff] %v6624
    %7702 = vst [vmem:[%s7281] ss:$9 sm:$0xff] %v6625
    %7703 = vst [vmem:[%s7283] ss:$9 sm:$0xff] %v6626
    %7704 = vst [vmem:[%s7285] ss:$9 sm:$0xff] %v6627
    %7705 = vst [vmem:[%s7287] ss:$9 sm:$0xff] %v6628
    %7706 = vst [vmem:[%s7289] ss:$9 sm:$0xff] %v6629
    %7707 = vst [vmem:[%s7291] ss:$9 sm:$0xff] %v6630
    %7708 = vst [vmem:[%s7293] ss:$9 sm:$0xff] %v6631
    %v7709 = vld [vmem:[#allocation1] sm:$0xff]
    %7710 = vst [vmem:[#allocation1] ss:$9 sm:$0xff] %v6632
    %7711 = vst [vmem:[%s7281] ss:$9 sm:$0xff] %v6633
    %7712 = vst [vmem:[%s7283] ss:$9 sm:$0xff] %v6634
    %7713 = vst [vmem:[%s7285] ss:$9 sm:$0xff] %v6635
    %7714 = vst [vmem:[%s7287] ss:$9 sm:$0xff] %v6636
    %7715 = vst [vmem:[%s7289] ss:$9 sm:$0xff] %v6637
    %7716 = vst [vmem:[%s7291] ss:$9 sm:$0xff] %v6638
    %7717 = vst [vmem:[%s7293] ss:$9 sm:$0xff] %v6639
    %v7718 = vld [vmem:[#allocation1] sm:$0xff]
    %7719 = vst [vmem:[#allocation1] ss:$9 sm:$0xff] %v6640
    %7720 = vst [vmem:[%s7281] ss:$9 sm:$0xff] %v6641
    %7721 = vst [vmem:[%s7283] ss:$9 sm:$0xff] %v6642
    %7722 = vst [vmem:[%s7285] ss:$9 sm:$0xff] %v6643
    %7723 = vst [vmem:[%s7287] ss:$9 sm:$0xff] %v6644
    %7724 = vst [vmem:[%s7289] ss:$9 sm:$0xff] %v6645
    %7725 = vst [vmem:[%s7291] ss:$9 sm:$0xff] %v6646
    %7726 = vst [vmem:[%s7293] ss:$9 sm:$0xff] %v6647
    %v7727 = vld [vmem:[#allocation1] sm:$0xff]
    %7728 = vst [vmem:[#allocation1] ss:$9 sm:$0xff] %v6648
    %7729 = vst [vmem:[%s7281] ss:$9 sm:$0xff] %v6649
    %7730 = vst [vmem:[%s7283] ss:$9 sm:$0xff] %v6650
    %7731 = vst [vmem:[%s7285] ss:$9 sm:$0xff] %v6651
    %7732 = vst [vmem:[%s7287] ss:$9 sm:$0xff] %v6652
    %7733 = vst [vmem:[%s7289] ss:$9 sm:$0xff] %v6653
    %7734 = vst [vmem:[%s7291] ss:$9 sm:$0xff] %v6654
    %7735 = vst [vmem:[%s7293] ss:$9 sm:$0xff] %v6655
    %v7736 = vld [vmem:[#allocation1] sm:$0xff]
    %7737 = vst [vmem:[#allocation1] ss:$9 sm:$0xff] %v6656
    %7738 = vst [vmem:[%s7281] ss:$9 sm:$0xff] %v6657
    %7739 = vst [vmem:[%s7283] ss:$9 sm:$0xff] %v6658
    %7740 = vst [vmem:[%s7285] ss:$9 sm:$0xff] %v6659
    %7741 = vst [vmem:[%s7287] ss:$9 sm:$0xff] %v6660
    %7742 = vst [vmem:[%s7289] ss:$9 sm:$0xff] %v6661
    %7743 = vst [vmem:[%s7291] ss:$9 sm:$0xff] %v6662
    %7744 = vst [vmem:[%s7293] ss:$9 sm:$0xff] %v6663
    %v7745 = vld [vmem:[#allocation1] sm:$0xff]
    %7746 = vst [vmem:[#allocation1] ss:$9 sm:$0xff] %v6664
    %7747 = vst [vmem:[%s7281] ss:$9 sm:$0xff] %v6665
    %7748 = vst [vmem:[%s7283] ss:$9 sm:$0xff] %v6666
    %7749 = vst [vmem:[%s7285] ss:$9 sm:$0xff] %v6667
    %7750 = vst [vmem:[%s7287] ss:$9 sm:$0xff] %v6668
    %7751 = vst [vmem:[%s7289] ss:$9 sm:$0xff] %v6669
    %7752 = vst [vmem:[%s7291] ss:$9 sm:$0xff] %v6670
    %7753 = vst [vmem:[%s7293] ss:$9 sm:$0xff] %v6671
    %v7754 = vld [vmem:[#allocation1] sm:$0xff]
    %7755 = vst [vmem:[#allocation1] ss:$9 sm:$0xff] %v6672
    %7756 = vst [vmem:[%s7281] ss:$9 sm:$0xff] %v6673
    %7757 = vst [vmem:[%s7283] ss:$9 sm:$0xff] %v6674
    %7758 = vst [vmem:[%s7285] ss:$9 sm:$0xff] %v6675
    %7759 = vst [vmem:[%s7287] ss:$9 sm:$0xff] %v6676
    %7760 = vst [vmem:[%s7289] ss:$9 sm:$0xff] %v6677
    %7761 = vst [vmem:[%s7291] ss:$9 sm:$0xff] %v6678
    %7762 = vst [vmem:[%s7293] ss:$9 sm:$0xff] %v6679
    %v7763 = vld [vmem:[#allocation1] sm:$0xff]
    %7764 = vst [vmem:[#allocation1] ss:$9 sm:$0xff] %v6680
    %7765 = vst [vmem:[%s7281] ss:$9 sm:$0xff] %v6681
    %7766 = vst [vmem:[%s7283] ss:$9 sm:$0xff] %v6682
    %7767 = vst [vmem:[%s7285] ss:$9 sm:$0xff] %v6683
    %7768 = vst [vmem:[%s7287] ss:$9 sm:$0xff] %v6684
    %7769 = vst [vmem:[%s7289] ss:$9 sm:$0xff] %v6685
    %7770 = vst [vmem:[%s7291] ss:$9 sm:$0xff] %v6686
    %7771 = vst [vmem:[%s7293] ss:$9 sm:$0xff] %v6687
    %v7772 = vld [vmem:[#allocation1] sm:$0xff]
    %7773 = vst [vmem:[#allocation1] ss:$9 sm:$0xff] %v6688
    %7774 = vst [vmem:[%s7281] ss:$9 sm:$0xff] %v6689
    %7775 = vst [vmem:[%s7283] ss:$9 sm:$0xff] %v6690
    %7776 = vst [vmem:[%s7285] ss:$9 sm:$0xff] %v6691
    %7777 = vst [vmem:[%s7287] ss:$9 sm:$0xff] %v6692
    %7778 = vst [vmem:[%s7289] ss:$9 sm:$0xff] %v6693
    %7779 = vst [vmem:[%s7291] ss:$9 sm:$0xff] %v6694
    %7780 = vst [vmem:[%s7293] ss:$9 sm:$0xff] %v6695
    %v7781 = vld [vmem:[#allocation1] sm:$0xff]
    %7782 = vst [vmem:[#allocation1] ss:$9 sm:$0xff] %v6696
    %7783 = vst [vmem:[%s7281] ss:$9 sm:$0xff] %v6697
    %7784 = vst [vmem:[%s7283] ss:$9 sm:$0xff] %v6698
    %7785 = vst [vmem:[%s7285] ss:$9 sm:$0xff] %v6699
    %7786 = vst [vmem:[%s7287] ss:$9 sm:$0xff] %v6700
    %7787 = vst [vmem:[%s7289] ss:$9 sm:$0xff] %v6701
    %7788 = vst [vmem:[%s7291] ss:$9 sm:$0xff] %v6702
    %7789 = vst [vmem:[%s7293] ss:$9 sm:$0xff] %v6703
    %v7790 = vld [vmem:[#allocation1] sm:$0xff]
    %7791 = vst [vmem:[#allocation1] ss:$9 sm:$0xff] %v6704
    %7792 = vst [vmem:[%s7281] ss:$9 sm:$0xff] %v6705
    %7793 = vst [vmem:[%s7283] ss:$9 sm:$0xff] %v6706
    %7794 = vst [vmem:[%s7285] ss:$9 sm:$0xff] %v6707
    %7795 = vst [vmem:[%s7287] ss:$9 sm:$0xff] %v6708
    %7796 = vst [vmem:[%s7289] ss:$9 sm:$0xff] %v6709
    %7797 = vst [vmem:[%s7291] ss:$9 sm:$0xff] %v6710
    %7798 = vst [vmem:[%s7293] ss:$9 sm:$0xff] %v6711
    %v7799 = vld [vmem:[#allocation1] sm:$0xff]
    %7800 = vst [vmem:[#allocation1] ss:$9 sm:$0xff] %v6712
    %7801 = vst [vmem:[%s7281] ss:$9 sm:$0xff] %v6713
    %7802 = vst [vmem:[%s7283] ss:$9 sm:$0xff] %v6714
    %7803 = vst [vmem:[%s7285] ss:$9 sm:$0xff] %v6715
    %7804 = vst [vmem:[%s7287] ss:$9 sm:$0xff] %v6716
    %7805 = vst [vmem:[%s7289] ss:$9 sm:$0xff] %v6717
    %7806 = vst [vmem:[%s7291] ss:$9 sm:$0xff] %v6718
    %7807 = vst [vmem:[%s7293] ss:$9 sm:$0xff] %v6719
    %v7808 = vld [vmem:[#allocation1] sm:$0xff]
    %7809 = vst [vmem:[#allocation1] ss:$9 sm:$0xff] %v6720
    %7810 = vst [vmem:[%s7281] ss:$9 sm:$0xff] %v6721
    %7811 = vst [vmem:[%s7283] ss:$9 sm:$0xff] %v6722
    %7812 = vst [vmem:[%s7285] ss:$9 sm:$0xff] %v6723
    %7813 = vst [vmem:[%s7287] ss:$9 sm:$0xff] %v6724
    %7814 = vst [vmem:[%s7289] ss:$9 sm:$0xff] %v6725
    %7815 = vst [vmem:[%s7291] ss:$9 sm:$0xff] %v6726
    %7816 = vst [vmem:[%s7293] ss:$9 sm:$0xff] %v6727
    %v7817 = vld [vmem:[#allocation1] sm:$0xff]
    %7818 = vst [vmem:[#allocation1] ss:$9 sm:$0xff] %v6728
    %7819 = vst [vmem:[%s7281] ss:$9 sm:$0xff] %v6729
    %7820 = vst [vmem:[%s7283] ss:$9 sm:$0xff] %v6730
    %7821 = vst [vmem:[%s7285] ss:$9 sm:$0xff] %v6731
    %7822 = vst [vmem:[%s7287] ss:$9 sm:$0xff] %v6732
    %7823 = vst [vmem:[%s7289] ss:$9 sm:$0xff] %v6733
    %7824 = vst [vmem:[%s7291] ss:$9 sm:$0xff] %v6734
    %7825 = vst [vmem:[%s7293] ss:$9 sm:$0xff] %v6735
    %v7826 = vld [vmem:[#allocation1] sm:$0xff]
    %7827 = vst [vmem:[#allocation1] ss:$9 sm:$0xff] %v6736
    %7828 = vst [vmem:[%s7281] ss:$9 sm:$0xff] %v6737
    %7829 = vst [vmem:[%s7283] ss:$9 sm:$0xff] %v6738
    %7830 = vst [vmem:[%s7285] ss:$9 sm:$0xff] %v6739
    %7831 = vst [vmem:[%s7287] ss:$9 sm:$0xff] %v6740
    %7832 = vst [vmem:[%s7289] ss:$9 sm:$0xff] %v6741
    %7833 = vst [vmem:[%s7291] ss:$9 sm:$0xff] %v6742
    %7834 = vst [vmem:[%s7293] ss:$9 sm:$0xff] %v6743
    %v7835 = vld [vmem:[#allocation1] sm:$0xff]
    %7836 = vst [vmem:[#allocation1] ss:$9 sm:$0xff] %v6744
    %7837 = vst [vmem:[%s7281] ss:$9 sm:$0xff] %v6745
    %7838 = vst [vmem:[%s7283] ss:$9 sm:$0xff] %v6746
    %7839 = vst [vmem:[%s7285] ss:$9 sm:$0xff] %v6747
    %7840 = vst [vmem:[%s7287] ss:$9 sm:$0xff] %v6748
    %7841 = vst [vmem:[%s7289] ss:$9 sm:$0xff] %v6749
    %7842 = vst [vmem:[%s7291] ss:$9 sm:$0xff] %v6750
    %7843 = vst [vmem:[%s7293] ss:$9 sm:$0xff] %v6751
    %v7844 = vld [vmem:[#allocation1] sm:$0xff]
    %7845 = vst [vmem:[#allocation1] ss:$9 sm:$0xff] %v6752
    %7846 = vst [vmem:[%s7281] ss:$9 sm:$0xff] %v6753
    %7847 = vst [vmem:[%s7283] ss:$9 sm:$0xff] %v6754
    %7848 = vst [vmem:[%s7285] ss:$9 sm:$0xff] %v6755
    %7849 = vst [vmem:[%s7287] ss:$9 sm:$0xff] %v6756
    %7850 = vst [vmem:[%s7289] ss:$9 sm:$0xff] %v6757
    %7851 = vst [vmem:[%s7291] ss:$9 sm:$0xff] %v6758
    %7852 = vst [vmem:[%s7293] ss:$9 sm:$0xff] %v6759
    %v7853 = vld [vmem:[#allocation1] sm:$0xff]
    %7854 = vst [vmem:[#allocation1] ss:$9 sm:$0xff] %v6760
    %7855 = vst [vmem:[%s7281] ss:$9 sm:$0xff] %v6761
    %7856 = vst [vmem:[%s7283] ss:$9 sm:$0xff] %v6762
    %7857 = vst [vmem:[%s7285] ss:$9 sm:$0xff] %v6763
    %7858 = vst [vmem:[%s7287] ss:$9 sm:$0xff] %v6764
    %7859 = vst [vmem:[%s7289] ss:$9 sm:$0xff] %v6765
    %7860 = vst [vmem:[%s7291] ss:$9 sm:$0xff] %v6766
    %7861 = vst [vmem:[%s7293] ss:$9 sm:$0xff] %v6767
    %v7862 = vld [vmem:[#allocation1] sm:$0xff]
    %7863 = vst [vmem:[#allocation1] ss:$9 sm:$0xff] %v6768
    %7864 = vst [vmem:[%s7281] ss:$9 sm:$0xff] %v6769
    %7865 = vst [vmem:[%s7283] ss:$9 sm:$0xff] %v6770
    %7866 = vst [vmem:[%s7285] ss:$9 sm:$0xff] %v6771
    %7867 = vst [vmem:[%s7287] ss:$9 sm:$0xff] %v6772
    %7868 = vst [vmem:[%s7289] ss:$9 sm:$0xff] %v6773
    %7869 = vst [vmem:[%s7291] ss:$9 sm:$0xff] %v6774
    %7870 = vst [vmem:[%s7293] ss:$9 sm:$0xff] %v6775
    %v7871 = vld [vmem:[#allocation1] sm:$0xff]
    %7872 = vst [vmem:[#allocation1] ss:$9 sm:$0xff] %v6776
    %7873 = vst [vmem:[%s7281] ss:$9 sm:$0xff] %v6777
    %7874 = vst [vmem:[%s7283] ss:$9 sm:$0xff] %v6778
    %7875 = vst [vmem:[%s7285] ss:$9 sm:$0xff] %v6779
    %7876 = vst [vmem:[%s7287] ss:$9 sm:$0xff] %v6780
    %7877 = vst [vmem:[%s7289] ss:$9 sm:$0xff] %v6781
    %7878 = vst [vmem:[%s7291] ss:$9 sm:$0xff] %v6782
    %7879 = vst [vmem:[%s7293] ss:$9 sm:$0xff] %v6783
    %v7880 = vld [vmem:[#allocation1] sm:$0xff]
    %7881 = vst [vmem:[#allocation1] ss:$9 sm:$0xff] %v6784
    %7882 = vst [vmem:[%s7281] ss:$9 sm:$0xff] %v6785
    %7883 = vst [vmem:[%s7283] ss:$9 sm:$0xff] %v6786
    %7884 = vst [vmem:[%s7285] ss:$9 sm:$0xff] %v6787
    %7885 = vst [vmem:[%s7287] ss:$9 sm:$0xff] %v6788
    %7886 = vst [vmem:[%s7289] ss:$9 sm:$0xff] %v6789
    %7887 = vst [vmem:[%s7291] ss:$9 sm:$0xff] %v6790
    %7888 = vst [vmem:[%s7293] ss:$9 sm:$0xff] %v6791
    %v7889 = vld [vmem:[#allocation1] sm:$0xff]
    %7890 = vst [vmem:[#allocation1] ss:$9 sm:$0xff] %v6792
    %7891 = vst [vmem:[%s7281] ss:$9 sm:$0xff] %v6793
    %7892 = vst [vmem:[%s7283] ss:$9 sm:$0xff] %v6794
    %7893 = vst [vmem:[%s7285] ss:$9 sm:$0xff] %v6795
    %7894 = vst [vmem:[%s7287] ss:$9 sm:$0xff] %v6796
    %7895 = vst [vmem:[%s7289] ss:$9 sm:$0xff] %v6797
    %7896 = vst [vmem:[%s7291] ss:$9 sm:$0xff] %v6798
    %7897 = vst [vmem:[%s7293] ss:$9 sm:$0xff] %v6799
    %v7898 = vld [vmem:[#allocation1] sm:$0xff]
    %7899 = vst [vmem:[#allocation1] ss:$9 sm:$0xff] %v6800
    %7900 = vst [vmem:[%s7281] ss:$9 sm:$0xff] %v6801
    %7901 = vst [vmem:[%s7283] ss:$9 sm:$0xff] %v6802
    %7902 = vst [vmem:[%s7285] ss:$9 sm:$0xff] %v6803
    %7903 = vst [vmem:[%s7287] ss:$9 sm:$0xff] %v6804
    %7904 = vst [vmem:[%s7289] ss:$9 sm:$0xff] %v6805
    %7905 = vst [vmem:[%s7291] ss:$9 sm:$0xff] %v6806
    %7906 = vst [vmem:[%s7293] ss:$9 sm:$0xff] %v6807
    %v7907 = vld [vmem:[#allocation1] sm:$0xff]
    %7908 = vst [vmem:[#allocation1] ss:$9 sm:$0xff] %v6808
    %7909 = vst [vmem:[%s7281] ss:$9 sm:$0xff] %v6809
    %7910 = vst [vmem:[%s7283] ss:$9 sm:$0xff] %v6810
    %7911 = vst [vmem:[%s7285] ss:$9 sm:$0xff] %v6811
    %7912 = vst [vmem:[%s7287] ss:$9 sm:$0xff] %v6812
    %7913 = vst [vmem:[%s7289] ss:$9 sm:$0xff] %v6813
    %7914 = vst [vmem:[%s7291] ss:$9 sm:$0xff] %v6814
    %7915 = vst [vmem:[%s7293] ss:$9 sm:$0xff] %v6815
    %v7916 = vld [vmem:[#allocation1] sm:$0xff]
    %7917 = vst [vmem:[#allocation1] ss:$9 sm:$0xff] %v6816
    %7918 = vst [vmem:[%s7281] ss:$9 sm:$0xff] %v6817
    %7919 = vst [vmem:[%s7283] ss:$9 sm:$0xff] %v6818
    %7920 = vst [vmem:[%s7285] ss:$9 sm:$0xff] %v6819
    %7921 = vst [vmem:[%s7287] ss:$9 sm:$0xff] %v6820
    %7922 = vst [vmem:[%s7289] ss:$9 sm:$0xff] %v6821
    %7923 = vst [vmem:[%s7291] ss:$9 sm:$0xff] %v6822
    %7924 = vst [vmem:[%s7293] ss:$9 sm:$0xff] %v6823
    %v7925 = vld [vmem:[#allocation1] sm:$0xff]
    %7926 = vst [vmem:[#allocation1] ss:$9 sm:$0xff] %v6824
    %7927 = vst [vmem:[%s7281] ss:$9 sm:$0xff] %v6825
    %7928 = vst [vmem:[%s7283] ss:$9 sm:$0xff] %v6826
    %7929 = vst [vmem:[%s7285] ss:$9 sm:$0xff] %v6827
    %7930 = vst [vmem:[%s7287] ss:$9 sm:$0xff] %v6828
    %7931 = vst [vmem:[%s7289] ss:$9 sm:$0xff] %v6829
    %7932 = vst [vmem:[%s7291] ss:$9 sm:$0xff] %v6830
    %7933 = vst [vmem:[%s7293] ss:$9 sm:$0xff] %v6831
    %v7934 = vld [vmem:[#allocation1] sm:$0xff]
    %7935 = vst [vmem:[#allocation1] ss:$9 sm:$0xff] %v6832
    %7936 = vst [vmem:[%s7281] ss:$9 sm:$0xff] %v6833
    %7937 = vst [vmem:[%s7283] ss:$9 sm:$0xff] %v6834
    %7938 = vst [vmem:[%s7285] ss:$9 sm:$0xff] %v6835
    %7939 = vst [vmem:[%s7287] ss:$9 sm:$0xff] %v6836
    %7940 = vst [vmem:[%s7289] ss:$9 sm:$0xff] %v6837
    %7941 = vst [vmem:[%s7291] ss:$9 sm:$0xff] %v6838
    %7942 = vst [vmem:[%s7293] ss:$9 sm:$0xff] %v6839
    %v7943 = vld [vmem:[#allocation1] sm:$0xff]
    %7944 = vst [vmem:[#allocation1] ss:$9 sm:$0xff] %v6840
    %7945 = vst [vmem:[%s7281] ss:$9 sm:$0xff] %v6841
    %7946 = vst [vmem:[%s7283] ss:$9 sm:$0xff] %v6842
    %7947 = vst [vmem:[%s7285] ss:$9 sm:$0xff] %v6843
    %7948 = vst [vmem:[%s7287] ss:$9 sm:$0xff] %v6844
    %7949 = vst [vmem:[%s7289] ss:$9 sm:$0xff] %v6845
    %7950 = vst [vmem:[%s7291] ss:$9 sm:$0xff] %v6846
    %7951 = vst [vmem:[%s7293] ss:$9 sm:$0xff] %v6847
    %v7952 = vld [vmem:[#allocation1] sm:$0xff]
    %7953 = vst [vmem:[#allocation1] ss:$9 sm:$0xff] %v6848
    %7954 = vst [vmem:[%s7281] ss:$9 sm:$0xff] %v6849
    %7955 = vst [vmem:[%s7283] ss:$9 sm:$0xff] %v6850
    %7956 = vst [vmem:[%s7285] ss:$9 sm:$0xff] %v6851
    %7957 = vst [vmem:[%s7287] ss:$9 sm:$0xff] %v6852
    %7958 = vst [vmem:[%s7289] ss:$9 sm:$0xff] %v6853
    %7959 = vst [vmem:[%s7291] ss:$9 sm:$0xff] %v6854
    %7960 = vst [vmem:[%s7293] ss:$9 sm:$0xff] %v6855
    %v7961 = vld [vmem:[#allocation1] sm:$0xff]
    %7962 = vst [vmem:[#allocation1] ss:$9 sm:$0xff] %v6856
    %7963 = vst [vmem:[%s7281] ss:$9 sm:$0xff] %v6857
    %7964 = vst [vmem:[%s7283] ss:$9 sm:$0xff] %v6858
    %7965 = vst [vmem:[%s7285] ss:$9 sm:$0xff] %v6859
    %7966 = vst [vmem:[%s7287] ss:$9 sm:$0xff] %v6860
    %7967 = vst [vmem:[%s7289] ss:$9 sm:$0xff] %v6861
    %7968 = vst [vmem:[%s7291] ss:$9 sm:$0xff] %v6862
    %7969 = vst [vmem:[%s7293] ss:$9 sm:$0xff] %v6863
    %v7970 = vld [vmem:[#allocation1] sm:$0xff]
    %7971 = vst [vmem:[#allocation1] ss:$9 sm:$0xff] %v6864
    %7972 = vst [vmem:[%s7281] ss:$9 sm:$0xff] %v6865
    %7973 = vst [vmem:[%s7283] ss:$9 sm:$0xff] %v6866
    %7974 = vst [vmem:[%s7285] ss:$9 sm:$0xff] %v6867
    %7975 = vst [vmem:[%s7287] ss:$9 sm:$0xff] %v6868
    %7976 = vst [vmem:[%s7289] ss:$9 sm:$0xff] %v6869
    %7977 = vst [vmem:[%s7291] ss:$9 sm:$0xff] %v6870
    %7978 = vst [vmem:[%s7293] ss:$9 sm:$0xff] %v6871
    %v7979 = vld [vmem:[#allocation1] sm:$0xff]
    %7980 = vst [vmem:[#allocation1] ss:$9 sm:$0xff] %v6872
    %7981 = vst [vmem:[%s7281] ss:$9 sm:$0xff] %v6873
    %7982 = vst [vmem:[%s7283] ss:$9 sm:$0xff] %v6874
    %7983 = vst [vmem:[%s7285] ss:$9 sm:$0xff] %v6875
    %7984 = vst [vmem:[%s7287] ss:$9 sm:$0xff] %v6876
    %7985 = vst [vmem:[%s7289] ss:$9 sm:$0xff] %v6877
    %7986 = vst [vmem:[%s7291] ss:$9 sm:$0xff] %v6878
    %7987 = vst [vmem:[%s7293] ss:$9 sm:$0xff] %v6879
    %v7988 = vld [vmem:[#allocation1] sm:$0xff]
    %7989 = vst [vmem:[#allocation1] ss:$9 sm:$0xff] %v6880
    %7990 = vst [vmem:[%s7281] ss:$9 sm:$0xff] %v6881
    %7991 = vst [vmem:[%s7283] ss:$9 sm:$0xff] %v6882
    %7992 = vst [vmem:[%s7285] ss:$9 sm:$0xff] %v6883
    %7993 = vst [vmem:[%s7287] ss:$9 sm:$0xff] %v6884
    %7994 = vst [vmem:[%s7289] ss:$9 sm:$0xff] %v6885
    %7995 = vst [vmem:[%s7291] ss:$9 sm:$0xff] %v6886
    %7996 = vst [vmem:[%s7293] ss:$9 sm:$0xff] %v6887
    %v7997 = vld [vmem:[#allocation1] sm:$0xff]
    %7998 = vst [vmem:[#allocation1] ss:$9 sm:$0xff] %v6888
    %7999 = vst [vmem:[%s7281] ss:$9 sm:$0xff] %v6889
    %8000 = vst [vmem:[%s7283] ss:$9 sm:$0xff] %v6890
    %8001 = vst [vmem:[%s7285] ss:$9 sm:$0xff] %v6891
    %8002 = vst [vmem:[%s7287] ss:$9 sm:$0xff] %v6892
    %8003 = vst [vmem:[%s7289] ss:$9 sm:$0xff] %v6893
    %8004 = vst [vmem:[%s7291] ss:$9 sm:$0xff] %v6894
    %8005 = vst [vmem:[%s7293] ss:$9 sm:$0xff] %v6895
    %v8006 = vld [vmem:[#allocation1] sm:$0xff]
    %8007 = vst [vmem:[#allocation1] ss:$9 sm:$0xff] %v6896
    %8008 = vst [vmem:[%s7281] ss:$9 sm:$0xff] %v6897
    %8009 = vst [vmem:[%s7283] ss:$9 sm:$0xff] %v6898
    %8010 = vst [vmem:[%s7285] ss:$9 sm:$0xff] %v6899
    %8011 = vst [vmem:[%s7287] ss:$9 sm:$0xff] %v6900
    %8012 = vst [vmem:[%s7289] ss:$9 sm:$0xff] %v6901
    %8013 = vst [vmem:[%s7291] ss:$9 sm:$0xff] %v6902
    %8014 = vst [vmem:[%s7293] ss:$9 sm:$0xff] %v6903
    %v8015 = vld [vmem:[#allocation1] sm:$0xff]
    %8016 = vst [vmem:[#allocation1] ss:$9 sm:$0xff] %v6904
    %8017 = vst [vmem:[%s7281] ss:$9 sm:$0xff] %v6905
    %8018 = vst [vmem:[%s7283] ss:$9 sm:$0xff] %v6906
    %8019 = vst [vmem:[%s7285] ss:$9 sm:$0xff] %v6907
    %8020 = vst [vmem:[%s7287] ss:$9 sm:$0xff] %v6908
    %8021 = vst [vmem:[%s7289] ss:$9 sm:$0xff] %v6909
    %8022 = vst [vmem:[%s7291] ss:$9 sm:$0xff] %v6910
    %8023 = vst [vmem:[%s7293] ss:$9 sm:$0xff] %v6911
    %v8024 = vld [vmem:[#allocation1] sm:$0xff]
    %8025 = vst [vmem:[#allocation1] ss:$9 sm:$0xff] %v6912
    %8026 = vst [vmem:[%s7281] ss:$9 sm:$0xff] %v6913
    %8027 = vst [vmem:[%s7283] ss:$9 sm:$0xff] %v6914
    %8028 = vst [vmem:[%s7285] ss:$9 sm:$0xff] %v6915
    %8029 = vst [vmem:[%s7287] ss:$9 sm:$0xff] %v6916
    %8030 = vst [vmem:[%s7289] ss:$9 sm:$0xff] %v6917
    %8031 = vst [vmem:[%s7291] ss:$9 sm:$0xff] %v6918
    %8032 = vst [vmem:[%s7293] ss:$9 sm:$0xff] %v6919
    %v8033 = vld [vmem:[#allocation1] sm:$0xff]
    %8034 = vst [vmem:[#allocation1] ss:$9 sm:$0xff] %v6920
    %8035 = vst [vmem:[%s7281] ss:$9 sm:$0xff] %v6921
    %8036 = vst [vmem:[%s7283] ss:$9 sm:$0xff] %v6922
    %8037 = vst [vmem:[%s7285] ss:$9 sm:$0xff] %v6923
    %8038 = vst [vmem:[%s7287] ss:$9 sm:$0xff] %v6924
    %8039 = vst [vmem:[%s7289] ss:$9 sm:$0xff] %v6925
    %8040 = vst [vmem:[%s7291] ss:$9 sm:$0xff] %v6926
    %8041 = vst [vmem:[%s7293] ss:$9 sm:$0xff] %v6927
    %v8042 = vld [vmem:[#allocation1] sm:$0xff]
    %8043 = vst [vmem:[#allocation1] ss:$9 sm:$0xff] %v6928
    %8044 = vst [vmem:[%s7281] ss:$9 sm:$0xff] %v6929
    %8045 = vst [vmem:[%s7283] ss:$9 sm:$0xff] %v6930
    %8046 = vst [vmem:[%s7285] ss:$9 sm:$0xff] %v6931
    %8047 = vst [vmem:[%s7287] ss:$9 sm:$0xff] %v6932
    %8048 = vst [vmem:[%s7289] ss:$9 sm:$0xff] %v6933
    %8049 = vst [vmem:[%s7291] ss:$9 sm:$0xff] %v6934
    %8050 = vst [vmem:[%s7293] ss:$9 sm:$0xff] %v6935
    %v8051 = vld [vmem:[#allocation1] sm:$0xff]
    %8052 = vst [vmem:[#allocation1] ss:$9 sm:$0xff] %v6936
    %8053 = vst [vmem:[%s7281] ss:$9 sm:$0xff] %v6937
    %8054 = vst [vmem:[%s7283] ss:$9 sm:$0xff] %v6938
    %8055 = vst [vmem:[%s7285] ss:$9 sm:$0xff] %v6939
    %8056 = vst [vmem:[%s7287] ss:$9 sm:$0xff] %v6940
    %8057 = vst [vmem:[%s7289] ss:$9 sm:$0xff] %v6941
    %8058 = vst [vmem:[%s7291] ss:$9 sm:$0xff] %v6942
    %8059 = vst [vmem:[%s7293] ss:$9 sm:$0xff] %v6943
    %v8060 = vld [vmem:[#allocation1] sm:$0xff]
    %8061 = vst [vmem:[#allocation1] ss:$9 sm:$0xff] %v6944
    %8062 = vst [vmem:[%s7281] ss:$9 sm:$0xff] %v6945
    %8063 = vst [vmem:[%s7283] ss:$9 sm:$0xff] %v6946
    %8064 = vst [vmem:[%s7285] ss:$9 sm:$0xff] %v6947
    %8065 = vst [vmem:[%s7287] ss:$9 sm:$0xff] %v6948
    %8066 = vst [vmem:[%s7289] ss:$9 sm:$0xff] %v6949
    %8067 = vst [vmem:[%s7291] ss:$9 sm:$0xff] %v6950
    %8068 = vst [vmem:[%s7293] ss:$9 sm:$0xff] %v6951
    %v8069 = vld [vmem:[#allocation1] sm:$0xff]
    %8070 = vst [vmem:[#allocation1] ss:$9 sm:$0xff] %v6952
    %8071 = vst [vmem:[%s7281] ss:$9 sm:$0xff] %v6953
    %8072 = vst [vmem:[%s7283] ss:$9 sm:$0xff] %v6954
    %8073 = vst [vmem:[%s7285] ss:$9 sm:$0xff] %v6955
    %8074 = vst [vmem:[%s7287] ss:$9 sm:$0xff] %v6956
    %8075 = vst [vmem:[%s7289] ss:$9 sm:$0xff] %v6957
    %8076 = vst [vmem:[%s7291] ss:$9 sm:$0xff] %v6958
    %8077 = vst [vmem:[%s7293] ss:$9 sm:$0xff] %v6959
    %v8078 = vld [vmem:[#allocation1] sm:$0xff]
    %8079 = vst [vmem:[#allocation1] ss:$9 sm:$0xff] %v6960
    %8080 = vst [vmem:[%s7281] ss:$9 sm:$0xff] %v6961
    %8081 = vst [vmem:[%s7283] ss:$9 sm:$0xff] %v6962
    %8082 = vst [vmem:[%s7285] ss:$9 sm:$0xff] %v6963
    %8083 = vst [vmem:[%s7287] ss:$9 sm:$0xff] %v6964
    %8084 = vst [vmem:[%s7289] ss:$9 sm:$0xff] %v6965
    %8085 = vst [vmem:[%s7291] ss:$9 sm:$0xff] %v6966
    %8086 = vst [vmem:[%s7293] ss:$9 sm:$0xff] %v6967
    %v8087 = vld [vmem:[#allocation1] sm:$0xff]
    %8088 = vst [vmem:[#allocation1] ss:$9 sm:$0xff] %v6968
    %8089 = vst [vmem:[%s7281] ss:$9 sm:$0xff] %v6969
    %8090 = vst [vmem:[%s7283] ss:$9 sm:$0xff] %v6970
    %8091 = vst [vmem:[%s7285] ss:$9 sm:$0xff] %v6971
    %8092 = vst [vmem:[%s7287] ss:$9 sm:$0xff] %v6972
    %8093 = vst [vmem:[%s7289] ss:$9 sm:$0xff] %v6973
    %8094 = vst [vmem:[%s7291] ss:$9 sm:$0xff] %v6974
    %8095 = vst [vmem:[%s7293] ss:$9 sm:$0xff] %v6975
    %v8096 = vld [vmem:[#allocation1] sm:$0xff]
    %8097 = vst [vmem:[#allocation1] ss:$9 sm:$0xff] %v6976
    %8098 = vst [vmem:[%s7281] ss:$9 sm:$0xff] %v6977
    %8099 = vst [vmem:[%s7283] ss:$9 sm:$0xff] %v6978
    %8100 = vst [vmem:[%s7285] ss:$9 sm:$0xff] %v6979
    %8101 = vst [vmem:[%s7287] ss:$9 sm:$0xff] %v6980
    %8102 = vst [vmem:[%s7289] ss:$9 sm:$0xff] %v6981
    %8103 = vst [vmem:[%s7291] ss:$9 sm:$0xff] %v6982
    %8104 = vst [vmem:[%s7293] ss:$9 sm:$0xff] %v6983
    %v8105 = vld [vmem:[#allocation1] sm:$0xff]
    %8106 = vst [vmem:[#allocation1] ss:$9 sm:$0xff] %v6984
    %8107 = vst [vmem:[%s7281] ss:$9 sm:$0xff] %v6985
    %8108 = vst [vmem:[%s7283] ss:$9 sm:$0xff] %v6986
    %8109 = vst [vmem:[%s7285] ss:$9 sm:$0xff] %v6987
    %8110 = vst [vmem:[%s7287] ss:$9 sm:$0xff] %v6988
    %8111 = vst [vmem:[%s7289] ss:$9 sm:$0xff] %v6989
    %8112 = vst [vmem:[%s7291] ss:$9 sm:$0xff] %v6990
    %8113 = vst [vmem:[%s7293] ss:$9 sm:$0xff] %v6991
    %v8114 = vld [vmem:[#allocation1] sm:$0xff]
    %8115 = vst [vmem:[#allocation1] ss:$9 sm:$0xff] %v6992
    %8116 = vst [vmem:[%s7281] ss:$9 sm:$0xff] %v6993
    %8117 = vst [vmem:[%s7283] ss:$9 sm:$0xff] %v6994
    %8118 = vst [vmem:[%s7285] ss:$9 sm:$0xff] %v6995
    %8119 = vst [vmem:[%s7287] ss:$9 sm:$0xff] %v6996
    %8120 = vst [vmem:[%s7289] ss:$9 sm:$0xff] %v6997
    %8121 = vst [vmem:[%s7291] ss:$9 sm:$0xff] %v6998
    %8122 = vst [vmem:[%s7293] ss:$9 sm:$0xff] %v6999
    %v8123 = vld [vmem:[#allocation1] sm:$0xff]
    %8124 = vst [vmem:[#allocation1] ss:$9 sm:$0xff] %v7000
    %8125 = vst [vmem:[%s7281] ss:$9 sm:$0xff] %v7001
    %8126 = vst [vmem:[%s7283] ss:$9 sm:$0xff] %v7002
    %8127 = vst [vmem:[%s7285] ss:$9 sm:$0xff] %v7003
    %8128 = vst [vmem:[%s7287] ss:$9 sm:$0xff] %v7004
    %8129 = vst [vmem:[%s7289] ss:$9 sm:$0xff] %v7005
    %8130 = vst [vmem:[%s7291] ss:$9 sm:$0xff] %v7006
    %8131 = vst [vmem:[%s7293] ss:$9 sm:$0xff] %v7007
    %v8132 = vld [vmem:[#allocation1] sm:$0xff]
    %8133 = vst [vmem:[#allocation1] ss:$9 sm:$0xff] %v7008
    %8134 = vst [vmem:[%s7281] ss:$9 sm:$0xff] %v7009
    %8135 = vst [vmem:[%s7283] ss:$9 sm:$0xff] %v7010
    %8136 = vst [vmem:[%s7285] ss:$9 sm:$0xff] %v7011
    %8137 = vst [vmem:[%s7287] ss:$9 sm:$0xff] %v7012
    %8138 = vst [vmem:[%s7289] ss:$9 sm:$0xff] %v7013
    %8139 = vst [vmem:[%s7291] ss:$9 sm:$0xff] %v7014
    %8140 = vst [vmem:[%s7293] ss:$9 sm:$0xff] %v7015
    %v8141 = vld [vmem:[#allocation1] sm:$0xff]
    %8142 = vst [vmem:[#allocation1] ss:$9 sm:$0xff] %v7016
    %8143 = vst [vmem:[%s7281] ss:$9 sm:$0xff] %v7017
    %8144 = vst [vmem:[%s7283] ss:$9 sm:$0xff] %v7018
    %8145 = vst [vmem:[%s7285] ss:$9 sm:$0xff] %v7019
    %8146 = vst [vmem:[%s7287] ss:$9 sm:$0xff] %v7020
    %8147 = vst [vmem:[%s7289] ss:$9 sm:$0xff] %v7021
    %8148 = vst [vmem:[%s7291] ss:$9 sm:$0xff] %v7022
    %8149 = vst [vmem:[%s7293] ss:$9 sm:$0xff] %v7023
    %v8150 = vld [vmem:[#allocation1] sm:$0xff]
    %8151 = vst [vmem:[#allocation1] ss:$9 sm:$0xff] %v7024
    %8152 = vst [vmem:[%s7281] ss:$9 sm:$0xff] %v7025
    %8153 = vst [vmem:[%s7283] ss:$9 sm:$0xff] %v7026
    %8154 = vst [vmem:[%s7285] ss:$9 sm:$0xff] %v7027
    %8155 = vst [vmem:[%s7287] ss:$9 sm:$0xff] %v7028
    %8156 = vst [vmem:[%s7289] ss:$9 sm:$0xff] %v7029
    %8157 = vst [vmem:[%s7291] ss:$9 sm:$0xff] %v7030
    %8158 = vst [vmem:[%s7293] ss:$9 sm:$0xff] %v7031
    %v8159 = vld [vmem:[#allocation1] sm:$0xff]
    %8160 = vst [vmem:[#allocation1] ss:$9 sm:$0xff] %v7032
    %8161 = vst [vmem:[%s7281] ss:$9 sm:$0xff] %v7033
    %8162 = vst [vmem:[%s7283] ss:$9 sm:$0xff] %v7034
    %8163 = vst [vmem:[%s7285] ss:$9 sm:$0xff] %v7035
    %8164 = vst [vmem:[%s7287] ss:$9 sm:$0xff] %v7036
    %8165 = vst [vmem:[%s7289] ss:$9 sm:$0xff] %v7037
    %8166 = vst [vmem:[%s7291] ss:$9 sm:$0xff] %v7038
    %8167 = vst [vmem:[%s7293] ss:$9 sm:$0xff] %v7039
    %v8168 = vld [vmem:[#allocation1] sm:$0xff]
    %8169 = vst [vmem:[#allocation1] ss:$9 sm:$0xff] %v7040
    %8170 = vst [vmem:[%s7281] ss:$9 sm:$0xff] %v7041
    %8171 = vst [vmem:[%s7283] ss:$9 sm:$0xff] %v7042
    %8172 = vst [vmem:[%s7285] ss:$9 sm:$0xff] %v7043
    %8173 = vst [vmem:[%s7287] ss:$9 sm:$0xff] %v7044
    %8174 = vst [vmem:[%s7289] ss:$9 sm:$0xff] %v7045
    %8175 = vst [vmem:[%s7291] ss:$9 sm:$0xff] %v7046
    %8176 = vst [vmem:[%s7293] ss:$9 sm:$0xff] %v7047
    %v8177 = vld [vmem:[#allocation1] sm:$0xff]
    %8178 = vst [vmem:[#allocation1] ss:$9 sm:$0xff] %v7048
    %8179 = vst [vmem:[%s7281] ss:$9 sm:$0xff] %v7049
    %8180 = vst [vmem:[%s7283] ss:$9 sm:$0xff] %v7050
    %8181 = vst [vmem:[%s7285] ss:$9 sm:$0xff] %v7051
    %8182 = vst [vmem:[%s7287] ss:$9 sm:$0xff] %v7052
    %8183 = vst [vmem:[%s7289] ss:$9 sm:$0xff] %v7053
    %8184 = vst [vmem:[%s7291] ss:$9 sm:$0xff] %v7054
    %8185 = vst [vmem:[%s7293] ss:$9 sm:$0xff] %v7055
    %v8186 = vld [vmem:[#allocation1] sm:$0xff]
    %8187 = vst [vmem:[#allocation1] ss:$9 sm:$0xff] %v7056
    %8188 = vst [vmem:[%s7281] ss:$9 sm:$0xff] %v7057
    %8189 = vst [vmem:[%s7283] ss:$9 sm:$0xff] %v7058
    %8190 = vst [vmem:[%s7285] ss:$9 sm:$0xff] %v7059
    %8191 = vst [vmem:[%s7287] ss:$9 sm:$0xff] %v7060
    %8192 = vst [vmem:[%s7289] ss:$9 sm:$0xff] %v7061
    %8193 = vst [vmem:[%s7291] ss:$9 sm:$0xff] %v7062
    %8194 = vst [vmem:[%s7293] ss:$9 sm:$0xff] %v7063
    %v8195 = vld [vmem:[#allocation1] sm:$0xff]
    %8196 = vst [vmem:[#allocation1] ss:$9 sm:$0xff] %v7064
    %8197 = vst [vmem:[%s7281] ss:$9 sm:$0xff] %v7065
    %8198 = vst [vmem:[%s7283] ss:$9 sm:$0xff] %v7066
    %8199 = vst [vmem:[%s7285] ss:$9 sm:$0xff] %v7067
    %8200 = vst [vmem:[%s7287] ss:$9 sm:$0xff] %v7068
    %8201 = vst [vmem:[%s7289] ss:$9 sm:$0xff] %v7069
    %8202 = vst [vmem:[%s7291] ss:$9 sm:$0xff] %v7070
    %8203 = vst [vmem:[%s7293] ss:$9 sm:$0xff] %v7071
    %v8204 = vld [vmem:[#allocation1] sm:$0xff]
    %8205 = vst [vmem:[#allocation1] ss:$9 sm:$0xff] %v7072
    %8206 = vst [vmem:[%s7281] ss:$9 sm:$0xff] %v7073
    %8207 = vst [vmem:[%s7283] ss:$9 sm:$0xff] %v7074
    %8208 = vst [vmem:[%s7285] ss:$9 sm:$0xff] %v7075
    %8209 = vst [vmem:[%s7287] ss:$9 sm:$0xff] %v7076
    %8210 = vst [vmem:[%s7289] ss:$9 sm:$0xff] %v7077
    %8211 = vst [vmem:[%s7291] ss:$9 sm:$0xff] %v7078
    %8212 = vst [vmem:[%s7293] ss:$9 sm:$0xff] %v7079
    %v8213 = vld [vmem:[#allocation1] sm:$0xff]
    %8214 = vst [vmem:[#allocation1] ss:$9 sm:$0xff] %v7080
    %8215 = vst [vmem:[%s7281] ss:$9 sm:$0xff] %v7081
    %8216 = vst [vmem:[%s7283] ss:$9 sm:$0xff] %v7082
    %8217 = vst [vmem:[%s7285] ss:$9 sm:$0xff] %v7083
    %8218 = vst [vmem:[%s7287] ss:$9 sm:$0xff] %v7084
    %8219 = vst [vmem:[%s7289] ss:$9 sm:$0xff] %v7085
    %8220 = vst [vmem:[%s7291] ss:$9 sm:$0xff] %v7086
    %8221 = vst [vmem:[%s7293] ss:$9 sm:$0xff] %v7087
    %v8222 = vld [vmem:[#allocation1] sm:$0xff]
    %8223 = vst [vmem:[#allocation1] ss:$9 sm:$0xff] %v7088
    %8224 = vst [vmem:[%s7281] ss:$9 sm:$0xff] %v7089
    %8225 = vst [vmem:[%s7283] ss:$9 sm:$0xff] %v7090
    %8226 = vst [vmem:[%s7285] ss:$9 sm:$0xff] %v7091
    %8227 = vst [vmem:[%s7287] ss:$9 sm:$0xff] %v7092
    %8228 = vst [vmem:[%s7289] ss:$9 sm:$0xff] %v7093
    %8229 = vst [vmem:[%s7291] ss:$9 sm:$0xff] %v7094
    %8230 = vst [vmem:[%s7293] ss:$9 sm:$0xff] %v7095
    %v8231 = vld [vmem:[#allocation1] sm:$0xff]
    %8232 = vst [vmem:[#allocation1] ss:$9 sm:$0xff] %v7096
    %8233 = vst [vmem:[%s7281] ss:$9 sm:$0xff] %v7097
    %8234 = vst [vmem:[%s7283] ss:$9 sm:$0xff] %v7098
    %8235 = vst [vmem:[%s7285] ss:$9 sm:$0xff] %v7099
    %8236 = vst [vmem:[%s7287] ss:$9 sm:$0xff] %v7100
    %8237 = vst [vmem:[%s7289] ss:$9 sm:$0xff] %v7101
    %8238 = vst [vmem:[%s7291] ss:$9 sm:$0xff] %v7102
    %8239 = vst [vmem:[%s7293] ss:$9 sm:$0xff] %v7103
    %v8240 = vld [vmem:[#allocation1] sm:$0xff]
    %8241 = vst [vmem:[#allocation1] ss:$9 sm:$0xff] %v7104
    %8242 = vst [vmem:[%s7281] ss:$9 sm:$0xff] %v7105
    %8243 = vst [vmem:[%s7283] ss:$9 sm:$0xff] %v7106
    %8244 = vst [vmem:[%s7285] ss:$9 sm:$0xff] %v7107
    %8245 = vst [vmem:[%s7287] ss:$9 sm:$0xff] %v7108
    %8246 = vst [vmem:[%s7289] ss:$9 sm:$0xff] %v7109
    %8247 = vst [vmem:[%s7291] ss:$9 sm:$0xff] %v7110
    %8248 = vst [vmem:[%s7293] ss:$9 sm:$0xff] %v7111
    %v8249 = vld [vmem:[#allocation1] sm:$0xff]
    %8250 = vst [vmem:[#allocation1] ss:$9 sm:$0xff] %v7112
    %8251 = vst [vmem:[%s7281] ss:$9 sm:$0xff] %v7113
    %8252 = vst [vmem:[%s7283] ss:$9 sm:$0xff] %v7114
    %8253 = vst [vmem:[%s7285] ss:$9 sm:$0xff] %v7115
    %8254 = vst [vmem:[%s7287] ss:$9 sm:$0xff] %v7116
    %8255 = vst [vmem:[%s7289] ss:$9 sm:$0xff] %v7117
    %8256 = vst [vmem:[%s7291] ss:$9 sm:$0xff] %v7118
    %8257 = vst [vmem:[%s7293] ss:$9 sm:$0xff] %v7119
    %v8258 = vld [vmem:[#allocation1] sm:$0xff]
    %8259 = vst [vmem:[#allocation1] ss:$9 sm:$0xff] %v7120
    %8260 = vst [vmem:[%s7281] ss:$9 sm:$0xff] %v7121
    %8261 = vst [vmem:[%s7283] ss:$9 sm:$0xff] %v7122
    %8262 = vst [vmem:[%s7285] ss:$9 sm:$0xff] %v7123
    %8263 = vst [vmem:[%s7287] ss:$9 sm:$0xff] %v7124
    %8264 = vst [vmem:[%s7289] ss:$9 sm:$0xff] %v7125
    %8265 = vst [vmem:[%s7291] ss:$9 sm:$0xff] %v7126
    %8266 = vst [vmem:[%s7293] ss:$9 sm:$0xff] %v7127
    %v8267 = vld [vmem:[#allocation1] sm:$0xff]
    %8268 = vst [vmem:[#allocation1] ss:$9 sm:$0xff] %v7128
    %8269 = vst [vmem:[%s7281] ss:$9 sm:$0xff] %v7129
    %8270 = vst [vmem:[%s7283] ss:$9 sm:$0xff] %v7130
    %8271 = vst [vmem:[%s7285] ss:$9 sm:$0xff] %v7131
    %8272 = vst [vmem:[%s7287] ss:$9 sm:$0xff] %v7132
    %8273 = vst [vmem:[%s7289] ss:$9 sm:$0xff] %v7133
    %8274 = vst [vmem:[%s7291] ss:$9 sm:$0xff] %v7134
    %8275 = vst [vmem:[%s7293] ss:$9 sm:$0xff] %v7135
    %v8276 = vld [vmem:[#allocation1] sm:$0xff]
    %8277 = vst [vmem:[#allocation1] ss:$9 sm:$0xff] %v7136
    %8278 = vst [vmem:[%s7281] ss:$9 sm:$0xff] %v7137
    %8279 = vst [vmem:[%s7283] ss:$9 sm:$0xff] %v7138
    %8280 = vst [vmem:[%s7285] ss:$9 sm:$0xff] %v7139
    %8281 = vst [vmem:[%s7287] ss:$9 sm:$0xff] %v7140
    %8282 = vst [vmem:[%s7289] ss:$9 sm:$0xff] %v7141
    %8283 = vst [vmem:[%s7291] ss:$9 sm:$0xff] %v7142
    %8284 = vst [vmem:[%s7293] ss:$9 sm:$0xff] %v7143
    %v8285 = vld [vmem:[#allocation1] sm:$0xff]
    %8286 = vst [vmem:[#allocation1] ss:$9 sm:$0xff] %v7144
    %8287 = vst [vmem:[%s7281] ss:$9 sm:$0xff] %v7145
    %8288 = vst [vmem:[%s7283] ss:$9 sm:$0xff] %v7146
    %8289 = vst [vmem:[%s7285] ss:$9 sm:$0xff] %v7147
    %8290 = vst [vmem:[%s7287] ss:$9 sm:$0xff] %v7148
    %8291 = vst [vmem:[%s7289] ss:$9 sm:$0xff] %v7149
    %8292 = vst [vmem:[%s7291] ss:$9 sm:$0xff] %v7150
    %8293 = vst [vmem:[%s7293] ss:$9 sm:$0xff] %v7151
    %v8294 = vld [vmem:[#allocation1] sm:$0xff]
    %8295 = vst [vmem:[#allocation1] ss:$9 sm:$0xff] %v7152
    %8296 = vst [vmem:[%s7281] ss:$9 sm:$0xff] %v7153
    %8297 = vst [vmem:[%s7283] ss:$9 sm:$0xff] %v7154
    %8298 = vst [vmem:[%s7285] ss:$9 sm:$0xff] %v7155
    %8299 = vst [vmem:[%s7287] ss:$9 sm:$0xff] %v7156
    %8300 = vst [vmem:[%s7289] ss:$9 sm:$0xff] %v7157
    %8301 = vst [vmem:[%s7291] ss:$9 sm:$0xff] %v7158
    %8302 = vst [vmem:[%s7293] ss:$9 sm:$0xff] %v7159
    %v8303 = vld [vmem:[#allocation1] sm:$0xff]
    %8304 = vst [vmem:[#allocation1] ss:$9 sm:$0xff] %v7160
    %8305 = vst [vmem:[%s7281] ss:$9 sm:$0xff] %v7161
    %8306 = vst [vmem:[%s7283] ss:$9 sm:$0xff] %v7162
    %8307 = vst [vmem:[%s7285] ss:$9 sm:$0xff] %v7163
    %8308 = vst [vmem:[%s7287] ss:$9 sm:$0xff] %v7164
    %8309 = vst [vmem:[%s7289] ss:$9 sm:$0xff] %v7165
    %8310 = vst [vmem:[%s7291] ss:$9 sm:$0xff] %v7166
    %8311 = vst [vmem:[%s7293] ss:$9 sm:$0xff] %v7167
    %v8312 = vld [vmem:[#allocation1] sm:$0xff]
    %8313 = vst [vmem:[#allocation1] ss:$9 sm:$0xff] %v7168
    %8314 = vst [vmem:[%s7281] ss:$9 sm:$0xff] %v7169
    %8315 = vst [vmem:[%s7283] ss:$9 sm:$0xff] %v7170
    %8316 = vst [vmem:[%s7285] ss:$9 sm:$0xff] %v7171
    %8317 = vst [vmem:[%s7287] ss:$9 sm:$0xff] %v7172
    %8318 = vst [vmem:[%s7289] ss:$9 sm:$0xff] %v7173
    %8319 = vst [vmem:[%s7291] ss:$9 sm:$0xff] %v7174
    %8320 = vst [vmem:[%s7293] ss:$9 sm:$0xff] %v7175
    %v8321 = vld [vmem:[#allocation1] sm:$0xff]
    %8322 = vst [vmem:[#allocation1] ss:$9 sm:$0xff] %v7176
    %8323 = vst [vmem:[%s7281] ss:$9 sm:$0xff] %v7177
    %8324 = vst [vmem:[%s7283] ss:$9 sm:$0xff] %v7178
    %8325 = vst [vmem:[%s7285] ss:$9 sm:$0xff] %v7179
    %8326 = vst [vmem:[%s7287] ss:$9 sm:$0xff] %v7180
    %8327 = vst [vmem:[%s7289] ss:$9 sm:$0xff] %v7181
    %8328 = vst [vmem:[%s7291] ss:$9 sm:$0xff] %v7182
    %8329 = vst [vmem:[%s7293] ss:$9 sm:$0xff] %v7183
    %v8330 = vld [vmem:[#allocation1] sm:$0xff]
    %8331 = vst [vmem:[#allocation1] ss:$9 sm:$0xff] %v7184
    %8332 = vst [vmem:[%s7281] ss:$9 sm:$0xff] %v7185
    %8333 = vst [vmem:[%s7283] ss:$9 sm:$0xff] %v7186
    %8334 = vst [vmem:[%s7285] ss:$9 sm:$0xff] %v7187
    %8335 = vst [vmem:[%s7287] ss:$9 sm:$0xff] %v7188
    %8336 = vst [vmem:[%s7289] ss:$9 sm:$0xff] %v7189
    %8337 = vst [vmem:[%s7291] ss:$9 sm:$0xff] %v7190
    %8338 = vst [vmem:[%s7293] ss:$9 sm:$0xff] %v7191
    %v8339 = vld [vmem:[#allocation1] sm:$0xff]
    %8340 = vst [vmem:[#allocation1] ss:$9 sm:$0xff] %v7192
    %8341 = vst [vmem:[%s7281] ss:$9 sm:$0xff] %v7193
    %8342 = vst [vmem:[%s7283] ss:$9 sm:$0xff] %v7194
    %8343 = vst [vmem:[%s7285] ss:$9 sm:$0xff] %v7195
    %8344 = vst [vmem:[%s7287] ss:$9 sm:$0xff] %v7196
    %8345 = vst [vmem:[%s7289] ss:$9 sm:$0xff] %v7197
    %8346 = vst [vmem:[%s7291] ss:$9 sm:$0xff] %v7198
    %8347 = vst [vmem:[%s7293] ss:$9 sm:$0xff] %v7199
    %v8348 = vld [vmem:[#allocation1] sm:$0xff]
    %8349 = vst [vmem:[#allocation1] ss:$9 sm:$0xff] %v7200
    %8350 = vst [vmem:[%s7281] ss:$9 sm:$0xff] %v7201
    %8351 = vst [vmem:[%s7283] ss:$9 sm:$0xff] %v7202
    %8352 = vst [vmem:[%s7285] ss:$9 sm:$0xff] %v7203
    %8353 = vst [vmem:[%s7287] ss:$9 sm:$0xff] %v7204
    %8354 = vst [vmem:[%s7289] ss:$9 sm:$0xff] %v7205
    %8355 = vst [vmem:[%s7291] ss:$9 sm:$0xff] %v7206
    %8356 = vst [vmem:[%s7293] ss:$9 sm:$0xff] %v7207
    %v8357 = vld [vmem:[#allocation1] sm:$0xff]
    %8358 = vst [vmem:[#allocation1] ss:$9 sm:$0xff] %v7208
    %8359 = vst [vmem:[%s7281] ss:$9 sm:$0xff] %v7209
    %8360 = vst [vmem:[%s7283] ss:$9 sm:$0xff] %v7210
    %8361 = vst [vmem:[%s7285] ss:$9 sm:$0xff] %v7211
    %8362 = vst [vmem:[%s7287] ss:$9 sm:$0xff] %v7212
    %8363 = vst [vmem:[%s7289] ss:$9 sm:$0xff] %v7213
    %8364 = vst [vmem:[%s7291] ss:$9 sm:$0xff] %v7214
    %8365 = vst [vmem:[%s7293] ss:$9 sm:$0xff] %v7215
    %v8366 = vld [vmem:[#allocation1] sm:$0xff]
    %8367 = vst [vmem:[#allocation1] ss:$9 sm:$0xff] %v7216
    %8368 = vst [vmem:[%s7281] ss:$9 sm:$0xff] %v7217
    %8369 = vst [vmem:[%s7283] ss:$9 sm:$0xff] %v7218
    %8370 = vst [vmem:[%s7285] ss:$9 sm:$0xff] %v7219
    %8371 = vst [vmem:[%s7287] ss:$9 sm:$0xff] %v7220
    %8372 = vst [vmem:[%s7289] ss:$9 sm:$0xff] %v7221
    %8373 = vst [vmem:[%s7291] ss:$9 sm:$0xff] %v7222
    %8374 = vst [vmem:[%s7293] ss:$9 sm:$0xff] %v7223
    %v8375 = vld [vmem:[#allocation1] sm:$0xff]
    %8376 = vst [vmem:[#allocation1] ss:$9 sm:$0xff] %v7224
    %8377 = vst [vmem:[%s7281] ss:$9 sm:$0xff] %v7225
    %8378 = vst [vmem:[%s7283] ss:$9 sm:$0xff] %v7226
    %8379 = vst [vmem:[%s7285] ss:$9 sm:$0xff] %v7227
    %8380 = vst [vmem:[%s7287] ss:$9 sm:$0xff] %v7228
    %8381 = vst [vmem:[%s7289] ss:$9 sm:$0xff] %v7229
    %8382 = vst [vmem:[%s7291] ss:$9 sm:$0xff] %v7230
    %8383 = vst [vmem:[%s7293] ss:$9 sm:$0xff] %v7231
    %v8384 = vld [vmem:[#allocation1] sm:$0xff]
    %8385 = vst [vmem:[#allocation1] ss:$9 sm:$0xff] %v7232
    %8386 = vst [vmem:[%s7281] ss:$9 sm:$0xff] %v7233
    %8387 = vst [vmem:[%s7283] ss:$9 sm:$0xff] %v7234
    %8388 = vst [vmem:[%s7285] ss:$9 sm:$0xff] %v7235
    %8389 = vst [vmem:[%s7287] ss:$9 sm:$0xff] %v7236
    %8390 = vst [vmem:[%s7289] ss:$9 sm:$0xff] %v7237
    %8391 = vst [vmem:[%s7291] ss:$9 sm:$0xff] %v7238
    %8392 = vst [vmem:[%s7293] ss:$9 sm:$0xff] %v7239
    %v8393 = vld [vmem:[#allocation1] sm:$0xff]
    %8394 = vst [vmem:[#allocation1] ss:$9 sm:$0xff] %v7240
    %8395 = vst [vmem:[%s7281] ss:$9 sm:$0xff] %v7241
    %8396 = vst [vmem:[%s7283] ss:$9 sm:$0xff] %v7242
    %8397 = vst [vmem:[%s7285] ss:$9 sm:$0xff] %v7243
    %8398 = vst [vmem:[%s7287] ss:$9 sm:$0xff] %v7244
    %8399 = vst [vmem:[%s7289] ss:$9 sm:$0xff] %v7245
    %8400 = vst [vmem:[%s7291] ss:$9 sm:$0xff] %v7246
    %8401 = vst [vmem:[%s7293] ss:$9 sm:$0xff] %v7247
    %v8402 = vld [vmem:[#allocation1] sm:$0xff]
    %8403 = vst [vmem:[#allocation1] ss:$9 sm:$0xff] %v7248
    %8404 = vst [vmem:[%s7281] ss:$9 sm:$0xff] %v7249
    %8405 = vst [vmem:[%s7283] ss:$9 sm:$0xff] %v7250
    %8406 = vst [vmem:[%s7285] ss:$9 sm:$0xff] %v7251
    %8407 = vst [vmem:[%s7287] ss:$9 sm:$0xff] %v7252
    %8408 = vst [vmem:[%s7289] ss:$9 sm:$0xff] %v7253
    %8409 = vst [vmem:[%s7291] ss:$9 sm:$0xff] %v7254
    %8410 = vst [vmem:[%s7293] ss:$9 sm:$0xff] %v7255
    %v8411 = vld [vmem:[#allocation1] sm:$0xff]
    %8412 = vst [vmem:[#allocation1] ss:$9 sm:$0xff] %v7256
    %8413 = vst [vmem:[%s7281] ss:$9 sm:$0xff] %v7257
    %8414 = vst [vmem:[%s7283] ss:$9 sm:$0xff] %v7258
    %8415 = vst [vmem:[%s7285] ss:$9 sm:$0xff] %v7259
    %8416 = vst [vmem:[%s7287] ss:$9 sm:$0xff] %v7260
    %8417 = vst [vmem:[%s7289] ss:$9 sm:$0xff] %v7261
    %8418 = vst [vmem:[%s7291] ss:$9 sm:$0xff] %v7262
    %8419 = vst [vmem:[%s7293] ss:$9 sm:$0xff] %v7263
    %v8420 = vld [vmem:[#allocation1] sm:$0xff]
    %8421 = vst [vmem:[#allocation1] ss:$9 sm:$0xff] %v7264
    %8422 = vst [vmem:[%s7281] ss:$9 sm:$0xff] %v7265
    %8423 = vst [vmem:[%s7283] ss:$9 sm:$0xff] %v7266
    %8424 = vst [vmem:[%s7285] ss:$9 sm:$0xff] %v7267
    %8425 = vst [vmem:[%s7287] ss:$9 sm:$0xff] %v7268
    %8426 = vst [vmem:[%s7289] ss:$9 sm:$0xff] %v7269
    %8427 = vst [vmem:[%s7291] ss:$9 sm:$0xff] %v7270
    %8428 = vst [vmem:[%s7293] ss:$9 sm:$0xff] %v7271
    %v8429 = vld [vmem:[#allocation1] sm:$0xff]
    %8430 = vst [vmem:[#allocation1] ss:$9 sm:$0xff] %v7272
    %8431 = vst [vmem:[%s7281] ss:$9 sm:$0xff] %v7273
    %8432 = vst [vmem:[%s7283] ss:$9 sm:$0xff] %v7274
    %8433 = vst [vmem:[%s7285] ss:$9 sm:$0xff] %v7275
    %8434 = vst [vmem:[%s7287] ss:$9 sm:$0xff] %v7276
    %8435 = vst [vmem:[%s7289] ss:$9 sm:$0xff] %v7277
    %8436 = vst [vmem:[%s7291] ss:$9 sm:$0xff] %v7278
    %8437 = vst [vmem:[%s7293] ss:$9 sm:$0xff] %v7279
    %v8438 = vld [vmem:[#allocation1] sm:$0xff]
    %8439 = vset.pattern.permute.xlu0 0
    %8440 = vperm.xlu0 %8439, %v7295
    %v8441 = vpop.permute.xlu0 %8440
    %8442 = vset.pattern.permute.xlu0 0
    %8443 = vperm.xlu0 %8442, %v7304
    %v8444 = vpop.permute.xlu0 %8443
    %8445 = vset.pattern.permute.xlu0 0
    %8446 = vperm.xlu0 %8445, %v7313
    %v8447 = vpop.permute.xlu0 %8446
    %8448 = vset.pattern.permute.xlu0 0
    %8449 = vperm.xlu0 %8448, %v7322
    %v8450 = vpop.permute.xlu0 %8449
    %8451 = vset.pattern.permute.xlu0 0
    %8452 = vperm.xlu0 %8451, %v7331
    %v8453 = vpop.permute.xlu0 %8452
    %8454 = vset.pattern.permute.xlu0 0
    %8455 = vperm.xlu0 %8454, %v7340
    %v8456 = vpop.permute.xlu0 %8455
    %8457 = vset.pattern.permute.xlu0 0
    %8458 = vperm.xlu0 %8457, %v7349
    %v8459 = vpop.permute.xlu0 %8458
    %8460 = vset.pattern.permute.xlu0 0
    %8461 = vperm.xlu0 %8460, %v7358
    %v8462 = vpop.permute.xlu0 %8461
    %8463 = vset.pattern.permute.xlu0 0
    %8464 = vperm.xlu0 %8463, %v7367
    %v8465 = vpop.permute.xlu0 %8464
    %8466 = vset.pattern.permute.xlu0 0
    %8467 = vperm.xlu0 %8466, %v7376
    %v8468 = vpop.permute.xlu0 %8467
    %8469 = vset.pattern.permute.xlu0 0
    %8470 = vperm.xlu0 %8469, %v7385
    %v8471 = vpop.permute.xlu0 %8470
    %8472 = vset.pattern.permute.xlu0 0
    %8473 = vperm.xlu0 %8472, %v7394
    %v8474 = vpop.permute.xlu0 %8473
    %8475 = vset.pattern.permute.xlu0 0
    %8476 = vperm.xlu0 %8475, %v7403
    %v8477 = vpop.permute.xlu0 %8476
    %8478 = vset.pattern.permute.xlu0 0
    %8479 = vperm.xlu0 %8478, %v7412
    %v8480 = vpop.permute.xlu0 %8479
    %8481 = vset.pattern.permute.xlu0 0
    %8482 = vperm.xlu0 %8481, %v7421
    %v8483 = vpop.permute.xlu0 %8482
    %8484 = vset.pattern.permute.xlu0 0
    %8485 = vperm.xlu0 %8484, %v7430
    %v8486 = vpop.permute.xlu0 %8485
    %8487 = vset.pattern.permute.xlu0 0
    %8488 = vperm.xlu0 %8487, %v7439
    %v8489 = vpop.permute.xlu0 %8488
    %8490 = vset.pattern.permute.xlu0 0
    %8491 = vperm.xlu0 %8490, %v7448
    %v8492 = vpop.permute.xlu0 %8491
    %8493 = vset.pattern.permute.xlu0 0
    %8494 = vperm.xlu0 %8493, %v7457
    %v8495 = vpop.permute.xlu0 %8494
    %8496 = vset.pattern.permute.xlu0 0
    %8497 = vperm.xlu0 %8496, %v7466
    %v8498 = vpop.permute.xlu0 %8497
    %8499 = vset.pattern.permute.xlu0 0
    %8500 = vperm.xlu0 %8499, %v7475
    %v8501 = vpop.permute.xlu0 %8500
    %8502 = vset.pattern.permute.xlu0 0
    %8503 = vperm.xlu0 %8502, %v7484
    %v8504 = vpop.permute.xlu0 %8503
    %8505 = vset.pattern.permute.xlu0 0
    %8506 = vperm.xlu0 %8505, %v7493
    %v8507 = vpop.permute.xlu0 %8506
    %8508 = vset.pattern.permute.xlu0 0
    %8509 = vperm.xlu0 %8508, %v7502
    %v8510 = vpop.permute.xlu0 %8509
    %8511 = vset.pattern.permute.xlu0 0
    %8512 = vperm.xlu0 %8511, %v7511
    %v8513 = vpop.permute.xlu0 %8512
    %8514 = vset.pattern.permute.xlu0 0
    %8515 = vperm.xlu0 %8514, %v7520
    %v8516 = vpop.permute.xlu0 %8515
    %8517 = vset.pattern.permute.xlu0 0
    %8518 = vperm.xlu0 %8517, %v7529
    %v8519 = vpop.permute.xlu0 %8518
    %8520 = vset.pattern.permute.xlu0 0
    %8521 = vperm.xlu0 %8520, %v7538
    %v8522 = vpop.permute.xlu0 %8521
    %8523 = vset.pattern.permute.xlu0 0
    %8524 = vperm.xlu0 %8523, %v7547
    %v8525 = vpop.permute.xlu0 %8524
    %8526 = vset.pattern.permute.xlu0 0
    %8527 = vperm.xlu0 %8526, %v7556
    %v8528 = vpop.permute.xlu0 %8527
    %8529 = vset.pattern.permute.xlu0 0
    %8530 = vperm.xlu0 %8529, %v7565
    %v8531 = vpop.permute.xlu0 %8530
    %8532 = vset.pattern.permute.xlu0 0
    %8533 = vperm.xlu0 %8532, %v7574
    %v8534 = vpop.permute.xlu0 %8533
    %8535 = vset.pattern.permute.xlu0 0
    %8536 = vperm.xlu0 %8535, %v7583
    %v8537 = vpop.permute.xlu0 %8536
    %8538 = vset.pattern.permute.xlu0 0
    %8539 = vperm.xlu0 %8538, %v7592
    %v8540 = vpop.permute.xlu0 %8539
    %8541 = vset.pattern.permute.xlu0 0
    %8542 = vperm.xlu0 %8541, %v7601
    %v8543 = vpop.permute.xlu0 %8542
    %8544 = vset.pattern.permute.xlu0 0
    %8545 = vperm.xlu0 %8544, %v7610
    %v8546 = vpop.permute.xlu0 %8545
    %8547 = vset.pattern.permute.xlu0 0
    %8548 = vperm.xlu0 %8547, %v7619
    %v8549 = vpop.permute.xlu0 %8548
    %8550 = vset.pattern.permute.xlu0 0
    %8551 = vperm.xlu0 %8550, %v7628
    %v8552 = vpop.permute.xlu0 %8551
    %8553 = vset.pattern.permute.xlu0 0
    %8554 = vperm.xlu0 %8553, %v7637
    %v8555 = vpop.permute.xlu0 %8554
    %8556 = vset.pattern.permute.xlu0 0
    %8557 = vperm.xlu0 %8556, %v7646
    %v8558 = vpop.permute.xlu0 %8557
    %8559 = vset.pattern.permute.xlu0 0
    %8560 = vperm.xlu0 %8559, %v7655
    %v8561 = vpop.permute.xlu0 %8560
    %8562 = vset.pattern.permute.xlu0 0
    %8563 = vperm.xlu0 %8562, %v7664
    %v8564 = vpop.permute.xlu0 %8563
    %8565 = vset.pattern.permute.xlu0 0
    %8566 = vperm.xlu0 %8565, %v7673
    %v8567 = vpop.permute.xlu0 %8566
    %8568 = vset.pattern.permute.xlu0 0
    %8569 = vperm.xlu0 %8568, %v7682
    %v8570 = vpop.permute.xlu0 %8569
    %8571 = vset.pattern.permute.xlu0 0
    %8572 = vperm.xlu0 %8571, %v7691
    %v8573 = vpop.permute.xlu0 %8572
    %8574 = vset.pattern.permute.xlu0 0
    %8575 = vperm.xlu0 %8574, %v7700
    %v8576 = vpop.permute.xlu0 %8575
    %8577 = vset.pattern.permute.xlu0 0
    %8578 = vperm.xlu0 %8577, %v7709
    %v8579 = vpop.permute.xlu0 %8578
    %8580 = vset.pattern.permute.xlu0 0
    %8581 = vperm.xlu0 %8580, %v7718
    %v8582 = vpop.permute.xlu0 %8581
    %8583 = vset.pattern.permute.xlu0 0
    %8584 = vperm.xlu0 %8583, %v7727
    %v8585 = vpop.permute.xlu0 %8584
    %8586 = vset.pattern.permute.xlu0 0
    %8587 = vperm.xlu0 %8586, %v7736
    %v8588 = vpop.permute.xlu0 %8587
    %8589 = vset.pattern.permute.xlu0 0
    %8590 = vperm.xlu0 %8589, %v7745
    %v8591 = vpop.permute.xlu0 %8590
    %8592 = vset.pattern.permute.xlu0 0
    %8593 = vperm.xlu0 %8592, %v7754
    %v8594 = vpop.permute.xlu0 %8593
    %8595 = vset.pattern.permute.xlu0 0
    %8596 = vperm.xlu0 %8595, %v7763
    %v8597 = vpop.permute.xlu0 %8596
    %8598 = vset.pattern.permute.xlu0 0
    %8599 = vperm.xlu0 %8598, %v7772
    %v8600 = vpop.permute.xlu0 %8599
    %8601 = vset.pattern.permute.xlu0 0
    %8602 = vperm.xlu0 %8601, %v7781
    %v8603 = vpop.permute.xlu0 %8602
    %8604 = vset.pattern.permute.xlu0 0
    %8605 = vperm.xlu0 %8604, %v7790
    %v8606 = vpop.permute.xlu0 %8605
    %8607 = vset.pattern.permute.xlu0 0
    %8608 = vperm.xlu0 %8607, %v7799
    %v8609 = vpop.permute.xlu0 %8608
    %8610 = vset.pattern.permute.xlu0 0
    %8611 = vperm.xlu0 %8610, %v7808
    %v8612 = vpop.permute.xlu0 %8611
    %8613 = vset.pattern.permute.xlu0 0
    %8614 = vperm.xlu0 %8613, %v7817
    %v8615 = vpop.permute.xlu0 %8614
    %8616 = vset.pattern.permute.xlu0 0
    %8617 = vperm.xlu0 %8616, %v7826
    %v8618 = vpop.permute.xlu0 %8617
    %8619 = vset.pattern.permute.xlu0 0
    %8620 = vperm.xlu0 %8619, %v7835
    %v8621 = vpop.permute.xlu0 %8620
    %8622 = vset.pattern.permute.xlu0 0
    %8623 = vperm.xlu0 %8622, %v7844
    %v8624 = vpop.permute.xlu0 %8623
    %8625 = vset.pattern.permute.xlu0 0
    %8626 = vperm.xlu0 %8625, %v7853
    %v8627 = vpop.permute.xlu0 %8626
    %8628 = vset.pattern.permute.xlu0 0
    %8629 = vperm.xlu0 %8628, %v7862
    %v8630 = vpop.permute.xlu0 %8629
    %8631 = vset.pattern.permute.xlu0 0
    %8632 = vperm.xlu0 %8631, %v7871
    %v8633 = vpop.permute.xlu0 %8632
    %8634 = vset.pattern.permute.xlu0 0
    %8635 = vperm.xlu0 %8634, %v7880
    %v8636 = vpop.permute.xlu0 %8635
    %8637 = vset.pattern.permute.xlu0 0
    %8638 = vperm.xlu0 %8637, %v7889
    %v8639 = vpop.permute.xlu0 %8638
    %8640 = vset.pattern.permute.xlu0 0
    %8641 = vperm.xlu0 %8640, %v7898
    %v8642 = vpop.permute.xlu0 %8641
    %8643 = vset.pattern.permute.xlu0 0
    %8644 = vperm.xlu0 %8643, %v7907
    %v8645 = vpop.permute.xlu0 %8644
    %8646 = vset.pattern.permute.xlu0 0
    %8647 = vperm.xlu0 %8646, %v7916
    %v8648 = vpop.permute.xlu0 %8647
    %8649 = vset.pattern.permute.xlu0 0
    %8650 = vperm.xlu0 %8649, %v7925
    %v8651 = vpop.permute.xlu0 %8650
    %8652 = vset.pattern.permute.xlu0 0
    %8653 = vperm.xlu0 %8652, %v7934
    %v8654 = vpop.permute.xlu0 %8653
    %8655 = vset.pattern.permute.xlu0 0
    %8656 = vperm.xlu0 %8655, %v7943
    %v8657 = vpop.permute.xlu0 %8656
    %8658 = vset.pattern.permute.xlu0 0
    %8659 = vperm.xlu0 %8658, %v7952
    %v8660 = vpop.permute.xlu0 %8659
    %8661 = vset.pattern.permute.xlu0 0
    %8662 = vperm.xlu0 %8661, %v7961
    %v8663 = vpop.permute.xlu0 %8662
    %8664 = vset.pattern.permute.xlu0 0
    %8665 = vperm.xlu0 %8664, %v7970
    %v8666 = vpop.permute.xlu0 %8665
    %8667 = vset.pattern.permute.xlu0 0
    %8668 = vperm.xlu0 %8667, %v7979
    %v8669 = vpop.permute.xlu0 %8668
    %8670 = vset.pattern.permute.xlu0 0
    %8671 = vperm.xlu0 %8670, %v7988
    %v8672 = vpop.permute.xlu0 %8671
    %8673 = vset.pattern.permute.xlu0 0
    %8674 = vperm.xlu0 %8673, %v7997
    %v8675 = vpop.permute.xlu0 %8674
    %8676 = vset.pattern.permute.xlu0 0
    %8677 = vperm.xlu0 %8676, %v8006
    %v8678 = vpop.permute.xlu0 %8677
    %8679 = vset.pattern.permute.xlu0 0
    %8680 = vperm.xlu0 %8679, %v8015
    %v8681 = vpop.permute.xlu0 %8680
    %8682 = vset.pattern.permute.xlu0 0
    %8683 = vperm.xlu0 %8682, %v8024
    %v8684 = vpop.permute.xlu0 %8683
    %8685 = vset.pattern.permute.xlu0 0
    %8686 = vperm.xlu0 %8685, %v8033
    %v8687 = vpop.permute.xlu0 %8686
    %8688 = vset.pattern.permute.xlu0 0
    %8689 = vperm.xlu0 %8688, %v8042
    %v8690 = vpop.permute.xlu0 %8689
    %8691 = vset.pattern.permute.xlu0 0
    %8692 = vperm.xlu0 %8691, %v8051
    %v8693 = vpop.permute.xlu0 %8692
    %8694 = vset.pattern.permute.xlu0 0
    %8695 = vperm.xlu0 %8694, %v8060
    %v8696 = vpop.permute.xlu0 %8695
    %8697 = vset.pattern.permute.xlu0 0
    %8698 = vperm.xlu0 %8697, %v8069
    %v8699 = vpop.permute.xlu0 %8698
    %8700 = vset.pattern.permute.xlu0 0
    %8701 = vperm.xlu0 %8700, %v8078
    %v8702 = vpop.permute.xlu0 %8701
    %8703 = vset.pattern.permute.xlu0 0
    %8704 = vperm.xlu0 %8703, %v8087
    %v8705 = vpop.permute.xlu0 %8704
    %8706 = vset.pattern.permute.xlu0 0
    %8707 = vperm.xlu0 %8706, %v8096
    %v8708 = vpop.permute.xlu0 %8707
    %8709 = vset.pattern.permute.xlu0 0
    %8710 = vperm.xlu0 %8709, %v8105
    %v8711 = vpop.permute.xlu0 %8710
    %8712 = vset.pattern.permute.xlu0 0
    %8713 = vperm.xlu0 %8712, %v8114
    %v8714 = vpop.permute.xlu0 %8713
    %8715 = vset.pattern.permute.xlu0 0
    %8716 = vperm.xlu0 %8715, %v8123
    %v8717 = vpop.permute.xlu0 %8716
    %8718 = vset.pattern.permute.xlu0 0
    %8719 = vperm.xlu0 %8718, %v8132
    %v8720 = vpop.permute.xlu0 %8719
    %8721 = vset.pattern.permute.xlu0 0
    %8722 = vperm.xlu0 %8721, %v8141
    %v8723 = vpop.permute.xlu0 %8722
    %8724 = vset.pattern.permute.xlu0 0
    %8725 = vperm.xlu0 %8724, %v8150
    %v8726 = vpop.permute.xlu0 %8725
    %8727 = vset.pattern.permute.xlu0 0
    %8728 = vperm.xlu0 %8727, %v8159
    %v8729 = vpop.permute.xlu0 %8728
    %8730 = vset.pattern.permute.xlu0 0
    %8731 = vperm.xlu0 %8730, %v8168
    %v8732 = vpop.permute.xlu0 %8731
    %8733 = vset.pattern.permute.xlu0 0
    %8734 = vperm.xlu0 %8733, %v8177
    %v8735 = vpop.permute.xlu0 %8734
    %8736 = vset.pattern.permute.xlu0 0
    %8737 = vperm.xlu0 %8736, %v8186
    %v8738 = vpop.permute.xlu0 %8737
    %8739 = vset.pattern.permute.xlu0 0
    %8740 = vperm.xlu0 %8739, %v8195
    %v8741 = vpop.permute.xlu0 %8740
    %8742 = vset.pattern.permute.xlu0 0
    %8743 = vperm.xlu0 %8742, %v8204
    %v8744 = vpop.permute.xlu0 %8743
    %8745 = vset.pattern.permute.xlu0 0
    %8746 = vperm.xlu0 %8745, %v8213
    %v8747 = vpop.permute.xlu0 %8746
    %8748 = vset.pattern.permute.xlu0 0
    %8749 = vperm.xlu0 %8748, %v8222
    %v8750 = vpop.permute.xlu0 %8749
    %8751 = vset.pattern.permute.xlu0 0
    %8752 = vperm.xlu0 %8751, %v8231
    %v8753 = vpop.permute.xlu0 %8752
    %8754 = vset.pattern.permute.xlu0 0
    %8755 = vperm.xlu0 %8754, %v8240
    %v8756 = vpop.permute.xlu0 %8755
    %8757 = vset.pattern.permute.xlu0 0
    %8758 = vperm.xlu0 %8757, %v8249
    %v8759 = vpop.permute.xlu0 %8758
    %8760 = vset.pattern.permute.xlu0 0
    %8761 = vperm.xlu0 %8760, %v8258
    %v8762 = vpop.permute.xlu0 %8761
    %8763 = vset.pattern.permute.xlu0 0
    %8764 = vperm.xlu0 %8763, %v8267
    %v8765 = vpop.permute.xlu0 %8764
    %8766 = vset.pattern.permute.xlu0 0
    %8767 = vperm.xlu0 %8766, %v8276
    %v8768 = vpop.permute.xlu0 %8767
    %8769 = vset.pattern.permute.xlu0 0
    %8770 = vperm.xlu0 %8769, %v8285
    %v8771 = vpop.permute.xlu0 %8770
    %8772 = vset.pattern.permute.xlu0 0
    %8773 = vperm.xlu0 %8772, %v8294
    %v8774 = vpop.permute.xlu0 %8773
    %8775 = vset.pattern.permute.xlu0 0
    %8776 = vperm.xlu0 %8775, %v8303
    %v8777 = vpop.permute.xlu0 %8776
    %8778 = vset.pattern.permute.xlu0 0
    %8779 = vperm.xlu0 %8778, %v8312
    %v8780 = vpop.permute.xlu0 %8779
    %8781 = vset.pattern.permute.xlu0 0
    %8782 = vperm.xlu0 %8781, %v8321
    %v8783 = vpop.permute.xlu0 %8782
    %8784 = vset.pattern.permute.xlu0 0
    %8785 = vperm.xlu0 %8784, %v8330
    %v8786 = vpop.permute.xlu0 %8785
    %8787 = vset.pattern.permute.xlu0 0
    %8788 = vperm.xlu0 %8787, %v8339
    %v8789 = vpop.permute.xlu0 %8788
    %8790 = vset.pattern.permute.xlu0 0
    %8791 = vperm.xlu0 %8790, %v8348
    %v8792 = vpop.permute.xlu0 %8791
    %8793 = vset.pattern.permute.xlu0 0
    %8794 = vperm.xlu0 %8793, %v8357
    %v8795 = vpop.permute.xlu0 %8794
    %8796 = vset.pattern.permute.xlu0 0
    %8797 = vperm.xlu0 %8796, %v8366
    %v8798 = vpop.permute.xlu0 %8797
    %8799 = vset.pattern.permute.xlu0 0
    %8800 = vperm.xlu0 %8799, %v8375
    %v8801 = vpop.permute.xlu0 %8800
    %8802 = vset.pattern.permute.xlu0 0
    %8803 = vperm.xlu0 %8802, %v8384
    %v8804 = vpop.permute.xlu0 %8803
    %8805 = vset.pattern.permute.xlu0 0
    %8806 = vperm.xlu0 %8805, %v8393
    %v8807 = vpop.permute.xlu0 %8806
    %8808 = vset.pattern.permute.xlu0 0
    %8809 = vperm.xlu0 %8808, %v8402
    %v8810 = vpop.permute.xlu0 %8809
    %8811 = vset.pattern.permute.xlu0 0
    %8812 = vperm.xlu0 %8811, %v8411
    %v8813 = vpop.permute.xlu0 %8812
    %8814 = vset.pattern.permute.xlu0 0
    %8815 = vperm.xlu0 %8814, %v8420
    %v8816 = vpop.permute.xlu0 %8815
    %8817 = vset.pattern.permute.xlu0 0
    %8818 = vperm.xlu0 %8817, %v8429
    %v8819 = vpop.permute.xlu0 %8818
    %8820 = vset.pattern.permute.xlu0 0
    %8821 = vperm.xlu0 %8820, %v8438
    %v8822 = vpop.permute.xlu0 %8821
    %v8823 = vlaneseq
    %v8824 = vand.u32 %v8823, 127
    %v8825 = vperm.slane %v8441, %v8824
    %v8826 = vadd.s32 %v8824, 4294967288
    %v8827 = vperm.slane %v8444, %v8826
    %vm8828 = vcmask 130112
    %v8829 = vsel %vm8828, %v8827, %v8825
    %v8830 = vadd.s32 %v8824, 4294967280
    %v8831 = vperm.slane %v8447, %v8830
    %vm8832 = vcmask 195712
    %v8833 = vsel %vm8832, %v8831, %v8829
    %v8834 = vadd.s32 %v8824, 4294967272
    %v8835 = vperm.slane %v8450, %v8834
    %vm8836 = vcmask 261312
    %v8837 = vsel %vm8836, %v8835, %v8833
    %v8838 = vadd.s32 %v8824, 4294967264
    %v8839 = vperm.slane %v8453, %v8838
    %vm8840 = vcmask 326912
    %v8841 = vsel %vm8840, %v8839, %v8837
    %v8842 = vadd.s32 %v8824, 4294967256
    %v8843 = vperm.slane %v8456, %v8842
    %vm8844 = vcmask 392512
    %v8845 = vsel %vm8844, %v8843, %v8841
    %v8846 = vadd.s32 %v8824, 4294967248
    %v8847 = vperm.slane %v8459, %v8846
    %vm8848 = vcmask 458112
    %v8849 = vsel %vm8848, %v8847, %v8845
    %v8850 = vadd.s32 %v8824, 4294967240
    %v8851 = vperm.slane %v8462, %v8850
    %vm8852 = vcmask 523712
    %v8853 = vsel %vm8852, %v8851, %v8849
    %v8854 = vadd.s32 %v8824, 4294967232
    %v8855 = vperm.slane %v8465, %v8854
    %vm8856 = vcmask 589312
    %v8857 = vsel %vm8856, %v8855, %v8853
    %v8858 = vadd.s32 %v8824, 4294967224
    %v8859 = vperm.slane %v8468, %v8858
    %vm8860 = vcmask 654912
    %v8861 = vsel %vm8860, %v8859, %v8857
    %v8862 = vadd.s32 %v8824, 4294967216
    %v8863 = vperm.slane %v8471, %v8862
    %vm8864 = vcmask 720512
    %v8865 = vsel %vm8864, %v8863, %v8861
    %v8866 = vadd.s32 %v8824, 4294967208
    %v8867 = vperm.slane %v8474, %v8866
    %vm8868 = vcmask 786112
    %v8869 = vsel %vm8868, %v8867, %v8865
    %v8870 = vadd.s32 %v8824, 4294967200
    %v8871 = vperm.slane %v8477, %v8870
    %vm8872 = vcmask 851712
    %v8873 = vsel %vm8872, %v8871, %v8869
    %v8874 = vadd.s32 %v8824, 4294967192
    %v8875 = vperm.slane %v8480, %v8874
    %vm8876 = vcmask 917312
    %v8877 = vsel %vm8876, %v8875, %v8873
    %v8878 = vadd.s32 %v8824, 4294967184
    %v8879 = vperm.slane %v8483, %v8878
    %vm8880 = vcmask 982912
    %v8881 = vsel %vm8880, %v8879, %v8877
    %v8882 = vadd.s32 %v8824, 4294967176
    %v8883 = vperm.slane %v8486, %v8882
    %vm8884 = vcmask 1048512
    %v8885 = vsel %vm8884, %v8883, %v8881
    %v8886 = vperm.slane %v8489, %v8824
    %v8887 = vperm.slane %v8492, %v8826
    %v8888 = vsel %vm8828, %v8887, %v8886
    %v8889 = vperm.slane %v8495, %v8830
    %v8890 = vsel %vm8832, %v8889, %v8888
    %v8891 = vperm.slane %v8498, %v8834
    %v8892 = vsel %vm8836, %v8891, %v8890
    %v8893 = vperm.slane %v8501, %v8838
    %v8894 = vsel %vm8840, %v8893, %v8892
    %v8895 = vperm.slane %v8504, %v8842
    %v8896 = vsel %vm8844, %v8895, %v8894
    %v8897 = vperm.slane %v8507, %v8846
    %v8898 = vsel %vm8848, %v8897, %v8896
    %v8899 = vperm.slane %v8510, %v8850
    %v8900 = vsel %vm8852, %v8899, %v8898
    %v8901 = vperm.slane %v8513, %v8854
    %v8902 = vsel %vm8856, %v8901, %v8900
    %v8903 = vperm.slane %v8516, %v8858
    %v8904 = vsel %vm8860, %v8903, %v8902
    %v8905 = vperm.slane %v8519, %v8862
    %v8906 = vsel %vm8864, %v8905, %v8904
    %v8907 = vperm.slane %v8522, %v8866
    %v8908 = vsel %vm8868, %v8907, %v8906
    %v8909 = vperm.slane %v8525, %v8870
    %v8910 = vsel %vm8872, %v8909, %v8908
    %v8911 = vperm.slane %v8528, %v8874
    %v8912 = vsel %vm8876, %v8911, %v8910
    %v8913 = vperm.slane %v8531, %v8878
    %v8914 = vsel %vm8880, %v8913, %v8912
    %v8915 = vperm.slane %v8534, %v8882
    %v8916 = vsel %vm8884, %v8915, %v8914
    %v8917 = vperm.slane %v8537, %v8824
    %v8918 = vperm.slane %v8540, %v8826
    %v8919 = vsel %vm8828, %v8918, %v8917
    %v8920 = vperm.slane %v8543, %v8830
    %v8921 = vsel %vm8832, %v8920, %v8919
    %v8922 = vperm.slane %v8546, %v8834
    %v8923 = vsel %vm8836, %v8922, %v8921
    %v8924 = vperm.slane %v8549, %v8838
    %v8925 = vsel %vm8840, %v8924, %v8923
    %v8926 = vperm.slane %v8552, %v8842
    %v8927 = vsel %vm8844, %v8926, %v8925
    %v8928 = vperm.slane %v8555, %v8846
    %v8929 = vsel %vm8848, %v8928, %v8927
    %v8930 = vperm.slane %v8558, %v8850
    %v8931 = vsel %vm8852, %v8930, %v8929
    %v8932 = vperm.slane %v8561, %v8854
    %v8933 = vsel %vm8856, %v8932, %v8931
    %v8934 = vperm.slane %v8564, %v8858
    %v8935 = vsel %vm8860, %v8934, %v8933
    %v8936 = vperm.slane %v8567, %v8862
    %v8937 = vsel %vm8864, %v8936, %v8935
    %v8938 = vperm.slane %v8570, %v8866
    %v8939 = vsel %vm8868, %v8938, %v8937
    %v8940 = vperm.slane %v8573, %v8870
    %v8941 = vsel %vm8872, %v8940, %v8939
    %v8942 = vperm.slane %v8576, %v8874
    %v8943 = vsel %vm8876, %v8942, %v8941
    %v8944 = vperm.slane %v8579, %v8878
    %v8945 = vsel %vm8880, %v8944, %v8943
    %v8946 = vperm.slane %v8582, %v8882
    %v8947 = vsel %vm8884, %v8946, %v8945
    %v8948 = vperm.slane %v8585, %v8824
    %v8949 = vperm.slane %v8588, %v8826
    %v8950 = vsel %vm8828, %v8949, %v8948
    %v8951 = vperm.slane %v8591, %v8830
    %v8952 = vsel %vm8832, %v8951, %v8950
    %v8953 = vperm.slane %v8594, %v8834
    %v8954 = vsel %vm8836, %v8953, %v8952
    %v8955 = vperm.slane %v8597, %v8838
    %v8956 = vsel %vm8840, %v8955, %v8954
    %v8957 = vperm.slane %v8600, %v8842
    %v8958 = vsel %vm8844, %v8957, %v8956
    %v8959 = vperm.slane %v8603, %v8846
    %v8960 = vsel %vm8848, %v8959, %v8958
    %v8961 = vperm.slane %v8606, %v8850
    %v8962 = vsel %vm8852, %v8961, %v8960
    %v8963 = vperm.slane %v8609, %v8854
    %v8964 = vsel %vm8856, %v8963, %v8962
    %v8965 = vperm.slane %v8612, %v8858
    %v8966 = vsel %vm8860, %v8965, %v8964
    %v8967 = vperm.slane %v8615, %v8862
    %v8968 = vsel %vm8864, %v8967, %v8966
    %v8969 = vperm.slane %v8618, %v8866
    %v8970 = vsel %vm8868, %v8969, %v8968
    %v8971 = vperm.slane %v8621, %v8870
    %v8972 = vsel %vm8872, %v8971, %v8970
    %v8973 = vperm.slane %v8624, %v8874
    %v8974 = vsel %vm8876, %v8973, %v8972
    %v8975 = vperm.slane %v8627, %v8878
    %v8976 = vsel %vm8880, %v8975, %v8974
    %v8977 = vperm.slane %v8630, %v8882
    %v8978 = vsel %vm8884, %v8977, %v8976
    %v8979 = vperm.slane %v8633, %v8824
    %v8980 = vperm.slane %v8636, %v8826
    %v8981 = vsel %vm8828, %v8980, %v8979
    %v8982 = vperm.slane %v8639, %v8830
    %v8983 = vsel %vm8832, %v8982, %v8981
    %v8984 = vperm.slane %v8642, %v8834
    %v8985 = vsel %vm8836, %v8984, %v8983
    %v8986 = vperm.slane %v8645, %v8838
    %v8987 = vsel %vm8840, %v8986, %v8985
    %v8988 = vperm.slane %v8648, %v8842
    %v8989 = vsel %vm8844, %v8988, %v8987
    %v8990 = vperm.slane %v8651, %v8846
    %v8991 = vsel %vm8848, %v8990, %v8989
    %v8992 = vperm.slane %v8654, %v8850
    %v8993 = vsel %vm8852, %v8992, %v8991
    %v8994 = vperm.slane %v8657, %v8854
    %v8995 = vsel %vm8856, %v8994, %v8993
    %v8996 = vperm.slane %v8660, %v8858
    %v8997 = vsel %vm8860, %v8996, %v8995
    %v8998 = vperm.slane %v8663, %v8862
    %v8999 = vsel %vm8864, %v8998, %v8997
    %v9000 = vperm.slane %v8666, %v8866
    %v9001 = vsel %vm8868, %v9000, %v8999
    %v9002 = vperm.slane %v8669, %v8870
    %v9003 = vsel %vm8872, %v9002, %v9001
    %v9004 = vperm.slane %v8672, %v8874
    %v9005 = vsel %vm8876, %v9004, %v9003
    %v9006 = vperm.slane %v8675, %v8878
    %v9007 = vsel %vm8880, %v9006, %v9005
    %v9008 = vperm.slane %v8678, %v8882
    %v9009 = vsel %vm8884, %v9008, %v9007
    %v9010 = vperm.slane %v8681, %v8824
    %v9011 = vperm.slane %v8684, %v8826
    %v9012 = vsel %vm8828, %v9011, %v9010
    %v9013 = vperm.slane %v8687, %v8830
    %v9014 = vsel %vm8832, %v9013, %v9012
    %v9015 = vperm.slane %v8690, %v8834
    %v9016 = vsel %vm8836, %v9015, %v9014
    %v9017 = vperm.slane %v8693, %v8838
    %v9018 = vsel %vm8840, %v9017, %v9016
    %v9019 = vperm.slane %v8696, %v8842
    %v9020 = vsel %vm8844, %v9019, %v9018
    %v9021 = vperm.slane %v8699, %v8846
    %v9022 = vsel %vm8848, %v9021, %v9020
    %v9023 = vperm.slane %v8702, %v8850
    %v9024 = vsel %vm8852, %v9023, %v9022
    %v9025 = vperm.slane %v8705, %v8854
    %v9026 = vsel %vm8856, %v9025, %v9024
    %v9027 = vperm.slane %v8708, %v8858
    %v9028 = vsel %vm8860, %v9027, %v9026
    %v9029 = vperm.slane %v8711, %v8862
    %v9030 = vsel %vm8864, %v9029, %v9028
    %v9031 = vperm.slane %v8714, %v8866
    %v9032 = vsel %vm8868, %v9031, %v9030
    %v9033 = vperm.slane %v8717, %v8870
    %v9034 = vsel %vm8872, %v9033, %v9032
    %v9035 = vperm.slane %v8720, %v8874
    %v9036 = vsel %vm8876, %v9035, %v9034
    %v9037 = vperm.slane %v8723, %v8878
    %v9038 = vsel %vm8880, %v9037, %v9036
    %v9039 = vperm.slane %v8726, %v8882
    %v9040 = vsel %vm8884, %v9039, %v9038
    %v9041 = vperm.slane %v8729, %v8824
    %v9042 = vperm.slane %v8732, %v8826
    %v9043 = vsel %vm8828, %v9042, %v9041
    %v9044 = vperm.slane %v8735, %v8830
    %v9045 = vsel %vm8832, %v9044, %v9043
    %v9046 = vperm.slane %v8738, %v8834
    %v9047 = vsel %vm8836, %v9046, %v9045
    %v9048 = vperm.slane %v8741, %v8838
    %v9049 = vsel %vm8840, %v9048, %v9047
    %v9050 = vperm.slane %v8744, %v8842
    %v9051 = vsel %vm8844, %v9050, %v9049
    %v9052 = vperm.slane %v8747, %v8846
    %v9053 = vsel %vm8848, %v9052, %v9051
    %v9054 = vperm.slane %v8750, %v8850
    %v9055 = vsel %vm8852, %v9054, %v9053
    %v9056 = vperm.slane %v8753, %v8854
    %v9057 = vsel %vm8856, %v9056, %v9055
    %v9058 = vperm.slane %v8756, %v8858
    %v9059 = vsel %vm8860, %v9058, %v9057
    %v9060 = vperm.slane %v8759, %v8862
    %v9061 = vsel %vm8864, %v9060, %v9059
    %v9062 = vperm.slane %v8762, %v8866
    %v9063 = vsel %vm8868, %v9062, %v9061
    %v9064 = vperm.slane %v8765, %v8870
    %v9065 = vsel %vm8872, %v9064, %v9063
    %v9066 = vperm.slane %v8768, %v8874
    %v9067 = vsel %vm8876, %v9066, %v9065
    %v9068 = vperm.slane %v8771, %v8878
    %v9069 = vsel %vm8880, %v9068, %v9067
    %v9070 = vperm.slane %v8774, %v8882
    %v9071 = vsel %vm8884, %v9070, %v9069
    %v9072 = vperm.slane %v8777, %v8824
    %v9073 = vperm.slane %v8780, %v8826
    %v9074 = vsel %vm8828, %v9073, %v9072
    %v9075 = vperm.slane %v8783, %v8830
    %v9076 = vsel %vm8832, %v9075, %v9074
    %v9077 = vperm.slane %v8786, %v8834
    %v9078 = vsel %vm8836, %v9077, %v9076
    %v9079 = vperm.slane %v8789, %v8838
    %v9080 = vsel %vm8840, %v9079, %v9078
    %v9081 = vperm.slane %v8792, %v8842
    %v9082 = vsel %vm8844, %v9081, %v9080
    %v9083 = vperm.slane %v8795, %v8846
    %v9084 = vsel %vm8848, %v9083, %v9082
    %v9085 = vperm.slane %v8798, %v8850
    %v9086 = vsel %vm8852, %v9085, %v9084
    %v9087 = vperm.slane %v8801, %v8854
    %v9088 = vsel %vm8856, %v9087, %v9086
    %v9089 = vperm.slane %v8804, %v8858
    %v9090 = vsel %vm8860, %v9089, %v9088
    %v9091 = vperm.slane %v8807, %v8862
    %v9092 = vsel %vm8864, %v9091, %v9090
    %v9093 = vperm.slane %v8810, %v8866
    %v9094 = vsel %vm8868, %v9093, %v9092
    %v9095 = vperm.slane %v8813, %v8870
    %v9096 = vsel %vm8872, %v9095, %v9094
    %v9097 = vperm.slane %v8816, %v8874
    %v9098 = vsel %vm8876, %v9097, %v9096
    %v9099 = vperm.slane %v8819, %v8878
    %v9100 = vsel %vm8880, %v9099, %v9098
    %v9101 = vperm.slane %v8822, %v8882
    %v9102 = vsel %vm8884, %v9101, %v9100
    %v9103 = vrot.slane %v8916, 7
    %v9104 = vrot.slane %v8947, 6
    %v9105 = vrot.slane %v8978, 5
    %v9106 = vrot.slane %v9009, 4
    %v9107 = vrot.slane %v9040, 3
    %v9108 = vrot.slane %v9071, 2
    %v9109 = vrot.slane %v9102, 1
    %vm9110 = vcmask 1040384
    %v9111 = vsel %vm9110, %v8885, %v9103
    %vm9112 = vcmask 1042434
    %v9113 = vsel %vm9112, %v9104, %v9105
    %vm9114 = vcmask 1041408
    %v9115 = vsel %vm9114, %v9111, %v9113
    %vm9116 = vcmask 1044484
    %v9117 = vsel %vm9116, %v9106, %v9107
    %vm9118 = vcmask 1046534
    %v9119 = vsel %vm9118, %v9108, %v9109
    %vm9120 = vcmask 1045508
    %v9121 = vsel %vm9120, %v9117, %v9119
    %vm9122 = vcmask 1043456
    %v9123 = vsel %vm9122, %v9115, %v9121
    %9125 = vst [vmem:[#allocation6] sm:$0xff] %v9123
    // Predicated region
    $region30: #{tpu_custom_call.1} parent=1 // pred_check
      _
    $region31: #{tpu_custom_call.1} parent=1 // pred_check_branch
      %9127 = sbr.rel (0) target = $region33
    $region32: #{tpu_custom_call.1} parent=1 // pred_region
      %9129 = vsyncadd [#allocation5], 0
      %s9131 = sshll.u32 [#allocation6], 4
      %s9132 = int_to_ptr.vmem [resolvable:$true] %s9131
      %s9133 = sshll.u32 %s6, 4
      %s9134 = int_to_ptr.hbm [resolvable:$true] %s9133
      %9136 = dma.vmem_to_hbm [thread:$0]  %s9132, 128, %s9134, [#allocation5]
    $region33: #{tpu_custom_call.1} parent=1 // pred_fallthru
      _
    // Predicated region
    $region34: #{tpu_custom_call.1} parent=1 // pred_check
      _
    $region35: #{tpu_custom_call.1} parent=1 // pred_check_branch
      %9138 = sbr.rel (0) target = $region37
    $region36: #{tpu_custom_call.1} parent=1 // pred_region
      %9140 = dma.done [#allocation5], 128
    $region37: #{tpu_custom_call.1} parent=1 // pred_fallthru
      _
    %9141 = vsyncpa [#allocation4], 1
    %9142 = vsyncpa [#allocation5], 1

</llo_original>
